<compile_context>
chip_gen: v7x
topology: tpu7x:2x2x1
jax: 0.10.0
libtpu: 0.0.40
codegen_flags: <defaults>
</compile_context>

<pallas_src>
import jax
import jax.numpy as jnp
from jax.experimental import pallas as pl
from jax.experimental.pallas import tpu as pltpu

CP = 128          # lane padding for channels / features
K5 = 5            # conv kernel size
NK = K5 * K5      # 25 taps

_COMPILER_PARAMS = pltpu.CompilerParams(
    dimension_semantics=("parallel",),          # shard batch grid across TCs (v7x megacore)
    vmem_limit_bytes=32 * 1024 * 1024,          # explicit, safe on v5e/v6e/v7x
)


# ---------------------------------------------------------------------------
# Kernel A: conv1 (as matmul) + bias + ReLU + fused 2x2 max-pool
# ---------------------------------------------------------------------------
def _conv1_pool_relu_kernel(p_ref, w_ref, b_ref, o_ref):
    # p_ref: (4, rb, 144, 25) bf16  -- im2col patches grouped by 2x2 pool position
    # w_ref: (25, 128) bf16, b_ref: (1, 128) f32, o_ref: (rb, 144, 128) bf16
    rb = p_ref.shape[1]
    w = w_ref[...]
    acc = jnp.dot(p_ref[0].reshape(rb * 144, NK), w,
                  preferred_element_type=jnp.float32)
    for p in range(1, 4):
        y = jnp.dot(p_ref[p].reshape(rb * 144, NK), w,
                    preferred_element_type=jnp.float32)
        acc = jnp.maximum(acc, y)                       # 2x2 max-pool fused here
    acc = jnp.maximum(acc + b_ref[...], 0.0)            # f32 bias + ReLU epilogue
    o_ref[...] = acc.reshape(rb, 144, CP).astype(o_ref.dtype)


def conv1_pool_relu(p1, w1, b1):
    B = p1.shape[1]
    rb = min(B, 2)
    return pl.pallas_call(
        _conv1_pool_relu_kernel,
        out_shape=jax.ShapeDtypeStruct((B, 144, CP), jnp.bfloat16),
        grid=(pl.cdiv(B, rb),),
        in_specs=[
            pl.BlockSpec((4, rb, 144, NK), lambda b: (0, b, 0, 0)),
            pl.BlockSpec((NK, CP), lambda b: (0, 0)),
            pl.BlockSpec((1, CP), lambda b: (0, 0)),
        ],
        out_specs=pl.BlockSpec((rb, 144, CP), lambda b: (b, 0, 0)),
        compiler_params=_COMPILER_PARAMS,
    )(p1, w1, b1)


# ---------------------------------------------------------------------------
# Kernel B: conv2 (in-kernel im2col via shifted matmuls) + bias + ReLU
#           + fused 2x2 max-pool + NHWC flatten
# ---------------------------------------------------------------------------
def _conv2_pool_relu_kernel(h_ref, w_ref, b_ref, o_ref, s_ref):
    # h_ref: (rb, 12, 12, 128) bf16; w_ref: (25, 128, 128) bf16; b_ref: (1, 128) f32
    # o_ref: (rb, 16, 128) bf16; s_ref: VMEM scratch (rb, 8, 8, 128) f32
    rb = h_ref.shape[0]
    acc = jnp.zeros((rb * 64, CP), jnp.float32)
    for i in range(K5):                                 # shifted-window matmuls
        for j in range(K5):
            lhs = h_ref[:, i:i + 8, j:j + 8, :].reshape(rb * 64, CP)
            acc = acc + jnp.dot(lhs, w_ref[i * K5 + j],
                                preferred_element_type=jnp.float32)
    acc = jnp.maximum(acc + b_ref[...], 0.0)            # ReLU commutes with max-pool
    s_ref[...] = acc.reshape(rb, 8, 8, CP)
    for ow2 in range(4):                                # fused 2x2 max-pool
        col = jnp.maximum(s_ref[:, :, 2 * ow2, :], s_ref[:, :, 2 * ow2 + 1, :])
        for oh2 in range(4):
            v = jnp.maximum(col[:, 2 * oh2:2 * oh2 + 1, :],
                            col[:, 2 * oh2 + 1:2 * oh2 + 2, :])
            k = oh2 * 4 + ow2                           # NHWC flatten position
            o_ref[:, k:k + 1, :] = v.astype(o_ref.dtype)


def conv2_pool_relu(h1, w2, b2):
    B = h1.shape[0]
    rb = min(B, 2)
    return pl.pallas_call(
        _conv2_pool_relu_kernel,
        out_shape=jax.ShapeDtypeStruct((B, 16, CP), jnp.bfloat16),
        grid=(pl.cdiv(B, rb),),
        in_specs=[
            pl.BlockSpec((rb, 12, 12, CP), lambda b: (b, 0, 0, 0)),
            pl.BlockSpec((NK, CP, CP), lambda b: (0, 0, 0)),
            pl.BlockSpec((1, CP), lambda b: (0, 0)),
        ],
        out_specs=pl.BlockSpec((rb, 16, CP), lambda b: (b, 0, 0)),
        scratch_shapes=[pltpu.VMEM((rb, 8, 8, CP), jnp.float32)],
        compiler_params=_COMPILER_PARAMS,
    )(h1, w2, b2)


# ---------------------------------------------------------------------------
# Kernel C: fc1 + ReLU + fc2 + masked log-softmax (single fused kernel)
# ---------------------------------------------------------------------------
def _fc_head_kernel(x_ref, w1_ref, b1_ref, w2_ref, b2_ref, o_ref):
    h = jnp.dot(x_ref[...], w1_ref[...], preferred_element_type=jnp.float32)
    h = jnp.maximum(h + b1_ref[...], 0.0)
    # TODO(synk): Dropout2d / F.dropout are identity in eval mode; training-mode dropout not implemented.
    logits = jnp.dot(h.astype(jnp.bfloat16), w2_ref[...],
                     preferred_element_type=jnp.float32) + b2_ref[...]
    cols = jax.lax.broadcasted_iota(jnp.int32, logits.shape, 1)
    valid = cols < 10                                   # only first 10 lanes are real classes
    m = jnp.max(jnp.where(valid, logits, -1e30), axis=-1, keepdims=True)
    e = jnp.where(valid, jnp.exp(logits - m), 0.0)
    lse = jnp.log(jnp.sum(e, axis=-1, keepdims=True))
    o_ref[...] = logits - (m + lse)


def fc_head(xf, fw1, fb1, fw2, fb2):
    B = xf.shape[0]
    tm = min(B, 128)
    return pl.pallas_call(
        _fc_head_kernel,
        out_shape=jax.ShapeDtypeStruct((B, CP), jnp.float32),
        grid=(pl.cdiv(B, tm),),
        in_specs=[
            pl.BlockSpec((tm, 16 * CP), lambda i: (i, 0)),
            pl.BlockSpec((16 * CP, CP), lambda i: (0, 0)),
            pl.BlockSpec((1, CP), lambda i: (0, 0)),
            pl.BlockSpec((CP, CP), lambda i: (0, 0)),
            pl.BlockSpec((1, CP), lambda i: (0, 0)),
        ],
        out_specs=pl.BlockSpec((tm, CP), lambda i: (i, 0)),
        compiler_params=_COMPILER_PARAMS,
    )(xf, fw1, fb1, fw2, fb2)


# ---------------------------------------------------------------------------
# Glue: patch extraction, weight preparation (one-time, tiny), forward pass
# ---------------------------------------------------------------------------
def _conv1_pool_patches(x):
    # x: (B, 28, 28) f32 -> (4, B, 144, 25) bf16, grouped by 2x2 pool position.
    B = x.shape[0]
    cols = []
    for ki in range(K5):
        for kj in range(K5):
            s = x[:, ki:ki + 24, kj:kj + 24].reshape(B, 12, 2, 12, 2)
            s = jnp.transpose(s, (0, 2, 4, 1, 3)).reshape(B, 4, 144)
            cols.append(s)
    p = jnp.stack(cols, axis=-1)                        # (B, 4, 144, 25)
    return jnp.transpose(p, (1, 0, 2, 3)).astype(jnp.bfloat16)


def _prepare_params(params):
    f32, bf16 = jnp.float32, jnp.bfloat16
    # conv1: (10,1,5,5) -> (25, 128); row order = ki*5+kj (matches patch order)
    w1 = params["conv1_w"].reshape(10, NK).T
    w1 = jnp.zeros((NK, CP), f32).at[:, :10].set(w1).astype(bf16)
    b1 = jnp.zeros((1, CP), f32).at[0, :10].set(params["conv1_b"])
    # conv2: (20,10,5,5) -> (25, 128, 128) as [tap, in_ch_pad, out_ch_pad]
    w2 = jnp.transpose(params["conv2_w"], (2, 3, 1, 0)).reshape(NK, 10, 20)
    w2 = jnp.zeros((NK, CP, CP), f32).at[:, :10, :20].set(w2).astype(bf16)
    b2 = jnp.zeros((1, CP), f32).at[0, :20].set(params["conv2_b"])
    # fc1: (50,320) with torch flatten index c*16+s -> rows ordered s*128+c (NHWC-pad flatten)
    fw1 = jnp.transpose(params["fc1_w"].reshape(50, 20, 16), (2, 1, 0))   # [s, c, o]
    fw1 = jnp.zeros((16, CP, CP), f32).at[:, :20, :50].set(fw1)
    fw1 = fw1.reshape(16 * CP, CP).astype(bf16)
    fb1 = jnp.zeros((1, CP), f32).at[0, :50].set(params["fc1_b"])
    # fc2: (10,50) -> (128,128)
    fw2 = jnp.zeros((CP, CP), f32).at[:50, :10].set(params["fc2_w"].T).astype(bf16)
    fb2 = jnp.zeros((1, CP), f32).at[0, :10].set(params["fc2_b"])
    return dict(w1=w1, b1=b1, w2=w2, b2=b2, fw1=fw1, fb1=fb1, fw2=fw2, fb2=fb2)


def init_params(key):
    ks = jax.random.split(key, 8)

    def u(k, shape, fan_in):
        bound = 1.0 / jnp.sqrt(jnp.float32(fan_in))
        return jax.random.uniform(k, shape, jnp.float32, -bound, bound)

    return {
        "conv1_w": u(ks[0], (10, 1, 5, 5), 1 * 25),
        "conv1_b": u(ks[1], (10,), 1 * 25),
        "conv2_w": u(ks[2], (20, 10, 5, 5), 10 * 25),
        "conv2_b": u(ks[3], (20,), 10 * 25),
        "fc1_w": u(ks[4], (50, 320), 320),
        "fc1_b": u(ks[5], (50,), 320),
        "fc2_w": u(ks[6], (10, 50), 50),
        "fc2_b": u(ks[7], (10,), 50),
    }


def net_forward(params, x_nchw):
    # x_nchw: (B, 1, 28, 28) f32 — same layout as the PyTorch module input (eval mode).
    B = x_nchw.shape[0]
    prep = _prepare_params(params)
    x = x_nchw.reshape(B, 28, 28).astype(jnp.float32)
    p1 = _conv1_pool_patches(x)                              # (4, B, 144, 25) bf16
    h1 = conv1_pool_relu(p1, prep["w1"], prep["b1"])         # (B, 144, 128) bf16
    h1 = h1.reshape(B, 12, 12, CP)                           # free (row-major) reshape
    feat = conv2_pool_relu(h1, prep["w2"], prep["b2"])       # (B, 16, 128) bf16
    xf = feat.reshape(B, 16 * CP)                            # free reshape
    logits = fc_head(xf, prep["fw1"], prep["fb1"], prep["fw2"], prep["fb2"])
    return logits[:, :10]                                    # drop padded class lanes


# ---------------------------------------------------------------------------
# Pure-JAX reference (for a loose numerical check against bf16 MXU path)
# ---------------------------------------------------------------------------
def reference_forward(params, x_nchw):
    dn = ("NCHW", "OIHW", "NCHW")
    y = jax.lax.conv_general_dilated(x_nchw, params["conv1_w"], (1, 1), "VALID",
                                     dimension_numbers=dn)
    y = y + params["conv1_b"][None, :, None, None]
    y = jax.lax.reduce_window(y, -jnp.inf, jax.lax.max, (1, 1, 2, 2), (1, 1, 2, 2), "VALID")
    y = jnp.maximum(y, 0.0)
    y = jax.lax.conv_general_dilated(y, params["conv2_w"], (1, 1), "VALID",
                                     dimension_numbers=dn)
    y = y + params["conv2_b"][None, :, None, None]
    y = jax.lax.reduce_window(y, -jnp.inf, jax.lax.max, (1, 1, 2, 2), (1, 1, 2, 2), "VALID")
    y = jnp.maximum(y, 0.0)
    y = y.reshape(y.shape[0], 320)
    y = jnp.maximum(y @ params["fc1_w"].T + params["fc1_b"], 0.0)
    y = y @ params["fc2_w"].T + params["fc2_b"]
    return jax.nn.log_softmax(y, axis=-1)


if __name__ == "__main__":
    key = jax.random.PRNGKey(0)
    pkey, xkey = jax.random.split(key)
    params = init_params(pkey)
    # MNIST-shaped input (28x28 required so the flatten yields 320 features), batch = 2.
    x = jax.random.normal(xkey, (2, 1, 28, 28), jnp.float32)

    out = jax.jit(net_forward)(params, x)
    out = jax.block_until_ready(out)
    assert out.shape == (2, 10)

    ref = jax.block_until_ready(jax.jit(reference_forward)(params, x))
    err = float(jnp.max(jnp.abs(out - ref)))
    assert err < 0.15, f"mismatch vs reference: max abs err = {err}"

    print("KERNEL_OK")
</pallas_src>

<mosaic_0001>
module attributes {stable_mosaic.version = 11 : i64} {
  func.func @_conv1_pool_relu_kernel(%arg0: i32, %arg1: memref<4x2x144x25xbf16, #tpu.memory_space<vmem>>, %arg2: memref<25x128xbf16, #tpu.memory_space<vmem>>, %arg3: memref<1x128xf32, #tpu.memory_space<vmem>>, %arg4: memref<2x144x128xbf16, #tpu.memory_space<vmem>>) attributes {dimension_semantics = [#tpu.dimension_semantics<parallel>], iteration_bounds = array<i64: 1>, scalar_prefetch = 0 : i64, scratch_operands = 0 : i64, tpu.core_type = #tpu.core_type<tc>, window_params = [{transform_indices = @transform_0, window_bounds = array<i64: 4, 2, 144, 25>}, {pipeline_mode = #tpu.pipeline_mode<synchronous>, transform_indices = @transform_1, window_bounds = array<i64: 25, 128>}, {pipeline_mode = #tpu.pipeline_mode<synchronous>, transform_indices = @transform_2, window_bounds = array<i64: 1, 128>}, {transform_indices = @transform_3, window_bounds = array<i64: 2, 144, 128>}]} {
    %c0 = arith.constant 0 : index
    %c0_0 = arith.constant 0 : index
    %0 = vector.load %arg2[%c0, %c0_0] : memref<25x128xbf16, #tpu.memory_space<vmem>>, vector<25x128xbf16>
    %c0_1 = arith.constant 0 : index
    %c0_2 = arith.constant 0 : index
    %c0_3 = arith.constant 0 : index
    %c0_4 = arith.constant 0 : index
    %1 = vector.load %arg1[%c0_1, %c0_2, %c0_3, %c0_4] : memref<4x2x144x25xbf16, #tpu.memory_space<vmem>>, vector<1x2x144x25xbf16>
    %2 = vector.shape_cast %1 : vector<1x2x144x25xbf16> to vector<2x144x25xbf16>
    %3 = vector.shape_cast %2 : vector<2x144x25xbf16> to vector<288x25xbf16>
    %cst = arith.constant dense<0.000000e+00> : vector<288x128xf32>
    %4 = tpu.matmul %3, %0, %cst {dimension_numbers = #tpu.dot_dimension_numbers<[1], [0], [0], [1], [0, 0, 1, 1], [], []>} : vector<288x25xbf16>, vector<25x128xbf16>, vector<288x128xf32> -> vector<288x128xf32>
    %c1 = arith.constant 1 : index
    %c0_5 = arith.constant 0 : index
    %c0_6 = arith.constant 0 : index
    %c0_7 = arith.constant 0 : index
    %5 = vector.load %arg1[%c1, %c0_5, %c0_6, %c0_7] : memref<4x2x144x25xbf16, #tpu.memory_space<vmem>>, vector<1x2x144x25xbf16>
    %6 = vector.shape_cast %5 : vector<1x2x144x25xbf16> to vector<2x144x25xbf16>
    %7 = vector.shape_cast %6 : vector<2x144x25xbf16> to vector<288x25xbf16>
    %cst_8 = arith.constant dense<0.000000e+00> : vector<288x128xf32>
    %8 = tpu.matmul %7, %0, %cst_8 {dimension_numbers = #tpu.dot_dimension_numbers<[1], [0], [0], [1], [0, 0, 1, 1], [], []>} : vector<288x25xbf16>, vector<25x128xbf16>, vector<288x128xf32> -> vector<288x128xf32>
    %9 = arith.maximumf %4, %8 : vector<288x128xf32>
    %c2 = arith.constant 2 : index
    %c0_9 = arith.constant 0 : index
    %c0_10 = arith.constant 0 : index
    %c0_11 = arith.constant 0 : index
    %10 = vector.load %arg1[%c2, %c0_9, %c0_10, %c0_11] : memref<4x2x144x25xbf16, #tpu.memory_space<vmem>>, vector<1x2x144x25xbf16>
    %11 = vector.shape_cast %10 : vector<1x2x144x25xbf16> to vector<2x144x25xbf16>
    %12 = vector.shape_cast %11 : vector<2x144x25xbf16> to vector<288x25xbf16>
    %cst_12 = arith.constant dense<0.000000e+00> : vector<288x128xf32>
    %13 = tpu.matmul %12, %0, %cst_12 {dimension_numbers = #tpu.dot_dimension_numbers<[1], [0], [0], [1], [0, 0, 1, 1], [], []>} : vector<288x25xbf16>, vector<25x128xbf16>, vector<288x128xf32> -> vector<288x128xf32>
    %14 = arith.maximumf %9, %13 : vector<288x128xf32>
    %c3 = arith.constant 3 : index
    %c0_13 = arith.constant 0 : index
    %c0_14 = arith.constant 0 : index
    %c0_15 = arith.constant 0 : index
    %15 = vector.load %arg1[%c3, %c0_13, %c0_14, %c0_15] : memref<4x2x144x25xbf16, #tpu.memory_space<vmem>>, vector<1x2x144x25xbf16>
    %16 = vector.shape_cast %15 : vector<1x2x144x25xbf16> to vector<2x144x25xbf16>
    %17 = vector.shape_cast %16 : vector<2x144x25xbf16> to vector<288x25xbf16>
    %cst_16 = arith.constant dense<0.000000e+00> : vector<288x128xf32>
    %18 = tpu.matmul %17, %0, %cst_16 {dimension_numbers = #tpu.dot_dimension_numbers<[1], [0], [0], [1], [0, 0, 1, 1], [], []>} : vector<288x25xbf16>, vector<25x128xbf16>, vector<288x128xf32> -> vector<288x128xf32>
    %19 = arith.maximumf %14, %18 : vector<288x128xf32>
    %c0_17 = arith.constant 0 : index
    %c0_18 = arith.constant 0 : index
    %20 = vector.load %arg3[%c0_17, %c0_18] : memref<1x128xf32, #tpu.memory_space<vmem>>, vector<1x128xf32>
    %21 = vector.broadcast %20 : vector<1x128xf32> to vector<288x128xf32>
    %22 = arith.addf %19, %21 : vector<288x128xf32>
    %cst_19 = arith.constant 0.000000e+00 : f32
    %23 = vector.broadcast %cst_19 : f32 to vector<288x128xf32>
    %24 = arith.maximumf %22, %23 : vector<288x128xf32>
    %25 = vector.shape_cast %24 : vector<288x128xf32> to vector<2x144x128xf32>
    %26 = arith.truncf %25 : vector<2x144x128xf32> to vector<2x144x128xbf16>
    %c0_20 = arith.constant 0 : index
    %c0_21 = arith.constant 0 : index
    %c0_22 = arith.constant 0 : index
    %27 = vector.load %arg4[%c0_20, %c0_21, %c0_22] : memref<2x144x128xbf16, #tpu.memory_space<vmem>>, vector<2x144x128xbf16>
    tpu.vector_store %arg4[%c0_20, %c0_21, %c0_22], %26 {strides = array<i32>} : memref<2x144x128xbf16, #tpu.memory_space<vmem>>, vector<2x144x128xbf16>,
    return
  }
  func.func @transform_0(%arg0: i32) -> (i32, i32, i32, i32) {
    %c0_i32 = arith.constant 0 : i32
    %c0_i32_0 = arith.constant 0 : i32
    %c0_i32_1 = arith.constant 0 : i32
    %c0_i32_2 = arith.constant 0 : i32
    return %c0_i32, %arg0, %c0_i32_0, %c0_i32_1 : i32, i32, i32, i32
  }
  func.func @transform_1(%arg0: i32) -> (i32, i32) {
    %c0_i32 = arith.constant 0 : i32
    %c0_i32_0 = arith.constant 0 : i32
    %c0_i32_1 = arith.constant 0 : i32
    return %c0_i32, %c0_i32_0 : i32, i32
  }
  func.func @transform_2(%arg0: i32) -> (i32, i32) {
    %c0_i32 = arith.constant 0 : i32
    %c0_i32_0 = arith.constant 0 : i32
    %c0_i32_1 = arith.constant 0 : i32
    return %c0_i32, %c0_i32_0 : i32, i32
  }
  func.func @transform_3(%arg0: i32) -> (i32, i32, i32) {
    %c0_i32 = arith.constant 0 : i32
    %c0_i32_0 = arith.constant 0 : i32
    %c0_i32_1 = arith.constant 0 : i32
    return %arg0, %c0_i32, %c0_i32_0 : i32, i32, i32
  }
}

module attributes {stable_mosaic.version = 11 : i64} {
  func.func @_conv2_pool_relu_kernel(%arg0: i32, %arg1: memref<2x12x12x128xbf16, #tpu.memory_space<vmem>>, %arg2: memref<25x128x128xbf16, #tpu.memory_space<vmem>>, %arg3: memref<1x128xf32, #tpu.memory_space<vmem>>, %arg4: memref<2x16x128xbf16, #tpu.memory_space<vmem>>, %arg5: memref<2x8x8x128xf32, #tpu.memory_space<vmem>>) attributes {dimension_semantics = [#tpu.dimension_semantics<parallel>], iteration_bounds = array<i64: 1>, scalar_prefetch = 0 : i64, scratch_operands = 1 : i64, tpu.core_type = #tpu.core_type<tc>, window_params = [{transform_indices = @transform_0, window_bounds = array<i64: 2, 12, 12, 128>}, {pipeline_mode = #tpu.pipeline_mode<synchronous>, transform_indices = @transform_1, window_bounds = array<i64: 25, 128, 128>}, {pipeline_mode = #tpu.pipeline_mode<synchronous>, transform_indices = @transform_2, window_bounds = array<i64: 1, 128>}, {transform_indices = @transform_3, window_bounds = array<i64: 2, 16, 128>}]} {
    %cst = arith.constant 0.000000e+00 : f32
    %0 = vector.broadcast %cst : f32 to vector<128x128xf32>
    %c0 = arith.constant 0 : index
    %c0_0 = arith.constant 0 : index
    %c0_1 = arith.constant 0 : index
    %c0_2 = arith.constant 0 : index
    %1 = vector.load %arg1[%c0, %c0_0, %c0_1, %c0_2] : memref<2x12x12x128xbf16, #tpu.memory_space<vmem>>, vector<2x8x8x128xbf16>
    %2 = vector.shape_cast %1 : vector<2x8x8x128xbf16> to vector<128x128xbf16>
    %c0_3 = arith.constant 0 : index
    %c0_4 = arith.constant 0 : index
    %c0_5 = arith.constant 0 : index
    %3 = vector.load %arg2[%c0_3, %c0_4, %c0_5] : memref<25x128x128xbf16, #tpu.memory_space<vmem>>, vector<1x128x128xbf16>
    %4 = vector.shape_cast %3 : vector<1x128x128xbf16> to vector<128x128xbf16>
    %cst_6 = arith.constant dense<0.000000e+00> : vector<128x128xf32>
    %5 = tpu.matmul %2, %4, %cst_6 {dimension_numbers = #tpu.dot_dimension_numbers<[1], [0], [0], [1], [0, 0, 1, 1], [], []>} : vector<128x128xbf16>, vector<128x128xbf16>, vector<128x128xf32> -> vector<128x128xf32>
    %6 = arith.addf %0, %5 : vector<128x128xf32>
    %c0_7 = arith.constant 0 : index
    %c0_8 = arith.constant 0 : index
    %c1 = arith.constant 1 : index
    %c0_9 = arith.constant 0 : index
    %7 = vector.load %arg1[%c0_7, %c0_8, %c1, %c0_9] : memref<2x12x12x128xbf16, #tpu.memory_space<vmem>>, vector<2x8x8x128xbf16>
    %8 = vector.shape_cast %7 : vector<2x8x8x128xbf16> to vector<128x128xbf16>
    %c1_10 = arith.constant 1 : index
    %c0_11 = arith.constant 0 : index
    %c0_12 = arith.constant 0 : index
    %9 = vector.load %arg2[%c1_10, %c0_11, %c0_12] : memref<25x128x128xbf16, #tpu.memory_space<vmem>>, vector<1x128x128xbf16>
    %10 = vector.shape_cast %9 : vector<1x128x128xbf16> to vector<128x128xbf16>
    %cst_13 = arith.constant dense<0.000000e+00> : vector<128x128xf32>
    %11 = tpu.matmul %8, %10, %cst_13 {dimension_numbers = #tpu.dot_dimension_numbers<[1], [0], [0], [1], [0, 0, 1, 1], [], []>} : vector<128x128xbf16>, vector<128x128xbf16>, vector<128x128xf32> -> vector<128x128xf32>
    %12 = arith.addf %6, %11 : vector<128x128xf32>
    %c0_14 = arith.constant 0 : index
    %c0_15 = arith.constant 0 : index
    %c2 = arith.constant 2 : index
    %c0_16 = arith.constant 0 : index
    %13 = vector.load %arg1[%c0_14, %c0_15, %c2, %c0_16] : memref<2x12x12x128xbf16, #tpu.memory_space<vmem>>, vector<2x8x8x128xbf16>
    %14 = vector.shape_cast %13 : vector<2x8x8x128xbf16> to vector<128x128xbf16>
    %c2_17 = arith.constant 2 : index
    %c0_18 = arith.constant 0 : index
    %c0_19 = arith.constant 0 : index
    %15 = vector.load %arg2[%c2_17, %c0_18, %c0_19] : memref<25x128x128xbf16, #tpu.memory_space<vmem>>, vector<1x128x128xbf16>
    %16 = vector.shape_cast %15 : vector<1x128x128xbf16> to vector<128x128xbf16>
    %cst_20 = arith.constant dense<0.000000e+00> : vector<128x128xf32>
    %17 = tpu.matmul %14, %16, %cst_20 {dimension_numbers = #tpu.dot_dimension_numbers<[1], [0], [0], [1], [0, 0, 1, 1], [], []>} : vector<128x128xbf16>, vector<128x128xbf16>, vector<128x128xf32> -> vector<128x128xf32>
    %18 = arith.addf %12, %17 : vector<128x128xf32>
    %c0_21 = arith.constant 0 : index
    %c0_22 = arith.constant 0 : index
    %c3 = arith.constant 3 : index
    %c0_23 = arith.constant 0 : index
    %19 = vector.load %arg1[%c0_21, %c0_22, %c3, %c0_23] : memref<2x12x12x128xbf16, #tpu.memory_space<vmem>>, vector<2x8x8x128xbf16>
    %20 = vector.shape_cast %19 : vector<2x8x8x128xbf16> to vector<128x128xbf16>
    %c3_24 = arith.constant 3 : index
    %c0_25 = arith.constant 0 : index
    %c0_26 = arith.constant 0 : index
    %21 = vector.load %arg2[%c3_24, %c0_25, %c0_26] : memref<25x128x128xbf16, #tpu.memory_space<vmem>>, vector<1x128x128xbf16>
    %22 = vector.shape_cast %21 : vector<1x128x128xbf16> to vector<128x128xbf16>
    %cst_27 = arith.constant dense<0.000000e+00> : vector<128x128xf32>
    %23 = tpu.matmul %20, %22, %cst_27 {dimension_numbers = #tpu.dot_dimension_numbers<[1], [0], [0], [1], [0, 0, 1, 1], [], []>} : vector<128x128xbf16>, vector<128x128xbf16>, vector<128x128xf32> -> vector<128x128xf32>
    %24 = arith.addf %18, %23 : vector<128x128xf32>
    %c0_28 = arith.constant 0 : index
    %c0_29 = arith.constant 0 : index
    %c4 = arith.constant 4 : index
    %c0_30 = arith.constant 0 : index
    %25 = vector.load %arg1[%c0_28, %c0_29, %c4, %c0_30] : memref<2x12x12x128xbf16, #tpu.memory_space<vmem>>, vector<2x8x8x128xbf16>
    %26 = vector.shape_cast %25 : vector<2x8x8x128xbf16> to vector<128x128xbf16>
    %c4_31 = arith.constant 4 : index
    %c0_32 = arith.constant 0 : index
    %c0_33 = arith.constant 0 : index
    %27 = vector.load %arg2[%c4_31, %c0_32, %c0_33] : memref<25x128x128xbf16, #tpu.memory_space<vmem>>, vector<1x128x128xbf16>
    %28 = vector.shape_cast %27 : vector<1x128x128xbf16> to vector<128x128xbf16>
    %cst_34 = arith.constant dense<0.000000e+00> : vector<128x128xf32>
    %29 = tpu.matmul %26, %28, %cst_34 {dimension_numbers = #tpu.dot_dimension_numbers<[1], [0], [0], [1], [0, 0, 1, 1], [], []>} : vector<128x128xbf16>, vector<128x128xbf16>, vector<128x128xf32> -> vector<128x128xf32>
    %30 = arith.addf %24, %29 : vector<128x128xf32>
    %c0_35 = arith.constant 0 : index
    %c1_36 = arith.constant 1 : index
    %c0_37 = arith.constant 0 : index
    %c0_38 = arith.constant 0 : index
    %31 = vector.load %arg1[%c0_35, %c1_36, %c0_37, %c0_38] : memref<2x12x12x128xbf16, #tpu.memory_space<vmem>>, vector<2x8x8x128xbf16>
    %32 = vector.shape_cast %31 : vector<2x8x8x128xbf16> to vector<128x128xbf16>
    %c5 = arith.constant 5 : index
    %c0_39 = arith.constant 0 : index
    %c0_40 = arith.constant 0 : index
    %33 = vector.load %arg2[%c5, %c0_39, %c0_40] : memref<25x128x128xbf16, #tpu.memory_space<vmem>>, vector<1x128x128xbf16>
    %34 = vector.shape_cast %33 : vector<1x128x128xbf16> to vector<128x128xbf16>
    %cst_41 = arith.constant dense<0.000000e+00> : vector<128x128xf32>
    %35 = tpu.matmul %32, %34, %cst_41 {dimension_numbers = #tpu.dot_dimension_numbers<[1], [0], [0], [1], [0, 0, 1, 1], [], []>} : vector<128x128xbf16>, vector<128x128xbf16>, vector<128x128xf32> -> vector<128x128xf32>
    %36 = arith.addf %30, %35 : vector<128x128xf32>
    %c0_42 = arith.constant 0 : index
    %c1_43 = arith.constant 1 : index
    %c1_44 = arith.constant 1 : index
    %c0_45 = arith.constant 0 : index
    %37 = vector.load %arg1[%c0_42, %c1_43, %c1_44, %c0_45] : memref<2x12x12x128xbf16, #tpu.memory_space<vmem>>, vector<2x8x8x128xbf16>
    %38 = vector.shape_cast %37 : vector<2x8x8x128xbf16> to vector<128x128xbf16>
    %c6 = arith.constant 6 : index
    %c0_46 = arith.constant 0 : index
    %c0_47 = arith.constant 0 : index
    %39 = vector.load %arg2[%c6, %c0_46, %c0_47] : memref<25x128x128xbf16, #tpu.memory_space<vmem>>, vector<1x128x128xbf16>
    %40 = vector.shape_cast %39 : vector<1x128x128xbf16> to vector<128x128xbf16>
    %cst_48 = arith.constant dense<0.000000e+00> : vector<128x128xf32>
    %41 = tpu.matmul %38, %40, %cst_48 {dimension_numbers = #tpu.dot_dimension_numbers<[1], [0], [0], [1], [0, 0, 1, 1], [], []>} : vector<128x128xbf16>, vector<128x128xbf16>, vector<128x128xf32> -> vector<128x128xf32>
    %42 = arith.addf %36, %41 : vector<128x128xf32>
    %c0_49 = arith.constant 0 : index
    %c1_50 = arith.constant 1 : index
    %c2_51 = arith.constant 2 : index
    %c0_52 = arith.constant 0 : index
    %43 = vector.load %arg1[%c0_49, %c1_50, %c2_51, %c0_52] : memref<2x12x12x128xbf16, #tpu.memory_space<vmem>>, vector<2x8x8x128xbf16>
    %44 = vector.shape_cast %43 : vector<2x8x8x128xbf16> to vector<128x128xbf16>
    %c7 = arith.constant 7 : index
    %c0_53 = arith.constant 0 : index
    %c0_54 = arith.constant 0 : index
    %45 = vector.load %arg2[%c7, %c0_53, %c0_54] : memref<25x128x128xbf16, #tpu.memory_space<vmem>>, vector<1x128x128xbf16>
    %46 = vector.shape_cast %45 : vector<1x128x128xbf16> to vector<128x128xbf16>
    %cst_55 = arith.constant dense<0.000000e+00> : vector<128x128xf32>
    %47 = tpu.matmul %44, %46, %cst_55 {dimension_numbers = #tpu.dot_dimension_numbers<[1], [0], [0], [1], [0, 0, 1, 1], [], []>} : vector<128x128xbf16>, vector<128x128xbf16>, vector<128x128xf32> -> vector<128x128xf32>
    %48 = arith.addf %42, %47 : vector<128x128xf32>
    %c0_56 = arith.constant 0 : index
    %c1_57 = arith.constant 1 : index
    %c3_58 = arith.constant 3 : index
    %c0_59 = arith.constant 0 : index
    %49 = vector.load %arg1[%c0_56, %c1_57, %c3_58, %c0_59] : memref<2x12x12x128xbf16, #tpu.memory_space<vmem>>, vector<2x8x8x128xbf16>
    %50 = vector.shape_cast %49 : vector<2x8x8x128xbf16> to vector<128x128xbf16>
    %c8 = arith.constant 8 : index
    %c0_60 = arith.constant 0 : index
    %c0_61 = arith.constant 0 : index
    %51 = vector.load %arg2[%c8, %c0_60, %c0_61] : memref<25x128x128xbf16, #tpu.memory_space<vmem>>, vector<1x128x128xbf16>
    %52 = vector.shape_cast %51 : vector<1x128x128xbf16> to vector<128x128xbf16>
    %cst_62 = arith.constant dense<0.000000e+00> : vector<128x128xf32>
    %53 = tpu.matmul %50, %52, %cst_62 {dimension_numbers = #tpu.dot_dimension_numbers<[1], [0], [0], [1], [0, 0, 1, 1], [], []>} : vector<128x128xbf16>, vector<128x128xbf16>, vector<128x128xf32> -> vector<128x128xf32>
    %54 = arith.addf %48, %53 : vector<128x128xf32>
    %c0_63 = arith.constant 0 : index
    %c1_64 = arith.constant 1 : index
    %c4_65 = arith.constant 4 : index
    %c0_66 = arith.constant 0 : index
    %55 = vector.load %arg1[%c0_63, %c1_64, %c4_65, %c0_66] : memref<2x12x12x128xbf16, #tpu.memory_space<vmem>>, vector<2x8x8x128xbf16>
    %56 = vector.shape_cast %55 : vector<2x8x8x128xbf16> to vector<128x128xbf16>
    %c9 = arith.constant 9 : index
    %c0_67 = arith.constant 0 : index
    %c0_68 = arith.constant 0 : index
    %57 = vector.load %arg2[%c9, %c0_67, %c0_68] : memref<25x128x128xbf16, #tpu.memory_space<vmem>>, vector<1x128x128xbf16>
    %58 = vector.shape_cast %57 : vector<1x128x128xbf16> to vector<128x128xbf16>
    %cst_69 = arith.constant dense<0.000000e+00> : vector<128x128xf32>
    %59 = tpu.matmul %56, %58, %cst_69 {dimension_numbers = #tpu.dot_dimension_numbers<[1], [0], [0], [1], [0, 0, 1, 1], [], []>} : vector<128x128xbf16>, vector<128x128xbf16>, vector<128x128xf32> -> vector<128x128xf32>
    %60 = arith.addf %54, %59 : vector<128x128xf32>
    %c0_70 = arith.constant 0 : index
    %c2_71 = arith.constant 2 : index
    %c0_72 = arith.constant 0 : index
    %c0_73 = arith.constant 0 : index
    %61 = vector.load %arg1[%c0_70, %c2_71, %c0_72, %c0_73] : memref<2x12x12x128xbf16, #tpu.memory_space<vmem>>, vector<2x8x8x128xbf16>
    %62 = vector.shape_cast %61 : vector<2x8x8x128xbf16> to vector<128x128xbf16>
    %c10 = arith.constant 10 : index
    %c0_74 = arith.constant 0 : index
    %c0_75 = arith.constant 0 : index
    %63 = vector.load %arg2[%c10, %c0_74, %c0_75] : memref<25x128x128xbf16, #tpu.memory_space<vmem>>, vector<1x128x128xbf16>
    %64 = vector.shape_cast %63 : vector<1x128x128xbf16> to vector<128x128xbf16>
    %cst_76 = arith.constant dense<0.000000e+00> : vector<128x128xf32>
    %65 = tpu.matmul %62, %64, %cst_76 {dimension_numbers = #tpu.dot_dimension_numbers<[1], [0], [0], [1], [0, 0, 1, 1], [], []>} : vector<128x128xbf16>, vector<128x128xbf16>, vector<128x128xf32> -> vector<128x128xf32>
    %66 = arith.addf %60, %65 : vector<128x128xf32>
    %c0_77 = arith.constant 0 : index
    %c2_78 = arith.constant 2 : index
    %c1_79 = arith.constant 1 : index
    %c0_80 = arith.constant 0 : index
    %67 = vector.load %arg1[%c0_77, %c2_78, %c1_79, %c0_80] : memref<2x12x12x128xbf16, #tpu.memory_space<vmem>>, vector<2x8x8x128xbf16>
    %68 = vector.shape_cast %67 : vector<2x8x8x128xbf16> to vector<128x128xbf16>
    %c11 = arith.constant 11 : index
    %c0_81 = arith.constant 0 : index
    %c0_82 = arith.constant 0 : index
    %69 = vector.load %arg2[%c11, %c0_81, %c0_82] : memref<25x128x128xbf16, #tpu.memory_space<vmem>>, vector<1x128x128xbf16>
    %70 = vector.shape_cast %69 : vector<1x128x128xbf16> to vector<128x128xbf16>
    %cst_83 = arith.constant dense<0.000000e+00> : vector<128x128xf32>
    %71 = tpu.matmul %68, %70, %cst_83 {dimension_numbers = #tpu.dot_dimension_numbers<[1], [0], [0], [1], [0, 0, 1, 1], [], []>} : vector<128x128xbf16>, vector<128x128xbf16>, vector<128x128xf32> -> vector<128x128xf32>
    %72 = arith.addf %66, %71 : vector<128x128xf32>
    %c0_84 = arith.constant 0 : index
    %c2_85 = arith.constant 2 : index
    %c2_86 = arith.constant 2 : index
    %c0_87 = arith.constant 0 : index
    %73 = vector.load %arg1[%c0_84, %c2_85, %c2_86, %c0_87] : memref<2x12x12x128xbf16, #tpu.memory_space<vmem>>, vector<2x8x8x128xbf16>
    %74 = vector.shape_cast %73 : vector<2x8x8x128xbf16> to vector<128x128xbf16>
    %c12 = arith.constant 12 : index
    %c0_88 = arith.constant 0 : index
    %c0_89 = arith.constant 0 : index
    %75 = vector.load %arg2[%c12, %c0_88, %c0_89] : memref<25x128x128xbf16, #tpu.memory_space<vmem>>, vector<1x128x128xbf16>
    %76 = vector.shape_cast %75 : vector<1x128x128xbf16> to vector<128x128xbf16>
    %cst_90 = arith.constant dense<0.000000e+00> : vector<128x128xf32>
    %77 = tpu.matmul %74, %76, %cst_90 {dimension_numbers = #tpu.dot_dimension_numbers<[1], [0], [0], [1], [0, 0, 1, 1], [], []>} : vector<128x128xbf16>, vector<128x128xbf16>, vector<128x128xf32> -> vector<128x128xf32>
    %78 = arith.addf %72, %77 : vector<128x128xf32>
    %c0_91 = arith.constant 0 : index
    %c2_92 = arith.constant 2 : index
    %c3_93 = arith.constant 3 : index
    %c0_94 = arith.constant 0 : index
    %79 = vector.load %arg1[%c0_91, %c2_92, %c3_93, %c0_94] : memref<2x12x12x128xbf16, #tpu.memory_space<vmem>>, vector<2x8x8x128xbf16>
    %80 = vector.shape_cast %79 : vector<2x8x8x128xbf16> to vector<128x128xbf16>
    %c13 = arith.constant 13 : index
    %c0_95 = arith.constant 0 : index
    %c0_96 = arith.constant 0 : index
    %81 = vector.load %arg2[%c13, %c0_95, %c0_96] : memref<25x128x128xbf16, #tpu.memory_space<vmem>>, vector<1x128x128xbf16>
    %82 = vector.shape_cast %81 : vector<1x128x128xbf16> to vector<128x128xbf16>
    %cst_97 = arith.constant dense<0.000000e+00> : vector<128x128xf32>
    %83 = tpu.matmul %80, %82, %cst_97 {dimension_numbers = #tpu.dot_dimension_numbers<[1], [0], [0], [1], [0, 0, 1, 1], [], []>} : vector<128x128xbf16>, vector<128x128xbf16>, vector<128x128xf32> -> vector<128x128xf32>
    %84 = arith.addf %78, %83 : vector<128x128xf32>
    %c0_98 = arith.constant 0 : index
    %c2_99 = arith.constant 2 : index
    %c4_100 = arith.constant 4 : index
    %c0_101 = arith.constant 0 : index
    %85 = vector.load %arg1[%c0_98, %c2_99, %c4_100, %c0_101] : memref<2x12x12x128xbf16, #tpu.memory_space<vmem>>, vector<2x8x8x128xbf16>
    %86 = vector.shape_cast %85 : vector<2x8x8x128xbf16> to vector<128x128xbf16>
    %c14 = arith.constant 14 : index
    %c0_102 = arith.constant 0 : index
    %c0_103 = arith.constant 0 : index
    %87 = vector.load %arg2[%c14, %c0_102, %c0_103] : memref<25x128x128xbf16, #tpu.memory_space<vmem>>, vector<1x128x128xbf16>
    %88 = vector.shape_cast %87 : vector<1x128x128xbf16> to vector<128x128xbf16>
    %cst_104 = arith.constant dense<0.000000e+00> : vector<128x128xf32>
    %89 = tpu.matmul %86, %88, %cst_104 {dimension_numbers = #tpu.dot_dimension_numbers<[1], [0], [0], [1], [0, 0, 1, 1], [], []>} : vector<128x128xbf16>, vector<128x128xbf16>, vector<128x128xf32> -> vector<128x128xf32>
    %90 = arith.addf %84, %89 : vector<128x128xf32>
    %c0_105 = arith.constant 0 : index
    %c3_106 = arith.constant 3 : index
    %c0_107 = arith.constant 0 : index
    %c0_108 = arith.constant 0 : index
    %91 = vector.load %arg1[%c0_105, %c3_106, %c0_107, %c0_108] : memref<2x12x12x128xbf16, #tpu.memory_space<vmem>>, vector<2x8x8x128xbf16>
    %92 = vector.shape_cast %91 : vector<2x8x8x128xbf16> to vector<128x128xbf16>
    %c15 = arith.constant 15 : index
    %c0_109 = arith.constant 0 : index
    %c0_110 = arith.constant 0 : index
    %93 = vector.load %arg2[%c15, %c0_109, %c0_110] : memref<25x128x128xbf16, #tpu.memory_space<vmem>>, vector<1x128x128xbf16>
    %94 = vector.shape_cast %93 : vector<1x128x128xbf16> to vector<128x128xbf16>
    %cst_111 = arith.constant dense<0.000000e+00> : vector<128x128xf32>
    %95 = tpu.matmul %92, %94, %cst_111 {dimension_numbers = #tpu.dot_dimension_numbers<[1], [0], [0], [1], [0, 0, 1, 1], [], []>} : vector<128x128xbf16>, vector<128x128xbf16>, vector<128x128xf32> -> vector<128x128xf32>
    %96 = arith.addf %90, %95 : vector<128x128xf32>
    %c0_112 = arith.constant 0 : index
    %c3_113 = arith.constant 3 : index
    %c1_114 = arith.constant 1 : index
    %c0_115 = arith.constant 0 : index
    %97 = vector.load %arg1[%c0_112, %c3_113, %c1_114, %c0_115] : memref<2x12x12x128xbf16, #tpu.memory_space<vmem>>, vector<2x8x8x128xbf16>
    %98 = vector.shape_cast %97 : vector<2x8x8x128xbf16> to vector<128x128xbf16>
    %c16 = arith.constant 16 : index
    %c0_116 = arith.constant 0 : index
    %c0_117 = arith.constant 0 : index
    %99 = vector.load %arg2[%c16, %c0_116, %c0_117] : memref<25x128x128xbf16, #tpu.memory_space<vmem>>, vector<1x128x128xbf16>
    %100 = vector.shape_cast %99 : vector<1x128x128xbf16> to vector<128x128xbf16>
    %cst_118 = arith.constant dense<0.000000e+00> : vector<128x128xf32>
    %101 = tpu.matmul %98, %100, %cst_118 {dimension_numbers = #tpu.dot_dimension_numbers<[1], [0], [0], [1], [0, 0, 1, 1], [], []>} : vector<128x128xbf16>, vector<128x128xbf16>, vector<128x128xf32> -> vector<128x128xf32>
    %102 = arith.addf %96, %101 : vector<128x128xf32>
    %c0_119 = arith.constant 0 : index
    %c3_120 = arith.constant 3 : index
    %c2_121 = arith.constant 2 : index
    %c0_122 = arith.constant 0 : index
    %103 = vector.load %arg1[%c0_119, %c3_120, %c2_121, %c0_122] : memref<2x12x12x128xbf16, #tpu.memory_space<vmem>>, vector<2x8x8x128xbf16>
    %104 = vector.shape_cast %103 : vector<2x8x8x128xbf16> to vector<128x128xbf16>
    %c17 = arith.constant 17 : index
    %c0_123 = arith.constant 0 : index
    %c0_124 = arith.constant 0 : index
    %105 = vector.load %arg2[%c17, %c0_123, %c0_124] : memref<25x128x128xbf16, #tpu.memory_space<vmem>>, vector<1x128x128xbf16>
    %106 = vector.shape_cast %105 : vector<1x128x128xbf16> to vector<128x128xbf16>
    %cst_125 = arith.constant dense<0.000000e+00> : vector<128x128xf32>
    %107 = tpu.matmul %104, %106, %cst_125 {dimension_numbers = #tpu.dot_dimension_numbers<[1], [0], [0], [1], [0, 0, 1, 1], [], []>} : vector<128x128xbf16>, vector<128x128xbf16>, vector<128x128xf32> -> vector<128x128xf32>
    %108 = arith.addf %102, %107 : vector<128x128xf32>
    %c0_126 = arith.constant 0 : index
    %c3_127 = arith.constant 3 : index
    %c3_128 = arith.constant 3 : index
    %c0_129 = arith.constant 0 : index
    %109 = vector.load %arg1[%c0_126, %c3_127, %c3_128, %c0_129] : memref<2x12x12x128xbf16, #tpu.memory_space<vmem>>, vector<2x8x8x128xbf16>
    %110 = vector.shape_cast %109 : vector<2x8x8x128xbf16> to vector<128x128xbf16>
    %c18 = arith.constant 18 : index
    %c0_130 = arith.constant 0 : index
    %c0_131 = arith.constant 0 : index
    %111 = vector.load %arg2[%c18, %c0_130, %c0_131] : memref<25x128x128xbf16, #tpu.memory_space<vmem>>, vector<1x128x128xbf16>
    %112 = vector.shape_cast %111 : vector<1x128x128xbf16> to vector<128x128xbf16>
    %cst_132 = arith.constant dense<0.000000e+00> : vector<128x128xf32>
    %113 = tpu.matmul %110, %112, %cst_132 {dimension_numbers = #tpu.dot_dimension_numbers<[1], [0], [0], [1], [0, 0, 1, 1], [], []>} : vector<128x128xbf16>, vector<128x128xbf16>, vector<128x128xf32> -> vector<128x128xf32>
    %114 = arith.addf %108, %113 : vector<128x128xf32>
    %c0_133 = arith.constant 0 : index
    %c3_134 = arith.constant 3 : index
    %c4_135 = arith.constant 4 : index
    %c0_136 = arith.constant 0 : index
    %115 = vector.load %arg1[%c0_133, %c3_134, %c4_135, %c0_136] : memref<2x12x12x128xbf16, #tpu.memory_space<vmem>>, vector<2x8x8x128xbf16>
    %116 = vector.shape_cast %115 : vector<2x8x8x128xbf16> to vector<128x128xbf16>
    %c19 = arith.constant 19 : index
    %c0_137 = arith.constant 0 : index
    %c0_138 = arith.constant 0 : index
    %117 = vector.load %arg2[%c19, %c0_137, %c0_138] : memref<25x128x128xbf16, #tpu.memory_space<vmem>>, vector<1x128x128xbf16>
    %118 = vector.shape_cast %117 : vector<1x128x128xbf16> to vector<128x128xbf16>
    %cst_139 = arith.constant dense<0.000000e+00> : vector<128x128xf32>
    %119 = tpu.matmul %116, %118, %cst_139 {dimension_numbers = #tpu.dot_dimension_numbers<[1], [0], [0], [1], [0, 0, 1, 1], [], []>} : vector<128x128xbf16>, vector<128x128xbf16>, vector<128x128xf32> -> vector<128x128xf32>
    %120 = arith.addf %114, %119 : vector<128x128xf32>
    %c0_140 = arith.constant 0 : index
    %c4_141 = arith.constant 4 : index
    %c0_142 = arith.constant 0 : index
    %c0_143 = arith.constant 0 : index
    %121 = vector.load %arg1[%c0_140, %c4_141, %c0_142, %c0_143] : memref<2x12x12x128xbf16, #tpu.memory_space<vmem>>, vector<2x8x8x128xbf16>
    %122 = vector.shape_cast %121 : vector<2x8x8x128xbf16> to vector<128x128xbf16>
    %c20 = arith.constant 20 : index
    %c0_144 = arith.constant 0 : index
    %c0_145 = arith.constant 0 : index
    %123 = vector.load %arg2[%c20, %c0_144, %c0_145] : memref<25x128x128xbf16, #tpu.memory_space<vmem>>, vector<1x128x128xbf16>
    %124 = vector.shape_cast %123 : vector<1x128x128xbf16> to vector<128x128xbf16>
    %cst_146 = arith.constant dense<0.000000e+00> : vector<128x128xf32>
    %125 = tpu.matmul %122, %124, %cst_146 {dimension_numbers = #tpu.dot_dimension_numbers<[1], [0], [0], [1], [0, 0, 1, 1], [], []>} : vector<128x128xbf16>, vector<128x128xbf16>, vector<128x128xf32> -> vector<128x128xf32>
    %126 = arith.addf %120, %125 : vector<128x128xf32>
    %c0_147 = arith.constant 0 : index
    %c4_148 = arith.constant 4 : index
    %c1_149 = arith.constant 1 : index
    %c0_150 = arith.constant 0 : index
    %127 = vector.load %arg1[%c0_147, %c4_148, %c1_149, %c0_150] : memref<2x12x12x128xbf16, #tpu.memory_space<vmem>>, vector<2x8x8x128xbf16>
    %128 = vector.shape_cast %127 : vector<2x8x8x128xbf16> to vector<128x128xbf16>
    %c21 = arith.constant 21 : index
    %c0_151 = arith.constant 0 : index
    %c0_152 = arith.constant 0 : index
    %129 = vector.load %arg2[%c21, %c0_151, %c0_152] : memref<25x128x128xbf16, #tpu.memory_space<vmem>>, vector<1x128x128xbf16>
    %130 = vector.shape_cast %129 : vector<1x128x128xbf16> to vector<128x128xbf16>
    %cst_153 = arith.constant dense<0.000000e+00> : vector<128x128xf32>
    %131 = tpu.matmul %128, %130, %cst_153 {dimension_numbers = #tpu.dot_dimension_numbers<[1], [0], [0], [1], [0, 0, 1, 1], [], []>} : vector<128x128xbf16>, vector<128x128xbf16>, vector<128x128xf32> -> vector<128x128xf32>
    %132 = arith.addf %126, %131 : vector<128x128xf32>
    %c0_154 = arith.constant 0 : index
    %c4_155 = arith.constant 4 : index
    %c2_156 = arith.constant 2 : index
    %c0_157 = arith.constant 0 : index
    %133 = vector.load %arg1[%c0_154, %c4_155, %c2_156, %c0_157] : memref<2x12x12x128xbf16, #tpu.memory_space<vmem>>, vector<2x8x8x128xbf16>
    %134 = vector.shape_cast %133 : vector<2x8x8x128xbf16> to vector<128x128xbf16>
    %c22 = arith.constant 22 : index
    %c0_158 = arith.constant 0 : index
    %c0_159 = arith.constant 0 : index
    %135 = vector.load %arg2[%c22, %c0_158, %c0_159] : memref<25x128x128xbf16, #tpu.memory_space<vmem>>, vector<1x128x128xbf16>
    %136 = vector.shape_cast %135 : vector<1x128x128xbf16> to vector<128x128xbf16>
    %cst_160 = arith.constant dense<0.000000e+00> : vector<128x128xf32>
    %137 = tpu.matmul %134, %136, %cst_160 {dimension_numbers = #tpu.dot_dimension_numbers<[1], [0], [0], [1], [0, 0, 1, 1], [], []>} : vector<128x128xbf16>, vector<128x128xbf16>, vector<128x128xf32> -> vector<128x128xf32>
    %138 = arith.addf %132, %137 : vector<128x128xf32>
    %c0_161 = arith.constant 0 : index
    %c4_162 = arith.constant 4 : index
    %c3_163 = arith.constant 3 : index
    %c0_164 = arith.constant 0 : index
    %139 = vector.load %arg1[%c0_161, %c4_162, %c3_163, %c0_164] : memref<2x12x12x128xbf16, #tpu.memory_space<vmem>>, vector<2x8x8x128xbf16>
    %140 = vector.shape_cast %139 : vector<2x8x8x128xbf16> to vector<128x128xbf16>
    %c23 = arith.constant 23 : index
    %c0_165 = arith.constant 0 : index
    %c0_166 = arith.constant 0 : index
    %141 = vector.load %arg2[%c23, %c0_165, %c0_166] : memref<25x128x128xbf16, #tpu.memory_space<vmem>>, vector<1x128x128xbf16>
    %142 = vector.shape_cast %141 : vector<1x128x128xbf16> to vector<128x128xbf16>
    %cst_167 = arith.constant dense<0.000000e+00> : vector<128x128xf32>
    %143 = tpu.matmul %140, %142, %cst_167 {dimension_numbers = #tpu.dot_dimension_numbers<[1], [0], [0], [1], [0, 0, 1, 1], [], []>} : vector<128x128xbf16>, vector<128x128xbf16>, vector<128x128xf32> -> vector<128x128xf32>
    %144 = arith.addf %138, %143 : vector<128x128xf32>
    %c0_168 = arith.constant 0 : index
    %c4_169 = arith.constant 4 : index
    %c4_170 = arith.constant 4 : index
    %c0_171 = arith.constant 0 : index
    %145 = vector.load %arg1[%c0_168, %c4_169, %c4_170, %c0_171] : memref<2x12x12x128xbf16, #tpu.memory_space<vmem>>, vector<2x8x8x128xbf16>
    %146 = vector.shape_cast %145 : vector<2x8x8x128xbf16> to vector<128x128xbf16>
    %c24 = arith.constant 24 : index
    %c0_172 = arith.constant 0 : index
    %c0_173 = arith.constant 0 : index
    %147 = vector.load %arg2[%c24, %c0_172, %c0_173] : memref<25x128x128xbf16, #tpu.memory_space<vmem>>, vector<1x128x128xbf16>
    %148 = vector.shape_cast %147 : vector<1x128x128xbf16> to vector<128x128xbf16>
    %cst_174 = arith.constant dense<0.000000e+00> : vector<128x128xf32>
    %149 = tpu.matmul %146, %148, %cst_174 {dimension_numbers = #tpu.dot_dimension_numbers<[1], [0], [0], [1], [0, 0, 1, 1], [], []>} : vector<128x128xbf16>, vector<128x128xbf16>, vector<128x128xf32> -> vector<128x128xf32>
    %150 = arith.addf %144, %149 : vector<128x128xf32>
    %c0_175 = arith.constant 0 : index
    %c0_176 = arith.constant 0 : index
    %151 = vector.load %arg3[%c0_175, %c0_176] : memref<1x128xf32, #tpu.memory_space<vmem>>, vector<1x128xf32>
    %152 = vector.broadcast %151 : vector<1x128xf32> to vector<128x128xf32>
    %153 = arith.addf %150, %152 : vector<128x128xf32>
    %cst_177 = arith.constant 0.000000e+00 : f32
    %154 = vector.broadcast %cst_177 : f32 to vector<128x128xf32>
    %155 = arith.maximumf %153, %154 : vector<128x128xf32>
    %156 = vector.shape_cast %155 : vector<128x128xf32> to vector<2x8x8x128xf32>
    %c0_178 = arith.constant 0 : index
    %c0_179 = arith.constant 0 : index
    %c0_180 = arith.constant 0 : index
    %c0_181 = arith.constant 0 : index
    %157 = vector.load %arg5[%c0_178, %c0_179, %c0_180, %c0_181] : memref<2x8x8x128xf32, #tpu.memory_space<vmem>>, vector<2x8x8x128xf32>
    tpu.vector_store %arg5[%c0_178, %c0_179, %c0_180, %c0_181], %156 {strides = array<i32>} : memref<2x8x8x128xf32, #tpu.memory_space<vmem>>, vector<2x8x8x128xf32>,
    %c0_182 = arith.constant 0 : index
    %c0_183 = arith.constant 0 : index
    %c0_184 = arith.constant 0 : index
    %c0_185 = arith.constant 0 : index
    %158 = vector.load %arg5[%c0_182, %c0_183, %c0_184, %c0_185] : memref<2x8x8x128xf32, #tpu.memory_space<vmem>>, vector<2x8x1x128xf32>
    %159 = vector.shape_cast %158 : vector<2x8x1x128xf32> to vector<2x8x128xf32>
    %c0_186 = arith.constant 0 : index
    %c0_187 = arith.constant 0 : index
    %c1_188 = arith.constant 1 : index
    %c0_189 = arith.constant 0 : index
    %160 = vector.load %arg5[%c0_186, %c0_187, %c1_188, %c0_189] : memref<2x8x8x128xf32, #tpu.memory_space<vmem>>, vector<2x8x1x128xf32>
    %161 = vector.shape_cast %160 : vector<2x8x1x128xf32> to vector<2x8x128xf32>
    %162 = arith.maximumf %159, %161 : vector<2x8x128xf32>
    %163 = vector.extract_strided_slice %162 {offsets = [0, 0, 0], sizes = [2, 1, 128], strides = [1, 1, 1]} : vector<2x8x128xf32> to vector<2x1x128xf32>
    %164 = vector.extract_strided_slice %162 {offsets = [0, 1, 0], sizes = [2, 1, 128], strides = [1, 1, 1]} : vector<2x8x128xf32> to vector<2x1x128xf32>
    %165 = arith.maximumf %163, %164 : vector<2x1x128xf32>
    %166 = arith.truncf %165 : vector<2x1x128xf32> to vector<2x1x128xbf16>
    %c0_190 = arith.constant 0 : index
    %c0_191 = arith.constant 0 : index
    %c0_192 = arith.constant 0 : index
    %167 = vector.load %arg4[%c0_190, %c0_191, %c0_192] : memref<2x16x128xbf16, #tpu.memory_space<vmem>>, vector<2x1x128xbf16>
    tpu.vector_store %arg4[%c0_190, %c0_191, %c0_192], %166 {strides = array<i32>} : memref<2x16x128xbf16, #tpu.memory_space<vmem>>, vector<2x1x128xbf16>,
    %168 = vector.extract_strided_slice %162 {offsets = [0, 2, 0], sizes = [2, 1, 128], strides = [1, 1, 1]} : vector<2x8x128xf32> to vector<2x1x128xf32>
    %169 = vector.extract_strided_slice %162 {offsets = [0, 3, 0], sizes = [2, 1, 128], strides = [1, 1, 1]} : vector<2x8x128xf32> to vector<2x1x128xf32>
    %170 = arith.maximumf %168, %169 : vector<2x1x128xf32>
    %171 = arith.truncf %170 : vector<2x1x128xf32> to vector<2x1x128xbf16>
    %c0_193 = arith.constant 0 : index
    %c4_194 = arith.constant 4 : index
    %c0_195 = arith.constant 0 : index
    %172 = vector.load %arg4[%c0_193, %c4_194, %c0_195] : memref<2x16x128xbf16, #tpu.memory_space<vmem>>, vector<2x1x128xbf16>
    tpu.vector_store %arg4[%c0_193, %c4_194, %c0_195], %171 {strides = array<i32>} : memref<2x16x128xbf16, #tpu.memory_space<vmem>>, vector<2x1x128xbf16>,
    %173 = vector.extract_strided_slice %162 {offsets = [0, 4, 0], sizes = [2, 1, 128], strides = [1, 1, 1]} : vector<2x8x128xf32> to vector<2x1x128xf32>
    %174 = vector.extract_strided_slice %162 {offsets = [0, 5, 0], sizes = [2, 1, 128], strides = [1, 1, 1]} : vector<2x8x128xf32> to vector<2x1x128xf32>
    %175 = arith.maximumf %173, %174 : vector<2x1x128xf32>
    %176 = arith.truncf %175 : vector<2x1x128xf32> to vector<2x1x128xbf16>
    %c0_196 = arith.constant 0 : index
    %c8_197 = arith.constant 8 : index
    %c0_198 = arith.constant 0 : index
    %177 = vector.load %arg4[%c0_196, %c8_197, %c0_198] : memref<2x16x128xbf16, #tpu.memory_space<vmem>>, vector<2x1x128xbf16>
    tpu.vector_store %arg4[%c0_196, %c8_197, %c0_198], %176 {strides = array<i32>} : memref<2x16x128xbf16, #tpu.memory_space<vmem>>, vector<2x1x128xbf16>,
    %178 = vector.extract_strided_slice %162 {offsets = [0, 6, 0], sizes = [2, 1, 128], strides = [1, 1, 1]} : vector<2x8x128xf32> to vector<2x1x128xf32>
    %179 = vector.extract_strided_slice %162 {offsets = [0, 7, 0], sizes = [2, 1, 128], strides = [1, 1, 1]} : vector<2x8x128xf32> to vector<2x1x128xf32>
    %180 = arith.maximumf %178, %179 : vector<2x1x128xf32>
    %181 = arith.truncf %180 : vector<2x1x128xf32> to vector<2x1x128xbf16>
    %c0_199 = arith.constant 0 : index
    %c12_200 = arith.constant 12 : index
    %c0_201 = arith.constant 0 : index
    %182 = vector.load %arg4[%c0_199, %c12_200, %c0_201] : memref<2x16x128xbf16, #tpu.memory_space<vmem>>, vector<2x1x128xbf16>
    tpu.vector_store %arg4[%c0_199, %c12_200, %c0_201], %181 {strides = array<i32>} : memref<2x16x128xbf16, #tpu.memory_space<vmem>>, vector<2x1x128xbf16>,
    %c0_202 = arith.constant 0 : index
    %c0_203 = arith.constant 0 : index
    %c2_204 = arith.constant 2 : index
    %c0_205 = arith.constant 0 : index
    %183 = vector.load %arg5[%c0_202, %c0_203, %c2_204, %c0_205] : memref<2x8x8x128xf32, #tpu.memory_space<vmem>>, vector<2x8x1x128xf32>
    %184 = vector.shape_cast %183 : vector<2x8x1x128xf32> to vector<2x8x128xf32>
    %c0_206 = arith.constant 0 : index
    %c0_207 = arith.constant 0 : index
    %c3_208 = arith.constant 3 : index
    %c0_209 = arith.constant 0 : index
    %185 = vector.load %arg5[%c0_206, %c0_207, %c3_208, %c0_209] : memref<2x8x8x128xf32, #tpu.memory_space<vmem>>, vector<2x8x1x128xf32>
    %186 = vector.shape_cast %185 : vector<2x8x1x128xf32> to vector<2x8x128xf32>
    %187 = arith.maximumf %184, %186 : vector<2x8x128xf32>
    %188 = vector.extract_strided_slice %187 {offsets = [0, 0, 0], sizes = [2, 1, 128], strides = [1, 1, 1]} : vector<2x8x128xf32> to vector<2x1x128xf32>
    %189 = vector.extract_strided_slice %187 {offsets = [0, 1, 0], sizes = [2, 1, 128], strides = [1, 1, 1]} : vector<2x8x128xf32> to vector<2x1x128xf32>
    %190 = arith.maximumf %188, %189 : vector<2x1x128xf32>
    %191 = arith.truncf %190 : vector<2x1x128xf32> to vector<2x1x128xbf16>
    %c0_210 = arith.constant 0 : index
    %c1_211 = arith.constant 1 : index
    %c0_212 = arith.constant 0 : index
    %192 = vector.load %arg4[%c0_210, %c1_211, %c0_212] : memref<2x16x128xbf16, #tpu.memory_space<vmem>>, vector<2x1x128xbf16>
    tpu.vector_store %arg4[%c0_210, %c1_211, %c0_212], %191 {strides = array<i32>} : memref<2x16x128xbf16, #tpu.memory_space<vmem>>, vector<2x1x128xbf16>,
    %193 = vector.extract_strided_slice %187 {offsets = [0, 2, 0], sizes = [2, 1, 128], strides = [1, 1, 1]} : vector<2x8x128xf32> to vector<2x1x128xf32>
    %194 = vector.extract_strided_slice %187 {offsets = [0, 3, 0], sizes = [2, 1, 128], strides = [1, 1, 1]} : vector<2x8x128xf32> to vector<2x1x128xf32>
    %195 = arith.maximumf %193, %194 : vector<2x1x128xf32>
    %196 = arith.truncf %195 : vector<2x1x128xf32> to vector<2x1x128xbf16>
    %c0_213 = arith.constant 0 : index
    %c5_214 = arith.constant 5 : index
    %c0_215 = arith.constant 0 : index
    %197 = vector.load %arg4[%c0_213, %c5_214, %c0_215] : memref<2x16x128xbf16, #tpu.memory_space<vmem>>, vector<2x1x128xbf16>
    tpu.vector_store %arg4[%c0_213, %c5_214, %c0_215], %196 {strides = array<i32>} : memref<2x16x128xbf16, #tpu.memory_space<vmem>>, vector<2x1x128xbf16>,
    %198 = vector.extract_strided_slice %187 {offsets = [0, 4, 0], sizes = [2, 1, 128], strides = [1, 1, 1]} : vector<2x8x128xf32> to vector<2x1x128xf32>
    %199 = vector.extract_strided_slice %187 {offsets = [0, 5, 0], sizes = [2, 1, 128], strides = [1, 1, 1]} : vector<2x8x128xf32> to vector<2x1x128xf32>
    %200 = arith.maximumf %198, %199 : vector<2x1x128xf32>
    %201 = arith.truncf %200 : vector<2x1x128xf32> to vector<2x1x128xbf16>
    %c0_216 = arith.constant 0 : index
    %c9_217 = arith.constant 9 : index
    %c0_218 = arith.constant 0 : index
    %202 = vector.load %arg4[%c0_216, %c9_217, %c0_218] : memref<2x16x128xbf16, #tpu.memory_space<vmem>>, vector<2x1x128xbf16>
    tpu.vector_store %arg4[%c0_216, %c9_217, %c0_218], %201 {strides = array<i32>} : memref<2x16x128xbf16, #tpu.memory_space<vmem>>, vector<2x1x128xbf16>,
    %203 = vector.extract_strided_slice %187 {offsets = [0, 6, 0], sizes = [2, 1, 128], strides = [1, 1, 1]} : vector<2x8x128xf32> to vector<2x1x128xf32>
    %204 = vector.extract_strided_slice %187 {offsets = [0, 7, 0], sizes = [2, 1, 128], strides = [1, 1, 1]} : vector<2x8x128xf32> to vector<2x1x128xf32>
    %205 = arith.maximumf %203, %204 : vector<2x1x128xf32>
    %206 = arith.truncf %205 : vector<2x1x128xf32> to vector<2x1x128xbf16>
    %c0_219 = arith.constant 0 : index
    %c13_220 = arith.constant 13 : index
    %c0_221 = arith.constant 0 : index
    %207 = vector.load %arg4[%c0_219, %c13_220, %c0_221] : memref<2x16x128xbf16, #tpu.memory_space<vmem>>, vector<2x1x128xbf16>
    tpu.vector_store %arg4[%c0_219, %c13_220, %c0_221], %206 {strides = array<i32>} : memref<2x16x128xbf16, #tpu.memory_space<vmem>>, vector<2x1x128xbf16>,
    %c0_222 = arith.constant 0 : index
    %c0_223 = arith.constant 0 : index
    %c4_224 = arith.constant 4 : index
    %c0_225 = arith.constant 0 : index
    %208 = vector.load %arg5[%c0_222, %c0_223, %c4_224, %c0_225] : memref<2x8x8x128xf32, #tpu.memory_space<vmem>>, vector<2x8x1x128xf32>
    %209 = vector.shape_cast %208 : vector<2x8x1x128xf32> to vector<2x8x128xf32>
    %c0_226 = arith.constant 0 : index
    %c0_227 = arith.constant 0 : index
    %c5_228 = arith.constant 5 : index
    %c0_229 = arith.constant 0 : index
    %210 = vector.load %arg5[%c0_226, %c0_227, %c5_228, %c0_229] : memref<2x8x8x128xf32, #tpu.memory_space<vmem>>, vector<2x8x1x128xf32>
    %211 = vector.shape_cast %210 : vector<2x8x1x128xf32> to vector<2x8x128xf32>
    %212 = arith.maximumf %209, %211 : vector<2x8x128xf32>
    %213 = vector.extract_strided_slice %212 {offsets = [0, 0, 0], sizes = [2, 1, 128], strides = [1, 1, 1]} : vector<2x8x128xf32> to vector<2x1x128xf32>
    %214 = vector.extract_strided_slice %212 {offsets = [0, 1, 0], sizes = [2, 1, 128], strides = [1, 1, 1]} : vector<2x8x128xf32> to vector<2x1x128xf32>
    %215 = arith.maximumf %213, %214 : vector<2x1x128xf32>
    %216 = arith.truncf %215 : vector<2x1x128xf32> to vector<2x1x128xbf16>
    %c0_230 = arith.constant 0 : index
    %c2_231 = arith.constant 2 : index
    %c0_232 = arith.constant 0 : index
    %217 = vector.load %arg4[%c0_230, %c2_231, %c0_232] : memref<2x16x128xbf16, #tpu.memory_space<vmem>>, vector<2x1x128xbf16>
    tpu.vector_store %arg4[%c0_230, %c2_231, %c0_232], %216 {strides = array<i32>} : memref<2x16x128xbf16, #tpu.memory_space<vmem>>, vector<2x1x128xbf16>,
    %218 = vector.extract_strided_slice %212 {offsets = [0, 2, 0], sizes = [2, 1, 128], strides = [1, 1, 1]} : vector<2x8x128xf32> to vector<2x1x128xf32>
    %219 = vector.extract_strided_slice %212 {offsets = [0, 3, 0], sizes = [2, 1, 128], strides = [1, 1, 1]} : vector<2x8x128xf32> to vector<2x1x128xf32>
    %220 = arith.maximumf %218, %219 : vector<2x1x128xf32>
    %221 = arith.truncf %220 : vector<2x1x128xf32> to vector<2x1x128xbf16>
    %c0_233 = arith.constant 0 : index
    %c6_234 = arith.constant 6 : index
    %c0_235 = arith.constant 0 : index
    %222 = vector.load %arg4[%c0_233, %c6_234, %c0_235] : memref<2x16x128xbf16, #tpu.memory_space<vmem>>, vector<2x1x128xbf16>
    tpu.vector_store %arg4[%c0_233, %c6_234, %c0_235], %221 {strides = array<i32>} : memref<2x16x128xbf16, #tpu.memory_space<vmem>>, vector<2x1x128xbf16>,
    %223 = vector.extract_strided_slice %212 {offsets = [0, 4, 0], sizes = [2, 1, 128], strides = [1, 1, 1]} : vector<2x8x128xf32> to vector<2x1x128xf32>
    %224 = vector.extract_strided_slice %212 {offsets = [0, 5, 0], sizes = [2, 1, 128], strides = [1, 1, 1]} : vector<2x8x128xf32> to vector<2x1x128xf32>
    %225 = arith.maximumf %223, %224 : vector<2x1x128xf32>
    %226 = arith.truncf %225 : vector<2x1x128xf32> to vector<2x1x128xbf16>
    %c0_236 = arith.constant 0 : index
    %c10_237 = arith.constant 10 : index
    %c0_238 = arith.constant 0 : index
    %227 = vector.load %arg4[%c0_236, %c10_237, %c0_238] : memref<2x16x128xbf16, #tpu.memory_space<vmem>>, vector<2x1x128xbf16>
    tpu.vector_store %arg4[%c0_236, %c10_237, %c0_238], %226 {strides = array<i32>} : memref<2x16x128xbf16, #tpu.memory_space<vmem>>, vector<2x1x128xbf16>,
    %228 = vector.extract_strided_slice %212 {offsets = [0, 6, 0], sizes = [2, 1, 128], strides = [1, 1, 1]} : vector<2x8x128xf32> to vector<2x1x128xf32>
    %229 = vector.extract_strided_slice %212 {offsets = [0, 7, 0], sizes = [2, 1, 128], strides = [1, 1, 1]} : vector<2x8x128xf32> to vector<2x1x128xf32>
    %230 = arith.maximumf %228, %229 : vector<2x1x128xf32>
    %231 = arith.truncf %230 : vector<2x1x128xf32> to vector<2x1x128xbf16>
    %c0_239 = arith.constant 0 : index
    %c14_240 = arith.constant 14 : index
    %c0_241 = arith.constant 0 : index
    %232 = vector.load %arg4[%c0_239, %c14_240, %c0_241] : memref<2x16x128xbf16, #tpu.memory_space<vmem>>, vector<2x1x128xbf16>
    tpu.vector_store %arg4[%c0_239, %c14_240, %c0_241], %231 {strides = array<i32>} : memref<2x16x128xbf16, #tpu.memory_space<vmem>>, vector<2x1x128xbf16>,
    %c0_242 = arith.constant 0 : index
    %c0_243 = arith.constant 0 : index
    %c6_244 = arith.constant 6 : index
    %c0_245 = arith.constant 0 : index
    %233 = vector.load %arg5[%c0_242, %c0_243, %c6_244, %c0_245] : memref<2x8x8x128xf32, #tpu.memory_space<vmem>>, vector<2x8x1x128xf32>
    %234 = vector.shape_cast %233 : vector<2x8x1x128xf32> to vector<2x8x128xf32>
    %c0_246 = arith.constant 0 : index
    %c0_247 = arith.constant 0 : index
    %c7_248 = arith.constant 7 : index
    %c0_249 = arith.constant 0 : index
    %235 = vector.load %arg5[%c0_246, %c0_247, %c7_248, %c0_249] : memref<2x8x8x128xf32, #tpu.memory_space<vmem>>, vector<2x8x1x128xf32>
    %236 = vector.shape_cast %235 : vector<2x8x1x128xf32> to vector<2x8x128xf32>
    %237 = arith.maximumf %234, %236 : vector<2x8x128xf32>
    %238 = vector.extract_strided_slice %237 {offsets = [0, 0, 0], sizes = [2, 1, 128], strides = [1, 1, 1]} : vector<2x8x128xf32> to vector<2x1x128xf32>
    %239 = vector.extract_strided_slice %237 {offsets = [0, 1, 0], sizes = [2, 1, 128], strides = [1, 1, 1]} : vector<2x8x128xf32> to vector<2x1x128xf32>
    %240 = arith.maximumf %238, %239 : vector<2x1x128xf32>
    %241 = arith.truncf %240 : vector<2x1x128xf32> to vector<2x1x128xbf16>
    %c0_250 = arith.constant 0 : index
    %c3_251 = arith.constant 3 : index
    %c0_252 = arith.constant 0 : index
    %242 = vector.load %arg4[%c0_250, %c3_251, %c0_252] : memref<2x16x128xbf16, #tpu.memory_space<vmem>>, vector<2x1x128xbf16>
    tpu.vector_store %arg4[%c0_250, %c3_251, %c0_252], %241 {strides = array<i32>} : memref<2x16x128xbf16, #tpu.memory_space<vmem>>, vector<2x1x128xbf16>,
    %243 = vector.extract_strided_slice %237 {offsets = [0, 2, 0], sizes = [2, 1, 128], strides = [1, 1, 1]} : vector<2x8x128xf32> to vector<2x1x128xf32>
    %244 = vector.extract_strided_slice %237 {offsets = [0, 3, 0], sizes = [2, 1, 128], strides = [1, 1, 1]} : vector<2x8x128xf32> to vector<2x1x128xf32>
    %245 = arith.maximumf %243, %244 : vector<2x1x128xf32>
    %246 = arith.truncf %245 : vector<2x1x128xf32> to vector<2x1x128xbf16>
    %c0_253 = arith.constant 0 : index
    %c7_254 = arith.constant 7 : index
    %c0_255 = arith.constant 0 : index
    %247 = vector.load %arg4[%c0_253, %c7_254, %c0_255] : memref<2x16x128xbf16, #tpu.memory_space<vmem>>, vector<2x1x128xbf16>
    tpu.vector_store %arg4[%c0_253, %c7_254, %c0_255], %246 {strides = array<i32>} : memref<2x16x128xbf16, #tpu.memory_space<vmem>>, vector<2x1x128xbf16>,
    %248 = vector.extract_strided_slice %237 {offsets = [0, 4, 0], sizes = [2, 1, 128], strides = [1, 1, 1]} : vector<2x8x128xf32> to vector<2x1x128xf32>
    %249 = vector.extract_strided_slice %237 {offsets = [0, 5, 0], sizes = [2, 1, 128], strides = [1, 1, 1]} : vector<2x8x128xf32> to vector<2x1x128xf32>
    %250 = arith.maximumf %248, %249 : vector<2x1x128xf32>
    %251 = arith.truncf %250 : vector<2x1x128xf32> to vector<2x1x128xbf16>
    %c0_256 = arith.constant 0 : index
    %c11_257 = arith.constant 11 : index
    %c0_258 = arith.constant 0 : index
    %252 = vector.load %arg4[%c0_256, %c11_257, %c0_258] : memref<2x16x128xbf16, #tpu.memory_space<vmem>>, vector<2x1x128xbf16>
    tpu.vector_store %arg4[%c0_256, %c11_257, %c0_258], %251 {strides = array<i32>} : memref<2x16x128xbf16, #tpu.memory_space<vmem>>, vector<2x1x128xbf16>,
    %253 = vector.extract_strided_slice %237 {offsets = [0, 6, 0], sizes = [2, 1, 128], strides = [1, 1, 1]} : vector<2x8x128xf32> to vector<2x1x128xf32>
    %254 = vector.extract_strided_slice %237 {offsets = [0, 7, 0], sizes = [2, 1, 128], strides = [1, 1, 1]} : vector<2x8x128xf32> to vector<2x1x128xf32>
    %255 = arith.maximumf %253, %254 : vector<2x1x128xf32>
    %256 = arith.truncf %255 : vector<2x1x128xf32> to vector<2x1x128xbf16>
    %c0_259 = arith.constant 0 : index
    %c15_260 = arith.constant 15 : index
    %c0_261 = arith.constant 0 : index
    %257 = vector.load %arg4[%c0_259, %c15_260, %c0_261] : memref<2x16x128xbf16, #tpu.memory_space<vmem>>, vector<2x1x128xbf16>
    tpu.vector_store %arg4[%c0_259, %c15_260, %c0_261], %256 {strides = array<i32>} : memref<2x16x128xbf16, #tpu.memory_space<vmem>>, vector<2x1x128xbf16>,
    return
  }
  func.func @transform_0(%arg0: i32) -> (i32, i32, i32, i32) {
    %c0_i32 = arith.constant 0 : i32
    %c0_i32_0 = arith.constant 0 : i32
    %c0_i32_1 = arith.constant 0 : i32
    %c0_i32_2 = arith.constant 0 : i32
    return %arg0, %c0_i32, %c0_i32_0, %c0_i32_1 : i32, i32, i32, i32
  }
  func.func @transform_1(%arg0: i32) -> (i32, i32, i32) {
    %c0_i32 = arith.constant 0 : i32
    %c0_i32_0 = arith.constant 0 : i32
    %c0_i32_1 = arith.constant 0 : i32
    %c0_i32_2 = arith.constant 0 : i32
    return %c0_i32, %c0_i32_0, %c0_i32_1 : i32, i32, i32
  }
  func.func @transform_2(%arg0: i32) -> (i32, i32) {
    %c0_i32 = arith.constant 0 : i32
    %c0_i32_0 = arith.constant 0 : i32
    %c0_i32_1 = arith.constant 0 : i32
    return %c0_i32, %c0_i32_0 : i32, i32
  }
  func.func @transform_3(%arg0: i32) -> (i32, i32, i32) {
    %c0_i32 = arith.constant 0 : i32
    %c0_i32_0 = arith.constant 0 : i32
    %c0_i32_1 = arith.constant 0 : i32
    return %arg0, %c0_i32, %c0_i32_0 : i32, i32, i32
  }
}

module attributes {stable_mosaic.version = 11 : i64} {
  func.func @_fc_head_kernel(%arg0: i32, %arg1: memref<2x2048xbf16, #tpu.memory_space<vmem>>, %arg2: memref<2048x128xbf16, #tpu.memory_space<vmem>>, %arg3: memref<1x128xf32, #tpu.memory_space<vmem>>, %arg4: memref<128x128xbf16, #tpu.memory_space<vmem>>, %arg5: memref<1x128xf32, #tpu.memory_space<vmem>>, %arg6: memref<2x128xf32, #tpu.memory_space<vmem>>) attributes {dimension_semantics = [#tpu.dimension_semantics<parallel>], iteration_bounds = array<i64: 1>, scalar_prefetch = 0 : i64, scratch_operands = 0 : i64, tpu.core_type = #tpu.core_type<tc>, window_params = [{transform_indices = @transform_0, window_bounds = array<i64: 2, 2048>}, {pipeline_mode = #tpu.pipeline_mode<synchronous>, transform_indices = @transform_1, window_bounds = array<i64: 2048, 128>}, {pipeline_mode = #tpu.pipeline_mode<synchronous>, transform_indices = @transform_2, window_bounds = array<i64: 1, 128>}, {pipeline_mode = #tpu.pipeline_mode<synchronous>, transform_indices = @transform_3, window_bounds = array<i64: 128, 128>}, {pipeline_mode = #tpu.pipeline_mode<synchronous>, transform_indices = @transform_4, window_bounds = array<i64: 1, 128>}, {transform_indices = @transform_5, window_bounds = array<i64: 2, 128>}]} {
    %c0 = arith.constant 0 : index
    %c0_0 = arith.constant 0 : index
    %0 = vector.load %arg1[%c0, %c0_0] : memref<2x2048xbf16, #tpu.memory_space<vmem>>, vector<2x2048xbf16>
    %c0_1 = arith.constant 0 : index
    %c0_2 = arith.constant 0 : index
    %1 = vector.load %arg2[%c0_1, %c0_2] : memref<2048x128xbf16, #tpu.memory_space<vmem>>, vector<2048x128xbf16>
    %cst = arith.constant dense<0.000000e+00> : vector<2x128xf32>
    %2 = tpu.matmul %0, %1, %cst {dimension_numbers = #tpu.dot_dimension_numbers<[1], [0], [0], [1], [0, 0, 1, 1], [], []>} : vector<2x2048xbf16>, vector<2048x128xbf16>, vector<2x128xf32> -> vector<2x128xf32>
    %c0_3 = arith.constant 0 : index
    %c0_4 = arith.constant 0 : index
    %3 = vector.load %arg3[%c0_3, %c0_4] : memref<1x128xf32, #tpu.memory_space<vmem>>, vector<1x128xf32>
    %4 = vector.broadcast %3 : vector<1x128xf32> to vector<2x128xf32>
    %5 = arith.addf %2, %4 : vector<2x128xf32>
    %cst_5 = arith.constant 0.000000e+00 : f32
    %6 = vector.broadcast %cst_5 : f32 to vector<2x128xf32>
    %7 = arith.maximumf %5, %6 : vector<2x128xf32>
    %8 = arith.truncf %7 : vector<2x128xf32> to vector<2x128xbf16>
    %c0_6 = arith.constant 0 : index
    %c0_7 = arith.constant 0 : index
    %9 = vector.load %arg4[%c0_6, %c0_7] : memref<128x128xbf16, #tpu.memory_space<vmem>>, vector<128x128xbf16>
    %cst_8 = arith.constant dense<0.000000e+00> : vector<2x128xf32>
    %10 = tpu.matmul %8, %9, %cst_8 {dimension_numbers = #tpu.dot_dimension_numbers<[1], [0], [0], [1], [0, 0, 1, 1], [], []>} : vector<2x128xbf16>, vector<128x128xbf16>, vector<2x128xf32> -> vector<2x128xf32>
    %c0_9 = arith.constant 0 : index
    %c0_10 = arith.constant 0 : index
    %11 = vector.load %arg5[%c0_9, %c0_10] : memref<1x128xf32, #tpu.memory_space<vmem>>, vector<1x128xf32>
    %12 = vector.broadcast %11 : vector<1x128xf32> to vector<2x128xf32>
    %13 = arith.addf %10, %12 : vector<2x128xf32>
    %14 = tpu.iota {dimensions = array<i32: 1>} : vector<2x128xi32>
    %c10_i32 = arith.constant 10 : i32
    %15 = vector.broadcast %c10_i32 : i32 to vector<2x128xi32>
    %16 = arith.cmpi slt, %14, %15 : vector<2x128xi32>
    %cst_11 = arith.constant -1.000000e+30 : f32
    %17 = vector.broadcast %cst_11 : f32 to vector<2x128xf32>
    %18 = arith.select %16, %13, %17 : vector<2x128xi1>, vector<2x128xf32>
    %cst_12 = arith.constant dense<0xFF800000> : vector<2xf32>
    %19 = vector.multi_reduction <maximumf>, %18, %cst_12 [1] : vector<2x128xf32> to vector<2xf32>
    %20 = vector.shape_cast %19 : vector<2xf32> to vector<2x1xf32>
    %21 = vector.broadcast %20 : vector<2x1xf32> to vector<2x128xf32>
    %22 = arith.subf %13, %21 : vector<2x128xf32>
    %23 = math.exp %22 : vector<2x128xf32>
    %cst_13 = arith.constant 0.000000e+00 : f32
    %24 = vector.broadcast %cst_13 : f32 to vector<2x128xf32>
    %25 = arith.select %16, %23, %24 : vector<2x128xi1>, vector<2x128xf32>
    %cst_14 = arith.constant dense<0.000000e+00> : vector<2xf32>
    %26 = vector.multi_reduction <add>, %25, %cst_14 [1] : vector<2x128xf32> to vector<2xf32>
    %27 = vector.shape_cast %26 : vector<2xf32> to vector<2x1xf32>
    %28 = math.log %27 : vector<2x1xf32>
    %29 = arith.addf %20, %28 : vector<2x1xf32>
    %30 = vector.broadcast %29 : vector<2x1xf32> to vector<2x128xf32>
    %31 = arith.subf %13, %30 : vector<2x128xf32>
    %c0_15 = arith.constant 0 : index
    %c0_16 = arith.constant 0 : index
    %32 = vector.load %arg6[%c0_15, %c0_16] : memref<2x128xf32, #tpu.memory_space<vmem>>, vector<2x128xf32>
    tpu.vector_store %arg6[%c0_15, %c0_16], %31 {strides = array<i32>} : memref<2x128xf32, #tpu.memory_space<vmem>>, vector<2x128xf32>,
    return
  }
  func.func @transform_0(%arg0: i32) -> (i32, i32) {
    %c0_i32 = arith.constant 0 : i32
    %c0_i32_0 = arith.constant 0 : i32
    return %arg0, %c0_i32 : i32, i32
  }
  func.func @transform_1(%arg0: i32) -> (i32, i32) {
    %c0_i32 = arith.constant 0 : i32
    %c0_i32_0 = arith.constant 0 : i32
    %c0_i32_1 = arith.constant 0 : i32
    return %c0_i32, %c0_i32_0 : i32, i32
  }
  func.func @transform_2(%arg0: i32) -> (i32, i32) {
    %c0_i32 = arith.constant 0 : i32
    %c0_i32_0 = arith.constant 0 : i32
    %c0_i32_1 = arith.constant 0 : i32
    return %c0_i32, %c0_i32_0 : i32, i32
  }
  func.func @transform_3(%arg0: i32) -> (i32, i32) {
    %c0_i32 = arith.constant 0 : i32
    %c0_i32_0 = arith.constant 0 : i32
    %c0_i32_1 = arith.constant 0 : i32
    return %c0_i32, %c0_i32_0 : i32, i32
  }
  func.func @transform_4(%arg0: i32) -> (i32, i32) {
    %c0_i32 = arith.constant 0 : i32
    %c0_i32_0 = arith.constant 0 : i32
    %c0_i32_1 = arith.constant 0 : i32
    return %c0_i32, %c0_i32_0 : i32, i32
  }
  func.func @transform_5(%arg0: i32) -> (i32, i32) {
    %c0_i32 = arith.constant 0 : i32
    %c0_i32_0 = arith.constant 0 : i32
    return %arg0, %c0_i32 : i32, i32
  }
}

</mosaic_0001>

<llo_original>
// kernel: net_forward.3
$region0: #{net_forward.3}
  #allocation0 [shape = 'u32[]', space=smem, size = 0x4, offset = 0x4, fixed_abs, tag = 'smem constant byte address 0x4 - core index']
  #allocation1 [shape = 'u32[144,128]{1,0:T(1,128)}', space=vmem, size = 0x12000, scoped, tag = 'internal scratch']
  %s0 = inlined_call_operand.vmem [shape: bf16[4,2,144,25], index: 0, kind: input, shape index: {}]
  %s1 = inlined_call_operand.vmem [shape: bf16[25,128], index: 1, kind: input, shape index: {}]
  %s2 = inlined_call_operand.vmem [shape: f32[1,128], index: 2, kind: input, shape index: {}]
  %s3 = inlined_call_operand.vmem [shape: bf16[2,144,128], index: 3, kind: output, shape index: {}]
  %s4 = sld [smem:[#allocation0]]
  $region22: #{net_forward.3} parent=0
    _
  %s6 = ssub.s32 1, %s4
  %s7 = scalar_select 0, %s6, %s4
  // Predicated region
  $region2: #{net_forward.3} parent=0 // pred_check
    _
  $region3: #{net_forward.3} parent=0 // pred_check_branch
    %9 = sbr.rel (0) target = $region5
  $region4: #{net_forward.3} parent=0 // pred_region
    _
  $region5: #{net_forward.3} parent=0 // pred_fallthru
    _
  // Predicated region
  $region6: #{net_forward.3} parent=0 // pred_check
    _
  $region7: #{net_forward.3} parent=0 // pred_check_branch
    %11 = sbr.rel (0) target = $region9
  $region8: #{net_forward.3} parent=0 // pred_region
    _
  $region9: #{net_forward.3} parent=0 // pred_fallthru
    _
  // Predicated region
  $region10: #{net_forward.3} parent=0 // pred_check
    _
  $region11: #{net_forward.3} parent=0 // pred_check_branch
    %13 = sbr.rel (0) target = $region13
  $region12: #{net_forward.3} parent=0 // pred_region
    _
  $region13: #{net_forward.3} parent=0 // pred_fallthru
    _
  %v15 = vld [vmem:[%s1] sm:$0xf]
  %v16 = vld [vmem:[%s1 + $0x4] sm:$0xf]
  %v17 = vld [vmem:[%s1 + $0x8] sm:$0xf]
  %v18 = vld [vmem:[%s1 + $0xc] sm:$0x1]
  %v19 = vld [vmem:[%s0] sm:$0xf]
  %v20 = vld [vmem:[%s0 + $0x4] sm:$0xf]
  %v21 = vld [vmem:[%s0 + $0x8] sm:$0xf]
  %v22 = vld [vmem:[%s0 + $0xc] sm:$0xf]
  %v23 = vld [vmem:[%s0 + $0x10] sm:$0xf]
  %v24 = vld [vmem:[%s0 + $0x14] sm:$0xf]
  %v25 = vld [vmem:[%s0 + $0x18] sm:$0xf]
  %v26 = vld [vmem:[%s0 + $0x1c] sm:$0xf]
  %v27 = vld [vmem:[%s0 + $0x20] sm:$0xf]
  %v28 = vld [vmem:[%s0 + $0x24] sm:$0xf]
  %v29 = vld [vmem:[%s0 + $0x28] sm:$0xf]
  %v30 = vld [vmem:[%s0 + $0x2c] sm:$0xf]
  %v31 = vld [vmem:[%s0 + $0x30] sm:$0xf]
  %v32 = vld [vmem:[%s0 + $0x34] sm:$0xf]
  %v33 = vld [vmem:[%s0 + $0x38] sm:$0xf]
  %v34 = vld [vmem:[%s0 + $0x3c] sm:$0xf]
  %v35 = vld [vmem:[%s0 + $0x40] sm:$0xf]
  %v36 = vld [vmem:[%s0 + $0x44] sm:$0xf]
  %v37 = vld [vmem:[%s0 + $0x48] sm:$0xf]
  %v38 = vld [vmem:[%s0 + $0x4c] sm:$0xf]
  %v39 = vld [vmem:[%s0 + $0x50] sm:$0xf]
  %v40 = vld [vmem:[%s0 + $0x54] sm:$0xf]
  %v41 = vld [vmem:[%s0 + $0x58] sm:$0xf]
  %v42 = vld [vmem:[%s0 + $0x5c] sm:$0xf]
  %v43 = vld [vmem:[%s0 + $0x60] sm:$0xf]
  %v44 = vld [vmem:[%s0 + $0x64] sm:$0xf]
  %v45 = vld [vmem:[%s0 + $0x68] sm:$0xf]
  %v46 = vld [vmem:[%s0 + $0x6c] sm:$0xf]
  %v47 = vld [vmem:[%s0 + $0x70] sm:$0xf]
  %v48 = vld [vmem:[%s0 + $0x74] sm:$0xf]
  %v49 = vld [vmem:[%s0 + $0x78] sm:$0xf]
  %v50 = vld [vmem:[%s0 + $0x7c] sm:$0xf]
  %v51 = vld [vmem:[%s0 + $0x80] sm:$0xf]
  %v52 = vld [vmem:[%s0 + $0x84] sm:$0xf]
  %v53 = vld [vmem:[%s0 + $0x88] sm:$0xf]
  %v54 = vld [vmem:[%s0 + $0x8c] sm:$0xf]
  %v91 = vunpack.c.l.b16 %v19
  %v92 = vunpack.c.l.b16 %v20
  %v93 = vunpack.c.l.b16 %v21
  %v94 = vunpack.c.l.b16 %v22
  %v95 = vunpack.c.l.b16 %v23
  %v96 = vunpack.c.l.b16 %v24
  %v97 = vunpack.c.l.b16 %v25
  %v98 = vunpack.c.l.b16 %v26
  %v99 = vunpack.c.l.b16 %v27
  %v100 = vunpack.c.l.b16 %v28
  %v101 = vunpack.c.l.b16 %v29
  %v102 = vunpack.c.l.b16 %v30
  %v103 = vunpack.c.l.b16 %v31
  %v104 = vunpack.c.l.b16 %v32
  %v105 = vunpack.c.l.b16 %v33
  %v106 = vunpack.c.l.b16 %v34
  %v107 = vunpack.c.l.b16 %v35
  %v108 = vunpack.c.l.b16 %v36
  %v109 = vunpack.c.l.b16 %v37
  %v110 = vunpack.c.l.b16 %v38
  %v111 = vunpack.c.l.b16 %v39
  %v112 = vunpack.c.l.b16 %v40
  %v113 = vunpack.c.l.b16 %v41
  %v114 = vunpack.c.l.b16 %v42
  %v115 = vunpack.c.l.b16 %v43
  %v116 = vunpack.c.l.b16 %v44
  %v117 = vunpack.c.l.b16 %v45
  %v118 = vunpack.c.l.b16 %v46
  %v119 = vunpack.c.l.b16 %v47
  %v120 = vunpack.c.l.b16 %v48
  %v121 = vunpack.c.l.b16 %v49
  %v122 = vunpack.c.l.b16 %v50
  %v123 = vunpack.c.l.b16 %v51
  %v124 = vunpack.c.l.b16 %v52
  %v125 = vunpack.c.l.b16 %v53
  %v126 = vunpack.c.l.b16 %v54
  %v127 = vpack.c.b16 %v92, %v91
  %v128 = vpack.c.b16 %v94, %v93
  %v129 = vpack.c.b16 %v96, %v95
  %v130 = vpack.c.b16 %v98, %v97
  %v131 = vpack.c.b16 %v100, %v99
  %v132 = vpack.c.b16 %v102, %v101
  %v133 = vpack.c.b16 %v104, %v103
  %v134 = vpack.c.b16 %v106, %v105
  %v135 = vpack.c.b16 %v108, %v107
  %v136 = vpack.c.b16 %v110, %v109
  %v137 = vpack.c.b16 %v112, %v111
  %v138 = vpack.c.b16 %v114, %v113
  %v139 = vpack.c.b16 %v116, %v115
  %v140 = vpack.c.b16 %v118, %v117
  %v141 = vpack.c.b16 %v120, %v119
  %v142 = vpack.c.b16 %v122, %v121
  %v143 = vpack.c.b16 %v124, %v123
  %v144 = vpack.c.b16 %v126, %v125
  %v149 = vunpack.c.l.b16 %v15
  %v150 = vunpack.c.l.b16 %v16
  %v151 = vunpack.c.l.b16 %v17
  %v152 = vunpack.c.l.b16 %v18
  %v153 = vpack.c.b16 %v150, %v149
  %v154 = vpack.c.b16 %v152, %v151
  %vm156 = vcmask 203776
  %v158 = vsel %vm156, %v127, 0
  %v161 = vsel %vm156, %v128, 0
  %v164 = vsel %vm156, %v129, 0
  %v167 = vsel %vm156, %v130, 0
  %v170 = vsel %vm156, %v131, 0
  %v173 = vsel %vm156, %v132, 0
  %v176 = vsel %vm156, %v133, 0
  %v179 = vsel %vm156, %v134, 0
  %v182 = vsel %vm156, %v135, 0
  %v185 = vsel %vm156, %v136, 0
  %v188 = vsel %vm156, %v137, 0
  %v191 = vsel %vm156, %v138, 0
  %v194 = vsel %vm156, %v139, 0
  %v197 = vsel %vm156, %v140, 0
  %v200 = vsel %vm156, %v141, 0
  %v203 = vsel %vm156, %v142, 0
  %v206 = vsel %vm156, %v143, 0
  %v209 = vsel %vm156, %v144, 0
  %vm211 = vcmask 1043456
  %vm212 = vcmask 1044480
  %v213 = vsel %vm211, 4294967295, 65535
  %v214 = vsel %vm212, %v213, 0
  %v216 = vand.u32 %v154, %v214
  %218 = vmatprep.subr.bf16.mxu0 0
  %219 = vmatpush1.bf16.msra.mxu0 %v153
  %220 = vmatprep.subr.bf16.mxu0 0
  %221 = vmatpush1.bf16.msra.mxu0 %v216
  %222 = vmatprep.subr.bf16.mxu0 0
  %223 = vmatpush1.bf16.msra.mxu0 0
  %224 = vmatprep.subr.bf16.mxu0 0
  %225 = vmatpush1.bf16.msra.mxu0 0
  %226 = vmatprep.subr.bf16.mxu0 0
  %227 = vmatpush1.bf16.msra.mxu0 0
  %228 = vmatprep.subr.bf16.mxu0 0
  %229 = vmatpush1.bf16.msra.mxu0 0
  %230 = vmatprep.subr.bf16.mxu0 0
  %231 = vmatpush1.bf16.msra.mxu0 0
  %232 = vmatprep.subr.bf16.mxu0 0
  %233 = vmatpush1.bf16.msra.mxu0 0
  %234 = vmatprep.subr.bf16.mxu0 0
  %235 = vmatpush1.bf16.msra.mxu0 0
  %236 = vmatprep.subr.bf16.mxu0 0
  %237 = vmatpush1.bf16.msra.mxu0 0
  %238 = vmatprep.subr.bf16.mxu0 0
  %239 = vmatpush1.bf16.msra.mxu0 0
  %240 = vmatprep.subr.bf16.mxu0 0
  %241 = vmatpush1.bf16.msra.mxu0 0
  %242 = vmatprep.subr.bf16.mxu0 0
  %243 = vmatpush1.bf16.msra.mxu0 0
  %244 = vmatprep.subr.bf16.mxu0 0
  %245 = vmatpush1.bf16.msra.mxu0 0
  %246 = vmatprep.subr.bf16.mxu0 0
  %247 = vmatpush1.bf16.msra.mxu0 0
  %248 = vmatprep.subr.bf16.mxu0 0
  %249 = vmatpush1.bf16.msra.mxu0 0
  %250 = vmatprep.mubr.bf16.mxu0 0
  %251 = vmatmul.mubr.bf16.gmra.mrb[0].mxu0 %v158
  %v252 = vpop.f32.mrb[0].mxu0
  %v253 = vadd.f32 0.0, %v252
  %v254 = vpop.f32.mrb[0].mxu0
  %v255 = vpop.f32.mrb[0].mxu0
  %v256 = vadd.f32 0.0, %v255
  %v257 = vpop.f32.mrb[0].mxu0
  %258 = vmatprep.mubr.bf16.mxu0 0
  %259 = vmatmul.mubr.bf16.gmra.mrb[0].mxu0 %v161
  %v260 = vpop.f32.mrb[0].mxu0
  %v261 = vadd.f32 0.0, %v260
  %v262 = vpop.f32.mrb[0].mxu0
  %v263 = vpop.f32.mrb[0].mxu0
  %v264 = vadd.f32 0.0, %v263
  %v265 = vpop.f32.mrb[0].mxu0
  %266 = vmatprep.mubr.bf16.mxu0 0
  %267 = vmatmul.mubr.bf16.gmra.mrb[0].mxu0 %v164
  %v268 = vpop.f32.mrb[0].mxu0
  %v269 = vadd.f32 0.0, %v268
  %v270 = vpop.f32.mrb[0].mxu0
  %v271 = vpop.f32.mrb[0].mxu0
  %v272 = vadd.f32 0.0, %v271
  %v273 = vpop.f32.mrb[0].mxu0
  %274 = vmatprep.mubr.bf16.mxu0 0
  %275 = vmatmul.mubr.bf16.gmra.mrb[0].mxu0 %v167
  %v276 = vpop.f32.mrb[0].mxu0
  %v277 = vadd.f32 0.0, %v276
  %v278 = vpop.f32.mrb[0].mxu0
  %v279 = vpop.f32.mrb[0].mxu0
  %v280 = vadd.f32 0.0, %v279
  %v281 = vpop.f32.mrb[0].mxu0
  %282 = vmatprep.mubr.bf16.mxu0 0
  %283 = vmatmul.mubr.bf16.gmra.mrb[0].mxu0 %v170
  %v284 = vpop.f32.mrb[0].mxu0
  %v285 = vadd.f32 0.0, %v284
  %v286 = vpop.f32.mrb[0].mxu0
  %v287 = vpop.f32.mrb[0].mxu0
  %v288 = vadd.f32 0.0, %v287
  %v289 = vpop.f32.mrb[0].mxu0
  %290 = vmatprep.mubr.bf16.mxu0 0
  %291 = vmatmul.mubr.bf16.gmra.mrb[0].mxu0 %v173
  %v292 = vpop.f32.mrb[0].mxu0
  %v293 = vadd.f32 0.0, %v292
  %v294 = vpop.f32.mrb[0].mxu0
  %v295 = vpop.f32.mrb[0].mxu0
  %v296 = vadd.f32 0.0, %v295
  %v297 = vpop.f32.mrb[0].mxu0
  %298 = vmatprep.mubr.bf16.mxu0 0
  %299 = vmatmul.mubr.bf16.gmra.mrb[0].mxu0 %v176
  %v300 = vpop.f32.mrb[0].mxu0
  %v301 = vadd.f32 0.0, %v300
  %v302 = vpop.f32.mrb[0].mxu0
  %v303 = vpop.f32.mrb[0].mxu0
  %v304 = vadd.f32 0.0, %v303
  %v305 = vpop.f32.mrb[0].mxu0
  %306 = vmatprep.mubr.bf16.mxu0 0
  %307 = vmatmul.mubr.bf16.gmra.mrb[0].mxu0 %v179
  %v308 = vpop.f32.mrb[0].mxu0
  %v309 = vadd.f32 0.0, %v308
  %v310 = vpop.f32.mrb[0].mxu0
  %v311 = vpop.f32.mrb[0].mxu0
  %v312 = vadd.f32 0.0, %v311
  %v313 = vpop.f32.mrb[0].mxu0
  %314 = vmatprep.mubr.bf16.mxu0 0
  %315 = vmatmul.mubr.bf16.gmra.mrb[0].mxu0 %v182
  %v316 = vpop.f32.mrb[0].mxu0
  %v317 = vadd.f32 0.0, %v316
  %v318 = vpop.f32.mrb[0].mxu0
  %v319 = vpop.f32.mrb[0].mxu0
  %v320 = vadd.f32 0.0, %v319
  %v321 = vpop.f32.mrb[0].mxu0
  %322 = vmatprep.mubr.bf16.mxu0 0
  %323 = vmatmul.mubr.bf16.gmra.mrb[0].mxu0 %v185
  %v324 = vpop.f32.mrb[0].mxu0
  %v325 = vadd.f32 0.0, %v324
  %v326 = vpop.f32.mrb[0].mxu0
  %v327 = vpop.f32.mrb[0].mxu0
  %v328 = vadd.f32 0.0, %v327
  %v329 = vpop.f32.mrb[0].mxu0
  %330 = vmatprep.mubr.bf16.mxu0 0
  %331 = vmatmul.mubr.bf16.gmra.mrb[0].mxu0 %v188
  %v332 = vpop.f32.mrb[0].mxu0
  %v333 = vadd.f32 0.0, %v332
  %v334 = vpop.f32.mrb[0].mxu0
  %v335 = vpop.f32.mrb[0].mxu0
  %v336 = vadd.f32 0.0, %v335
  %v337 = vpop.f32.mrb[0].mxu0
  %338 = vmatprep.mubr.bf16.mxu0 0
  %339 = vmatmul.mubr.bf16.gmra.mrb[0].mxu0 %v191
  %v340 = vpop.f32.mrb[0].mxu0
  %v341 = vadd.f32 0.0, %v340
  %v342 = vpop.f32.mrb[0].mxu0
  %v343 = vpop.f32.mrb[0].mxu0
  %v344 = vadd.f32 0.0, %v343
  %v345 = vpop.f32.mrb[0].mxu0
  %346 = vmatprep.mubr.bf16.mxu0 0
  %347 = vmatmul.mubr.bf16.gmra.mrb[0].mxu0 %v194
  %v348 = vpop.f32.mrb[0].mxu0
  %v349 = vadd.f32 0.0, %v348
  %v350 = vpop.f32.mrb[0].mxu0
  %v351 = vpop.f32.mrb[0].mxu0
  %v352 = vadd.f32 0.0, %v351
  %v353 = vpop.f32.mrb[0].mxu0
  %354 = vmatprep.mubr.bf16.mxu0 0
  %355 = vmatmul.mubr.bf16.gmra.mrb[0].mxu0 %v197
  %v356 = vpop.f32.mrb[0].mxu0
  %v357 = vadd.f32 0.0, %v356
  %v358 = vpop.f32.mrb[0].mxu0
  %v359 = vpop.f32.mrb[0].mxu0
  %v360 = vadd.f32 0.0, %v359
  %v361 = vpop.f32.mrb[0].mxu0
  %362 = vmatprep.mubr.bf16.mxu0 0
  %363 = vmatmul.mubr.bf16.gmra.mrb[0].mxu0 %v200
  %v364 = vpop.f32.mrb[0].mxu0
  %v365 = vadd.f32 0.0, %v364
  %v366 = vpop.f32.mrb[0].mxu0
  %v367 = vpop.f32.mrb[0].mxu0
  %v368 = vadd.f32 0.0, %v367
  %v369 = vpop.f32.mrb[0].mxu0
  %370 = vmatprep.mubr.bf16.mxu0 0
  %371 = vmatmul.mubr.bf16.gmra.mrb[0].mxu0 %v203
  %v372 = vpop.f32.mrb[0].mxu0
  %v373 = vadd.f32 0.0, %v372
  %v374 = vpop.f32.mrb[0].mxu0
  %v375 = vpop.f32.mrb[0].mxu0
  %v376 = vadd.f32 0.0, %v375
  %v377 = vpop.f32.mrb[0].mxu0
  %378 = vmatprep.mubr.bf16.mxu0 0
  %379 = vmatmul.mubr.bf16.gmra.mrb[0].mxu0 %v206
  %v380 = vpop.f32.mrb[0].mxu0
  %v381 = vadd.f32 0.0, %v380
  %v382 = vpop.f32.mrb[0].mxu0
  %v383 = vpop.f32.mrb[0].mxu0
  %v384 = vadd.f32 0.0, %v383
  %v385 = vpop.f32.mrb[0].mxu0
  %386 = vmatprep.mubr.bf16.mxu0 0
  %387 = vmatmul.mubr.bf16.gmra.mrb[0].mxu0 %v209
  %v388 = vpop.f32.mrb[0].mxu0
  %v389 = vadd.f32 0.0, %v388
  %v390 = vpop.f32.mrb[0].mxu0
  %v391 = vpop.f32.mrb[0].mxu0
  %v392 = vadd.f32 0.0, %v391
  %v393 = vpop.f32.mrb[0].mxu0
  %394 = vdwg.mxu0
  %s395 = scalar_lea.vmem %s0, 144
  %v396 = vld [vmem:[%s395] sm:$0xf]
  %v397 = vld [vmem:[%s395 + $0x4] sm:$0xf]
  %v398 = vld [vmem:[%s395 + $0x8] sm:$0xf]
  %v399 = vld [vmem:[%s395 + $0xc] sm:$0xf]
  %v400 = vld [vmem:[%s395 + $0x10] sm:$0xf]
  %v401 = vld [vmem:[%s395 + $0x14] sm:$0xf]
  %v402 = vld [vmem:[%s395 + $0x18] sm:$0xf]
  %v403 = vld [vmem:[%s395 + $0x1c] sm:$0xf]
  %v404 = vld [vmem:[%s395 + $0x20] sm:$0xf]
  %v405 = vld [vmem:[%s395 + $0x24] sm:$0xf]
  %v406 = vld [vmem:[%s395 + $0x28] sm:$0xf]
  %v407 = vld [vmem:[%s395 + $0x2c] sm:$0xf]
  %v408 = vld [vmem:[%s395 + $0x30] sm:$0xf]
  %v409 = vld [vmem:[%s395 + $0x34] sm:$0xf]
  %v410 = vld [vmem:[%s395 + $0x38] sm:$0xf]
  %v411 = vld [vmem:[%s395 + $0x3c] sm:$0xf]
  %v412 = vld [vmem:[%s395 + $0x40] sm:$0xf]
  %v413 = vld [vmem:[%s395 + $0x44] sm:$0xf]
  %v414 = vld [vmem:[%s395 + $0x48] sm:$0xf]
  %v415 = vld [vmem:[%s395 + $0x4c] sm:$0xf]
  %v416 = vld [vmem:[%s395 + $0x50] sm:$0xf]
  %v417 = vld [vmem:[%s395 + $0x54] sm:$0xf]
  %v418 = vld [vmem:[%s395 + $0x58] sm:$0xf]
  %v419 = vld [vmem:[%s395 + $0x5c] sm:$0xf]
  %v420 = vld [vmem:[%s395 + $0x60] sm:$0xf]
  %v421 = vld [vmem:[%s395 + $0x64] sm:$0xf]
  %v422 = vld [vmem:[%s395 + $0x68] sm:$0xf]
  %v423 = vld [vmem:[%s395 + $0x6c] sm:$0xf]
  %v424 = vld [vmem:[%s395 + $0x70] sm:$0xf]
  %v425 = vld [vmem:[%s395 + $0x74] sm:$0xf]
  %v426 = vld [vmem:[%s395 + $0x78] sm:$0xf]
  %v427 = vld [vmem:[%s395 + $0x7c] sm:$0xf]
  %v428 = vld [vmem:[%s395 + $0x80] sm:$0xf]
  %v429 = vld [vmem:[%s395 + $0x84] sm:$0xf]
  %v430 = vld [vmem:[%s395 + $0x88] sm:$0xf]
  %v431 = vld [vmem:[%s395 + $0x8c] sm:$0xf]
  %v468 = vunpack.c.l.b16 %v396
  %v469 = vunpack.c.l.b16 %v397
  %v470 = vunpack.c.l.b16 %v398
  %v471 = vunpack.c.l.b16 %v399
  %v472 = vunpack.c.l.b16 %v400
  %v473 = vunpack.c.l.b16 %v401
  %v474 = vunpack.c.l.b16 %v402
  %v475 = vunpack.c.l.b16 %v403
  %v476 = vunpack.c.l.b16 %v404
  %v477 = vunpack.c.l.b16 %v405
  %v478 = vunpack.c.l.b16 %v406
  %v479 = vunpack.c.l.b16 %v407
  %v480 = vunpack.c.l.b16 %v408
  %v481 = vunpack.c.l.b16 %v409
  %v482 = vunpack.c.l.b16 %v410
  %v483 = vunpack.c.l.b16 %v411
  %v484 = vunpack.c.l.b16 %v412
  %v485 = vunpack.c.l.b16 %v413
  %v486 = vunpack.c.l.b16 %v414
  %v487 = vunpack.c.l.b16 %v415
  %v488 = vunpack.c.l.b16 %v416
  %v489 = vunpack.c.l.b16 %v417
  %v490 = vunpack.c.l.b16 %v418
  %v491 = vunpack.c.l.b16 %v419
  %v492 = vunpack.c.l.b16 %v420
  %v493 = vunpack.c.l.b16 %v421
  %v494 = vunpack.c.l.b16 %v422
  %v495 = vunpack.c.l.b16 %v423
  %v496 = vunpack.c.l.b16 %v424
  %v497 = vunpack.c.l.b16 %v425
  %v498 = vunpack.c.l.b16 %v426
  %v499 = vunpack.c.l.b16 %v427
  %v500 = vunpack.c.l.b16 %v428
  %v501 = vunpack.c.l.b16 %v429
  %v502 = vunpack.c.l.b16 %v430
  %v503 = vunpack.c.l.b16 %v431
  %v504 = vpack.c.b16 %v469, %v468
  %v505 = vpack.c.b16 %v471, %v470
  %v506 = vpack.c.b16 %v473, %v472
  %v507 = vpack.c.b16 %v475, %v474
  %v508 = vpack.c.b16 %v477, %v476
  %v509 = vpack.c.b16 %v479, %v478
  %v510 = vpack.c.b16 %v481, %v480
  %v511 = vpack.c.b16 %v483, %v482
  %v512 = vpack.c.b16 %v485, %v484
  %v513 = vpack.c.b16 %v487, %v486
  %v514 = vpack.c.b16 %v489, %v488
  %v515 = vpack.c.b16 %v491, %v490
  %v516 = vpack.c.b16 %v493, %v492
  %v517 = vpack.c.b16 %v495, %v494
  %v518 = vpack.c.b16 %v497, %v496
  %v519 = vpack.c.b16 %v499, %v498
  %v520 = vpack.c.b16 %v501, %v500
  %v521 = vpack.c.b16 %v503, %v502
  %v523 = vsel %vm156, %v504, 0
  %v526 = vsel %vm156, %v505, 0
  %v529 = vsel %vm156, %v506, 0
  %v532 = vsel %vm156, %v507, 0
  %v535 = vsel %vm156, %v508, 0
  %v538 = vsel %vm156, %v509, 0
  %v541 = vsel %vm156, %v510, 0
  %v544 = vsel %vm156, %v511, 0
  %v547 = vsel %vm156, %v512, 0
  %v550 = vsel %vm156, %v513, 0
  %v553 = vsel %vm156, %v514, 0
  %v556 = vsel %vm156, %v515, 0
  %v559 = vsel %vm156, %v516, 0
  %v562 = vsel %vm156, %v517, 0
  %v565 = vsel %vm156, %v518, 0
  %v568 = vsel %vm156, %v519, 0
  %v571 = vsel %vm156, %v520, 0
  %v574 = vsel %vm156, %v521, 0
  %576 = vmatprep.subr.bf16.mxu0 0
  %577 = vmatpush1.bf16.msra.mxu0 %v153
  %578 = vmatprep.subr.bf16.mxu0 0
  %579 = vmatpush1.bf16.msra.mxu0 %v216
  %580 = vmatprep.subr.bf16.mxu0 0
  %581 = vmatpush1.bf16.msra.mxu0 0
  %582 = vmatprep.subr.bf16.mxu0 0
  %583 = vmatpush1.bf16.msra.mxu0 0
  %584 = vmatprep.subr.bf16.mxu0 0
  %585 = vmatpush1.bf16.msra.mxu0 0
  %586 = vmatprep.subr.bf16.mxu0 0
  %587 = vmatpush1.bf16.msra.mxu0 0
  %588 = vmatprep.subr.bf16.mxu0 0
  %589 = vmatpush1.bf16.msra.mxu0 0
  %590 = vmatprep.subr.bf16.mxu0 0
  %591 = vmatpush1.bf16.msra.mxu0 0
  %592 = vmatprep.subr.bf16.mxu0 0
  %593 = vmatpush1.bf16.msra.mxu0 0
  %594 = vmatprep.subr.bf16.mxu0 0
  %595 = vmatpush1.bf16.msra.mxu0 0
  %596 = vmatprep.subr.bf16.mxu0 0
  %597 = vmatpush1.bf16.msra.mxu0 0
  %598 = vmatprep.subr.bf16.mxu0 0
  %599 = vmatpush1.bf16.msra.mxu0 0
  %600 = vmatprep.subr.bf16.mxu0 0
  %601 = vmatpush1.bf16.msra.mxu0 0
  %602 = vmatprep.subr.bf16.mxu0 0
  %603 = vmatpush1.bf16.msra.mxu0 0
  %604 = vmatprep.subr.bf16.mxu0 0
  %605 = vmatpush1.bf16.msra.mxu0 0
  %606 = vmatprep.subr.bf16.mxu0 0
  %607 = vmatpush1.bf16.msra.mxu0 0
  %608 = vmatprep.mubr.bf16.mxu0 0
  %609 = vmatmul.mubr.bf16.gmra.mrb[0].mxu0 %v523
  %v610 = vpop.f32.mrb[0].mxu0
  %v611 = vadd.f32 0.0, %v610
  %v612 = vpop.f32.mrb[0].mxu0
  %v613 = vpop.f32.mrb[0].mxu0
  %v614 = vadd.f32 0.0, %v613
  %v615 = vpop.f32.mrb[0].mxu0
  %616 = vmatprep.mubr.bf16.mxu0 0
  %617 = vmatmul.mubr.bf16.gmra.mrb[0].mxu0 %v526
  %v618 = vpop.f32.mrb[0].mxu0
  %v619 = vadd.f32 0.0, %v618
  %v620 = vpop.f32.mrb[0].mxu0
  %v621 = vpop.f32.mrb[0].mxu0
  %v622 = vadd.f32 0.0, %v621
  %v623 = vpop.f32.mrb[0].mxu0
  %624 = vmatprep.mubr.bf16.mxu0 0
  %625 = vmatmul.mubr.bf16.gmra.mrb[0].mxu0 %v529
  %v626 = vpop.f32.mrb[0].mxu0
  %v627 = vadd.f32 0.0, %v626
  %v628 = vpop.f32.mrb[0].mxu0
  %v629 = vpop.f32.mrb[0].mxu0
  %v630 = vadd.f32 0.0, %v629
  %v631 = vpop.f32.mrb[0].mxu0
  %632 = vmatprep.mubr.bf16.mxu0 0
  %633 = vmatmul.mubr.bf16.gmra.mrb[0].mxu0 %v532
  %v634 = vpop.f32.mrb[0].mxu0
  %v635 = vadd.f32 0.0, %v634
  %v636 = vpop.f32.mrb[0].mxu0
  %v637 = vpop.f32.mrb[0].mxu0
  %v638 = vadd.f32 0.0, %v637
  %v639 = vpop.f32.mrb[0].mxu0
  %640 = vmatprep.mubr.bf16.mxu0 0
  %641 = vmatmul.mubr.bf16.gmra.mrb[0].mxu0 %v535
  %v642 = vpop.f32.mrb[0].mxu0
  %v643 = vadd.f32 0.0, %v642
  %v644 = vpop.f32.mrb[0].mxu0
  %v645 = vpop.f32.mrb[0].mxu0
  %v646 = vadd.f32 0.0, %v645
  %v647 = vpop.f32.mrb[0].mxu0
  %648 = vmatprep.mubr.bf16.mxu0 0
  %649 = vmatmul.mubr.bf16.gmra.mrb[0].mxu0 %v538
  %v650 = vpop.f32.mrb[0].mxu0
  %v651 = vadd.f32 0.0, %v650
  %v652 = vpop.f32.mrb[0].mxu0
  %v653 = vpop.f32.mrb[0].mxu0
  %v654 = vadd.f32 0.0, %v653
  %v655 = vpop.f32.mrb[0].mxu0
  %656 = vmatprep.mubr.bf16.mxu0 0
  %657 = vmatmul.mubr.bf16.gmra.mrb[0].mxu0 %v541
  %v658 = vpop.f32.mrb[0].mxu0
  %v659 = vadd.f32 0.0, %v658
  %v660 = vpop.f32.mrb[0].mxu0
  %v661 = vpop.f32.mrb[0].mxu0
  %v662 = vadd.f32 0.0, %v661
  %v663 = vpop.f32.mrb[0].mxu0
  %664 = vmatprep.mubr.bf16.mxu0 0
  %665 = vmatmul.mubr.bf16.gmra.mrb[0].mxu0 %v544
  %v666 = vpop.f32.mrb[0].mxu0
  %v667 = vadd.f32 0.0, %v666
  %v668 = vpop.f32.mrb[0].mxu0
  %v669 = vpop.f32.mrb[0].mxu0
  %v670 = vadd.f32 0.0, %v669
  %v671 = vpop.f32.mrb[0].mxu0
  %672 = vmatprep.mubr.bf16.mxu0 0
  %673 = vmatmul.mubr.bf16.gmra.mrb[0].mxu0 %v547
  %v674 = vpop.f32.mrb[0].mxu0
  %v675 = vadd.f32 0.0, %v674
  %v676 = vpop.f32.mrb[0].mxu0
  %v677 = vpop.f32.mrb[0].mxu0
  %v678 = vadd.f32 0.0, %v677
  %v679 = vpop.f32.mrb[0].mxu0
  %680 = vmatprep.mubr.bf16.mxu0 0
  %681 = vmatmul.mubr.bf16.gmra.mrb[0].mxu0 %v550
  %v682 = vpop.f32.mrb[0].mxu0
  %v683 = vadd.f32 0.0, %v682
  %v684 = vpop.f32.mrb[0].mxu0
  %v685 = vpop.f32.mrb[0].mxu0
  %v686 = vadd.f32 0.0, %v685
  %v687 = vpop.f32.mrb[0].mxu0
  %688 = vmatprep.mubr.bf16.mxu0 0
  %689 = vmatmul.mubr.bf16.gmra.mrb[0].mxu0 %v553
  %v690 = vpop.f32.mrb[0].mxu0
  %v691 = vadd.f32 0.0, %v690
  %v692 = vpop.f32.mrb[0].mxu0
  %v693 = vpop.f32.mrb[0].mxu0
  %v694 = vadd.f32 0.0, %v693
  %v695 = vpop.f32.mrb[0].mxu0
  %696 = vmatprep.mubr.bf16.mxu0 0
  %697 = vmatmul.mubr.bf16.gmra.mrb[0].mxu0 %v556
  %v698 = vpop.f32.mrb[0].mxu0
  %v699 = vadd.f32 0.0, %v698
  %v700 = vpop.f32.mrb[0].mxu0
  %v701 = vpop.f32.mrb[0].mxu0
  %v702 = vadd.f32 0.0, %v701
  %v703 = vpop.f32.mrb[0].mxu0
  %704 = vmatprep.mubr.bf16.mxu0 0
  %705 = vmatmul.mubr.bf16.gmra.mrb[0].mxu0 %v559
  %v706 = vpop.f32.mrb[0].mxu0
  %v707 = vadd.f32 0.0, %v706
  %v708 = vpop.f32.mrb[0].mxu0
  %v709 = vpop.f32.mrb[0].mxu0
  %v710 = vadd.f32 0.0, %v709
  %v711 = vpop.f32.mrb[0].mxu0
  %712 = vmatprep.mubr.bf16.mxu0 0
  %713 = vmatmul.mubr.bf16.gmra.mrb[0].mxu0 %v562
  %v714 = vpop.f32.mrb[0].mxu0
  %v715 = vadd.f32 0.0, %v714
  %v716 = vpop.f32.mrb[0].mxu0
  %v717 = vpop.f32.mrb[0].mxu0
  %v718 = vadd.f32 0.0, %v717
  %v719 = vpop.f32.mrb[0].mxu0
  %720 = vmatprep.mubr.bf16.mxu0 0
  %721 = vmatmul.mubr.bf16.gmra.mrb[0].mxu0 %v565
  %v722 = vpop.f32.mrb[0].mxu0
  %v723 = vadd.f32 0.0, %v722
  %v724 = vpop.f32.mrb[0].mxu0
  %v725 = vpop.f32.mrb[0].mxu0
  %v726 = vadd.f32 0.0, %v725
  %v727 = vpop.f32.mrb[0].mxu0
  %728 = vmatprep.mubr.bf16.mxu0 0
  %729 = vmatmul.mubr.bf16.gmra.mrb[0].mxu0 %v568
  %v730 = vpop.f32.mrb[0].mxu0
  %v731 = vadd.f32 0.0, %v730
  %v732 = vpop.f32.mrb[0].mxu0
  %v733 = vpop.f32.mrb[0].mxu0
  %v734 = vadd.f32 0.0, %v733
  %v735 = vpop.f32.mrb[0].mxu0
  %736 = vmatprep.mubr.bf16.mxu0 0
  %737 = vmatmul.mubr.bf16.gmra.mrb[0].mxu0 %v571
  %v738 = vpop.f32.mrb[0].mxu0
  %v739 = vadd.f32 0.0, %v738
  %v740 = vpop.f32.mrb[0].mxu0
  %v741 = vpop.f32.mrb[0].mxu0
  %v742 = vadd.f32 0.0, %v741
  %v743 = vpop.f32.mrb[0].mxu0
  %744 = vmatprep.mubr.bf16.mxu0 0
  %745 = vmatmul.mubr.bf16.gmra.mrb[0].mxu0 %v574
  %v746 = vpop.f32.mrb[0].mxu0
  %v747 = vadd.f32 0.0, %v746
  %v748 = vpop.f32.mrb[0].mxu0
  %v749 = vpop.f32.mrb[0].mxu0
  %v750 = vadd.f32 0.0, %v749
  %v751 = vpop.f32.mrb[0].mxu0
  %752 = vdwg.mxu0
  %v753 = vmax.f32 %v253, %v611
  %v754 = vmax.f32 %v256, %v614
  %v755 = vmax.f32 %v261, %v619
  %v756 = vmax.f32 %v264, %v622
  %v757 = vmax.f32 %v269, %v627
  %v758 = vmax.f32 %v272, %v630
  %v759 = vmax.f32 %v277, %v635
  %v760 = vmax.f32 %v280, %v638
  %v761 = vmax.f32 %v285, %v643
  %v762 = vmax.f32 %v288, %v646
  %v763 = vmax.f32 %v293, %v651
  %v764 = vmax.f32 %v296, %v654
  %v765 = vmax.f32 %v301, %v659
  %v766 = vmax.f32 %v304, %v662
  %v767 = vmax.f32 %v309, %v667
  %v768 = vmax.f32 %v312, %v670
  %v769 = vmax.f32 %v317, %v675
  %v770 = vmax.f32 %v320, %v678
  %v771 = vmax.f32 %v325, %v683
  %v772 = vmax.f32 %v328, %v686
  %v773 = vmax.f32 %v333, %v691
  %v774 = vmax.f32 %v336, %v694
  %v775 = vmax.f32 %v341, %v699
  %v776 = vmax.f32 %v344, %v702
  %v777 = vmax.f32 %v349, %v707
  %v778 = vmax.f32 %v352, %v710
  %v779 = vmax.f32 %v357, %v715
  %v780 = vmax.f32 %v360, %v718
  %v781 = vmax.f32 %v365, %v723
  %v782 = vmax.f32 %v368, %v726
  %v783 = vmax.f32 %v373, %v731
  %v784 = vmax.f32 %v376, %v734
  %v785 = vmax.f32 %v381, %v739
  %v786 = vmax.f32 %v384, %v742
  %v787 = vmax.f32 %v389, %v747
  %v788 = vmax.f32 %v392, %v750
  %s789 = scalar_lea.vmem %s0, 288
  %v790 = vld [vmem:[%s789] sm:$0xf]
  %v791 = vld [vmem:[%s789 + $0x4] sm:$0xf]
  %v792 = vld [vmem:[%s789 + $0x8] sm:$0xf]
  %v793 = vld [vmem:[%s789 + $0xc] sm:$0xf]
  %v794 = vld [vmem:[%s789 + $0x10] sm:$0xf]
  %v795 = vld [vmem:[%s789 + $0x14] sm:$0xf]
  %v796 = vld [vmem:[%s789 + $0x18] sm:$0xf]
  %v797 = vld [vmem:[%s789 + $0x1c] sm:$0xf]
  %v798 = vld [vmem:[%s789 + $0x20] sm:$0xf]
  %v799 = vld [vmem:[%s789 + $0x24] sm:$0xf]
  %v800 = vld [vmem:[%s789 + $0x28] sm:$0xf]
  %v801 = vld [vmem:[%s789 + $0x2c] sm:$0xf]
  %v802 = vld [vmem:[%s789 + $0x30] sm:$0xf]
  %v803 = vld [vmem:[%s789 + $0x34] sm:$0xf]
  %v804 = vld [vmem:[%s789 + $0x38] sm:$0xf]
  %v805 = vld [vmem:[%s789 + $0x3c] sm:$0xf]
  %v806 = vld [vmem:[%s789 + $0x40] sm:$0xf]
  %v807 = vld [vmem:[%s789 + $0x44] sm:$0xf]
  %v808 = vld [vmem:[%s789 + $0x48] sm:$0xf]
  %v809 = vld [vmem:[%s789 + $0x4c] sm:$0xf]
  %v810 = vld [vmem:[%s789 + $0x50] sm:$0xf]
  %v811 = vld [vmem:[%s789 + $0x54] sm:$0xf]
  %v812 = vld [vmem:[%s789 + $0x58] sm:$0xf]
  %v813 = vld [vmem:[%s789 + $0x5c] sm:$0xf]
  %v814 = vld [vmem:[%s789 + $0x60] sm:$0xf]
  %v815 = vld [vmem:[%s789 + $0x64] sm:$0xf]
  %v816 = vld [vmem:[%s789 + $0x68] sm:$0xf]
  %v817 = vld [vmem:[%s789 + $0x6c] sm:$0xf]
  %v818 = vld [vmem:[%s789 + $0x70] sm:$0xf]
  %v819 = vld [vmem:[%s789 + $0x74] sm:$0xf]
  %v820 = vld [vmem:[%s789 + $0x78] sm:$0xf]
  %v821 = vld [vmem:[%s789 + $0x7c] sm:$0xf]
  %v822 = vld [vmem:[%s789 + $0x80] sm:$0xf]
  %v823 = vld [vmem:[%s789 + $0x84] sm:$0xf]
  %v824 = vld [vmem:[%s789 + $0x88] sm:$0xf]
  %v825 = vld [vmem:[%s789 + $0x8c] sm:$0xf]
  %v862 = vunpack.c.l.b16 %v790
  %v863 = vunpack.c.l.b16 %v791
  %v864 = vunpack.c.l.b16 %v792
  %v865 = vunpack.c.l.b16 %v793
  %v866 = vunpack.c.l.b16 %v794
  %v867 = vunpack.c.l.b16 %v795
  %v868 = vunpack.c.l.b16 %v796
  %v869 = vunpack.c.l.b16 %v797
  %v870 = vunpack.c.l.b16 %v798
  %v871 = vunpack.c.l.b16 %v799
  %v872 = vunpack.c.l.b16 %v800
  %v873 = vunpack.c.l.b16 %v801
  %v874 = vunpack.c.l.b16 %v802
  %v875 = vunpack.c.l.b16 %v803
  %v876 = vunpack.c.l.b16 %v804
  %v877 = vunpack.c.l.b16 %v805
  %v878 = vunpack.c.l.b16 %v806
  %v879 = vunpack.c.l.b16 %v807
  %v880 = vunpack.c.l.b16 %v808
  %v881 = vunpack.c.l.b16 %v809
  %v882 = vunpack.c.l.b16 %v810
  %v883 = vunpack.c.l.b16 %v811
  %v884 = vunpack.c.l.b16 %v812
  %v885 = vunpack.c.l.b16 %v813
  %v886 = vunpack.c.l.b16 %v814
  %v887 = vunpack.c.l.b16 %v815
  %v888 = vunpack.c.l.b16 %v816
  %v889 = vunpack.c.l.b16 %v817
  %v890 = vunpack.c.l.b16 %v818
  %v891 = vunpack.c.l.b16 %v819
  %v892 = vunpack.c.l.b16 %v820
  %v893 = vunpack.c.l.b16 %v821
  %v894 = vunpack.c.l.b16 %v822
  %v895 = vunpack.c.l.b16 %v823
  %v896 = vunpack.c.l.b16 %v824
  %v897 = vunpack.c.l.b16 %v825
  %v898 = vpack.c.b16 %v863, %v862
  %v899 = vpack.c.b16 %v865, %v864
  %v900 = vpack.c.b16 %v867, %v866
  %v901 = vpack.c.b16 %v869, %v868
  %v902 = vpack.c.b16 %v871, %v870
  %v903 = vpack.c.b16 %v873, %v872
  %v904 = vpack.c.b16 %v875, %v874
  %v905 = vpack.c.b16 %v877, %v876
  %v906 = vpack.c.b16 %v879, %v878
  %v907 = vpack.c.b16 %v881, %v880
  %v908 = vpack.c.b16 %v883, %v882
  %v909 = vpack.c.b16 %v885, %v884
  %v910 = vpack.c.b16 %v887, %v886
  %v911 = vpack.c.b16 %v889, %v888
  %v912 = vpack.c.b16 %v891, %v890
  %v913 = vpack.c.b16 %v893, %v892
  %v914 = vpack.c.b16 %v895, %v894
  %v915 = vpack.c.b16 %v897, %v896
  %v917 = vsel %vm156, %v898, 0
  %v920 = vsel %vm156, %v899, 0
  %v923 = vsel %vm156, %v900, 0
  %v926 = vsel %vm156, %v901, 0
  %v929 = vsel %vm156, %v902, 0
  %v932 = vsel %vm156, %v903, 0
  %v935 = vsel %vm156, %v904, 0
  %v938 = vsel %vm156, %v905, 0
  %v941 = vsel %vm156, %v906, 0
  %v944 = vsel %vm156, %v907, 0
  %v947 = vsel %vm156, %v908, 0
  %v950 = vsel %vm156, %v909, 0
  %v953 = vsel %vm156, %v910, 0
  %v956 = vsel %vm156, %v911, 0
  %v959 = vsel %vm156, %v912, 0
  %v962 = vsel %vm156, %v913, 0
  %v965 = vsel %vm156, %v914, 0
  %v968 = vsel %vm156, %v915, 0
  %970 = vmatprep.subr.bf16.mxu0 0
  %971 = vmatpush1.bf16.msra.mxu0 %v153
  %972 = vmatprep.subr.bf16.mxu0 0
  %973 = vmatpush1.bf16.msra.mxu0 %v216
  %974 = vmatprep.subr.bf16.mxu0 0
  %975 = vmatpush1.bf16.msra.mxu0 0
  %976 = vmatprep.subr.bf16.mxu0 0
  %977 = vmatpush1.bf16.msra.mxu0 0
  %978 = vmatprep.subr.bf16.mxu0 0
  %979 = vmatpush1.bf16.msra.mxu0 0
  %980 = vmatprep.subr.bf16.mxu0 0
  %981 = vmatpush1.bf16.msra.mxu0 0
  %982 = vmatprep.subr.bf16.mxu0 0
  %983 = vmatpush1.bf16.msra.mxu0 0
  %984 = vmatprep.subr.bf16.mxu0 0
  %985 = vmatpush1.bf16.msra.mxu0 0
  %986 = vmatprep.subr.bf16.mxu0 0
  %987 = vmatpush1.bf16.msra.mxu0 0
  %988 = vmatprep.subr.bf16.mxu0 0
  %989 = vmatpush1.bf16.msra.mxu0 0
  %990 = vmatprep.subr.bf16.mxu0 0
  %991 = vmatpush1.bf16.msra.mxu0 0
  %992 = vmatprep.subr.bf16.mxu0 0
  %993 = vmatpush1.bf16.msra.mxu0 0
  %994 = vmatprep.subr.bf16.mxu0 0
  %995 = vmatpush1.bf16.msra.mxu0 0
  %996 = vmatprep.subr.bf16.mxu0 0
  %997 = vmatpush1.bf16.msra.mxu0 0
  %998 = vmatprep.subr.bf16.mxu0 0
  %999 = vmatpush1.bf16.msra.mxu0 0
  %1000 = vmatprep.subr.bf16.mxu0 0
  %1001 = vmatpush1.bf16.msra.mxu0 0
  %1002 = vmatprep.mubr.bf16.mxu0 0
  %1003 = vmatmul.mubr.bf16.gmra.mrb[0].mxu0 %v917
  %v1004 = vpop.f32.mrb[0].mxu0
  %v1005 = vadd.f32 0.0, %v1004
  %v1006 = vpop.f32.mrb[0].mxu0
  %v1007 = vpop.f32.mrb[0].mxu0
  %v1008 = vadd.f32 0.0, %v1007
  %v1009 = vpop.f32.mrb[0].mxu0
  %1010 = vmatprep.mubr.bf16.mxu0 0
  %1011 = vmatmul.mubr.bf16.gmra.mrb[0].mxu0 %v920
  %v1012 = vpop.f32.mrb[0].mxu0
  %v1013 = vadd.f32 0.0, %v1012
  %v1014 = vpop.f32.mrb[0].mxu0
  %v1015 = vpop.f32.mrb[0].mxu0
  %v1016 = vadd.f32 0.0, %v1015
  %v1017 = vpop.f32.mrb[0].mxu0
  %1018 = vmatprep.mubr.bf16.mxu0 0
  %1019 = vmatmul.mubr.bf16.gmra.mrb[0].mxu0 %v923
  %v1020 = vpop.f32.mrb[0].mxu0
  %v1021 = vadd.f32 0.0, %v1020
  %v1022 = vpop.f32.mrb[0].mxu0
  %v1023 = vpop.f32.mrb[0].mxu0
  %v1024 = vadd.f32 0.0, %v1023
  %v1025 = vpop.f32.mrb[0].mxu0
  %1026 = vmatprep.mubr.bf16.mxu0 0
  %1027 = vmatmul.mubr.bf16.gmra.mrb[0].mxu0 %v926
  %v1028 = vpop.f32.mrb[0].mxu0
  %v1029 = vadd.f32 0.0, %v1028
  %v1030 = vpop.f32.mrb[0].mxu0
  %v1031 = vpop.f32.mrb[0].mxu0
  %v1032 = vadd.f32 0.0, %v1031
  %v1033 = vpop.f32.mrb[0].mxu0
  %1034 = vmatprep.mubr.bf16.mxu0 0
  %1035 = vmatmul.mubr.bf16.gmra.mrb[0].mxu0 %v929
  %v1036 = vpop.f32.mrb[0].mxu0
  %v1037 = vadd.f32 0.0, %v1036
  %v1038 = vpop.f32.mrb[0].mxu0
  %v1039 = vpop.f32.mrb[0].mxu0
  %v1040 = vadd.f32 0.0, %v1039
  %v1041 = vpop.f32.mrb[0].mxu0
  %1042 = vmatprep.mubr.bf16.mxu0 0
  %1043 = vmatmul.mubr.bf16.gmra.mrb[0].mxu0 %v932
  %v1044 = vpop.f32.mrb[0].mxu0
  %v1045 = vadd.f32 0.0, %v1044
  %v1046 = vpop.f32.mrb[0].mxu0
  %v1047 = vpop.f32.mrb[0].mxu0
  %v1048 = vadd.f32 0.0, %v1047
  %v1049 = vpop.f32.mrb[0].mxu0
  %1050 = vmatprep.mubr.bf16.mxu0 0
  %1051 = vmatmul.mubr.bf16.gmra.mrb[0].mxu0 %v935
  %v1052 = vpop.f32.mrb[0].mxu0
  %v1053 = vadd.f32 0.0, %v1052
  %v1054 = vpop.f32.mrb[0].mxu0
  %v1055 = vpop.f32.mrb[0].mxu0
  %v1056 = vadd.f32 0.0, %v1055
  %v1057 = vpop.f32.mrb[0].mxu0
  %1058 = vmatprep.mubr.bf16.mxu0 0
  %1059 = vmatmul.mubr.bf16.gmra.mrb[0].mxu0 %v938
  %v1060 = vpop.f32.mrb[0].mxu0
  %v1061 = vadd.f32 0.0, %v1060
  %v1062 = vpop.f32.mrb[0].mxu0
  %v1063 = vpop.f32.mrb[0].mxu0
  %v1064 = vadd.f32 0.0, %v1063
  %v1065 = vpop.f32.mrb[0].mxu0
  %1066 = vmatprep.mubr.bf16.mxu0 0
  %1067 = vmatmul.mubr.bf16.gmra.mrb[0].mxu0 %v941
  %v1068 = vpop.f32.mrb[0].mxu0
  %v1069 = vadd.f32 0.0, %v1068
  %v1070 = vpop.f32.mrb[0].mxu0
  %v1071 = vpop.f32.mrb[0].mxu0
  %v1072 = vadd.f32 0.0, %v1071
  %v1073 = vpop.f32.mrb[0].mxu0
  %1074 = vmatprep.mubr.bf16.mxu0 0
  %1075 = vmatmul.mubr.bf16.gmra.mrb[0].mxu0 %v944
  %v1076 = vpop.f32.mrb[0].mxu0
  %v1077 = vadd.f32 0.0, %v1076
  %v1078 = vpop.f32.mrb[0].mxu0
  %v1079 = vpop.f32.mrb[0].mxu0
  %v1080 = vadd.f32 0.0, %v1079
  %v1081 = vpop.f32.mrb[0].mxu0
  %1082 = vmatprep.mubr.bf16.mxu0 0
  %1083 = vmatmul.mubr.bf16.gmra.mrb[0].mxu0 %v947
  %v1084 = vpop.f32.mrb[0].mxu0
  %v1085 = vadd.f32 0.0, %v1084
  %v1086 = vpop.f32.mrb[0].mxu0
  %v1087 = vpop.f32.mrb[0].mxu0
  %v1088 = vadd.f32 0.0, %v1087
  %v1089 = vpop.f32.mrb[0].mxu0
  %1090 = vmatprep.mubr.bf16.mxu0 0
  %1091 = vmatmul.mubr.bf16.gmra.mrb[0].mxu0 %v950
  %v1092 = vpop.f32.mrb[0].mxu0
  %v1093 = vadd.f32 0.0, %v1092
  %v1094 = vpop.f32.mrb[0].mxu0
  %v1095 = vpop.f32.mrb[0].mxu0
  %v1096 = vadd.f32 0.0, %v1095
  %v1097 = vpop.f32.mrb[0].mxu0
  %1098 = vmatprep.mubr.bf16.mxu0 0
  %1099 = vmatmul.mubr.bf16.gmra.mrb[0].mxu0 %v953
  %v1100 = vpop.f32.mrb[0].mxu0
  %v1101 = vadd.f32 0.0, %v1100
  %v1102 = vpop.f32.mrb[0].mxu0
  %v1103 = vpop.f32.mrb[0].mxu0
  %v1104 = vadd.f32 0.0, %v1103
  %v1105 = vpop.f32.mrb[0].mxu0
  %1106 = vmatprep.mubr.bf16.mxu0 0
  %1107 = vmatmul.mubr.bf16.gmra.mrb[0].mxu0 %v956
  %v1108 = vpop.f32.mrb[0].mxu0
  %v1109 = vadd.f32 0.0, %v1108
  %v1110 = vpop.f32.mrb[0].mxu0
  %v1111 = vpop.f32.mrb[0].mxu0
  %v1112 = vadd.f32 0.0, %v1111
  %v1113 = vpop.f32.mrb[0].mxu0
  %1114 = vmatprep.mubr.bf16.mxu0 0
  %1115 = vmatmul.mubr.bf16.gmra.mrb[0].mxu0 %v959
  %v1116 = vpop.f32.mrb[0].mxu0
  %v1117 = vadd.f32 0.0, %v1116
  %v1118 = vpop.f32.mrb[0].mxu0
  %v1119 = vpop.f32.mrb[0].mxu0
  %v1120 = vadd.f32 0.0, %v1119
  %v1121 = vpop.f32.mrb[0].mxu0
  %1122 = vmatprep.mubr.bf16.mxu0 0
  %1123 = vmatmul.mubr.bf16.gmra.mrb[0].mxu0 %v962
  %v1124 = vpop.f32.mrb[0].mxu0
  %v1125 = vadd.f32 0.0, %v1124
  %v1126 = vpop.f32.mrb[0].mxu0
  %v1127 = vpop.f32.mrb[0].mxu0
  %v1128 = vadd.f32 0.0, %v1127
  %v1129 = vpop.f32.mrb[0].mxu0
  %1130 = vmatprep.mubr.bf16.mxu0 0
  %1131 = vmatmul.mubr.bf16.gmra.mrb[0].mxu0 %v965
  %v1132 = vpop.f32.mrb[0].mxu0
  %v1133 = vadd.f32 0.0, %v1132
  %v1134 = vpop.f32.mrb[0].mxu0
  %v1135 = vpop.f32.mrb[0].mxu0
  %v1136 = vadd.f32 0.0, %v1135
  %v1137 = vpop.f32.mrb[0].mxu0
  %1138 = vmatprep.mubr.bf16.mxu0 0
  %1139 = vmatmul.mubr.bf16.gmra.mrb[0].mxu0 %v968
  %v1140 = vpop.f32.mrb[0].mxu0
  %v1141 = vadd.f32 0.0, %v1140
  %v1142 = vpop.f32.mrb[0].mxu0
  %v1143 = vpop.f32.mrb[0].mxu0
  %v1144 = vadd.f32 0.0, %v1143
  %v1145 = vpop.f32.mrb[0].mxu0
  %1146 = vdwg.mxu0
  %v1147 = vmax.f32 %v753, %v1005
  %v1148 = vmax.f32 %v754, %v1008
  %v1149 = vmax.f32 %v755, %v1013
  %v1150 = vmax.f32 %v756, %v1016
  %v1151 = vmax.f32 %v757, %v1021
  %v1152 = vmax.f32 %v758, %v1024
  %v1153 = vmax.f32 %v759, %v1029
  %v1154 = vmax.f32 %v760, %v1032
  %v1155 = vmax.f32 %v761, %v1037
  %v1156 = vmax.f32 %v762, %v1040
  %v1157 = vmax.f32 %v763, %v1045
  %v1158 = vmax.f32 %v764, %v1048
  %v1159 = vmax.f32 %v765, %v1053
  %v1160 = vmax.f32 %v766, %v1056
  %v1161 = vmax.f32 %v767, %v1061
  %v1162 = vmax.f32 %v768, %v1064
  %v1163 = vmax.f32 %v769, %v1069
  %v1164 = vmax.f32 %v770, %v1072
  %v1165 = vmax.f32 %v771, %v1077
  %v1166 = vmax.f32 %v772, %v1080
  %v1167 = vmax.f32 %v773, %v1085
  %v1168 = vmax.f32 %v774, %v1088
  %v1169 = vmax.f32 %v775, %v1093
  %v1170 = vmax.f32 %v776, %v1096
  %v1171 = vmax.f32 %v777, %v1101
  %v1172 = vmax.f32 %v778, %v1104
  %v1173 = vmax.f32 %v779, %v1109
  %v1174 = vmax.f32 %v780, %v1112
  %v1175 = vmax.f32 %v781, %v1117
  %v1176 = vmax.f32 %v782, %v1120
  %v1177 = vmax.f32 %v783, %v1125
  %v1178 = vmax.f32 %v784, %v1128
  %v1179 = vmax.f32 %v785, %v1133
  %v1180 = vmax.f32 %v786, %v1136
  %v1181 = vmax.f32 %v787, %v1141
  %v1182 = vmax.f32 %v788, %v1144
  %s1183 = scalar_lea.vmem %s0, 432
  %v1184 = vld [vmem:[%s1183] sm:$0xf]
  %v1185 = vld [vmem:[%s1183 + $0x4] sm:$0xf]
  %v1186 = vld [vmem:[%s1183 + $0x8] sm:$0xf]
  %v1187 = vld [vmem:[%s1183 + $0xc] sm:$0xf]
  %v1188 = vld [vmem:[%s1183 + $0x10] sm:$0xf]
  %v1189 = vld [vmem:[%s1183 + $0x14] sm:$0xf]
  %v1190 = vld [vmem:[%s1183 + $0x18] sm:$0xf]
  %v1191 = vld [vmem:[%s1183 + $0x1c] sm:$0xf]
  %v1192 = vld [vmem:[%s1183 + $0x20] sm:$0xf]
  %v1193 = vld [vmem:[%s1183 + $0x24] sm:$0xf]
  %v1194 = vld [vmem:[%s1183 + $0x28] sm:$0xf]
  %v1195 = vld [vmem:[%s1183 + $0x2c] sm:$0xf]
  %v1196 = vld [vmem:[%s1183 + $0x30] sm:$0xf]
  %v1197 = vld [vmem:[%s1183 + $0x34] sm:$0xf]
  %v1198 = vld [vmem:[%s1183 + $0x38] sm:$0xf]
  %v1199 = vld [vmem:[%s1183 + $0x3c] sm:$0xf]
  %v1200 = vld [vmem:[%s1183 + $0x40] sm:$0xf]
  %v1201 = vld [vmem:[%s1183 + $0x44] sm:$0xf]
  %v1202 = vld [vmem:[%s1183 + $0x48] sm:$0xf]
  %v1203 = vld [vmem:[%s1183 + $0x4c] sm:$0xf]
  %v1204 = vld [vmem:[%s1183 + $0x50] sm:$0xf]
  %v1205 = vld [vmem:[%s1183 + $0x54] sm:$0xf]
  %v1206 = vld [vmem:[%s1183 + $0x58] sm:$0xf]
  %v1207 = vld [vmem:[%s1183 + $0x5c] sm:$0xf]
  %v1208 = vld [vmem:[%s1183 + $0x60] sm:$0xf]
  %v1209 = vld [vmem:[%s1183 + $0x64] sm:$0xf]
  %v1210 = vld [vmem:[%s1183 + $0x68] sm:$0xf]
  %v1211 = vld [vmem:[%s1183 + $0x6c] sm:$0xf]
  %v1212 = vld [vmem:[%s1183 + $0x70] sm:$0xf]
  %v1213 = vld [vmem:[%s1183 + $0x74] sm:$0xf]
  %v1214 = vld [vmem:[%s1183 + $0x78] sm:$0xf]
  %v1215 = vld [vmem:[%s1183 + $0x7c] sm:$0xf]
  %v1216 = vld [vmem:[%s1183 + $0x80] sm:$0xf]
  %v1217 = vld [vmem:[%s1183 + $0x84] sm:$0xf]
  %v1218 = vld [vmem:[%s1183 + $0x88] sm:$0xf]
  %v1219 = vld [vmem:[%s1183 + $0x8c] sm:$0xf]
  %v1256 = vunpack.c.l.b16 %v1184
  %v1257 = vunpack.c.l.b16 %v1185
  %v1258 = vunpack.c.l.b16 %v1186
  %v1259 = vunpack.c.l.b16 %v1187
  %v1260 = vunpack.c.l.b16 %v1188
  %v1261 = vunpack.c.l.b16 %v1189
  %v1262 = vunpack.c.l.b16 %v1190
  %v1263 = vunpack.c.l.b16 %v1191
  %v1264 = vunpack.c.l.b16 %v1192
  %v1265 = vunpack.c.l.b16 %v1193
  %v1266 = vunpack.c.l.b16 %v1194
  %v1267 = vunpack.c.l.b16 %v1195
  %v1268 = vunpack.c.l.b16 %v1196
  %v1269 = vunpack.c.l.b16 %v1197
  %v1270 = vunpack.c.l.b16 %v1198
  %v1271 = vunpack.c.l.b16 %v1199
  %v1272 = vunpack.c.l.b16 %v1200
  %v1273 = vunpack.c.l.b16 %v1201
  %v1274 = vunpack.c.l.b16 %v1202
  %v1275 = vunpack.c.l.b16 %v1203
  %v1276 = vunpack.c.l.b16 %v1204
  %v1277 = vunpack.c.l.b16 %v1205
  %v1278 = vunpack.c.l.b16 %v1206
  %v1279 = vunpack.c.l.b16 %v1207
  %v1280 = vunpack.c.l.b16 %v1208
  %v1281 = vunpack.c.l.b16 %v1209
  %v1282 = vunpack.c.l.b16 %v1210
  %v1283 = vunpack.c.l.b16 %v1211
  %v1284 = vunpack.c.l.b16 %v1212
  %v1285 = vunpack.c.l.b16 %v1213
  %v1286 = vunpack.c.l.b16 %v1214
  %v1287 = vunpack.c.l.b16 %v1215
  %v1288 = vunpack.c.l.b16 %v1216
  %v1289 = vunpack.c.l.b16 %v1217
  %v1290 = vunpack.c.l.b16 %v1218
  %v1291 = vunpack.c.l.b16 %v1219
  %v1292 = vpack.c.b16 %v1257, %v1256
  %v1293 = vpack.c.b16 %v1259, %v1258
  %v1294 = vpack.c.b16 %v1261, %v1260
  %v1295 = vpack.c.b16 %v1263, %v1262
  %v1296 = vpack.c.b16 %v1265, %v1264
  %v1297 = vpack.c.b16 %v1267, %v1266
  %v1298 = vpack.c.b16 %v1269, %v1268
  %v1299 = vpack.c.b16 %v1271, %v1270
  %v1300 = vpack.c.b16 %v1273, %v1272
  %v1301 = vpack.c.b16 %v1275, %v1274
  %v1302 = vpack.c.b16 %v1277, %v1276
  %v1303 = vpack.c.b16 %v1279, %v1278
  %v1304 = vpack.c.b16 %v1281, %v1280
  %v1305 = vpack.c.b16 %v1283, %v1282
  %v1306 = vpack.c.b16 %v1285, %v1284
  %v1307 = vpack.c.b16 %v1287, %v1286
  %v1308 = vpack.c.b16 %v1289, %v1288
  %v1309 = vpack.c.b16 %v1291, %v1290
  %v1311 = vsel %vm156, %v1292, 0
  %v1314 = vsel %vm156, %v1293, 0
  %v1317 = vsel %vm156, %v1294, 0
  %v1320 = vsel %vm156, %v1295, 0
  %v1323 = vsel %vm156, %v1296, 0
  %v1326 = vsel %vm156, %v1297, 0
  %v1329 = vsel %vm156, %v1298, 0
  %v1332 = vsel %vm156, %v1299, 0
  %v1335 = vsel %vm156, %v1300, 0
  %v1338 = vsel %vm156, %v1301, 0
  %v1341 = vsel %vm156, %v1302, 0
  %v1344 = vsel %vm156, %v1303, 0
  %v1347 = vsel %vm156, %v1304, 0
  %v1350 = vsel %vm156, %v1305, 0
  %v1353 = vsel %vm156, %v1306, 0
  %v1356 = vsel %vm156, %v1307, 0
  %v1359 = vsel %vm156, %v1308, 0
  %v1362 = vsel %vm156, %v1309, 0
  %1364 = vmatprep.subr.bf16.mxu0 0
  %1365 = vmatpush1.bf16.msra.mxu0 %v153
  %1366 = vmatprep.subr.bf16.mxu0 0
  %1367 = vmatpush1.bf16.msra.mxu0 %v216
  %1368 = vmatprep.subr.bf16.mxu0 0
  %1369 = vmatpush1.bf16.msra.mxu0 0
  %1370 = vmatprep.subr.bf16.mxu0 0
  %1371 = vmatpush1.bf16.msra.mxu0 0
  %1372 = vmatprep.subr.bf16.mxu0 0
  %1373 = vmatpush1.bf16.msra.mxu0 0
  %1374 = vmatprep.subr.bf16.mxu0 0
  %1375 = vmatpush1.bf16.msra.mxu0 0
  %1376 = vmatprep.subr.bf16.mxu0 0
  %1377 = vmatpush1.bf16.msra.mxu0 0
  %1378 = vmatprep.subr.bf16.mxu0 0
  %1379 = vmatpush1.bf16.msra.mxu0 0
  %1380 = vmatprep.subr.bf16.mxu0 0
  %1381 = vmatpush1.bf16.msra.mxu0 0
  %1382 = vmatprep.subr.bf16.mxu0 0
  %1383 = vmatpush1.bf16.msra.mxu0 0
  %1384 = vmatprep.subr.bf16.mxu0 0
  %1385 = vmatpush1.bf16.msra.mxu0 0
  %1386 = vmatprep.subr.bf16.mxu0 0
  %1387 = vmatpush1.bf16.msra.mxu0 0
  %1388 = vmatprep.subr.bf16.mxu0 0
  %1389 = vmatpush1.bf16.msra.mxu0 0
  %1390 = vmatprep.subr.bf16.mxu0 0
  %1391 = vmatpush1.bf16.msra.mxu0 0
  %1392 = vmatprep.subr.bf16.mxu0 0
  %1393 = vmatpush1.bf16.msra.mxu0 0
  %1394 = vmatprep.subr.bf16.mxu0 0
  %1395 = vmatpush1.bf16.msra.mxu0 0
  %1396 = vmatprep.mubr.bf16.mxu0 0
  %1397 = vmatmul.mubr.bf16.gmra.mrb[0].mxu0 %v1311
  %v1398 = vpop.f32.mrb[0].mxu0
  %v1399 = vadd.f32 0.0, %v1398
  %v1400 = vpop.f32.mrb[0].mxu0
  %v1401 = vpop.f32.mrb[0].mxu0
  %v1402 = vadd.f32 0.0, %v1401
  %v1403 = vpop.f32.mrb[0].mxu0
  %1404 = vmatprep.mubr.bf16.mxu0 0
  %1405 = vmatmul.mubr.bf16.gmra.mrb[0].mxu0 %v1314
  %v1406 = vpop.f32.mrb[0].mxu0
  %v1407 = vadd.f32 0.0, %v1406
  %v1408 = vpop.f32.mrb[0].mxu0
  %v1409 = vpop.f32.mrb[0].mxu0
  %v1410 = vadd.f32 0.0, %v1409
  %v1411 = vpop.f32.mrb[0].mxu0
  %1412 = vmatprep.mubr.bf16.mxu0 0
  %1413 = vmatmul.mubr.bf16.gmra.mrb[0].mxu0 %v1317
  %v1414 = vpop.f32.mrb[0].mxu0
  %v1415 = vadd.f32 0.0, %v1414
  %v1416 = vpop.f32.mrb[0].mxu0
  %v1417 = vpop.f32.mrb[0].mxu0
  %v1418 = vadd.f32 0.0, %v1417
  %v1419 = vpop.f32.mrb[0].mxu0
  %1420 = vmatprep.mubr.bf16.mxu0 0
  %1421 = vmatmul.mubr.bf16.gmra.mrb[0].mxu0 %v1320
  %v1422 = vpop.f32.mrb[0].mxu0
  %v1423 = vadd.f32 0.0, %v1422
  %v1424 = vpop.f32.mrb[0].mxu0
  %v1425 = vpop.f32.mrb[0].mxu0
  %v1426 = vadd.f32 0.0, %v1425
  %v1427 = vpop.f32.mrb[0].mxu0
  %1428 = vmatprep.mubr.bf16.mxu0 0
  %1429 = vmatmul.mubr.bf16.gmra.mrb[0].mxu0 %v1323
  %v1430 = vpop.f32.mrb[0].mxu0
  %v1431 = vadd.f32 0.0, %v1430
  %v1432 = vpop.f32.mrb[0].mxu0
  %v1433 = vpop.f32.mrb[0].mxu0
  %v1434 = vadd.f32 0.0, %v1433
  %v1435 = vpop.f32.mrb[0].mxu0
  %1436 = vmatprep.mubr.bf16.mxu0 0
  %1437 = vmatmul.mubr.bf16.gmra.mrb[0].mxu0 %v1326
  %v1438 = vpop.f32.mrb[0].mxu0
  %v1439 = vadd.f32 0.0, %v1438
  %v1440 = vpop.f32.mrb[0].mxu0
  %v1441 = vpop.f32.mrb[0].mxu0
  %v1442 = vadd.f32 0.0, %v1441
  %v1443 = vpop.f32.mrb[0].mxu0
  %1444 = vmatprep.mubr.bf16.mxu0 0
  %1445 = vmatmul.mubr.bf16.gmra.mrb[0].mxu0 %v1329
  %v1446 = vpop.f32.mrb[0].mxu0
  %v1447 = vadd.f32 0.0, %v1446
  %v1448 = vpop.f32.mrb[0].mxu0
  %v1449 = vpop.f32.mrb[0].mxu0
  %v1450 = vadd.f32 0.0, %v1449
  %v1451 = vpop.f32.mrb[0].mxu0
  %1452 = vmatprep.mubr.bf16.mxu0 0
  %1453 = vmatmul.mubr.bf16.gmra.mrb[0].mxu0 %v1332
  %v1454 = vpop.f32.mrb[0].mxu0
  %v1455 = vadd.f32 0.0, %v1454
  %v1456 = vpop.f32.mrb[0].mxu0
  %v1457 = vpop.f32.mrb[0].mxu0
  %v1458 = vadd.f32 0.0, %v1457
  %v1459 = vpop.f32.mrb[0].mxu0
  %1460 = vmatprep.mubr.bf16.mxu0 0
  %1461 = vmatmul.mubr.bf16.gmra.mrb[0].mxu0 %v1335
  %v1462 = vpop.f32.mrb[0].mxu0
  %v1463 = vadd.f32 0.0, %v1462
  %v1464 = vpop.f32.mrb[0].mxu0
  %v1465 = vpop.f32.mrb[0].mxu0
  %v1466 = vadd.f32 0.0, %v1465
  %v1467 = vpop.f32.mrb[0].mxu0
  %1468 = vmatprep.mubr.bf16.mxu0 0
  %1469 = vmatmul.mubr.bf16.gmra.mrb[0].mxu0 %v1338
  %v1470 = vpop.f32.mrb[0].mxu0
  %v1471 = vadd.f32 0.0, %v1470
  %v1472 = vpop.f32.mrb[0].mxu0
  %v1473 = vpop.f32.mrb[0].mxu0
  %v1474 = vadd.f32 0.0, %v1473
  %v1475 = vpop.f32.mrb[0].mxu0
  %1476 = vmatprep.mubr.bf16.mxu0 0
  %1477 = vmatmul.mubr.bf16.gmra.mrb[0].mxu0 %v1341
  %v1478 = vpop.f32.mrb[0].mxu0
  %v1479 = vadd.f32 0.0, %v1478
  %v1480 = vpop.f32.mrb[0].mxu0
  %v1481 = vpop.f32.mrb[0].mxu0
  %v1482 = vadd.f32 0.0, %v1481
  %v1483 = vpop.f32.mrb[0].mxu0
  %1484 = vmatprep.mubr.bf16.mxu0 0
  %1485 = vmatmul.mubr.bf16.gmra.mrb[0].mxu0 %v1344
  %v1486 = vpop.f32.mrb[0].mxu0
  %v1487 = vadd.f32 0.0, %v1486
  %v1488 = vpop.f32.mrb[0].mxu0
  %v1489 = vpop.f32.mrb[0].mxu0
  %v1490 = vadd.f32 0.0, %v1489
  %v1491 = vpop.f32.mrb[0].mxu0
  %1492 = vmatprep.mubr.bf16.mxu0 0
  %1493 = vmatmul.mubr.bf16.gmra.mrb[0].mxu0 %v1347
  %v1494 = vpop.f32.mrb[0].mxu0
  %v1495 = vadd.f32 0.0, %v1494
  %v1496 = vpop.f32.mrb[0].mxu0
  %v1497 = vpop.f32.mrb[0].mxu0
  %v1498 = vadd.f32 0.0, %v1497
  %v1499 = vpop.f32.mrb[0].mxu0
  %1500 = vmatprep.mubr.bf16.mxu0 0
  %1501 = vmatmul.mubr.bf16.gmra.mrb[0].mxu0 %v1350
  %v1502 = vpop.f32.mrb[0].mxu0
  %v1503 = vadd.f32 0.0, %v1502
  %v1504 = vpop.f32.mrb[0].mxu0
  %v1505 = vpop.f32.mrb[0].mxu0
  %v1506 = vadd.f32 0.0, %v1505
  %v1507 = vpop.f32.mrb[0].mxu0
  %1508 = vmatprep.mubr.bf16.mxu0 0
  %1509 = vmatmul.mubr.bf16.gmra.mrb[0].mxu0 %v1353
  %v1510 = vpop.f32.mrb[0].mxu0
  %v1511 = vadd.f32 0.0, %v1510
  %v1512 = vpop.f32.mrb[0].mxu0
  %v1513 = vpop.f32.mrb[0].mxu0
  %v1514 = vadd.f32 0.0, %v1513
  %v1515 = vpop.f32.mrb[0].mxu0
  %1516 = vmatprep.mubr.bf16.mxu0 0
  %1517 = vmatmul.mubr.bf16.gmra.mrb[0].mxu0 %v1356
  %v1518 = vpop.f32.mrb[0].mxu0
  %v1519 = vadd.f32 0.0, %v1518
  %v1520 = vpop.f32.mrb[0].mxu0
  %v1521 = vpop.f32.mrb[0].mxu0
  %v1522 = vadd.f32 0.0, %v1521
  %v1523 = vpop.f32.mrb[0].mxu0
  %1524 = vmatprep.mubr.bf16.mxu0 0
  %1525 = vmatmul.mubr.bf16.gmra.mrb[0].mxu0 %v1359
  %v1526 = vpop.f32.mrb[0].mxu0
  %v1527 = vadd.f32 0.0, %v1526
  %v1528 = vpop.f32.mrb[0].mxu0
  %v1529 = vpop.f32.mrb[0].mxu0
  %v1530 = vadd.f32 0.0, %v1529
  %v1531 = vpop.f32.mrb[0].mxu0
  %1532 = vmatprep.mubr.bf16.mxu0 0
  %1533 = vmatmul.mubr.bf16.gmra.mrb[0].mxu0 %v1362
  %v1534 = vpop.f32.mrb[0].mxu0
  %v1535 = vadd.f32 0.0, %v1534
  %v1536 = vpop.f32.mrb[0].mxu0
  %v1537 = vpop.f32.mrb[0].mxu0
  %v1538 = vadd.f32 0.0, %v1537
  %v1539 = vpop.f32.mrb[0].mxu0
  %1540 = vdwg.mxu0
  %v1541 = vmax.f32 %v1147, %v1399
  %v1542 = vmax.f32 %v1148, %v1402
  %v1543 = vmax.f32 %v1149, %v1407
  %v1544 = vmax.f32 %v1150, %v1410
  %v1545 = vmax.f32 %v1151, %v1415
  %v1546 = vmax.f32 %v1152, %v1418
  %v1547 = vmax.f32 %v1153, %v1423
  %v1548 = vmax.f32 %v1154, %v1426
  %v1549 = vmax.f32 %v1155, %v1431
  %v1550 = vmax.f32 %v1156, %v1434
  %v1551 = vmax.f32 %v1157, %v1439
  %v1552 = vmax.f32 %v1158, %v1442
  %v1553 = vmax.f32 %v1159, %v1447
  %v1554 = vmax.f32 %v1160, %v1450
  %v1555 = vmax.f32 %v1161, %v1455
  %v1556 = vmax.f32 %v1162, %v1458
  %v1557 = vmax.f32 %v1163, %v1463
  %v1558 = vmax.f32 %v1164, %v1466
  %v1559 = vmax.f32 %v1165, %v1471
  %v1560 = vmax.f32 %v1166, %v1474
  %v1561 = vmax.f32 %v1167, %v1479
  %v1562 = vmax.f32 %v1168, %v1482
  %v1563 = vmax.f32 %v1169, %v1487
  %v1564 = vmax.f32 %v1170, %v1490
  %v1565 = vmax.f32 %v1171, %v1495
  %v1566 = vmax.f32 %v1172, %v1498
  %v1567 = vmax.f32 %v1173, %v1503
  %v1568 = vmax.f32 %v1174, %v1506
  %v1569 = vmax.f32 %v1175, %v1511
  %v1570 = vmax.f32 %v1176, %v1514
  %v1571 = vmax.f32 %v1177, %v1519
  %v1572 = vmax.f32 %v1178, %v1522
  %v1573 = vmax.f32 %v1179, %v1527
  %v1574 = vmax.f32 %v1180, %v1530
  %v1575 = vmax.f32 %v1181, %v1535
  %v1576 = vmax.f32 %v1182, %v1538
  %v1577 = vld [vmem:[%s2] sm:$0x1]
  %v1579 = vlaneseq
  %v1580 = vshrl.u32 %v1579, 7
  %v1581 = vsub.s32 0, %v1580
  %v1582 = vrot.slane %v1577, %v1581
  %v1584 = vadd.f32 %v1541, %v1582
  %v1585 = vadd.f32 %v1542, %v1582
  %v1586 = vadd.f32 %v1543, %v1582
  %v1587 = vadd.f32 %v1544, %v1582
  %v1588 = vadd.f32 %v1545, %v1582
  %v1589 = vadd.f32 %v1546, %v1582
  %v1590 = vadd.f32 %v1547, %v1582
  %v1591 = vadd.f32 %v1548, %v1582
  %v1592 = vadd.f32 %v1549, %v1582
  %v1593 = vadd.f32 %v1550, %v1582
  %v1594 = vadd.f32 %v1551, %v1582
  %v1595 = vadd.f32 %v1552, %v1582
  %v1596 = vadd.f32 %v1553, %v1582
  %v1597 = vadd.f32 %v1554, %v1582
  %v1598 = vadd.f32 %v1555, %v1582
  %v1599 = vadd.f32 %v1556, %v1582
  %v1600 = vadd.f32 %v1557, %v1582
  %v1601 = vadd.f32 %v1558, %v1582
  %v1602 = vadd.f32 %v1559, %v1582
  %v1603 = vadd.f32 %v1560, %v1582
  %v1604 = vadd.f32 %v1561, %v1582
  %v1605 = vadd.f32 %v1562, %v1582
  %v1606 = vadd.f32 %v1563, %v1582
  %v1607 = vadd.f32 %v1564, %v1582
  %v1608 = vadd.f32 %v1565, %v1582
  %v1609 = vadd.f32 %v1566, %v1582
  %v1610 = vadd.f32 %v1567, %v1582
  %v1611 = vadd.f32 %v1568, %v1582
  %v1612 = vadd.f32 %v1569, %v1582
  %v1613 = vadd.f32 %v1570, %v1582
  %v1614 = vadd.f32 %v1571, %v1582
  %v1615 = vadd.f32 %v1572, %v1582
  %v1616 = vadd.f32 %v1573, %v1582
  %v1617 = vadd.f32 %v1574, %v1582
  %v1618 = vadd.f32 %v1575, %v1582
  %v1619 = vadd.f32 %v1576, %v1582
  %v1620 = vmax.f32 %v1584, 0.0
  %v1621 = vmax.f32 %v1585, 0.0
  %v1622 = vmax.f32 %v1586, 0.0
  %v1623 = vmax.f32 %v1587, 0.0
  %v1624 = vmax.f32 %v1588, 0.0
  %v1625 = vmax.f32 %v1589, 0.0
  %v1626 = vmax.f32 %v1590, 0.0
  %v1627 = vmax.f32 %v1591, 0.0
  %v1628 = vmax.f32 %v1592, 0.0
  %v1629 = vmax.f32 %v1593, 0.0
  %v1630 = vmax.f32 %v1594, 0.0
  %v1631 = vmax.f32 %v1595, 0.0
  %v1632 = vmax.f32 %v1596, 0.0
  %v1633 = vmax.f32 %v1597, 0.0
  %v1634 = vmax.f32 %v1598, 0.0
  %v1635 = vmax.f32 %v1599, 0.0
  %v1636 = vmax.f32 %v1600, 0.0
  %v1637 = vmax.f32 %v1601, 0.0
  %v1638 = vmax.f32 %v1602, 0.0
  %v1639 = vmax.f32 %v1603, 0.0
  %v1640 = vmax.f32 %v1604, 0.0
  %v1641 = vmax.f32 %v1605, 0.0
  %v1642 = vmax.f32 %v1606, 0.0
  %v1643 = vmax.f32 %v1607, 0.0
  %v1644 = vmax.f32 %v1608, 0.0
  %v1645 = vmax.f32 %v1609, 0.0
  %v1646 = vmax.f32 %v1610, 0.0
  %v1647 = vmax.f32 %v1611, 0.0
  %v1648 = vmax.f32 %v1612, 0.0
  %v1649 = vmax.f32 %v1613, 0.0
  %v1650 = vmax.f32 %v1614, 0.0
  %v1651 = vmax.f32 %v1615, 0.0
  %v1652 = vmax.f32 %v1616, 0.0
  %v1653 = vmax.f32 %v1617, 0.0
  %v1654 = vmax.f32 %v1618, 0.0
  %v1655 = vmax.f32 %v1619, 0.0
  %v1656 = vpack.c.bf16 %v1621, %v1620
  %v1657 = vpack.c.bf16 %v1623, %v1622
  %v1658 = vpack.c.bf16 %v1625, %v1624
  %v1659 = vpack.c.bf16 %v1627, %v1626
  %v1660 = vpack.c.bf16 %v1629, %v1628
  %v1661 = vpack.c.bf16 %v1631, %v1630
  %v1662 = vpack.c.bf16 %v1633, %v1632
  %v1663 = vpack.c.bf16 %v1635, %v1634
  %v1664 = vpack.c.bf16 %v1637, %v1636
  %v1665 = vpack.c.bf16 %v1639, %v1638
  %v1666 = vpack.c.bf16 %v1641, %v1640
  %v1667 = vpack.c.bf16 %v1643, %v1642
  %v1668 = vpack.c.bf16 %v1645, %v1644
  %v1669 = vpack.c.bf16 %v1647, %v1646
  %v1670 = vpack.c.bf16 %v1649, %v1648
  %v1671 = vpack.c.bf16 %v1651, %v1650
  %v1672 = vpack.c.bf16 %v1653, %v1652
  %v1673 = vpack.c.bf16 %v1655, %v1654
  %v1692 = vunpack.c.l.b16 %v1656
  %v1693 = vunpack.c.h.b16 %v1656
  %v1694 = vunpack.c.l.b16 %v1657
  %v1695 = vunpack.c.h.b16 %v1657
  %v1696 = vunpack.c.l.b16 %v1658
  %v1697 = vunpack.c.h.b16 %v1658
  %v1698 = vunpack.c.l.b16 %v1659
  %v1699 = vunpack.c.h.b16 %v1659
  %v1700 = vunpack.c.l.b16 %v1660
  %v1701 = vunpack.c.h.b16 %v1660
  %v1702 = vunpack.c.l.b16 %v1661
  %v1703 = vunpack.c.h.b16 %v1661
  %v1704 = vunpack.c.l.b16 %v1662
  %v1705 = vunpack.c.h.b16 %v1662
  %v1706 = vunpack.c.l.b16 %v1663
  %v1707 = vunpack.c.h.b16 %v1663
  %v1708 = vunpack.c.l.b16 %v1664
  %v1709 = vunpack.c.h.b16 %v1664
  %v1710 = vunpack.c.l.b16 %v1665
  %v1711 = vunpack.c.h.b16 %v1665
  %v1712 = vunpack.c.l.b16 %v1666
  %v1713 = vunpack.c.h.b16 %v1666
  %v1714 = vunpack.c.l.b16 %v1667
  %v1715 = vunpack.c.h.b16 %v1667
  %v1716 = vunpack.c.l.b16 %v1668
  %v1717 = vunpack.c.h.b16 %v1668
  %v1718 = vunpack.c.l.b16 %v1669
  %v1719 = vunpack.c.h.b16 %v1669
  %v1720 = vunpack.c.l.b16 %v1670
  %v1721 = vunpack.c.h.b16 %v1670
  %v1722 = vunpack.c.l.b16 %v1671
  %v1723 = vunpack.c.h.b16 %v1671
  %v1724 = vunpack.c.l.b16 %v1672
  %v1725 = vunpack.c.h.b16 %v1672
  %v1726 = vunpack.c.l.b16 %v1673
  %v1727 = vunpack.c.h.b16 %v1673
  %v1728 = vpack.c.b16 %v1692, %v1692
  %v1729 = vpack.c.b16 %v1693, %v1693
  %v1730 = vpack.c.b16 %v1694, %v1694
  %v1731 = vpack.c.b16 %v1695, %v1695
  %v1732 = vpack.c.b16 %v1696, %v1696
  %v1733 = vpack.c.b16 %v1697, %v1697
  %v1734 = vpack.c.b16 %v1698, %v1698
  %v1735 = vpack.c.b16 %v1699, %v1699
  %v1736 = vpack.c.b16 %v1700, %v1700
  %v1737 = vpack.c.b16 %v1701, %v1701
  %v1738 = vpack.c.b16 %v1702, %v1702
  %v1739 = vpack.c.b16 %v1703, %v1703
  %v1740 = vpack.c.b16 %v1704, %v1704
  %v1741 = vpack.c.b16 %v1705, %v1705
  %v1742 = vpack.c.b16 %v1706, %v1706
  %v1743 = vpack.c.b16 %v1707, %v1707
  %v1744 = vpack.c.b16 %v1708, %v1708
  %v1745 = vpack.c.b16 %v1709, %v1709
  %v1746 = vpack.c.b16 %v1710, %v1710
  %v1747 = vpack.c.b16 %v1711, %v1711
  %v1748 = vpack.c.b16 %v1712, %v1712
  %v1749 = vpack.c.b16 %v1713, %v1713
  %v1750 = vpack.c.b16 %v1714, %v1714
  %v1751 = vpack.c.b16 %v1715, %v1715
  %v1752 = vpack.c.b16 %v1716, %v1716
  %v1753 = vpack.c.b16 %v1717, %v1717
  %v1754 = vpack.c.b16 %v1718, %v1718
  %v1755 = vpack.c.b16 %v1719, %v1719
  %v1756 = vpack.c.b16 %v1720, %v1720
  %v1757 = vpack.c.b16 %v1721, %v1721
  %v1758 = vpack.c.b16 %v1722, %v1722
  %v1759 = vpack.c.b16 %v1723, %v1723
  %v1760 = vpack.c.b16 %v1724, %v1724
  %v1761 = vpack.c.b16 %v1725, %v1725
  %v1762 = vpack.c.b16 %v1726, %v1726
  %v1763 = vpack.c.b16 %v1727, %v1727
  %1800 = vst [vmem:[%s3] sm:$0xf] %v1728
  %1801 = vst [vmem:[%s3 + $0x4] sm:$0xf] %v1729
  %1802 = vst [vmem:[%s3 + $0x8] sm:$0xf] %v1730
  %1803 = vst [vmem:[%s3 + $0xc] sm:$0xf] %v1731
  %1804 = vst [vmem:[%s3 + $0x10] sm:$0xf] %v1732
  %1805 = vst [vmem:[%s3 + $0x14] sm:$0xf] %v1733
  %1806 = vst [vmem:[%s3 + $0x18] sm:$0xf] %v1734
  %1807 = vst [vmem:[%s3 + $0x1c] sm:$0xf] %v1735
  %1808 = vst [vmem:[%s3 + $0x20] sm:$0xf] %v1736
  %1809 = vst [vmem:[%s3 + $0x24] sm:$0xf] %v1737
  %1810 = vst [vmem:[%s3 + $0x28] sm:$0xf] %v1738
  %1811 = vst [vmem:[%s3 + $0x2c] sm:$0xf] %v1739
  %1812 = vst [vmem:[%s3 + $0x30] sm:$0xf] %v1740
  %1813 = vst [vmem:[%s3 + $0x34] sm:$0xf] %v1741
  %1814 = vst [vmem:[%s3 + $0x38] sm:$0xf] %v1742
  %1815 = vst [vmem:[%s3 + $0x3c] sm:$0xf] %v1743
  %1816 = vst [vmem:[%s3 + $0x40] sm:$0xf] %v1744
  %1817 = vst [vmem:[%s3 + $0x44] sm:$0xf] %v1745
  %1818 = vst [vmem:[%s3 + $0x48] sm:$0xf] %v1746
  %1819 = vst [vmem:[%s3 + $0x4c] sm:$0xf] %v1747
  %1820 = vst [vmem:[%s3 + $0x50] sm:$0xf] %v1748
  %1821 = vst [vmem:[%s3 + $0x54] sm:$0xf] %v1749
  %1822 = vst [vmem:[%s3 + $0x58] sm:$0xf] %v1750
  %1823 = vst [vmem:[%s3 + $0x5c] sm:$0xf] %v1751
  %1824 = vst [vmem:[%s3 + $0x60] sm:$0xf] %v1752
  %1825 = vst [vmem:[%s3 + $0x64] sm:$0xf] %v1753
  %1826 = vst [vmem:[%s3 + $0x68] sm:$0xf] %v1754
  %1827 = vst [vmem:[%s3 + $0x6c] sm:$0xf] %v1755
  %1828 = vst [vmem:[%s3 + $0x70] sm:$0xf] %v1756
  %1829 = vst [vmem:[%s3 + $0x74] sm:$0xf] %v1757
  %1830 = vst [vmem:[%s3 + $0x78] sm:$0xf] %v1758
  %1831 = vst [vmem:[%s3 + $0x7c] sm:$0xf] %v1759
  %1832 = vst [vmem:[%s3 + $0x80] sm:$0xf] %v1760
  %1833 = vst [vmem:[%s3 + $0x84] sm:$0xf] %v1761
  %1834 = vst [vmem:[%s3 + $0x88] sm:$0xf] %v1762
  %1835 = vst [vmem:[%s3 + $0x8c] sm:$0xf] %v1763
  // Predicated region
  $region14: #{net_forward.3} parent=0 // pred_check
    _
  $region15: #{net_forward.3} parent=0 // pred_check_branch
    %1837 = sbr.rel (0) target = $region17
  $region16: #{net_forward.3} parent=0 // pred_region
    _
  $region17: #{net_forward.3} parent=0 // pred_fallthru
    _
  // Predicated region
  $region18: #{net_forward.3} parent=0 // pred_check
    _
  $region19: #{net_forward.3} parent=0 // pred_check_branch
    %1839 = sbr.rel (0) target = $region21
  $region20: #{net_forward.3} parent=0 // pred_region
    _
  $region21: #{net_forward.3} parent=0 // pred_fallthru
    _

// kernel: net_forward.5
$region0: #{net_forward.5}
  #allocation0 [shape = 'u32[]', space=smem, size = 0x4, offset = 0x4, fixed_abs, tag = 'smem constant byte address 0x4 - core index']
  #allocation1 [shape = 'u32[144,128]{1,0:T(1,128)}', space=vmem, size = 0x12000, scoped, tag = 'internal scratch']
  %s0 = inlined_call_operand.vmem [shape: bf16[2,2048], index: 0, kind: input, shape index: {}]
  %s1 = inlined_call_operand.vmem [shape: bf16[2048,128], index: 1, kind: input, shape index: {}]
  %s2 = inlined_call_operand.vmem [shape: f32[1,128], index: 2, kind: input, shape index: {}]
  %s3 = inlined_call_operand.vmem [shape: bf16[128,128], index: 3, kind: input, shape index: {}]
  %s4 = inlined_call_operand.vmem [shape: f32[1,128], index: 4, kind: input, shape index: {}]
  %s5 = inlined_call_operand.hbm [shape: f32[2,128], index: 5, kind: output, shape index: {}]
  %s6 = sld [smem:[#allocation0]]
  $region30: #{net_forward.5} parent=0
    _
  %s8 = ssub.s32 1, %s6
  %s9 = scalar_select 0, %s8, %s6
  $region1: #{net_forward.5} parent=0
    #allocation2 [shape = 'u8[1024]{0}', space=vmem, size = 0x400, scoped, tag = 'output window, operand 0, single buffered']
    #allocation3 [shape = 's32[1]{0}', space=sflag, size = 0x4, scoped, tag = 'scoped memory for net_forward.5']
    %10 = vsyncpa [#allocation3], 0
    // Predicated region
    $region2: #{net_forward.5} parent=1 // pred_check
      _
    $region3: #{net_forward.5} parent=1 // pred_check_branch
      %12 = sbr.rel (0) target = $region5
    $region4: #{net_forward.5} parent=1 // pred_region
      _
    $region5: #{net_forward.5} parent=1 // pred_fallthru
      _
    // Predicated region
    $region6: #{net_forward.5} parent=1 // pred_check
      _
    $region7: #{net_forward.5} parent=1 // pred_check_branch
      %14 = sbr.rel (0) target = $region9
    $region8: #{net_forward.5} parent=1 // pred_region
      _
    $region9: #{net_forward.5} parent=1 // pred_fallthru
      _
    // Predicated region
    $region10: #{net_forward.5} parent=1 // pred_check
      _
    $region11: #{net_forward.5} parent=1 // pred_check_branch
      %16 = sbr.rel (0) target = $region13
    $region12: #{net_forward.5} parent=1 // pred_region
      _
    $region13: #{net_forward.5} parent=1 // pred_fallthru
      _
    // Predicated region
    $region14: #{net_forward.5} parent=1 // pred_check
      _
    $region15: #{net_forward.5} parent=1 // pred_check_branch
      %18 = sbr.rel (0) target = $region17
    $region16: #{net_forward.5} parent=1 // pred_region
      _
    $region17: #{net_forward.5} parent=1 // pred_fallthru
      _
    // Predicated region
    $region18: #{net_forward.5} parent=1 // pred_check
      _
    $region19: #{net_forward.5} parent=1 // pred_check_branch
      %20 = sbr.rel (0) target = $region21
    $region20: #{net_forward.5} parent=1 // pred_region
      _
    $region21: #{net_forward.5} parent=1 // pred_fallthru
      _
    %v22 = vld [vmem:[%s0] sm:$0xff]
    %v23 = vld [vmem:[%s0 + $0x8] sm:$0xff]
    %v24 = vld [vmem:[%s1] sm:$0xf]
    %v25 = vld [vmem:[%s1 + $0x4] sm:$0xf]
    %v26 = vld [vmem:[%s1 + $0x8] sm:$0xf]
    %v27 = vld [vmem:[%s1 + $0xc] sm:$0xf]
    %v28 = vld [vmem:[%s1 + $0x10] sm:$0xf]
    %v29 = vld [vmem:[%s1 + $0x14] sm:$0xf]
    %v30 = vld [vmem:[%s1 + $0x18] sm:$0xf]
    %v31 = vld [vmem:[%s1 + $0x1c] sm:$0xf]
    %v32 = vld [vmem:[%s1 + $0x20] sm:$0xf]
    %v33 = vld [vmem:[%s1 + $0x24] sm:$0xf]
    %v34 = vld [vmem:[%s1 + $0x28] sm:$0xf]
    %v35 = vld [vmem:[%s1 + $0x2c] sm:$0xf]
    %v36 = vld [vmem:[%s1 + $0x30] sm:$0xf]
    %v37 = vld [vmem:[%s1 + $0x34] sm:$0xf]
    %v38 = vld [vmem:[%s1 + $0x38] sm:$0xf]
    %v39 = vld [vmem:[%s1 + $0x3c] sm:$0xf]
    %v40 = vld [vmem:[%s1 + $0x40] sm:$0xf]
    %v41 = vld [vmem:[%s1 + $0x44] sm:$0xf]
    %v42 = vld [vmem:[%s1 + $0x48] sm:$0xf]
    %v43 = vld [vmem:[%s1 + $0x4c] sm:$0xf]
    %v44 = vld [vmem:[%s1 + $0x50] sm:$0xf]
    %v45 = vld [vmem:[%s1 + $0x54] sm:$0xf]
    %v46 = vld [vmem:[%s1 + $0x58] sm:$0xf]
    %v47 = vld [vmem:[%s1 + $0x5c] sm:$0xf]
    %v48 = vld [vmem:[%s1 + $0x60] sm:$0xf]
    %v49 = vld [vmem:[%s1 + $0x64] sm:$0xf]
    %v50 = vld [vmem:[%s1 + $0x68] sm:$0xf]
    %v51 = vld [vmem:[%s1 + $0x6c] sm:$0xf]
    %v52 = vld [vmem:[%s1 + $0x70] sm:$0xf]
    %v53 = vld [vmem:[%s1 + $0x74] sm:$0xf]
    %v54 = vld [vmem:[%s1 + $0x78] sm:$0xf]
    %v55 = vld [vmem:[%s1 + $0x7c] sm:$0xf]
    %v56 = vld [vmem:[%s1 + $0x80] sm:$0xf]
    %v57 = vld [vmem:[%s1 + $0x84] sm:$0xf]
    %v58 = vld [vmem:[%s1 + $0x88] sm:$0xf]
    %v59 = vld [vmem:[%s1 + $0x8c] sm:$0xf]
    %v60 = vld [vmem:[%s1 + $0x90] sm:$0xf]
    %v61 = vld [vmem:[%s1 + $0x94] sm:$0xf]
    %v62 = vld [vmem:[%s1 + $0x98] sm:$0xf]
    %v63 = vld [vmem:[%s1 + $0x9c] sm:$0xf]
    %v64 = vld [vmem:[%s1 + $0xa0] sm:$0xf]
    %v65 = vld [vmem:[%s1 + $0xa4] sm:$0xf]
    %v66 = vld [vmem:[%s1 + $0xa8] sm:$0xf]
    %v67 = vld [vmem:[%s1 + $0xac] sm:$0xf]
    %v68 = vld [vmem:[%s1 + $0xb0] sm:$0xf]
    %v69 = vld [vmem:[%s1 + $0xb4] sm:$0xf]
    %v70 = vld [vmem:[%s1 + $0xb8] sm:$0xf]
    %v71 = vld [vmem:[%s1 + $0xbc] sm:$0xf]
    %v72 = vld [vmem:[%s1 + $0xc0] sm:$0xf]
    %v73 = vld [vmem:[%s1 + $0xc4] sm:$0xf]
    %v74 = vld [vmem:[%s1 + $0xc8] sm:$0xf]
    %v75 = vld [vmem:[%s1 + $0xcc] sm:$0xf]
    %v76 = vld [vmem:[%s1 + $0xd0] sm:$0xf]
    %v77 = vld [vmem:[%s1 + $0xd4] sm:$0xf]
    %v78 = vld [vmem:[%s1 + $0xd8] sm:$0xf]
    %v79 = vld [vmem:[%s1 + $0xdc] sm:$0xf]
    %v80 = vld [vmem:[%s1 + $0xe0] sm:$0xf]
    %v81 = vld [vmem:[%s1 + $0xe4] sm:$0xf]
    %v82 = vld [vmem:[%s1 + $0xe8] sm:$0xf]
    %v83 = vld [vmem:[%s1 + $0xec] sm:$0xf]
    %v84 = vld [vmem:[%s1 + $0xf0] sm:$0xf]
    %v85 = vld [vmem:[%s1 + $0xf4] sm:$0xf]
    %v86 = vld [vmem:[%s1 + $0xf8] sm:$0xf]
    %v87 = vld [vmem:[%s1 + $0xfc] sm:$0xf]
    %v88 = vld [vmem:[%s1 + $0x100] sm:$0xf]
    %v89 = vld [vmem:[%s1 + $0x104] sm:$0xf]
    %v90 = vld [vmem:[%s1 + $0x108] sm:$0xf]
    %v91 = vld [vmem:[%s1 + $0x10c] sm:$0xf]
    %v92 = vld [vmem:[%s1 + $0x110] sm:$0xf]
    %v93 = vld [vmem:[%s1 + $0x114] sm:$0xf]
    %v94 = vld [vmem:[%s1 + $0x118] sm:$0xf]
    %v95 = vld [vmem:[%s1 + $0x11c] sm:$0xf]
    %v96 = vld [vmem:[%s1 + $0x120] sm:$0xf]
    %v97 = vld [vmem:[%s1 + $0x124] sm:$0xf]
    %v98 = vld [vmem:[%s1 + $0x128] sm:$0xf]
    %v99 = vld [vmem:[%s1 + $0x12c] sm:$0xf]
    %v100 = vld [vmem:[%s1 + $0x130] sm:$0xf]
    %v101 = vld [vmem:[%s1 + $0x134] sm:$0xf]
    %v102 = vld [vmem:[%s1 + $0x138] sm:$0xf]
    %v103 = vld [vmem:[%s1 + $0x13c] sm:$0xf]
    %v104 = vld [vmem:[%s1 + $0x140] sm:$0xf]
    %v105 = vld [vmem:[%s1 + $0x144] sm:$0xf]
    %v106 = vld [vmem:[%s1 + $0x148] sm:$0xf]
    %v107 = vld [vmem:[%s1 + $0x14c] sm:$0xf]
    %v108 = vld [vmem:[%s1 + $0x150] sm:$0xf]
    %v109 = vld [vmem:[%s1 + $0x154] sm:$0xf]
    %v110 = vld [vmem:[%s1 + $0x158] sm:$0xf]
    %v111 = vld [vmem:[%s1 + $0x15c] sm:$0xf]
    %v112 = vld [vmem:[%s1 + $0x160] sm:$0xf]
    %v113 = vld [vmem:[%s1 + $0x164] sm:$0xf]
    %v114 = vld [vmem:[%s1 + $0x168] sm:$0xf]
    %v115 = vld [vmem:[%s1 + $0x16c] sm:$0xf]
    %v116 = vld [vmem:[%s1 + $0x170] sm:$0xf]
    %v117 = vld [vmem:[%s1 + $0x174] sm:$0xf]
    %v118 = vld [vmem:[%s1 + $0x178] sm:$0xf]
    %v119 = vld [vmem:[%s1 + $0x17c] sm:$0xf]
    %v120 = vld [vmem:[%s1 + $0x180] sm:$0xf]
    %v121 = vld [vmem:[%s1 + $0x184] sm:$0xf]
    %v122 = vld [vmem:[%s1 + $0x188] sm:$0xf]
    %v123 = vld [vmem:[%s1 + $0x18c] sm:$0xf]
    %v124 = vld [vmem:[%s1 + $0x190] sm:$0xf]
    %v125 = vld [vmem:[%s1 + $0x194] sm:$0xf]
    %v126 = vld [vmem:[%s1 + $0x198] sm:$0xf]
    %v127 = vld [vmem:[%s1 + $0x19c] sm:$0xf]
    %v128 = vld [vmem:[%s1 + $0x1a0] sm:$0xf]
    %v129 = vld [vmem:[%s1 + $0x1a4] sm:$0xf]
    %v130 = vld [vmem:[%s1 + $0x1a8] sm:$0xf]
    %v131 = vld [vmem:[%s1 + $0x1ac] sm:$0xf]
    %v132 = vld [vmem:[%s1 + $0x1b0] sm:$0xf]
    %v133 = vld [vmem:[%s1 + $0x1b4] sm:$0xf]
    %v134 = vld [vmem:[%s1 + $0x1b8] sm:$0xf]
    %v135 = vld [vmem:[%s1 + $0x1bc] sm:$0xf]
    %v136 = vld [vmem:[%s1 + $0x1c0] sm:$0xf]
    %v137 = vld [vmem:[%s1 + $0x1c4] sm:$0xf]
    %v138 = vld [vmem:[%s1 + $0x1c8] sm:$0xf]
    %v139 = vld [vmem:[%s1 + $0x1cc] sm:$0xf]
    %v140 = vld [vmem:[%s1 + $0x1d0] sm:$0xf]
    %v141 = vld [vmem:[%s1 + $0x1d4] sm:$0xf]
    %v142 = vld [vmem:[%s1 + $0x1d8] sm:$0xf]
    %v143 = vld [vmem:[%s1 + $0x1dc] sm:$0xf]
    %v144 = vld [vmem:[%s1 + $0x1e0] sm:$0xf]
    %v145 = vld [vmem:[%s1 + $0x1e4] sm:$0xf]
    %v146 = vld [vmem:[%s1 + $0x1e8] sm:$0xf]
    %v147 = vld [vmem:[%s1 + $0x1ec] sm:$0xf]
    %v148 = vld [vmem:[%s1 + $0x1f0] sm:$0xf]
    %v149 = vld [vmem:[%s1 + $0x1f4] sm:$0xf]
    %v150 = vld [vmem:[%s1 + $0x1f8] sm:$0xf]
    %v151 = vld [vmem:[%s1 + $0x1fc] sm:$0xf]
    %v152 = vld [vmem:[%s1 + $0x200] sm:$0xf]
    %v153 = vld [vmem:[%s1 + $0x204] sm:$0xf]
    %v154 = vld [vmem:[%s1 + $0x208] sm:$0xf]
    %v155 = vld [vmem:[%s1 + $0x20c] sm:$0xf]
    %v156 = vld [vmem:[%s1 + $0x210] sm:$0xf]
    %v157 = vld [vmem:[%s1 + $0x214] sm:$0xf]
    %v158 = vld [vmem:[%s1 + $0x218] sm:$0xf]
    %v159 = vld [vmem:[%s1 + $0x21c] sm:$0xf]
    %v160 = vld [vmem:[%s1 + $0x220] sm:$0xf]
    %v161 = vld [vmem:[%s1 + $0x224] sm:$0xf]
    %v162 = vld [vmem:[%s1 + $0x228] sm:$0xf]
    %v163 = vld [vmem:[%s1 + $0x22c] sm:$0xf]
    %v164 = vld [vmem:[%s1 + $0x230] sm:$0xf]
    %v165 = vld [vmem:[%s1 + $0x234] sm:$0xf]
    %v166 = vld [vmem:[%s1 + $0x238] sm:$0xf]
    %v167 = vld [vmem:[%s1 + $0x23c] sm:$0xf]
    %v168 = vld [vmem:[%s1 + $0x240] sm:$0xf]
    %v169 = vld [vmem:[%s1 + $0x244] sm:$0xf]
    %v170 = vld [vmem:[%s1 + $0x248] sm:$0xf]
    %v171 = vld [vmem:[%s1 + $0x24c] sm:$0xf]
    %v172 = vld [vmem:[%s1 + $0x250] sm:$0xf]
    %v173 = vld [vmem:[%s1 + $0x254] sm:$0xf]
    %v174 = vld [vmem:[%s1 + $0x258] sm:$0xf]
    %v175 = vld [vmem:[%s1 + $0x25c] sm:$0xf]
    %v176 = vld [vmem:[%s1 + $0x260] sm:$0xf]
    %v177 = vld [vmem:[%s1 + $0x264] sm:$0xf]
    %v178 = vld [vmem:[%s1 + $0x268] sm:$0xf]
    %v179 = vld [vmem:[%s1 + $0x26c] sm:$0xf]
    %v180 = vld [vmem:[%s1 + $0x270] sm:$0xf]
    %v181 = vld [vmem:[%s1 + $0x274] sm:$0xf]
    %v182 = vld [vmem:[%s1 + $0x278] sm:$0xf]
    %v183 = vld [vmem:[%s1 + $0x27c] sm:$0xf]
    %v184 = vld [vmem:[%s1 + $0x280] sm:$0xf]
    %v185 = vld [vmem:[%s1 + $0x284] sm:$0xf]
    %v186 = vld [vmem:[%s1 + $0x288] sm:$0xf]
    %v187 = vld [vmem:[%s1 + $0x28c] sm:$0xf]
    %v188 = vld [vmem:[%s1 + $0x290] sm:$0xf]
    %v189 = vld [vmem:[%s1 + $0x294] sm:$0xf]
    %v190 = vld [vmem:[%s1 + $0x298] sm:$0xf]
    %v191 = vld [vmem:[%s1 + $0x29c] sm:$0xf]
    %v192 = vld [vmem:[%s1 + $0x2a0] sm:$0xf]
    %v193 = vld [vmem:[%s1 + $0x2a4] sm:$0xf]
    %v194 = vld [vmem:[%s1 + $0x2a8] sm:$0xf]
    %v195 = vld [vmem:[%s1 + $0x2ac] sm:$0xf]
    %v196 = vld [vmem:[%s1 + $0x2b0] sm:$0xf]
    %v197 = vld [vmem:[%s1 + $0x2b4] sm:$0xf]
    %v198 = vld [vmem:[%s1 + $0x2b8] sm:$0xf]
    %v199 = vld [vmem:[%s1 + $0x2bc] sm:$0xf]
    %v200 = vld [vmem:[%s1 + $0x2c0] sm:$0xf]
    %v201 = vld [vmem:[%s1 + $0x2c4] sm:$0xf]
    %v202 = vld [vmem:[%s1 + $0x2c8] sm:$0xf]
    %v203 = vld [vmem:[%s1 + $0x2cc] sm:$0xf]
    %v204 = vld [vmem:[%s1 + $0x2d0] sm:$0xf]
    %v205 = vld [vmem:[%s1 + $0x2d4] sm:$0xf]
    %v206 = vld [vmem:[%s1 + $0x2d8] sm:$0xf]
    %v207 = vld [vmem:[%s1 + $0x2dc] sm:$0xf]
    %v208 = vld [vmem:[%s1 + $0x2e0] sm:$0xf]
    %v209 = vld [vmem:[%s1 + $0x2e4] sm:$0xf]
    %v210 = vld [vmem:[%s1 + $0x2e8] sm:$0xf]
    %v211 = vld [vmem:[%s1 + $0x2ec] sm:$0xf]
    %v212 = vld [vmem:[%s1 + $0x2f0] sm:$0xf]
    %v213 = vld [vmem:[%s1 + $0x2f4] sm:$0xf]
    %v214 = vld [vmem:[%s1 + $0x2f8] sm:$0xf]
    %v215 = vld [vmem:[%s1 + $0x2fc] sm:$0xf]
    %v216 = vld [vmem:[%s1 + $0x300] sm:$0xf]
    %v217 = vld [vmem:[%s1 + $0x304] sm:$0xf]
    %v218 = vld [vmem:[%s1 + $0x308] sm:$0xf]
    %v219 = vld [vmem:[%s1 + $0x30c] sm:$0xf]
    %v220 = vld [vmem:[%s1 + $0x310] sm:$0xf]
    %v221 = vld [vmem:[%s1 + $0x314] sm:$0xf]
    %v222 = vld [vmem:[%s1 + $0x318] sm:$0xf]
    %v223 = vld [vmem:[%s1 + $0x31c] sm:$0xf]
    %v224 = vld [vmem:[%s1 + $0x320] sm:$0xf]
    %v225 = vld [vmem:[%s1 + $0x324] sm:$0xf]
    %v226 = vld [vmem:[%s1 + $0x328] sm:$0xf]
    %v227 = vld [vmem:[%s1 + $0x32c] sm:$0xf]
    %v228 = vld [vmem:[%s1 + $0x330] sm:$0xf]
    %v229 = vld [vmem:[%s1 + $0x334] sm:$0xf]
    %v230 = vld [vmem:[%s1 + $0x338] sm:$0xf]
    %v231 = vld [vmem:[%s1 + $0x33c] sm:$0xf]
    %v232 = vld [vmem:[%s1 + $0x340] sm:$0xf]
    %v233 = vld [vmem:[%s1 + $0x344] sm:$0xf]
    %v234 = vld [vmem:[%s1 + $0x348] sm:$0xf]
    %v235 = vld [vmem:[%s1 + $0x34c] sm:$0xf]
    %v236 = vld [vmem:[%s1 + $0x350] sm:$0xf]
    %v237 = vld [vmem:[%s1 + $0x354] sm:$0xf]
    %v238 = vld [vmem:[%s1 + $0x358] sm:$0xf]
    %v239 = vld [vmem:[%s1 + $0x35c] sm:$0xf]
    %v240 = vld [vmem:[%s1 + $0x360] sm:$0xf]
    %v241 = vld [vmem:[%s1 + $0x364] sm:$0xf]
    %v242 = vld [vmem:[%s1 + $0x368] sm:$0xf]
    %v243 = vld [vmem:[%s1 + $0x36c] sm:$0xf]
    %v244 = vld [vmem:[%s1 + $0x370] sm:$0xf]
    %v245 = vld [vmem:[%s1 + $0x374] sm:$0xf]
    %v246 = vld [vmem:[%s1 + $0x378] sm:$0xf]
    %v247 = vld [vmem:[%s1 + $0x37c] sm:$0xf]
    %v248 = vld [vmem:[%s1 + $0x380] sm:$0xf]
    %v249 = vld [vmem:[%s1 + $0x384] sm:$0xf]
    %v250 = vld [vmem:[%s1 + $0x388] sm:$0xf]
    %v251 = vld [vmem:[%s1 + $0x38c] sm:$0xf]
    %v252 = vld [vmem:[%s1 + $0x390] sm:$0xf]
    %v253 = vld [vmem:[%s1 + $0x394] sm:$0xf]
    %v254 = vld [vmem:[%s1 + $0x398] sm:$0xf]
    %v255 = vld [vmem:[%s1 + $0x39c] sm:$0xf]
    %v256 = vld [vmem:[%s1 + $0x3a0] sm:$0xf]
    %v257 = vld [vmem:[%s1 + $0x3a4] sm:$0xf]
    %v258 = vld [vmem:[%s1 + $0x3a8] sm:$0xf]
    %v259 = vld [vmem:[%s1 + $0x3ac] sm:$0xf]
    %v260 = vld [vmem:[%s1 + $0x3b0] sm:$0xf]
    %v261 = vld [vmem:[%s1 + $0x3b4] sm:$0xf]
    %v262 = vld [vmem:[%s1 + $0x3b8] sm:$0xf]
    %v263 = vld [vmem:[%s1 + $0x3bc] sm:$0xf]
    %v264 = vld [vmem:[%s1 + $0x3c0] sm:$0xf]
    %v265 = vld [vmem:[%s1 + $0x3c4] sm:$0xf]
    %v266 = vld [vmem:[%s1 + $0x3c8] sm:$0xf]
    %v267 = vld [vmem:[%s1 + $0x3cc] sm:$0xf]
    %v268 = vld [vmem:[%s1 + $0x3d0] sm:$0xf]
    %v269 = vld [vmem:[%s1 + $0x3d4] sm:$0xf]
    %v270 = vld [vmem:[%s1 + $0x3d8] sm:$0xf]
    %v271 = vld [vmem:[%s1 + $0x3dc] sm:$0xf]
    %v272 = vld [vmem:[%s1 + $0x3e0] sm:$0xf]
    %v273 = vld [vmem:[%s1 + $0x3e4] sm:$0xf]
    %v274 = vld [vmem:[%s1 + $0x3e8] sm:$0xf]
    %v275 = vld [vmem:[%s1 + $0x3ec] sm:$0xf]
    %v276 = vld [vmem:[%s1 + $0x3f0] sm:$0xf]
    %v277 = vld [vmem:[%s1 + $0x3f4] sm:$0xf]
    %v278 = vld [vmem:[%s1 + $0x3f8] sm:$0xf]
    %v279 = vld [vmem:[%s1 + $0x3fc] sm:$0xf]
    %v280 = vld [vmem:[%s2] sm:$0x1]
    %v282 = vlaneseq
    %v283 = vshrl.u32 %v282, 7
    %v284 = vsub.s32 0, %v283
    %v285 = vrot.slane %v280, %v284
    %v289 = vcombine.high %v22, %v22
    %v291 = vunpack.c.l.s4 1966171168
    %v292 = vunpack.c.0.s8 %v291
    %v293 = vlaneseq
    %v294 = vshrl.u32 %v293, 7
    %v295 = vsub.s32 %v292, %v294
    %v296 = vrot.slane %v22, %v295
    %v298 = vunpack.c.l.s4 1966171168
    %v299 = vunpack.c.0.s8 %v298
    %v300 = vlaneseq
    %v301 = vshrl.u32 %v300, 7
    %v302 = vsub.s32 %v299, %v301
    %v303 = vrot.slane %v289, %v302
    %v304 = vcombine.high %v296, %v296
    %v305 = vcombine.high %v303, %v303
    %v307 = vunpack.c.l.s4 1966171168
    %v308 = vunpack.c.0.s8 %v307
    %v309 = vlaneseq
    %v310 = vshrl.u32 %v309, 7
    %v311 = vsub.s32 %v308, %v310
    %v312 = vrot.slane %v296, %v311
    %v314 = vunpack.c.l.s4 1966171168
    %v315 = vunpack.c.0.s8 %v314
    %v316 = vlaneseq
    %v317 = vshrl.u32 %v316, 7
    %v318 = vsub.s32 %v315, %v317
    %v319 = vrot.slane %v303, %v318
    %v321 = vunpack.c.l.s4 1966171168
    %v322 = vunpack.c.0.s8 %v321
    %v323 = vlaneseq
    %v324 = vshrl.u32 %v323, 7
    %v325 = vsub.s32 %v322, %v324
    %v326 = vrot.slane %v304, %v325
    %v328 = vunpack.c.l.s4 1966171168
    %v329 = vunpack.c.0.s8 %v328
    %v330 = vlaneseq
    %v331 = vshrl.u32 %v330, 7
    %v332 = vsub.s32 %v329, %v331
    %v333 = vrot.slane %v305, %v332
    %v334 = vcombine.high %v312, %v312
    %v335 = vcombine.high %v319, %v319
    %v336 = vcombine.high %v326, %v326
    %v337 = vcombine.high %v333, %v333
    %v338 = vcombine.high %v23, %v23
    %v340 = vunpack.c.l.s4 1966171168
    %v341 = vunpack.c.0.s8 %v340
    %v342 = vlaneseq
    %v343 = vshrl.u32 %v342, 7
    %v344 = vsub.s32 %v341, %v343
    %v345 = vrot.slane %v23, %v344
    %v347 = vunpack.c.l.s4 1966171168
    %v348 = vunpack.c.0.s8 %v347
    %v349 = vlaneseq
    %v350 = vshrl.u32 %v349, 7
    %v351 = vsub.s32 %v348, %v350
    %v352 = vrot.slane %v338, %v351
    %v353 = vcombine.high %v345, %v345
    %v354 = vcombine.high %v352, %v352
    %v356 = vunpack.c.l.s4 1966171168
    %v357 = vunpack.c.0.s8 %v356
    %v358 = vlaneseq
    %v359 = vshrl.u32 %v358, 7
    %v360 = vsub.s32 %v357, %v359
    %v361 = vrot.slane %v345, %v360
    %v363 = vunpack.c.l.s4 1966171168
    %v364 = vunpack.c.0.s8 %v363
    %v365 = vlaneseq
    %v366 = vshrl.u32 %v365, 7
    %v367 = vsub.s32 %v364, %v366
    %v368 = vrot.slane %v352, %v367
    %v370 = vunpack.c.l.s4 1966171168
    %v371 = vunpack.c.0.s8 %v370
    %v372 = vlaneseq
    %v373 = vshrl.u32 %v372, 7
    %v374 = vsub.s32 %v371, %v373
    %v375 = vrot.slane %v353, %v374
    %v377 = vunpack.c.l.s4 1966171168
    %v378 = vunpack.c.0.s8 %v377
    %v379 = vlaneseq
    %v380 = vshrl.u32 %v379, 7
    %v381 = vsub.s32 %v378, %v380
    %v382 = vrot.slane %v354, %v381
    %v383 = vcombine.high %v361, %v361
    %v384 = vcombine.high %v368, %v368
    %v385 = vcombine.high %v375, %v375
    %v386 = vcombine.high %v382, %v382
    %v659 = vunpack.c.l.b16 %v24
    %v660 = vunpack.c.l.b16 %v25
    %v661 = vunpack.c.l.b16 %v26
    %v662 = vunpack.c.l.b16 %v27
    %v663 = vunpack.c.l.b16 %v28
    %v664 = vunpack.c.l.b16 %v29
    %v665 = vunpack.c.l.b16 %v30
    %v666 = vunpack.c.l.b16 %v31
    %v667 = vunpack.c.l.b16 %v32
    %v668 = vunpack.c.l.b16 %v33
    %v669 = vunpack.c.l.b16 %v34
    %v670 = vunpack.c.l.b16 %v35
    %v671 = vunpack.c.l.b16 %v36
    %v672 = vunpack.c.l.b16 %v37
    %v673 = vunpack.c.l.b16 %v38
    %v674 = vunpack.c.l.b16 %v39
    %v675 = vunpack.c.l.b16 %v40
    %v676 = vunpack.c.l.b16 %v41
    %v677 = vunpack.c.l.b16 %v42
    %v678 = vunpack.c.l.b16 %v43
    %v679 = vunpack.c.l.b16 %v44
    %v680 = vunpack.c.l.b16 %v45
    %v681 = vunpack.c.l.b16 %v46
    %v682 = vunpack.c.l.b16 %v47
    %v683 = vunpack.c.l.b16 %v48
    %v684 = vunpack.c.l.b16 %v49
    %v685 = vunpack.c.l.b16 %v50
    %v686 = vunpack.c.l.b16 %v51
    %v687 = vunpack.c.l.b16 %v52
    %v688 = vunpack.c.l.b16 %v53
    %v689 = vunpack.c.l.b16 %v54
    %v690 = vunpack.c.l.b16 %v55
    %v691 = vunpack.c.l.b16 %v56
    %v692 = vunpack.c.l.b16 %v57
    %v693 = vunpack.c.l.b16 %v58
    %v694 = vunpack.c.l.b16 %v59
    %v695 = vunpack.c.l.b16 %v60
    %v696 = vunpack.c.l.b16 %v61
    %v697 = vunpack.c.l.b16 %v62
    %v698 = vunpack.c.l.b16 %v63
    %v699 = vunpack.c.l.b16 %v64
    %v700 = vunpack.c.l.b16 %v65
    %v701 = vunpack.c.l.b16 %v66
    %v702 = vunpack.c.l.b16 %v67
    %v703 = vunpack.c.l.b16 %v68
    %v704 = vunpack.c.l.b16 %v69
    %v705 = vunpack.c.l.b16 %v70
    %v706 = vunpack.c.l.b16 %v71
    %v707 = vunpack.c.l.b16 %v72
    %v708 = vunpack.c.l.b16 %v73
    %v709 = vunpack.c.l.b16 %v74
    %v710 = vunpack.c.l.b16 %v75
    %v711 = vunpack.c.l.b16 %v76
    %v712 = vunpack.c.l.b16 %v77
    %v713 = vunpack.c.l.b16 %v78
    %v714 = vunpack.c.l.b16 %v79
    %v715 = vunpack.c.l.b16 %v80
    %v716 = vunpack.c.l.b16 %v81
    %v717 = vunpack.c.l.b16 %v82
    %v718 = vunpack.c.l.b16 %v83
    %v719 = vunpack.c.l.b16 %v84
    %v720 = vunpack.c.l.b16 %v85
    %v721 = vunpack.c.l.b16 %v86
    %v722 = vunpack.c.l.b16 %v87
    %v723 = vunpack.c.l.b16 %v88
    %v724 = vunpack.c.l.b16 %v89
    %v725 = vunpack.c.l.b16 %v90
    %v726 = vunpack.c.l.b16 %v91
    %v727 = vunpack.c.l.b16 %v92
    %v728 = vunpack.c.l.b16 %v93
    %v729 = vunpack.c.l.b16 %v94
    %v730 = vunpack.c.l.b16 %v95
    %v731 = vunpack.c.l.b16 %v96
    %v732 = vunpack.c.l.b16 %v97
    %v733 = vunpack.c.l.b16 %v98
    %v734 = vunpack.c.l.b16 %v99
    %v735 = vunpack.c.l.b16 %v100
    %v736 = vunpack.c.l.b16 %v101
    %v737 = vunpack.c.l.b16 %v102
    %v738 = vunpack.c.l.b16 %v103
    %v739 = vunpack.c.l.b16 %v104
    %v740 = vunpack.c.l.b16 %v105
    %v741 = vunpack.c.l.b16 %v106
    %v742 = vunpack.c.l.b16 %v107
    %v743 = vunpack.c.l.b16 %v108
    %v744 = vunpack.c.l.b16 %v109
    %v745 = vunpack.c.l.b16 %v110
    %v746 = vunpack.c.l.b16 %v111
    %v747 = vunpack.c.l.b16 %v112
    %v748 = vunpack.c.l.b16 %v113
    %v749 = vunpack.c.l.b16 %v114
    %v750 = vunpack.c.l.b16 %v115
    %v751 = vunpack.c.l.b16 %v116
    %v752 = vunpack.c.l.b16 %v117
    %v753 = vunpack.c.l.b16 %v118
    %v754 = vunpack.c.l.b16 %v119
    %v755 = vunpack.c.l.b16 %v120
    %v756 = vunpack.c.l.b16 %v121
    %v757 = vunpack.c.l.b16 %v122
    %v758 = vunpack.c.l.b16 %v123
    %v759 = vunpack.c.l.b16 %v124
    %v760 = vunpack.c.l.b16 %v125
    %v761 = vunpack.c.l.b16 %v126
    %v762 = vunpack.c.l.b16 %v127
    %v763 = vunpack.c.l.b16 %v128
    %v764 = vunpack.c.l.b16 %v129
    %v765 = vunpack.c.l.b16 %v130
    %v766 = vunpack.c.l.b16 %v131
    %v767 = vunpack.c.l.b16 %v132
    %v768 = vunpack.c.l.b16 %v133
    %v769 = vunpack.c.l.b16 %v134
    %v770 = vunpack.c.l.b16 %v135
    %v771 = vunpack.c.l.b16 %v136
    %v772 = vunpack.c.l.b16 %v137
    %v773 = vunpack.c.l.b16 %v138
    %v774 = vunpack.c.l.b16 %v139
    %v775 = vunpack.c.l.b16 %v140
    %v776 = vunpack.c.l.b16 %v141
    %v777 = vunpack.c.l.b16 %v142
    %v778 = vunpack.c.l.b16 %v143
    %v779 = vunpack.c.l.b16 %v144
    %v780 = vunpack.c.l.b16 %v145
    %v781 = vunpack.c.l.b16 %v146
    %v782 = vunpack.c.l.b16 %v147
    %v783 = vunpack.c.l.b16 %v148
    %v784 = vunpack.c.l.b16 %v149
    %v785 = vunpack.c.l.b16 %v150
    %v786 = vunpack.c.l.b16 %v151
    %v787 = vunpack.c.l.b16 %v152
    %v788 = vunpack.c.l.b16 %v153
    %v789 = vunpack.c.l.b16 %v154
    %v790 = vunpack.c.l.b16 %v155
    %v791 = vunpack.c.l.b16 %v156
    %v792 = vunpack.c.l.b16 %v157
    %v793 = vunpack.c.l.b16 %v158
    %v794 = vunpack.c.l.b16 %v159
    %v795 = vunpack.c.l.b16 %v160
    %v796 = vunpack.c.l.b16 %v161
    %v797 = vunpack.c.l.b16 %v162
    %v798 = vunpack.c.l.b16 %v163
    %v799 = vunpack.c.l.b16 %v164
    %v800 = vunpack.c.l.b16 %v165
    %v801 = vunpack.c.l.b16 %v166
    %v802 = vunpack.c.l.b16 %v167
    %v803 = vunpack.c.l.b16 %v168
    %v804 = vunpack.c.l.b16 %v169
    %v805 = vunpack.c.l.b16 %v170
    %v806 = vunpack.c.l.b16 %v171
    %v807 = vunpack.c.l.b16 %v172
    %v808 = vunpack.c.l.b16 %v173
    %v809 = vunpack.c.l.b16 %v174
    %v810 = vunpack.c.l.b16 %v175
    %v811 = vunpack.c.l.b16 %v176
    %v812 = vunpack.c.l.b16 %v177
    %v813 = vunpack.c.l.b16 %v178
    %v814 = vunpack.c.l.b16 %v179
    %v815 = vunpack.c.l.b16 %v180
    %v816 = vunpack.c.l.b16 %v181
    %v817 = vunpack.c.l.b16 %v182
    %v818 = vunpack.c.l.b16 %v183
    %v819 = vunpack.c.l.b16 %v184
    %v820 = vunpack.c.l.b16 %v185
    %v821 = vunpack.c.l.b16 %v186
    %v822 = vunpack.c.l.b16 %v187
    %v823 = vunpack.c.l.b16 %v188
    %v824 = vunpack.c.l.b16 %v189
    %v825 = vunpack.c.l.b16 %v190
    %v826 = vunpack.c.l.b16 %v191
    %v827 = vunpack.c.l.b16 %v192
    %v828 = vunpack.c.l.b16 %v193
    %v829 = vunpack.c.l.b16 %v194
    %v830 = vunpack.c.l.b16 %v195
    %v831 = vunpack.c.l.b16 %v196
    %v832 = vunpack.c.l.b16 %v197
    %v833 = vunpack.c.l.b16 %v198
    %v834 = vunpack.c.l.b16 %v199
    %v835 = vunpack.c.l.b16 %v200
    %v836 = vunpack.c.l.b16 %v201
    %v837 = vunpack.c.l.b16 %v202
    %v838 = vunpack.c.l.b16 %v203
    %v839 = vunpack.c.l.b16 %v204
    %v840 = vunpack.c.l.b16 %v205
    %v841 = vunpack.c.l.b16 %v206
    %v842 = vunpack.c.l.b16 %v207
    %v843 = vunpack.c.l.b16 %v208
    %v844 = vunpack.c.l.b16 %v209
    %v845 = vunpack.c.l.b16 %v210
    %v846 = vunpack.c.l.b16 %v211
    %v847 = vunpack.c.l.b16 %v212
    %v848 = vunpack.c.l.b16 %v213
    %v849 = vunpack.c.l.b16 %v214
    %v850 = vunpack.c.l.b16 %v215
    %v851 = vunpack.c.l.b16 %v216
    %v852 = vunpack.c.l.b16 %v217
    %v853 = vunpack.c.l.b16 %v218
    %v854 = vunpack.c.l.b16 %v219
    %v855 = vunpack.c.l.b16 %v220
    %v856 = vunpack.c.l.b16 %v221
    %v857 = vunpack.c.l.b16 %v222
    %v858 = vunpack.c.l.b16 %v223
    %v859 = vunpack.c.l.b16 %v224
    %v860 = vunpack.c.l.b16 %v225
    %v861 = vunpack.c.l.b16 %v226
    %v862 = vunpack.c.l.b16 %v227
    %v863 = vunpack.c.l.b16 %v228
    %v864 = vunpack.c.l.b16 %v229
    %v865 = vunpack.c.l.b16 %v230
    %v866 = vunpack.c.l.b16 %v231
    %v867 = vunpack.c.l.b16 %v232
    %v868 = vunpack.c.l.b16 %v233
    %v869 = vunpack.c.l.b16 %v234
    %v870 = vunpack.c.l.b16 %v235
    %v871 = vunpack.c.l.b16 %v236
    %v872 = vunpack.c.l.b16 %v237
    %v873 = vunpack.c.l.b16 %v238
    %v874 = vunpack.c.l.b16 %v239
    %v875 = vunpack.c.l.b16 %v240
    %v876 = vunpack.c.l.b16 %v241
    %v877 = vunpack.c.l.b16 %v242
    %v878 = vunpack.c.l.b16 %v243
    %v879 = vunpack.c.l.b16 %v244
    %v880 = vunpack.c.l.b16 %v245
    %v881 = vunpack.c.l.b16 %v246
    %v882 = vunpack.c.l.b16 %v247
    %v883 = vunpack.c.l.b16 %v248
    %v884 = vunpack.c.l.b16 %v249
    %v885 = vunpack.c.l.b16 %v250
    %v886 = vunpack.c.l.b16 %v251
    %v887 = vunpack.c.l.b16 %v252
    %v888 = vunpack.c.l.b16 %v253
    %v889 = vunpack.c.l.b16 %v254
    %v890 = vunpack.c.l.b16 %v255
    %v891 = vunpack.c.l.b16 %v256
    %v892 = vunpack.c.l.b16 %v257
    %v893 = vunpack.c.l.b16 %v258
    %v894 = vunpack.c.l.b16 %v259
    %v895 = vunpack.c.l.b16 %v260
    %v896 = vunpack.c.l.b16 %v261
    %v897 = vunpack.c.l.b16 %v262
    %v898 = vunpack.c.l.b16 %v263
    %v899 = vunpack.c.l.b16 %v264
    %v900 = vunpack.c.l.b16 %v265
    %v901 = vunpack.c.l.b16 %v266
    %v902 = vunpack.c.l.b16 %v267
    %v903 = vunpack.c.l.b16 %v268
    %v904 = vunpack.c.l.b16 %v269
    %v905 = vunpack.c.l.b16 %v270
    %v906 = vunpack.c.l.b16 %v271
    %v907 = vunpack.c.l.b16 %v272
    %v908 = vunpack.c.l.b16 %v273
    %v909 = vunpack.c.l.b16 %v274
    %v910 = vunpack.c.l.b16 %v275
    %v911 = vunpack.c.l.b16 %v276
    %v912 = vunpack.c.l.b16 %v277
    %v913 = vunpack.c.l.b16 %v278
    %v914 = vunpack.c.l.b16 %v279
    %v915 = vpack.c.b16 %v660, %v659
    %v916 = vpack.c.b16 %v662, %v661
    %v917 = vpack.c.b16 %v664, %v663
    %v918 = vpack.c.b16 %v666, %v665
    %v919 = vpack.c.b16 %v668, %v667
    %v920 = vpack.c.b16 %v670, %v669
    %v921 = vpack.c.b16 %v672, %v671
    %v922 = vpack.c.b16 %v674, %v673
    %v923 = vpack.c.b16 %v676, %v675
    %v924 = vpack.c.b16 %v678, %v677
    %v925 = vpack.c.b16 %v680, %v679
    %v926 = vpack.c.b16 %v682, %v681
    %v927 = vpack.c.b16 %v684, %v683
    %v928 = vpack.c.b16 %v686, %v685
    %v929 = vpack.c.b16 %v688, %v687
    %v930 = vpack.c.b16 %v690, %v689
    %v931 = vpack.c.b16 %v692, %v691
    %v932 = vpack.c.b16 %v694, %v693
    %v933 = vpack.c.b16 %v696, %v695
    %v934 = vpack.c.b16 %v698, %v697
    %v935 = vpack.c.b16 %v700, %v699
    %v936 = vpack.c.b16 %v702, %v701
    %v937 = vpack.c.b16 %v704, %v703
    %v938 = vpack.c.b16 %v706, %v705
    %v939 = vpack.c.b16 %v708, %v707
    %v940 = vpack.c.b16 %v710, %v709
    %v941 = vpack.c.b16 %v712, %v711
    %v942 = vpack.c.b16 %v714, %v713
    %v943 = vpack.c.b16 %v716, %v715
    %v944 = vpack.c.b16 %v718, %v717
    %v945 = vpack.c.b16 %v720, %v719
    %v946 = vpack.c.b16 %v722, %v721
    %v947 = vpack.c.b16 %v724, %v723
    %v948 = vpack.c.b16 %v726, %v725
    %v949 = vpack.c.b16 %v728, %v727
    %v950 = vpack.c.b16 %v730, %v729
    %v951 = vpack.c.b16 %v732, %v731
    %v952 = vpack.c.b16 %v734, %v733
    %v953 = vpack.c.b16 %v736, %v735
    %v954 = vpack.c.b16 %v738, %v737
    %v955 = vpack.c.b16 %v740, %v739
    %v956 = vpack.c.b16 %v742, %v741
    %v957 = vpack.c.b16 %v744, %v743
    %v958 = vpack.c.b16 %v746, %v745
    %v959 = vpack.c.b16 %v748, %v747
    %v960 = vpack.c.b16 %v750, %v749
    %v961 = vpack.c.b16 %v752, %v751
    %v962 = vpack.c.b16 %v754, %v753
    %v963 = vpack.c.b16 %v756, %v755
    %v964 = vpack.c.b16 %v758, %v757
    %v965 = vpack.c.b16 %v760, %v759
    %v966 = vpack.c.b16 %v762, %v761
    %v967 = vpack.c.b16 %v764, %v763
    %v968 = vpack.c.b16 %v766, %v765
    %v969 = vpack.c.b16 %v768, %v767
    %v970 = vpack.c.b16 %v770, %v769
    %v971 = vpack.c.b16 %v772, %v771
    %v972 = vpack.c.b16 %v774, %v773
    %v973 = vpack.c.b16 %v776, %v775
    %v974 = vpack.c.b16 %v778, %v777
    %v975 = vpack.c.b16 %v780, %v779
    %v976 = vpack.c.b16 %v782, %v781
    %v977 = vpack.c.b16 %v784, %v783
    %v978 = vpack.c.b16 %v786, %v785
    %v979 = vpack.c.b16 %v788, %v787
    %v980 = vpack.c.b16 %v790, %v789
    %v981 = vpack.c.b16 %v792, %v791
    %v982 = vpack.c.b16 %v794, %v793
    %v983 = vpack.c.b16 %v796, %v795
    %v984 = vpack.c.b16 %v798, %v797
    %v985 = vpack.c.b16 %v800, %v799
    %v986 = vpack.c.b16 %v802, %v801
    %v987 = vpack.c.b16 %v804, %v803
    %v988 = vpack.c.b16 %v806, %v805
    %v989 = vpack.c.b16 %v808, %v807
    %v990 = vpack.c.b16 %v810, %v809
    %v991 = vpack.c.b16 %v812, %v811
    %v992 = vpack.c.b16 %v814, %v813
    %v993 = vpack.c.b16 %v816, %v815
    %v994 = vpack.c.b16 %v818, %v817
    %v995 = vpack.c.b16 %v820, %v819
    %v996 = vpack.c.b16 %v822, %v821
    %v997 = vpack.c.b16 %v824, %v823
    %v998 = vpack.c.b16 %v826, %v825
    %v999 = vpack.c.b16 %v828, %v827
    %v1000 = vpack.c.b16 %v830, %v829
    %v1001 = vpack.c.b16 %v832, %v831
    %v1002 = vpack.c.b16 %v834, %v833
    %v1003 = vpack.c.b16 %v836, %v835
    %v1004 = vpack.c.b16 %v838, %v837
    %v1005 = vpack.c.b16 %v840, %v839
    %v1006 = vpack.c.b16 %v842, %v841
    %v1007 = vpack.c.b16 %v844, %v843
    %v1008 = vpack.c.b16 %v846, %v845
    %v1009 = vpack.c.b16 %v848, %v847
    %v1010 = vpack.c.b16 %v850, %v849
    %v1011 = vpack.c.b16 %v852, %v851
    %v1012 = vpack.c.b16 %v854, %v853
    %v1013 = vpack.c.b16 %v856, %v855
    %v1014 = vpack.c.b16 %v858, %v857
    %v1015 = vpack.c.b16 %v860, %v859
    %v1016 = vpack.c.b16 %v862, %v861
    %v1017 = vpack.c.b16 %v864, %v863
    %v1018 = vpack.c.b16 %v866, %v865
    %v1019 = vpack.c.b16 %v868, %v867
    %v1020 = vpack.c.b16 %v870, %v869
    %v1021 = vpack.c.b16 %v872, %v871
    %v1022 = vpack.c.b16 %v874, %v873
    %v1023 = vpack.c.b16 %v876, %v875
    %v1024 = vpack.c.b16 %v878, %v877
    %v1025 = vpack.c.b16 %v880, %v879
    %v1026 = vpack.c.b16 %v882, %v881
    %v1027 = vpack.c.b16 %v884, %v883
    %v1028 = vpack.c.b16 %v886, %v885
    %v1029 = vpack.c.b16 %v888, %v887
    %v1030 = vpack.c.b16 %v890, %v889
    %v1031 = vpack.c.b16 %v892, %v891
    %v1032 = vpack.c.b16 %v894, %v893
    %v1033 = vpack.c.b16 %v896, %v895
    %v1034 = vpack.c.b16 %v898, %v897
    %v1035 = vpack.c.b16 %v900, %v899
    %v1036 = vpack.c.b16 %v902, %v901
    %v1037 = vpack.c.b16 %v904, %v903
    %v1038 = vpack.c.b16 %v906, %v905
    %v1039 = vpack.c.b16 %v908, %v907
    %v1040 = vpack.c.b16 %v910, %v909
    %v1041 = vpack.c.b16 %v912, %v911
    %v1042 = vpack.c.b16 %v914, %v913
    %1171 = vmatprep.subr.bf16.mxu0 0
    %1172 = vmatpush1.bf16.msra.mxu0 %v915
    %1173 = vmatprep.subr.bf16.mxu0 0
    %1174 = vmatpush1.bf16.msra.mxu0 %v916
    %1175 = vmatprep.subr.bf16.mxu0 0
    %1176 = vmatpush1.bf16.msra.mxu0 %v917
    %1177 = vmatprep.subr.bf16.mxu0 0
    %1178 = vmatpush1.bf16.msra.mxu0 %v918
    %1179 = vmatprep.subr.bf16.mxu0 0
    %1180 = vmatpush1.bf16.msra.mxu0 %v919
    %1181 = vmatprep.subr.bf16.mxu0 0
    %1182 = vmatpush1.bf16.msra.mxu0 %v920
    %1183 = vmatprep.subr.bf16.mxu0 0
    %1184 = vmatpush1.bf16.msra.mxu0 %v921
    %1185 = vmatprep.subr.bf16.mxu0 0
    %1186 = vmatpush1.bf16.msra.mxu0 %v922
    %1187 = vmatprep.subr.bf16.mxu0 0
    %1188 = vmatpush1.bf16.msra.mxu0 %v923
    %1189 = vmatprep.subr.bf16.mxu0 0
    %1190 = vmatpush1.bf16.msra.mxu0 %v924
    %1191 = vmatprep.subr.bf16.mxu0 0
    %1192 = vmatpush1.bf16.msra.mxu0 %v925
    %1193 = vmatprep.subr.bf16.mxu0 0
    %1194 = vmatpush1.bf16.msra.mxu0 %v926
    %1195 = vmatprep.subr.bf16.mxu0 0
    %1196 = vmatpush1.bf16.msra.mxu0 %v927
    %1197 = vmatprep.subr.bf16.mxu0 0
    %1198 = vmatpush1.bf16.msra.mxu0 %v928
    %1199 = vmatprep.subr.bf16.mxu0 0
    %1200 = vmatpush1.bf16.msra.mxu0 %v929
    %1201 = vmatprep.subr.bf16.mxu0 0
    %1202 = vmatpush1.bf16.msra.mxu0 %v930
    %1203 = vmatprep.mubr.bf16.mxu0 %v326
    %1204 = vmatmul.mubr.bf16.gmra.mrb[0].mxu0 %v312
    %v1205 = vpop.f32.mrb[0].mxu0
    %v1206 = vadd.f32 %v285, %v1205
    %v1207 = vpop.f32.mrb[0].mxu0
    %v1208 = vpop.f32.mrb[0].mxu0
    %v1209 = vpop.f32.mrb[0].mxu0
    %1210 = vdwg.mxu0
    %1211 = vmatprep.subr.bf16.mxu0 0
    %1212 = vmatpush1.bf16.msra.mxu0 %v931
    %1213 = vmatprep.subr.bf16.mxu0 0
    %1214 = vmatpush1.bf16.msra.mxu0 %v932
    %1215 = vmatprep.subr.bf16.mxu0 0
    %1216 = vmatpush1.bf16.msra.mxu0 %v933
    %1217 = vmatprep.subr.bf16.mxu0 0
    %1218 = vmatpush1.bf16.msra.mxu0 %v934
    %1219 = vmatprep.subr.bf16.mxu0 0
    %1220 = vmatpush1.bf16.msra.mxu0 %v935
    %1221 = vmatprep.subr.bf16.mxu0 0
    %1222 = vmatpush1.bf16.msra.mxu0 %v936
    %1223 = vmatprep.subr.bf16.mxu0 0
    %1224 = vmatpush1.bf16.msra.mxu0 %v937
    %1225 = vmatprep.subr.bf16.mxu0 0
    %1226 = vmatpush1.bf16.msra.mxu0 %v938
    %1227 = vmatprep.subr.bf16.mxu0 0
    %1228 = vmatpush1.bf16.msra.mxu0 %v939
    %1229 = vmatprep.subr.bf16.mxu0 0
    %1230 = vmatpush1.bf16.msra.mxu0 %v940
    %1231 = vmatprep.subr.bf16.mxu0 0
    %1232 = vmatpush1.bf16.msra.mxu0 %v941
    %1233 = vmatprep.subr.bf16.mxu0 0
    %1234 = vmatpush1.bf16.msra.mxu0 %v942
    %1235 = vmatprep.subr.bf16.mxu0 0
    %1236 = vmatpush1.bf16.msra.mxu0 %v943
    %1237 = vmatprep.subr.bf16.mxu0 0
    %1238 = vmatpush1.bf16.msra.mxu0 %v944
    %1239 = vmatprep.subr.bf16.mxu0 0
    %1240 = vmatpush1.bf16.msra.mxu0 %v945
    %1241 = vmatprep.subr.bf16.mxu0 0
    %1242 = vmatpush1.bf16.msra.mxu0 %v946
    %1243 = vmatprep.mubr.bf16.mxu0 %v336
    %1244 = vmatmul.mubr.bf16.gmra.mrb[0].mxu0 %v334
    %v1245 = vpop.f32.mrb[0].mxu0
    %v1246 = vadd.f32 %v1206, %v1245
    %v1247 = vpop.f32.mrb[0].mxu0
    %v1248 = vpop.f32.mrb[0].mxu0
    %v1249 = vpop.f32.mrb[0].mxu0
    %1250 = vdwg.mxu0
    %1251 = vmatprep.subr.bf16.mxu0 0
    %1252 = vmatpush1.bf16.msra.mxu0 %v947
    %1253 = vmatprep.subr.bf16.mxu0 0
    %1254 = vmatpush1.bf16.msra.mxu0 %v948
    %1255 = vmatprep.subr.bf16.mxu0 0
    %1256 = vmatpush1.bf16.msra.mxu0 %v949
    %1257 = vmatprep.subr.bf16.mxu0 0
    %1258 = vmatpush1.bf16.msra.mxu0 %v950
    %1259 = vmatprep.subr.bf16.mxu0 0
    %1260 = vmatpush1.bf16.msra.mxu0 %v951
    %1261 = vmatprep.subr.bf16.mxu0 0
    %1262 = vmatpush1.bf16.msra.mxu0 %v952
    %1263 = vmatprep.subr.bf16.mxu0 0
    %1264 = vmatpush1.bf16.msra.mxu0 %v953
    %1265 = vmatprep.subr.bf16.mxu0 0
    %1266 = vmatpush1.bf16.msra.mxu0 %v954
    %1267 = vmatprep.subr.bf16.mxu0 0
    %1268 = vmatpush1.bf16.msra.mxu0 %v955
    %1269 = vmatprep.subr.bf16.mxu0 0
    %1270 = vmatpush1.bf16.msra.mxu0 %v956
    %1271 = vmatprep.subr.bf16.mxu0 0
    %1272 = vmatpush1.bf16.msra.mxu0 %v957
    %1273 = vmatprep.subr.bf16.mxu0 0
    %1274 = vmatpush1.bf16.msra.mxu0 %v958
    %1275 = vmatprep.subr.bf16.mxu0 0
    %1276 = vmatpush1.bf16.msra.mxu0 %v959
    %1277 = vmatprep.subr.bf16.mxu0 0
    %1278 = vmatpush1.bf16.msra.mxu0 %v960
    %1279 = vmatprep.subr.bf16.mxu0 0
    %1280 = vmatpush1.bf16.msra.mxu0 %v961
    %1281 = vmatprep.subr.bf16.mxu0 0
    %1282 = vmatpush1.bf16.msra.mxu0 %v962
    %1283 = vmatprep.mubr.bf16.mxu0 %v333
    %1284 = vmatmul.mubr.bf16.gmra.mrb[0].mxu0 %v319
    %v1285 = vpop.f32.mrb[0].mxu0
    %v1286 = vadd.f32 %v1246, %v1285
    %v1287 = vpop.f32.mrb[0].mxu0
    %v1288 = vpop.f32.mrb[0].mxu0
    %v1289 = vpop.f32.mrb[0].mxu0
    %1290 = vdwg.mxu0
    %1291 = vmatprep.subr.bf16.mxu0 0
    %1292 = vmatpush1.bf16.msra.mxu0 %v963
    %1293 = vmatprep.subr.bf16.mxu0 0
    %1294 = vmatpush1.bf16.msra.mxu0 %v964
    %1295 = vmatprep.subr.bf16.mxu0 0
    %1296 = vmatpush1.bf16.msra.mxu0 %v965
    %1297 = vmatprep.subr.bf16.mxu0 0
    %1298 = vmatpush1.bf16.msra.mxu0 %v966
    %1299 = vmatprep.subr.bf16.mxu0 0
    %1300 = vmatpush1.bf16.msra.mxu0 %v967
    %1301 = vmatprep.subr.bf16.mxu0 0
    %1302 = vmatpush1.bf16.msra.mxu0 %v968
    %1303 = vmatprep.subr.bf16.mxu0 0
    %1304 = vmatpush1.bf16.msra.mxu0 %v969
    %1305 = vmatprep.subr.bf16.mxu0 0
    %1306 = vmatpush1.bf16.msra.mxu0 %v970
    %1307 = vmatprep.subr.bf16.mxu0 0
    %1308 = vmatpush1.bf16.msra.mxu0 %v971
    %1309 = vmatprep.subr.bf16.mxu0 0
    %1310 = vmatpush1.bf16.msra.mxu0 %v972
    %1311 = vmatprep.subr.bf16.mxu0 0
    %1312 = vmatpush1.bf16.msra.mxu0 %v973
    %1313 = vmatprep.subr.bf16.mxu0 0
    %1314 = vmatpush1.bf16.msra.mxu0 %v974
    %1315 = vmatprep.subr.bf16.mxu0 0
    %1316 = vmatpush1.bf16.msra.mxu0 %v975
    %1317 = vmatprep.subr.bf16.mxu0 0
    %1318 = vmatpush1.bf16.msra.mxu0 %v976
    %1319 = vmatprep.subr.bf16.mxu0 0
    %1320 = vmatpush1.bf16.msra.mxu0 %v977
    %1321 = vmatprep.subr.bf16.mxu0 0
    %1322 = vmatpush1.bf16.msra.mxu0 %v978
    %1323 = vmatprep.mubr.bf16.mxu0 %v337
    %1324 = vmatmul.mubr.bf16.gmra.mrb[0].mxu0 %v335
    %v1325 = vpop.f32.mrb[0].mxu0
    %v1326 = vadd.f32 %v1286, %v1325
    %v1327 = vpop.f32.mrb[0].mxu0
    %v1328 = vpop.f32.mrb[0].mxu0
    %v1329 = vpop.f32.mrb[0].mxu0
    %1330 = vdwg.mxu0
    %1331 = vmatprep.subr.bf16.mxu0 0
    %1332 = vmatpush1.bf16.msra.mxu0 %v979
    %1333 = vmatprep.subr.bf16.mxu0 0
    %1334 = vmatpush1.bf16.msra.mxu0 %v980
    %1335 = vmatprep.subr.bf16.mxu0 0
    %1336 = vmatpush1.bf16.msra.mxu0 %v981
    %1337 = vmatprep.subr.bf16.mxu0 0
    %1338 = vmatpush1.bf16.msra.mxu0 %v982
    %1339 = vmatprep.subr.bf16.mxu0 0
    %1340 = vmatpush1.bf16.msra.mxu0 %v983
    %1341 = vmatprep.subr.bf16.mxu0 0
    %1342 = vmatpush1.bf16.msra.mxu0 %v984
    %1343 = vmatprep.subr.bf16.mxu0 0
    %1344 = vmatpush1.bf16.msra.mxu0 %v985
    %1345 = vmatprep.subr.bf16.mxu0 0
    %1346 = vmatpush1.bf16.msra.mxu0 %v986
    %1347 = vmatprep.subr.bf16.mxu0 0
    %1348 = vmatpush1.bf16.msra.mxu0 %v987
    %1349 = vmatprep.subr.bf16.mxu0 0
    %1350 = vmatpush1.bf16.msra.mxu0 %v988
    %1351 = vmatprep.subr.bf16.mxu0 0
    %1352 = vmatpush1.bf16.msra.mxu0 %v989
    %1353 = vmatprep.subr.bf16.mxu0 0
    %1354 = vmatpush1.bf16.msra.mxu0 %v990
    %1355 = vmatprep.subr.bf16.mxu0 0
    %1356 = vmatpush1.bf16.msra.mxu0 %v991
    %1357 = vmatprep.subr.bf16.mxu0 0
    %1358 = vmatpush1.bf16.msra.mxu0 %v992
    %1359 = vmatprep.subr.bf16.mxu0 0
    %1360 = vmatpush1.bf16.msra.mxu0 %v993
    %1361 = vmatprep.subr.bf16.mxu0 0
    %1362 = vmatpush1.bf16.msra.mxu0 %v994
    %1363 = vmatprep.mubr.bf16.mxu0 %v375
    %1364 = vmatmul.mubr.bf16.gmra.mrb[0].mxu0 %v361
    %v1365 = vpop.f32.mrb[0].mxu0
    %v1366 = vadd.f32 %v1326, %v1365
    %v1367 = vpop.f32.mrb[0].mxu0
    %v1368 = vpop.f32.mrb[0].mxu0
    %v1369 = vpop.f32.mrb[0].mxu0
    %1370 = vdwg.mxu0
    %1371 = vmatprep.subr.bf16.mxu0 0
    %1372 = vmatpush1.bf16.msra.mxu0 %v995
    %1373 = vmatprep.subr.bf16.mxu0 0
    %1374 = vmatpush1.bf16.msra.mxu0 %v996
    %1375 = vmatprep.subr.bf16.mxu0 0
    %1376 = vmatpush1.bf16.msra.mxu0 %v997
    %1377 = vmatprep.subr.bf16.mxu0 0
    %1378 = vmatpush1.bf16.msra.mxu0 %v998
    %1379 = vmatprep.subr.bf16.mxu0 0
    %1380 = vmatpush1.bf16.msra.mxu0 %v999
    %1381 = vmatprep.subr.bf16.mxu0 0
    %1382 = vmatpush1.bf16.msra.mxu0 %v1000
    %1383 = vmatprep.subr.bf16.mxu0 0
    %1384 = vmatpush1.bf16.msra.mxu0 %v1001
    %1385 = vmatprep.subr.bf16.mxu0 0
    %1386 = vmatpush1.bf16.msra.mxu0 %v1002
    %1387 = vmatprep.subr.bf16.mxu0 0
    %1388 = vmatpush1.bf16.msra.mxu0 %v1003
    %1389 = vmatprep.subr.bf16.mxu0 0
    %1390 = vmatpush1.bf16.msra.mxu0 %v1004
    %1391 = vmatprep.subr.bf16.mxu0 0
    %1392 = vmatpush1.bf16.msra.mxu0 %v1005
    %1393 = vmatprep.subr.bf16.mxu0 0
    %1394 = vmatpush1.bf16.msra.mxu0 %v1006
    %1395 = vmatprep.subr.bf16.mxu0 0
    %1396 = vmatpush1.bf16.msra.mxu0 %v1007
    %1397 = vmatprep.subr.bf16.mxu0 0
    %1398 = vmatpush1.bf16.msra.mxu0 %v1008
    %1399 = vmatprep.subr.bf16.mxu0 0
    %1400 = vmatpush1.bf16.msra.mxu0 %v1009
    %1401 = vmatprep.subr.bf16.mxu0 0
    %1402 = vmatpush1.bf16.msra.mxu0 %v1010
    %1403 = vmatprep.mubr.bf16.mxu0 %v385
    %1404 = vmatmul.mubr.bf16.gmra.mrb[0].mxu0 %v383
    %v1405 = vpop.f32.mrb[0].mxu0
    %v1406 = vadd.f32 %v1366, %v1405
    %v1407 = vpop.f32.mrb[0].mxu0
    %v1408 = vpop.f32.mrb[0].mxu0
    %v1409 = vpop.f32.mrb[0].mxu0
    %1410 = vdwg.mxu0
    %1411 = vmatprep.subr.bf16.mxu0 0
    %1412 = vmatpush1.bf16.msra.mxu0 %v1011
    %1413 = vmatprep.subr.bf16.mxu0 0
    %1414 = vmatpush1.bf16.msra.mxu0 %v1012
    %1415 = vmatprep.subr.bf16.mxu0 0
    %1416 = vmatpush1.bf16.msra.mxu0 %v1013
    %1417 = vmatprep.subr.bf16.mxu0 0
    %1418 = vmatpush1.bf16.msra.mxu0 %v1014
    %1419 = vmatprep.subr.bf16.mxu0 0
    %1420 = vmatpush1.bf16.msra.mxu0 %v1015
    %1421 = vmatprep.subr.bf16.mxu0 0
    %1422 = vmatpush1.bf16.msra.mxu0 %v1016
    %1423 = vmatprep.subr.bf16.mxu0 0
    %1424 = vmatpush1.bf16.msra.mxu0 %v1017
    %1425 = vmatprep.subr.bf16.mxu0 0
    %1426 = vmatpush1.bf16.msra.mxu0 %v1018
    %1427 = vmatprep.subr.bf16.mxu0 0
    %1428 = vmatpush1.bf16.msra.mxu0 %v1019
    %1429 = vmatprep.subr.bf16.mxu0 0
    %1430 = vmatpush1.bf16.msra.mxu0 %v1020
    %1431 = vmatprep.subr.bf16.mxu0 0
    %1432 = vmatpush1.bf16.msra.mxu0 %v1021
    %1433 = vmatprep.subr.bf16.mxu0 0
    %1434 = vmatpush1.bf16.msra.mxu0 %v1022
    %1435 = vmatprep.subr.bf16.mxu0 0
    %1436 = vmatpush1.bf16.msra.mxu0 %v1023
    %1437 = vmatprep.subr.bf16.mxu0 0
    %1438 = vmatpush1.bf16.msra.mxu0 %v1024
    %1439 = vmatprep.subr.bf16.mxu0 0
    %1440 = vmatpush1.bf16.msra.mxu0 %v1025
    %1441 = vmatprep.subr.bf16.mxu0 0
    %1442 = vmatpush1.bf16.msra.mxu0 %v1026
    %1443 = vmatprep.mubr.bf16.mxu0 %v382
    %1444 = vmatmul.mubr.bf16.gmra.mrb[0].mxu0 %v368
    %v1445 = vpop.f32.mrb[0].mxu0
    %v1446 = vadd.f32 %v1406, %v1445
    %v1447 = vpop.f32.mrb[0].mxu0
    %v1448 = vpop.f32.mrb[0].mxu0
    %v1449 = vpop.f32.mrb[0].mxu0
    %1450 = vdwg.mxu0
    %1451 = vmatprep.subr.bf16.mxu0 0
    %1452 = vmatpush1.bf16.msra.mxu0 %v1027
    %1453 = vmatprep.subr.bf16.mxu0 0
    %1454 = vmatpush1.bf16.msra.mxu0 %v1028
    %1455 = vmatprep.subr.bf16.mxu0 0
    %1456 = vmatpush1.bf16.msra.mxu0 %v1029
    %1457 = vmatprep.subr.bf16.mxu0 0
    %1458 = vmatpush1.bf16.msra.mxu0 %v1030
    %1459 = vmatprep.subr.bf16.mxu0 0
    %1460 = vmatpush1.bf16.msra.mxu0 %v1031
    %1461 = vmatprep.subr.bf16.mxu0 0
    %1462 = vmatpush1.bf16.msra.mxu0 %v1032
    %1463 = vmatprep.subr.bf16.mxu0 0
    %1464 = vmatpush1.bf16.msra.mxu0 %v1033
    %1465 = vmatprep.subr.bf16.mxu0 0
    %1466 = vmatpush1.bf16.msra.mxu0 %v1034
    %1467 = vmatprep.subr.bf16.mxu0 0
    %1468 = vmatpush1.bf16.msra.mxu0 %v1035
    %1469 = vmatprep.subr.bf16.mxu0 0
    %1470 = vmatpush1.bf16.msra.mxu0 %v1036
    %1471 = vmatprep.subr.bf16.mxu0 0
    %1472 = vmatpush1.bf16.msra.mxu0 %v1037
    %1473 = vmatprep.subr.bf16.mxu0 0
    %1474 = vmatpush1.bf16.msra.mxu0 %v1038
    %1475 = vmatprep.subr.bf16.mxu0 0
    %1476 = vmatpush1.bf16.msra.mxu0 %v1039
    %1477 = vmatprep.subr.bf16.mxu0 0
    %1478 = vmatpush1.bf16.msra.mxu0 %v1040
    %1479 = vmatprep.subr.bf16.mxu0 0
    %1480 = vmatpush1.bf16.msra.mxu0 %v1041
    %1481 = vmatprep.subr.bf16.mxu0 0
    %1482 = vmatpush1.bf16.msra.mxu0 %v1042
    %1483 = vmatprep.mubr.bf16.mxu0 %v386
    %1484 = vmatmul.mubr.bf16.gmra.mrb[0].mxu0 %v384
    %v1485 = vpop.f32.mrb[0].mxu0
    %v1486 = vadd.f32 %v1446, %v1485
    %v1487 = vpop.f32.mrb[0].mxu0
    %v1488 = vpop.f32.mrb[0].mxu0
    %v1489 = vpop.f32.mrb[0].mxu0
    %1490 = vdwg.mxu0
    %v1491 = vmax.f32 %v1486, 0.0
    %v1492 = vpack.c.bf16 %v1491, %v1491
    %v1493 = vld [vmem:[%s3] sm:$0xf]
    %v1494 = vld [vmem:[%s3 + $0x4] sm:$0xf]
    %v1495 = vld [vmem:[%s3 + $0x8] sm:$0xf]
    %v1496 = vld [vmem:[%s3 + $0xc] sm:$0xf]
    %v1497 = vld [vmem:[%s3 + $0x10] sm:$0xf]
    %v1498 = vld [vmem:[%s3 + $0x14] sm:$0xf]
    %v1499 = vld [vmem:[%s3 + $0x18] sm:$0xf]
    %v1500 = vld [vmem:[%s3 + $0x1c] sm:$0xf]
    %v1501 = vld [vmem:[%s3 + $0x20] sm:$0xf]
    %v1502 = vld [vmem:[%s3 + $0x24] sm:$0xf]
    %v1503 = vld [vmem:[%s3 + $0x28] sm:$0xf]
    %v1504 = vld [vmem:[%s3 + $0x2c] sm:$0xf]
    %v1505 = vld [vmem:[%s3 + $0x30] sm:$0xf]
    %v1506 = vld [vmem:[%s3 + $0x34] sm:$0xf]
    %v1507 = vld [vmem:[%s3 + $0x38] sm:$0xf]
    %v1508 = vld [vmem:[%s3 + $0x3c] sm:$0xf]
    %v1509 = vld [vmem:[%s4] sm:$0x1]
    %v1511 = vlaneseq
    %v1512 = vshrl.u32 %v1511, 7
    %v1513 = vsub.s32 0, %v1512
    %v1514 = vrot.slane %v1509, %v1513
    %v1532 = vunpack.c.l.b16 %v1493
    %v1533 = vunpack.c.l.b16 %v1494
    %v1534 = vunpack.c.l.b16 %v1495
    %v1535 = vunpack.c.l.b16 %v1496
    %v1536 = vunpack.c.l.b16 %v1497
    %v1537 = vunpack.c.l.b16 %v1498
    %v1538 = vunpack.c.l.b16 %v1499
    %v1539 = vunpack.c.l.b16 %v1500
    %v1540 = vunpack.c.l.b16 %v1501
    %v1541 = vunpack.c.l.b16 %v1502
    %v1542 = vunpack.c.l.b16 %v1503
    %v1543 = vunpack.c.l.b16 %v1504
    %v1544 = vunpack.c.l.b16 %v1505
    %v1545 = vunpack.c.l.b16 %v1506
    %v1546 = vunpack.c.l.b16 %v1507
    %v1547 = vunpack.c.l.b16 %v1508
    %v1548 = vpack.c.b16 %v1533, %v1532
    %v1549 = vpack.c.b16 %v1535, %v1534
    %v1550 = vpack.c.b16 %v1537, %v1536
    %v1551 = vpack.c.b16 %v1539, %v1538
    %v1552 = vpack.c.b16 %v1541, %v1540
    %v1553 = vpack.c.b16 %v1543, %v1542
    %v1554 = vpack.c.b16 %v1545, %v1544
    %v1555 = vpack.c.b16 %v1547, %v1546
    %1564 = vmatprep.subr.bf16.mxu0 0
    %1565 = vmatpush1.bf16.msra.mxu0 %v1548
    %1566 = vmatprep.subr.bf16.mxu0 0
    %1567 = vmatpush1.bf16.msra.mxu0 %v1549
    %1568 = vmatprep.subr.bf16.mxu0 0
    %1569 = vmatpush1.bf16.msra.mxu0 %v1550
    %1570 = vmatprep.subr.bf16.mxu0 0
    %1571 = vmatpush1.bf16.msra.mxu0 %v1551
    %1572 = vmatprep.subr.bf16.mxu0 0
    %1573 = vmatpush1.bf16.msra.mxu0 %v1552
    %1574 = vmatprep.subr.bf16.mxu0 0
    %1575 = vmatpush1.bf16.msra.mxu0 %v1553
    %1576 = vmatprep.subr.bf16.mxu0 0
    %1577 = vmatpush1.bf16.msra.mxu0 %v1554
    %1578 = vmatprep.subr.bf16.mxu0 0
    %1579 = vmatpush1.bf16.msra.mxu0 %v1555
    %1580 = vmatprep.subr.bf16.mxu0 0
    %1581 = vmatpush1.bf16.msra.mxu0 0
    %1582 = vmatprep.subr.bf16.mxu0 0
    %1583 = vmatpush1.bf16.msra.mxu0 0
    %1584 = vmatprep.subr.bf16.mxu0 0
    %1585 = vmatpush1.bf16.msra.mxu0 0
    %1586 = vmatprep.subr.bf16.mxu0 0
    %1587 = vmatpush1.bf16.msra.mxu0 0
    %1588 = vmatprep.subr.bf16.mxu0 0
    %1589 = vmatpush1.bf16.msra.mxu0 0
    %1590 = vmatprep.subr.bf16.mxu0 0
    %1591 = vmatpush1.bf16.msra.mxu0 0
    %1592 = vmatprep.subr.bf16.mxu0 0
    %1593 = vmatpush1.bf16.msra.mxu0 0
    %1594 = vmatprep.subr.bf16.mxu0 0
    %1595 = vmatpush1.bf16.msra.mxu0 0
    %1596 = vmatprep.mubr.bf16.mxu0 0
    %1597 = vmatmul.mubr.bf16.gmra.mrb[0].mxu0 %v1492
    %v1598 = vpop.f32.mrb[0].mxu0
    %v1599 = vadd.f32 %v1514, %v1598
    %v1600 = vpop.f32.mrb[0].mxu0
    %v1601 = vpop.f32.mrb[0].mxu0
    %v1602 = vpop.f32.mrb[0].mxu0
    %1603 = vdwg.mxu0
    %v1604 = vlaneseq
    %v1605 = vand.u32 %v1604, 127
    %vm1606 = vcmp.lt.s32.totalorder %v1605, 10
    %v1607 = vsel %vm1606, %v1599, -1e+30
    %vm1608 = vcmask 1041408
    %v1609 = vsel %vm1608, %v1607, -inf
    %1610 = vmax.xlane.f32.xlu0 %v1609
    %v1611 = vpop.xlane.xlu0 %1610
    %v1612 = vsub.f32 %v1599, %v1611
    %v1613 = vmul.f32 %v1612, 1.442695
    %v1614 = vpow.pop %v1613
    %v1615 = vsel %vm1606, %v1614, 0.0
    %v1616 = vsel %vm1608, %v1615, 0.0
    %1617 = vadd.xlane.f32.xlu0 %v1616
    %v1618 = vpop.xlane.xlu0 %1617
    %v1619 = vlog2.pop %v1618
    %v1620 = vmul.f32 %v1619, 0.6931472
    %v1621 = vadd.f32 %v1611, %v1620
    %v1622 = vsub.f32 %v1599, %v1621
    %1623 = vst [vmem:[#allocation2] sm:$0x3] %v1622
    // Predicated region
    $region22: #{net_forward.5} parent=1 // pred_check
      _
    $region23: #{net_forward.5} parent=1 // pred_check_branch
      %1625 = sbr.rel (0) target = $region25
    $region24: #{net_forward.5} parent=1 // pred_region
      %s1627 = ssub.s32 32, 32
      %1628 = vsyncadd [#allocation3], %s1627
      %s1630 = sshll.u32 [#allocation2], 4
      %s1631 = int_to_ptr.vmem [resolvable:$true] %s1630
      %1633 = dma.vmem_to_hbm [thread:$0]  %s1631, 32, %s5, [#allocation3]
    $region25: #{net_forward.5} parent=1 // pred_fallthru
      _
    // Predicated region
    $region26: #{net_forward.5} parent=1 // pred_check
      _
    $region27: #{net_forward.5} parent=1 // pred_check_branch
      %1635 = sbr.rel (0) target = $region29
    $region28: #{net_forward.5} parent=1 // pred_region
      %1636 = dma.done [#allocation3], 32
    $region29: #{net_forward.5} parent=1 // pred_fallthru
      _
    %1637 = vsyncpa [#allocation3], 1

// kernel: net_forward.4
$region0: #{net_forward.4}
  #allocation0 [shape = 'u32[]', space=smem, size = 0x4, offset = 0x4, fixed_abs, tag = 'smem constant byte address 0x4 - core index']
  #allocation1 [shape = 'u32[144,128]{1,0:T(1,128)}', space=vmem, size = 0x12000, scoped, tag = 'internal scratch']
  #allocation2 [shape = 'f32[2,8,8,128]{3,2,1,0:T(8,128)}', space=vmem, size = 0x10000, scoped, tag = 'scratch operand']
  %s0 = inlined_call_operand.vmem [shape: bf16[2,12,12,128], index: 0, kind: input, shape index: {}]
  %s1 = inlined_call_operand.vmem [shape: bf16[25,128,128], index: 1, kind: input, shape index: {}]
  %s2 = inlined_call_operand.vmem [shape: f32[1,128], index: 2, kind: input, shape index: {}]
  %s3 = inlined_call_operand.vmem [shape: bf16[2,16,128], index: 3, kind: output, shape index: {}]
  %s4 = sld [smem:[#allocation0]]
  $region22: #{net_forward.4} parent=0
    _
  %s6 = ssub.s32 1, %s4
  %s7 = scalar_select 0, %s6, %s4
  // Predicated region
  $region2: #{net_forward.4} parent=0 // pred_check
    _
  $region3: #{net_forward.4} parent=0 // pred_check_branch
    %9 = sbr.rel (0) target = $region5
  $region4: #{net_forward.4} parent=0 // pred_region
    _
  $region5: #{net_forward.4} parent=0 // pred_fallthru
    _
  // Predicated region
  $region6: #{net_forward.4} parent=0 // pred_check
    _
  $region7: #{net_forward.4} parent=0 // pred_check_branch
    %11 = sbr.rel (0) target = $region9
  $region8: #{net_forward.4} parent=0 // pred_region
    _
  $region9: #{net_forward.4} parent=0 // pred_fallthru
    _
  // Predicated region
  $region10: #{net_forward.4} parent=0 // pred_check
    _
  $region11: #{net_forward.4} parent=0 // pred_check_branch
    %13 = sbr.rel (0) target = $region13
  $region12: #{net_forward.4} parent=0 // pred_region
    _
  $region13: #{net_forward.4} parent=0 // pred_fallthru
    _
  %v15 = vld [vmem:[%s0] sm:$0xf]
  %v16 = vld [vmem:[%s0 + $0x8] sm:$0xf]
  %v17 = vld [vmem:[%s0 + $0x10] sm:$0xf]
  %v18 = vld [vmem:[%s0 + $0x18] sm:$0xf]
  %v19 = vld [vmem:[%s0 + $0x20] sm:$0xf]
  %v20 = vld [vmem:[%s0 + $0x28] sm:$0xf]
  %v21 = vld [vmem:[%s0 + $0x30] sm:$0xf]
  %v22 = vld [vmem:[%s0 + $0x38] sm:$0xf]
  %v23 = vld [vmem:[%s0 + $0x60] sm:$0xf]
  %v24 = vld [vmem:[%s0 + $0x68] sm:$0xf]
  %v25 = vld [vmem:[%s0 + $0x70] sm:$0xf]
  %v26 = vld [vmem:[%s0 + $0x78] sm:$0xf]
  %v27 = vld [vmem:[%s0 + $0x80] sm:$0xf]
  %v28 = vld [vmem:[%s0 + $0x88] sm:$0xf]
  %v29 = vld [vmem:[%s0 + $0x90] sm:$0xf]
  %v30 = vld [vmem:[%s0 + $0x98] sm:$0xf]
  %v31 = vld [vmem:[%s1] sm:$0xf]
  %v32 = vld [vmem:[%s1 + $0x4] sm:$0xf]
  %v33 = vld [vmem:[%s1 + $0x8] sm:$0xf]
  %v34 = vld [vmem:[%s1 + $0xc] sm:$0xf]
  %v35 = vld [vmem:[%s1 + $0x10] sm:$0xf]
  %v36 = vld [vmem:[%s1 + $0x14] sm:$0xf]
  %v37 = vld [vmem:[%s1 + $0x18] sm:$0xf]
  %v38 = vld [vmem:[%s1 + $0x1c] sm:$0xf]
  %v39 = vld [vmem:[%s1 + $0x20] sm:$0xf]
  %v40 = vld [vmem:[%s1 + $0x24] sm:$0xf]
  %v41 = vld [vmem:[%s1 + $0x28] sm:$0xf]
  %v42 = vld [vmem:[%s1 + $0x2c] sm:$0xf]
  %v43 = vld [vmem:[%s1 + $0x30] sm:$0xf]
  %v44 = vld [vmem:[%s1 + $0x34] sm:$0xf]
  %v45 = vld [vmem:[%s1 + $0x38] sm:$0xf]
  %v46 = vld [vmem:[%s1 + $0x3c] sm:$0xf]
  %v47 = vld [vmem:[%s0 + $0x4] sm:$0x1]
  %v48 = vld [vmem:[%s0 + $0xc] sm:$0x1]
  %v49 = vld [vmem:[%s0 + $0x14] sm:$0x1]
  %v50 = vld [vmem:[%s0 + $0x1c] sm:$0x1]
  %v51 = vld [vmem:[%s0 + $0x24] sm:$0x1]
  %v52 = vld [vmem:[%s0 + $0x2c] sm:$0x1]
  %v53 = vld [vmem:[%s0 + $0x34] sm:$0x1]
  %v54 = vld [vmem:[%s0 + $0x3c] sm:$0x1]
  %v55 = vld [vmem:[%s0 + $0x64] sm:$0x1]
  %v56 = vld [vmem:[%s0 + $0x6c] sm:$0x1]
  %v57 = vld [vmem:[%s0 + $0x74] sm:$0x1]
  %v58 = vld [vmem:[%s0 + $0x7c] sm:$0x1]
  %v59 = vld [vmem:[%s0 + $0x84] sm:$0x1]
  %v60 = vld [vmem:[%s0 + $0x8c] sm:$0x1]
  %v61 = vld [vmem:[%s0 + $0x94] sm:$0x1]
  %v62 = vld [vmem:[%s0 + $0x9c] sm:$0x1]
  %vm63 = vsmask.f32 3328
  %vm64 = vsmask.f32 7440
  %vm65 = vmor %vm63, %vm64
  %v67 = vshrl.u32 %v15, 16
  %v69 = vrot.slane %v67, 4
  %v70 = vshll.u32 %v15, 16
  %v72 = vrot.slane %v70, 5
  %v73 = vor.u32 %v69, %v72
  %v74 = vrot.slane %v73, 4
  %v76 = vshll.u32 %v47, 16
  %v78 = vrot.slane %v76, 5
  %v79 = vsel %vm65, %v74, %v78
  %v81 = vshrl.u32 %v16, 16
  %v83 = vrot.slane %v81, 4
  %v84 = vshll.u32 %v16, 16
  %v86 = vrot.slane %v84, 5
  %v87 = vor.u32 %v83, %v86
  %v88 = vrot.slane %v87, 4
  %v90 = vshll.u32 %v48, 16
  %v92 = vrot.slane %v90, 5
  %v93 = vsel %vm65, %v88, %v92
  %v95 = vshrl.u32 %v17, 16
  %v97 = vrot.slane %v95, 4
  %v98 = vshll.u32 %v17, 16
  %v100 = vrot.slane %v98, 5
  %v101 = vor.u32 %v97, %v100
  %v102 = vrot.slane %v101, 4
  %v104 = vshll.u32 %v49, 16
  %v106 = vrot.slane %v104, 5
  %v107 = vsel %vm65, %v102, %v106
  %v109 = vshrl.u32 %v18, 16
  %v111 = vrot.slane %v109, 4
  %v112 = vshll.u32 %v18, 16
  %v114 = vrot.slane %v112, 5
  %v115 = vor.u32 %v111, %v114
  %v116 = vrot.slane %v115, 4
  %v118 = vshll.u32 %v50, 16
  %v120 = vrot.slane %v118, 5
  %v121 = vsel %vm65, %v116, %v120
  %v123 = vshrl.u32 %v19, 16
  %v125 = vrot.slane %v123, 4
  %v126 = vshll.u32 %v19, 16
  %v128 = vrot.slane %v126, 5
  %v129 = vor.u32 %v125, %v128
  %v130 = vrot.slane %v129, 4
  %v132 = vshll.u32 %v51, 16
  %v134 = vrot.slane %v132, 5
  %v135 = vsel %vm65, %v130, %v134
  %v137 = vshrl.u32 %v20, 16
  %v139 = vrot.slane %v137, 4
  %v140 = vshll.u32 %v20, 16
  %v142 = vrot.slane %v140, 5
  %v143 = vor.u32 %v139, %v142
  %v144 = vrot.slane %v143, 4
  %v146 = vshll.u32 %v52, 16
  %v148 = vrot.slane %v146, 5
  %v149 = vsel %vm65, %v144, %v148
  %v151 = vshrl.u32 %v21, 16
  %v153 = vrot.slane %v151, 4
  %v154 = vshll.u32 %v21, 16
  %v156 = vrot.slane %v154, 5
  %v157 = vor.u32 %v153, %v156
  %v158 = vrot.slane %v157, 4
  %v160 = vshll.u32 %v53, 16
  %v162 = vrot.slane %v160, 5
  %v163 = vsel %vm65, %v158, %v162
  %v165 = vshrl.u32 %v22, 16
  %v167 = vrot.slane %v165, 4
  %v168 = vshll.u32 %v22, 16
  %v170 = vrot.slane %v168, 5
  %v171 = vor.u32 %v167, %v170
  %v172 = vrot.slane %v171, 4
  %v174 = vshll.u32 %v54, 16
  %v176 = vrot.slane %v174, 5
  %v177 = vsel %vm65, %v172, %v176
  %v179 = vshrl.u32 %v23, 16
  %v181 = vrot.slane %v179, 4
  %v182 = vshll.u32 %v23, 16
  %v184 = vrot.slane %v182, 5
  %v185 = vor.u32 %v181, %v184
  %v186 = vrot.slane %v185, 4
  %v188 = vshll.u32 %v55, 16
  %v190 = vrot.slane %v188, 5
  %v191 = vsel %vm65, %v186, %v190
  %v193 = vshrl.u32 %v24, 16
  %v195 = vrot.slane %v193, 4
  %v196 = vshll.u32 %v24, 16
  %v198 = vrot.slane %v196, 5
  %v199 = vor.u32 %v195, %v198
  %v200 = vrot.slane %v199, 4
  %v202 = vshll.u32 %v56, 16
  %v204 = vrot.slane %v202, 5
  %v205 = vsel %vm65, %v200, %v204
  %v207 = vshrl.u32 %v25, 16
  %v209 = vrot.slane %v207, 4
  %v210 = vshll.u32 %v25, 16
  %v212 = vrot.slane %v210, 5
  %v213 = vor.u32 %v209, %v212
  %v214 = vrot.slane %v213, 4
  %v216 = vshll.u32 %v57, 16
  %v218 = vrot.slane %v216, 5
  %v219 = vsel %vm65, %v214, %v218
  %v221 = vshrl.u32 %v26, 16
  %v223 = vrot.slane %v221, 4
  %v224 = vshll.u32 %v26, 16
  %v226 = vrot.slane %v224, 5
  %v227 = vor.u32 %v223, %v226
  %v228 = vrot.slane %v227, 4
  %v230 = vshll.u32 %v58, 16
  %v232 = vrot.slane %v230, 5
  %v233 = vsel %vm65, %v228, %v232
  %v235 = vshrl.u32 %v27, 16
  %v237 = vrot.slane %v235, 4
  %v238 = vshll.u32 %v27, 16
  %v240 = vrot.slane %v238, 5
  %v241 = vor.u32 %v237, %v240
  %v242 = vrot.slane %v241, 4
  %v244 = vshll.u32 %v59, 16
  %v246 = vrot.slane %v244, 5
  %v247 = vsel %vm65, %v242, %v246
  %v249 = vshrl.u32 %v28, 16
  %v251 = vrot.slane %v249, 4
  %v252 = vshll.u32 %v28, 16
  %v254 = vrot.slane %v252, 5
  %v255 = vor.u32 %v251, %v254
  %v256 = vrot.slane %v255, 4
  %v258 = vshll.u32 %v60, 16
  %v260 = vrot.slane %v258, 5
  %v261 = vsel %vm65, %v256, %v260
  %v263 = vshrl.u32 %v29, 16
  %v265 = vrot.slane %v263, 4
  %v266 = vshll.u32 %v29, 16
  %v268 = vrot.slane %v266, 5
  %v269 = vor.u32 %v265, %v268
  %v270 = vrot.slane %v269, 4
  %v272 = vshll.u32 %v61, 16
  %v274 = vrot.slane %v272, 5
  %v275 = vsel %vm65, %v270, %v274
  %v277 = vshrl.u32 %v30, 16
  %v279 = vrot.slane %v277, 4
  %v280 = vshll.u32 %v30, 16
  %v282 = vrot.slane %v280, 5
  %v283 = vor.u32 %v279, %v282
  %v284 = vrot.slane %v283, 4
  %v286 = vshll.u32 %v62, 16
  %v288 = vrot.slane %v286, 5
  %v289 = vsel %vm65, %v284, %v288
  %s290 = scalar_lea.vmem %s1, 64
  %v291 = vld [vmem:[%s290] sm:$0xf]
  %v292 = vld [vmem:[%s290 + $0x4] sm:$0xf]
  %v293 = vld [vmem:[%s290 + $0x8] sm:$0xf]
  %v294 = vld [vmem:[%s290 + $0xc] sm:$0xf]
  %v295 = vld [vmem:[%s290 + $0x10] sm:$0xf]
  %v296 = vld [vmem:[%s290 + $0x14] sm:$0xf]
  %v297 = vld [vmem:[%s290 + $0x18] sm:$0xf]
  %v298 = vld [vmem:[%s290 + $0x1c] sm:$0xf]
  %v299 = vld [vmem:[%s290 + $0x20] sm:$0xf]
  %v300 = vld [vmem:[%s290 + $0x24] sm:$0xf]
  %v301 = vld [vmem:[%s290 + $0x28] sm:$0xf]
  %v302 = vld [vmem:[%s290 + $0x2c] sm:$0xf]
  %v303 = vld [vmem:[%s290 + $0x30] sm:$0xf]
  %v304 = vld [vmem:[%s290 + $0x34] sm:$0xf]
  %v305 = vld [vmem:[%s290 + $0x38] sm:$0xf]
  %v306 = vld [vmem:[%s290 + $0x3c] sm:$0xf]
  %v307 = vunpack.c.l.b16 %v79
  %v308 = vunpack.c.l.b16 %v93
  %v309 = vunpack.c.l.b16 %v107
  %v310 = vunpack.c.l.b16 %v121
  %v311 = vunpack.c.l.b16 %v135
  %v312 = vunpack.c.l.b16 %v149
  %v313 = vunpack.c.l.b16 %v163
  %v314 = vunpack.c.l.b16 %v177
  %v315 = vunpack.c.l.b16 %v191
  %v316 = vunpack.c.l.b16 %v205
  %v317 = vunpack.c.l.b16 %v219
  %v318 = vunpack.c.l.b16 %v233
  %v319 = vunpack.c.l.b16 %v247
  %v320 = vunpack.c.l.b16 %v261
  %v321 = vunpack.c.l.b16 %v275
  %v322 = vunpack.c.l.b16 %v289
  %v323 = vpack.c.b16 %v308, %v307
  %v324 = vpack.c.b16 %v310, %v309
  %v325 = vpack.c.b16 %v312, %v311
  %v326 = vpack.c.b16 %v314, %v313
  %v327 = vpack.c.b16 %v316, %v315
  %v328 = vpack.c.b16 %v318, %v317
  %v329 = vpack.c.b16 %v320, %v319
  %v330 = vpack.c.b16 %v322, %v321
  %v355 = vunpack.c.l.b16 %v291
  %v356 = vunpack.c.l.b16 %v292
  %v357 = vunpack.c.l.b16 %v293
  %v358 = vunpack.c.l.b16 %v294
  %v359 = vunpack.c.l.b16 %v295
  %v360 = vunpack.c.l.b16 %v296
  %v361 = vunpack.c.l.b16 %v297
  %v362 = vunpack.c.l.b16 %v298
  %v363 = vunpack.c.l.b16 %v299
  %v364 = vunpack.c.l.b16 %v300
  %v365 = vunpack.c.l.b16 %v301
  %v366 = vunpack.c.l.b16 %v302
  %v367 = vunpack.c.l.b16 %v303
  %v368 = vunpack.c.l.b16 %v304
  %v369 = vunpack.c.l.b16 %v305
  %v370 = vunpack.c.l.b16 %v306
  %v371 = vpack.c.b16 %v356, %v355
  %v372 = vpack.c.b16 %v358, %v357
  %v373 = vpack.c.b16 %v360, %v359
  %v374 = vpack.c.b16 %v362, %v361
  %v375 = vpack.c.b16 %v364, %v363
  %v376 = vpack.c.b16 %v366, %v365
  %v377 = vpack.c.b16 %v368, %v367
  %v378 = vpack.c.b16 %v370, %v369
  %387 = vmatprep.subr.bf16.mxu0 0
  %388 = vmatpush1.bf16.msra.mxu0 %v371
  %389 = vmatprep.subr.bf16.mxu0 0
  %390 = vmatpush1.bf16.msra.mxu0 %v372
  %391 = vmatprep.subr.bf16.mxu0 0
  %392 = vmatpush1.bf16.msra.mxu0 %v373
  %393 = vmatprep.subr.bf16.mxu0 0
  %394 = vmatpush1.bf16.msra.mxu0 %v374
  %395 = vmatprep.subr.bf16.mxu0 0
  %396 = vmatpush1.bf16.msra.mxu0 %v375
  %397 = vmatprep.subr.bf16.mxu0 0
  %398 = vmatpush1.bf16.msra.mxu0 %v376
  %399 = vmatprep.subr.bf16.mxu0 0
  %400 = vmatpush1.bf16.msra.mxu0 %v377
  %401 = vmatprep.subr.bf16.mxu0 0
  %402 = vmatpush1.bf16.msra.mxu0 %v378
  %403 = vmatprep.subr.bf16.mxu0 0
  %404 = vmatpush1.bf16.msra.mxu0 0
  %405 = vmatprep.subr.bf16.mxu0 0
  %406 = vmatpush1.bf16.msra.mxu0 0
  %407 = vmatprep.subr.bf16.mxu0 0
  %408 = vmatpush1.bf16.msra.mxu0 0
  %409 = vmatprep.subr.bf16.mxu0 0
  %410 = vmatpush1.bf16.msra.mxu0 0
  %411 = vmatprep.subr.bf16.mxu0 0
  %412 = vmatpush1.bf16.msra.mxu0 0
  %413 = vmatprep.subr.bf16.mxu0 0
  %414 = vmatpush1.bf16.msra.mxu0 0
  %415 = vmatprep.subr.bf16.mxu0 0
  %416 = vmatpush1.bf16.msra.mxu0 0
  %417 = vmatprep.subr.bf16.mxu0 0
  %418 = vmatpush1.bf16.msra.mxu0 0
  %419 = vmatprep.mubr.bf16.mxu0 0
  %420 = vmatmul.mubr.bf16.gmra.mrb[0].mxu0 %v323
  %v421 = vpop.f32.mrb[0].mxu0
  %v422 = vadd.f32 0.0, %v421
  %v423 = vpop.f32.mrb[0].mxu0
  %v424 = vpop.f32.mrb[0].mxu0
  %v425 = vadd.f32 0.0, %v424
  %v426 = vpop.f32.mrb[0].mxu0
  %427 = vmatprep.mubr.bf16.mxu0 0
  %428 = vmatmul.mubr.bf16.gmra.mrb[0].mxu0 %v324
  %v429 = vpop.f32.mrb[0].mxu0
  %v430 = vadd.f32 0.0, %v429
  %v431 = vpop.f32.mrb[0].mxu0
  %v432 = vpop.f32.mrb[0].mxu0
  %v433 = vadd.f32 0.0, %v432
  %v434 = vpop.f32.mrb[0].mxu0
  %435 = vmatprep.mubr.bf16.mxu0 0
  %436 = vmatmul.mubr.bf16.gmra.mrb[0].mxu0 %v325
  %v437 = vpop.f32.mrb[0].mxu0
  %v438 = vadd.f32 0.0, %v437
  %v439 = vpop.f32.mrb[0].mxu0
  %v440 = vpop.f32.mrb[0].mxu0
  %v441 = vadd.f32 0.0, %v440
  %v442 = vpop.f32.mrb[0].mxu0
  %443 = vmatprep.mubr.bf16.mxu0 0
  %444 = vmatmul.mubr.bf16.gmra.mrb[0].mxu0 %v326
  %v445 = vpop.f32.mrb[0].mxu0
  %v446 = vadd.f32 0.0, %v445
  %v447 = vpop.f32.mrb[0].mxu0
  %v448 = vpop.f32.mrb[0].mxu0
  %v449 = vadd.f32 0.0, %v448
  %v450 = vpop.f32.mrb[0].mxu0
  %451 = vmatprep.mubr.bf16.mxu0 0
  %452 = vmatmul.mubr.bf16.gmra.mrb[0].mxu0 %v327
  %v453 = vpop.f32.mrb[0].mxu0
  %v454 = vadd.f32 0.0, %v453
  %v455 = vpop.f32.mrb[0].mxu0
  %v456 = vpop.f32.mrb[0].mxu0
  %v457 = vadd.f32 0.0, %v456
  %v458 = vpop.f32.mrb[0].mxu0
  %459 = vmatprep.mubr.bf16.mxu0 0
  %460 = vmatmul.mubr.bf16.gmra.mrb[0].mxu0 %v328
  %v461 = vpop.f32.mrb[0].mxu0
  %v462 = vadd.f32 0.0, %v461
  %v463 = vpop.f32.mrb[0].mxu0
  %v464 = vpop.f32.mrb[0].mxu0
  %v465 = vadd.f32 0.0, %v464
  %v466 = vpop.f32.mrb[0].mxu0
  %467 = vmatprep.mubr.bf16.mxu0 0
  %468 = vmatmul.mubr.bf16.gmra.mrb[0].mxu0 %v329
  %v469 = vpop.f32.mrb[0].mxu0
  %v470 = vadd.f32 0.0, %v469
  %v471 = vpop.f32.mrb[0].mxu0
  %v472 = vpop.f32.mrb[0].mxu0
  %v473 = vadd.f32 0.0, %v472
  %v474 = vpop.f32.mrb[0].mxu0
  %475 = vmatprep.mubr.bf16.mxu0 0
  %476 = vmatmul.mubr.bf16.gmra.mrb[0].mxu0 %v330
  %v477 = vpop.f32.mrb[0].mxu0
  %v478 = vadd.f32 0.0, %v477
  %v479 = vpop.f32.mrb[0].mxu0
  %v480 = vpop.f32.mrb[0].mxu0
  %v481 = vadd.f32 0.0, %v480
  %v482 = vpop.f32.mrb[0].mxu0
  %483 = vdwg.mxu0
  %v500 = vunpack.c.l.b16 %v15
  %v501 = vunpack.c.l.b16 %v16
  %v502 = vunpack.c.l.b16 %v17
  %v503 = vunpack.c.l.b16 %v18
  %v504 = vunpack.c.l.b16 %v19
  %v505 = vunpack.c.l.b16 %v20
  %v506 = vunpack.c.l.b16 %v21
  %v507 = vunpack.c.l.b16 %v22
  %v508 = vunpack.c.l.b16 %v23
  %v509 = vunpack.c.l.b16 %v24
  %v510 = vunpack.c.l.b16 %v25
  %v511 = vunpack.c.l.b16 %v26
  %v512 = vunpack.c.l.b16 %v27
  %v513 = vunpack.c.l.b16 %v28
  %v514 = vunpack.c.l.b16 %v29
  %v515 = vunpack.c.l.b16 %v30
  %v516 = vpack.c.b16 %v501, %v500
  %v517 = vpack.c.b16 %v503, %v502
  %v518 = vpack.c.b16 %v505, %v504
  %v519 = vpack.c.b16 %v507, %v506
  %v520 = vpack.c.b16 %v509, %v508
  %v521 = vpack.c.b16 %v511, %v510
  %v522 = vpack.c.b16 %v513, %v512
  %v523 = vpack.c.b16 %v515, %v514
  %v548 = vunpack.c.l.b16 %v31
  %v549 = vunpack.c.l.b16 %v32
  %v550 = vunpack.c.l.b16 %v33
  %v551 = vunpack.c.l.b16 %v34
  %v552 = vunpack.c.l.b16 %v35
  %v553 = vunpack.c.l.b16 %v36
  %v554 = vunpack.c.l.b16 %v37
  %v555 = vunpack.c.l.b16 %v38
  %v556 = vunpack.c.l.b16 %v39
  %v557 = vunpack.c.l.b16 %v40
  %v558 = vunpack.c.l.b16 %v41
  %v559 = vunpack.c.l.b16 %v42
  %v560 = vunpack.c.l.b16 %v43
  %v561 = vunpack.c.l.b16 %v44
  %v562 = vunpack.c.l.b16 %v45
  %v563 = vunpack.c.l.b16 %v46
  %v564 = vpack.c.b16 %v549, %v548
  %v565 = vpack.c.b16 %v551, %v550
  %v566 = vpack.c.b16 %v553, %v552
  %v567 = vpack.c.b16 %v555, %v554
  %v568 = vpack.c.b16 %v557, %v556
  %v569 = vpack.c.b16 %v559, %v558
  %v570 = vpack.c.b16 %v561, %v560
  %v571 = vpack.c.b16 %v563, %v562
  %580 = vmatprep.subr.bf16.mxu0 0
  %581 = vmatpush1.bf16.msra.mxu0 %v564
  %582 = vmatprep.subr.bf16.mxu0 0
  %583 = vmatpush1.bf16.msra.mxu0 %v565
  %584 = vmatprep.subr.bf16.mxu0 0
  %585 = vmatpush1.bf16.msra.mxu0 %v566
  %586 = vmatprep.subr.bf16.mxu0 0
  %587 = vmatpush1.bf16.msra.mxu0 %v567
  %588 = vmatprep.subr.bf16.mxu0 0
  %589 = vmatpush1.bf16.msra.mxu0 %v568
  %590 = vmatprep.subr.bf16.mxu0 0
  %591 = vmatpush1.bf16.msra.mxu0 %v569
  %592 = vmatprep.subr.bf16.mxu0 0
  %593 = vmatpush1.bf16.msra.mxu0 %v570
  %594 = vmatprep.subr.bf16.mxu0 0
  %595 = vmatpush1.bf16.msra.mxu0 %v571
  %596 = vmatprep.subr.bf16.mxu0 0
  %597 = vmatpush1.bf16.msra.mxu0 0
  %598 = vmatprep.subr.bf16.mxu0 0
  %599 = vmatpush1.bf16.msra.mxu0 0
  %600 = vmatprep.subr.bf16.mxu0 0
  %601 = vmatpush1.bf16.msra.mxu0 0
  %602 = vmatprep.subr.bf16.mxu0 0
  %603 = vmatpush1.bf16.msra.mxu0 0
  %604 = vmatprep.subr.bf16.mxu0 0
  %605 = vmatpush1.bf16.msra.mxu0 0
  %606 = vmatprep.subr.bf16.mxu0 0
  %607 = vmatpush1.bf16.msra.mxu0 0
  %608 = vmatprep.subr.bf16.mxu0 0
  %609 = vmatpush1.bf16.msra.mxu0 0
  %610 = vmatprep.subr.bf16.mxu0 0
  %611 = vmatpush1.bf16.msra.mxu0 0
  %612 = vmatprep.mubr.bf16.mxu0 0
  %613 = vmatmul.mubr.bf16.gmra.mrb[0].mxu0 %v516
  %v614 = vpop.f32.mrb[0].mxu0
  %v615 = vadd.f32 %v422, %v614
  %v616 = vpop.f32.mrb[0].mxu0
  %v617 = vpop.f32.mrb[0].mxu0
  %v618 = vadd.f32 %v425, %v617
  %v619 = vpop.f32.mrb[0].mxu0
  %620 = vmatprep.mubr.bf16.mxu0 0
  %621 = vmatmul.mubr.bf16.gmra.mrb[0].mxu0 %v517
  %v622 = vpop.f32.mrb[0].mxu0
  %v623 = vadd.f32 %v430, %v622
  %v624 = vpop.f32.mrb[0].mxu0
  %v625 = vpop.f32.mrb[0].mxu0
  %v626 = vadd.f32 %v433, %v625
  %v627 = vpop.f32.mrb[0].mxu0
  %628 = vmatprep.mubr.bf16.mxu0 0
  %629 = vmatmul.mubr.bf16.gmra.mrb[0].mxu0 %v518
  %v630 = vpop.f32.mrb[0].mxu0
  %v631 = vadd.f32 %v438, %v630
  %v632 = vpop.f32.mrb[0].mxu0
  %v633 = vpop.f32.mrb[0].mxu0
  %v634 = vadd.f32 %v441, %v633
  %v635 = vpop.f32.mrb[0].mxu0
  %636 = vmatprep.mubr.bf16.mxu0 0
  %637 = vmatmul.mubr.bf16.gmra.mrb[0].mxu0 %v519
  %v638 = vpop.f32.mrb[0].mxu0
  %v639 = vadd.f32 %v446, %v638
  %v640 = vpop.f32.mrb[0].mxu0
  %v641 = vpop.f32.mrb[0].mxu0
  %v642 = vadd.f32 %v449, %v641
  %v643 = vpop.f32.mrb[0].mxu0
  %644 = vmatprep.mubr.bf16.mxu0 0
  %645 = vmatmul.mubr.bf16.gmra.mrb[0].mxu0 %v520
  %v646 = vpop.f32.mrb[0].mxu0
  %v647 = vadd.f32 %v454, %v646
  %v648 = vpop.f32.mrb[0].mxu0
  %v649 = vpop.f32.mrb[0].mxu0
  %v650 = vadd.f32 %v457, %v649
  %v651 = vpop.f32.mrb[0].mxu0
  %652 = vmatprep.mubr.bf16.mxu0 0
  %653 = vmatmul.mubr.bf16.gmra.mrb[0].mxu0 %v521
  %v654 = vpop.f32.mrb[0].mxu0
  %v655 = vadd.f32 %v462, %v654
  %v656 = vpop.f32.mrb[0].mxu0
  %v657 = vpop.f32.mrb[0].mxu0
  %v658 = vadd.f32 %v465, %v657
  %v659 = vpop.f32.mrb[0].mxu0
  %660 = vmatprep.mubr.bf16.mxu0 0
  %661 = vmatmul.mubr.bf16.gmra.mrb[0].mxu0 %v522
  %v662 = vpop.f32.mrb[0].mxu0
  %v663 = vadd.f32 %v470, %v662
  %v664 = vpop.f32.mrb[0].mxu0
  %v665 = vpop.f32.mrb[0].mxu0
  %v666 = vadd.f32 %v473, %v665
  %v667 = vpop.f32.mrb[0].mxu0
  %668 = vmatprep.mubr.bf16.mxu0 0
  %669 = vmatmul.mubr.bf16.gmra.mrb[0].mxu0 %v523
  %v670 = vpop.f32.mrb[0].mxu0
  %v671 = vadd.f32 %v478, %v670
  %v672 = vpop.f32.mrb[0].mxu0
  %v673 = vpop.f32.mrb[0].mxu0
  %v674 = vadd.f32 %v481, %v673
  %v675 = vpop.f32.mrb[0].mxu0
  %676 = vdwg.mxu0
  %v677 = vld [vmem:[%s0] sm:$0xe]
  %v678 = vld [vmem:[%s0 + $0x8] sm:$0xe]
  %v679 = vld [vmem:[%s0 + $0x10] sm:$0xe]
  %v680 = vld [vmem:[%s0 + $0x18] sm:$0xe]
  %v681 = vld [vmem:[%s0 + $0x20] sm:$0xe]
  %v682 = vld [vmem:[%s0 + $0x28] sm:$0xe]
  %v683 = vld [vmem:[%s0 + $0x30] sm:$0xe]
  %v684 = vld [vmem:[%s0 + $0x38] sm:$0xe]
  %v685 = vld [vmem:[%s0 + $0x60] sm:$0xe]
  %v686 = vld [vmem:[%s0 + $0x68] sm:$0xe]
  %v687 = vld [vmem:[%s0 + $0x70] sm:$0xe]
  %v688 = vld [vmem:[%s0 + $0x78] sm:$0xe]
  %v689 = vld [vmem:[%s0 + $0x80] sm:$0xe]
  %v690 = vld [vmem:[%s0 + $0x88] sm:$0xe]
  %v691 = vld [vmem:[%s0 + $0x90] sm:$0xe]
  %v692 = vld [vmem:[%s0 + $0x98] sm:$0xe]
  %vm725 = vcmask 1042432
  %vm726 = vcmask 1046532
  %vm727 = vmor %vm725, %vm726
  %v728 = vrot.slane %v677, 5
  %v729 = vrot.slane %v728, 4
  %v730 = vrot.slane %v47, 5
  %v731 = vsel %vm727, %v729, %v730
  %v732 = vrot.slane %v678, 5
  %v733 = vrot.slane %v732, 4
  %v734 = vrot.slane %v48, 5
  %v735 = vsel %vm727, %v733, %v734
  %v736 = vrot.slane %v679, 5
  %v737 = vrot.slane %v736, 4
  %v738 = vrot.slane %v49, 5
  %v739 = vsel %vm727, %v737, %v738
  %v740 = vrot.slane %v680, 5
  %v741 = vrot.slane %v740, 4
  %v742 = vrot.slane %v50, 5
  %v743 = vsel %vm727, %v741, %v742
  %v744 = vrot.slane %v681, 5
  %v745 = vrot.slane %v744, 4
  %v746 = vrot.slane %v51, 5
  %v747 = vsel %vm727, %v745, %v746
  %v748 = vrot.slane %v682, 5
  %v749 = vrot.slane %v748, 4
  %v750 = vrot.slane %v52, 5
  %v751 = vsel %vm727, %v749, %v750
  %v752 = vrot.slane %v683, 5
  %v753 = vrot.slane %v752, 4
  %v754 = vrot.slane %v53, 5
  %v755 = vsel %vm727, %v753, %v754
  %v756 = vrot.slane %v684, 5
  %v757 = vrot.slane %v756, 4
  %v758 = vrot.slane %v54, 5
  %v759 = vsel %vm727, %v757, %v758
  %v760 = vrot.slane %v685, 5
  %v761 = vrot.slane %v760, 4
  %v762 = vrot.slane %v55, 5
  %v763 = vsel %vm727, %v761, %v762
  %v764 = vrot.slane %v686, 5
  %v765 = vrot.slane %v764, 4
  %v766 = vrot.slane %v56, 5
  %v767 = vsel %vm727, %v765, %v766
  %v768 = vrot.slane %v687, 5
  %v769 = vrot.slane %v768, 4
  %v770 = vrot.slane %v57, 5
  %v771 = vsel %vm727, %v769, %v770
  %v772 = vrot.slane %v688, 5
  %v773 = vrot.slane %v772, 4
  %v774 = vrot.slane %v58, 5
  %v775 = vsel %vm727, %v773, %v774
  %v776 = vrot.slane %v689, 5
  %v777 = vrot.slane %v776, 4
  %v778 = vrot.slane %v59, 5
  %v779 = vsel %vm727, %v777, %v778
  %v780 = vrot.slane %v690, 5
  %v781 = vrot.slane %v780, 4
  %v782 = vrot.slane %v60, 5
  %v783 = vsel %vm727, %v781, %v782
  %v784 = vrot.slane %v691, 5
  %v785 = vrot.slane %v784, 4
  %v786 = vrot.slane %v61, 5
  %v787 = vsel %vm727, %v785, %v786
  %v788 = vrot.slane %v692, 5
  %v789 = vrot.slane %v788, 4
  %v790 = vrot.slane %v62, 5
  %v791 = vsel %vm727, %v789, %v790
  %s792 = scalar_lea.vmem %s1, 128
  %v793 = vld [vmem:[%s792] sm:$0xf]
  %v794 = vld [vmem:[%s792 + $0x4] sm:$0xf]
  %v795 = vld [vmem:[%s792 + $0x8] sm:$0xf]
  %v796 = vld [vmem:[%s792 + $0xc] sm:$0xf]
  %v797 = vld [vmem:[%s792 + $0x10] sm:$0xf]
  %v798 = vld [vmem:[%s792 + $0x14] sm:$0xf]
  %v799 = vld [vmem:[%s792 + $0x18] sm:$0xf]
  %v800 = vld [vmem:[%s792 + $0x1c] sm:$0xf]
  %v801 = vld [vmem:[%s792 + $0x20] sm:$0xf]
  %v802 = vld [vmem:[%s792 + $0x24] sm:$0xf]
  %v803 = vld [vmem:[%s792 + $0x28] sm:$0xf]
  %v804 = vld [vmem:[%s792 + $0x2c] sm:$0xf]
  %v805 = vld [vmem:[%s792 + $0x30] sm:$0xf]
  %v806 = vld [vmem:[%s792 + $0x34] sm:$0xf]
  %v807 = vld [vmem:[%s792 + $0x38] sm:$0xf]
  %v808 = vld [vmem:[%s792 + $0x3c] sm:$0xf]
  %v809 = vunpack.c.l.b16 %v731
  %v810 = vunpack.c.l.b16 %v735
  %v811 = vunpack.c.l.b16 %v739
  %v812 = vunpack.c.l.b16 %v743
  %v813 = vunpack.c.l.b16 %v747
  %v814 = vunpack.c.l.b16 %v751
  %v815 = vunpack.c.l.b16 %v755
  %v816 = vunpack.c.l.b16 %v759
  %v817 = vunpack.c.l.b16 %v763
  %v818 = vunpack.c.l.b16 %v767
  %v819 = vunpack.c.l.b16 %v771
  %v820 = vunpack.c.l.b16 %v775
  %v821 = vunpack.c.l.b16 %v779
  %v822 = vunpack.c.l.b16 %v783
  %v823 = vunpack.c.l.b16 %v787
  %v824 = vunpack.c.l.b16 %v791
  %v825 = vpack.c.b16 %v810, %v809
  %v826 = vpack.c.b16 %v812, %v811
  %v827 = vpack.c.b16 %v814, %v813
  %v828 = vpack.c.b16 %v816, %v815
  %v829 = vpack.c.b16 %v818, %v817
  %v830 = vpack.c.b16 %v820, %v819
  %v831 = vpack.c.b16 %v822, %v821
  %v832 = vpack.c.b16 %v824, %v823
  %v857 = vunpack.c.l.b16 %v793
  %v858 = vunpack.c.l.b16 %v794
  %v859 = vunpack.c.l.b16 %v795
  %v860 = vunpack.c.l.b16 %v796
  %v861 = vunpack.c.l.b16 %v797
  %v862 = vunpack.c.l.b16 %v798
  %v863 = vunpack.c.l.b16 %v799
  %v864 = vunpack.c.l.b16 %v800
  %v865 = vunpack.c.l.b16 %v801
  %v866 = vunpack.c.l.b16 %v802
  %v867 = vunpack.c.l.b16 %v803
  %v868 = vunpack.c.l.b16 %v804
  %v869 = vunpack.c.l.b16 %v805
  %v870 = vunpack.c.l.b16 %v806
  %v871 = vunpack.c.l.b16 %v807
  %v872 = vunpack.c.l.b16 %v808
  %v873 = vpack.c.b16 %v858, %v857
  %v874 = vpack.c.b16 %v860, %v859
  %v875 = vpack.c.b16 %v862, %v861
  %v876 = vpack.c.b16 %v864, %v863
  %v877 = vpack.c.b16 %v866, %v865
  %v878 = vpack.c.b16 %v868, %v867
  %v879 = vpack.c.b16 %v870, %v869
  %v880 = vpack.c.b16 %v872, %v871
  %889 = vmatprep.subr.bf16.mxu0 0
  %890 = vmatpush1.bf16.msra.mxu0 %v873
  %891 = vmatprep.subr.bf16.mxu0 0
  %892 = vmatpush1.bf16.msra.mxu0 %v874
  %893 = vmatprep.subr.bf16.mxu0 0
  %894 = vmatpush1.bf16.msra.mxu0 %v875
  %895 = vmatprep.subr.bf16.mxu0 0
  %896 = vmatpush1.bf16.msra.mxu0 %v876
  %897 = vmatprep.subr.bf16.mxu0 0
  %898 = vmatpush1.bf16.msra.mxu0 %v877
  %899 = vmatprep.subr.bf16.mxu0 0
  %900 = vmatpush1.bf16.msra.mxu0 %v878
  %901 = vmatprep.subr.bf16.mxu0 0
  %902 = vmatpush1.bf16.msra.mxu0 %v879
  %903 = vmatprep.subr.bf16.mxu0 0
  %904 = vmatpush1.bf16.msra.mxu0 %v880
  %905 = vmatprep.subr.bf16.mxu0 0
  %906 = vmatpush1.bf16.msra.mxu0 0
  %907 = vmatprep.subr.bf16.mxu0 0
  %908 = vmatpush1.bf16.msra.mxu0 0
  %909 = vmatprep.subr.bf16.mxu0 0
  %910 = vmatpush1.bf16.msra.mxu0 0
  %911 = vmatprep.subr.bf16.mxu0 0
  %912 = vmatpush1.bf16.msra.mxu0 0
  %913 = vmatprep.subr.bf16.mxu0 0
  %914 = vmatpush1.bf16.msra.mxu0 0
  %915 = vmatprep.subr.bf16.mxu0 0
  %916 = vmatpush1.bf16.msra.mxu0 0
  %917 = vmatprep.subr.bf16.mxu0 0
  %918 = vmatpush1.bf16.msra.mxu0 0
  %919 = vmatprep.subr.bf16.mxu0 0
  %920 = vmatpush1.bf16.msra.mxu0 0
  %921 = vmatprep.mubr.bf16.mxu0 0
  %922 = vmatmul.mubr.bf16.gmra.mrb[0].mxu0 %v825
  %v923 = vpop.f32.mrb[0].mxu0
  %v924 = vadd.f32 0.0, %v923
  %v925 = vpop.f32.mrb[0].mxu0
  %v926 = vpop.f32.mrb[0].mxu0
  %v927 = vadd.f32 0.0, %v926
  %v928 = vpop.f32.mrb[0].mxu0
  %929 = vmatprep.mubr.bf16.mxu0 0
  %930 = vmatmul.mubr.bf16.gmra.mrb[0].mxu0 %v826
  %v931 = vpop.f32.mrb[0].mxu0
  %v932 = vadd.f32 0.0, %v931
  %v933 = vpop.f32.mrb[0].mxu0
  %v934 = vpop.f32.mrb[0].mxu0
  %v935 = vadd.f32 0.0, %v934
  %v936 = vpop.f32.mrb[0].mxu0
  %937 = vmatprep.mubr.bf16.mxu0 0
  %938 = vmatmul.mubr.bf16.gmra.mrb[0].mxu0 %v827
  %v939 = vpop.f32.mrb[0].mxu0
  %v940 = vadd.f32 0.0, %v939
  %v941 = vpop.f32.mrb[0].mxu0
  %v942 = vpop.f32.mrb[0].mxu0
  %v943 = vadd.f32 0.0, %v942
  %v944 = vpop.f32.mrb[0].mxu0
  %945 = vmatprep.mubr.bf16.mxu0 0
  %946 = vmatmul.mubr.bf16.gmra.mrb[0].mxu0 %v828
  %v947 = vpop.f32.mrb[0].mxu0
  %v948 = vadd.f32 0.0, %v947
  %v949 = vpop.f32.mrb[0].mxu0
  %v950 = vpop.f32.mrb[0].mxu0
  %v951 = vadd.f32 0.0, %v950
  %v952 = vpop.f32.mrb[0].mxu0
  %953 = vmatprep.mubr.bf16.mxu0 0
  %954 = vmatmul.mubr.bf16.gmra.mrb[0].mxu0 %v829
  %v955 = vpop.f32.mrb[0].mxu0
  %v956 = vadd.f32 0.0, %v955
  %v957 = vpop.f32.mrb[0].mxu0
  %v958 = vpop.f32.mrb[0].mxu0
  %v959 = vadd.f32 0.0, %v958
  %v960 = vpop.f32.mrb[0].mxu0
  %961 = vmatprep.mubr.bf16.mxu0 0
  %962 = vmatmul.mubr.bf16.gmra.mrb[0].mxu0 %v830
  %v963 = vpop.f32.mrb[0].mxu0
  %v964 = vadd.f32 0.0, %v963
  %v965 = vpop.f32.mrb[0].mxu0
  %v966 = vpop.f32.mrb[0].mxu0
  %v967 = vadd.f32 0.0, %v966
  %v968 = vpop.f32.mrb[0].mxu0
  %969 = vmatprep.mubr.bf16.mxu0 0
  %970 = vmatmul.mubr.bf16.gmra.mrb[0].mxu0 %v831
  %v971 = vpop.f32.mrb[0].mxu0
  %v972 = vadd.f32 0.0, %v971
  %v973 = vpop.f32.mrb[0].mxu0
  %v974 = vpop.f32.mrb[0].mxu0
  %v975 = vadd.f32 0.0, %v974
  %v976 = vpop.f32.mrb[0].mxu0
  %977 = vmatprep.mubr.bf16.mxu0 0
  %978 = vmatmul.mubr.bf16.gmra.mrb[0].mxu0 %v832
  %v979 = vpop.f32.mrb[0].mxu0
  %v980 = vadd.f32 0.0, %v979
  %v981 = vpop.f32.mrb[0].mxu0
  %v982 = vpop.f32.mrb[0].mxu0
  %v983 = vadd.f32 0.0, %v982
  %v984 = vpop.f32.mrb[0].mxu0
  %985 = vdwg.mxu0
  %v986 = vadd.f32 %v615, %v924
  %v987 = vadd.f32 %v618, %v927
  %v988 = vadd.f32 %v623, %v932
  %v989 = vadd.f32 %v626, %v935
  %v990 = vadd.f32 %v631, %v940
  %v991 = vadd.f32 %v634, %v943
  %v992 = vadd.f32 %v639, %v948
  %v993 = vadd.f32 %v642, %v951
  %v994 = vadd.f32 %v647, %v956
  %v995 = vadd.f32 %v650, %v959
  %v996 = vadd.f32 %v655, %v964
  %v997 = vadd.f32 %v658, %v967
  %v998 = vadd.f32 %v663, %v972
  %v999 = vadd.f32 %v666, %v975
  %v1000 = vadd.f32 %v671, %v980
  %v1001 = vadd.f32 %v674, %v983
  %v1002 = vld [vmem:[%s0 + $0x4] sm:$0x3]
  %v1003 = vld [vmem:[%s0 + $0xc] sm:$0x3]
  %v1004 = vld [vmem:[%s0 + $0x14] sm:$0x3]
  %v1005 = vld [vmem:[%s0 + $0x1c] sm:$0x3]
  %v1006 = vld [vmem:[%s0 + $0x24] sm:$0x3]
  %v1007 = vld [vmem:[%s0 + $0x2c] sm:$0x3]
  %v1008 = vld [vmem:[%s0 + $0x34] sm:$0x3]
  %v1009 = vld [vmem:[%s0 + $0x3c] sm:$0x3]
  %v1010 = vld [vmem:[%s0 + $0x64] sm:$0x3]
  %v1011 = vld [vmem:[%s0 + $0x6c] sm:$0x3]
  %v1012 = vld [vmem:[%s0 + $0x74] sm:$0x3]
  %v1013 = vld [vmem:[%s0 + $0x7c] sm:$0x3]
  %v1014 = vld [vmem:[%s0 + $0x84] sm:$0x3]
  %v1015 = vld [vmem:[%s0 + $0x8c] sm:$0x3]
  %v1016 = vld [vmem:[%s0 + $0x94] sm:$0x3]
  %v1017 = vld [vmem:[%s0 + $0x9c] sm:$0x3]
  %vm1018 = vsmask.f32 2304
  %vm1019 = vsmask.f32 6416
  %vm1020 = vmor %vm1018, %vm1019
  %v1022 = vshrl.u32 %v677, 16
  %v1024 = vrot.slane %v1022, 5
  %v1025 = vshll.u32 %v677, 16
  %v1027 = vrot.slane %v1025, 6
  %v1028 = vor.u32 %v1024, %v1027
  %v1029 = vrot.slane %v1028, 4
  %v1031 = vshrl.u32 %v1002, 16
  %v1033 = vrot.slane %v1031, 5
  %v1034 = vshll.u32 %v1002, 16
  %v1036 = vrot.slane %v1034, 6
  %v1037 = vor.u32 %v1033, %v1036
  %v1038 = vsel %vm1020, %v1029, %v1037
  %v1040 = vshrl.u32 %v678, 16
  %v1042 = vrot.slane %v1040, 5
  %v1043 = vshll.u32 %v678, 16
  %v1045 = vrot.slane %v1043, 6
  %v1046 = vor.u32 %v1042, %v1045
  %v1047 = vrot.slane %v1046, 4
  %v1049 = vshrl.u32 %v1003, 16
  %v1051 = vrot.slane %v1049, 5
  %v1052 = vshll.u32 %v1003, 16
  %v1054 = vrot.slane %v1052, 6
  %v1055 = vor.u32 %v1051, %v1054
  %v1056 = vsel %vm1020, %v1047, %v1055
  %v1058 = vshrl.u32 %v679, 16
  %v1060 = vrot.slane %v1058, 5
  %v1061 = vshll.u32 %v679, 16
  %v1063 = vrot.slane %v1061, 6
  %v1064 = vor.u32 %v1060, %v1063
  %v1065 = vrot.slane %v1064, 4
  %v1067 = vshrl.u32 %v1004, 16
  %v1069 = vrot.slane %v1067, 5
  %v1070 = vshll.u32 %v1004, 16
  %v1072 = vrot.slane %v1070, 6
  %v1073 = vor.u32 %v1069, %v1072
  %v1074 = vsel %vm1020, %v1065, %v1073
  %v1076 = vshrl.u32 %v680, 16
  %v1078 = vrot.slane %v1076, 5
  %v1079 = vshll.u32 %v680, 16
  %v1081 = vrot.slane %v1079, 6
  %v1082 = vor.u32 %v1078, %v1081
  %v1083 = vrot.slane %v1082, 4
  %v1085 = vshrl.u32 %v1005, 16
  %v1087 = vrot.slane %v1085, 5
  %v1088 = vshll.u32 %v1005, 16
  %v1090 = vrot.slane %v1088, 6
  %v1091 = vor.u32 %v1087, %v1090
  %v1092 = vsel %vm1020, %v1083, %v1091
  %v1094 = vshrl.u32 %v681, 16
  %v1096 = vrot.slane %v1094, 5
  %v1097 = vshll.u32 %v681, 16
  %v1099 = vrot.slane %v1097, 6
  %v1100 = vor.u32 %v1096, %v1099
  %v1101 = vrot.slane %v1100, 4
  %v1103 = vshrl.u32 %v1006, 16
  %v1105 = vrot.slane %v1103, 5
  %v1106 = vshll.u32 %v1006, 16
  %v1108 = vrot.slane %v1106, 6
  %v1109 = vor.u32 %v1105, %v1108
  %v1110 = vsel %vm1020, %v1101, %v1109
  %v1112 = vshrl.u32 %v682, 16
  %v1114 = vrot.slane %v1112, 5
  %v1115 = vshll.u32 %v682, 16
  %v1117 = vrot.slane %v1115, 6
  %v1118 = vor.u32 %v1114, %v1117
  %v1119 = vrot.slane %v1118, 4
  %v1121 = vshrl.u32 %v1007, 16
  %v1123 = vrot.slane %v1121, 5
  %v1124 = vshll.u32 %v1007, 16
  %v1126 = vrot.slane %v1124, 6
  %v1127 = vor.u32 %v1123, %v1126
  %v1128 = vsel %vm1020, %v1119, %v1127
  %v1130 = vshrl.u32 %v683, 16
  %v1132 = vrot.slane %v1130, 5
  %v1133 = vshll.u32 %v683, 16
  %v1135 = vrot.slane %v1133, 6
  %v1136 = vor.u32 %v1132, %v1135
  %v1137 = vrot.slane %v1136, 4
  %v1139 = vshrl.u32 %v1008, 16
  %v1141 = vrot.slane %v1139, 5
  %v1142 = vshll.u32 %v1008, 16
  %v1144 = vrot.slane %v1142, 6
  %v1145 = vor.u32 %v1141, %v1144
  %v1146 = vsel %vm1020, %v1137, %v1145
  %v1148 = vshrl.u32 %v684, 16
  %v1150 = vrot.slane %v1148, 5
  %v1151 = vshll.u32 %v684, 16
  %v1153 = vrot.slane %v1151, 6
  %v1154 = vor.u32 %v1150, %v1153
  %v1155 = vrot.slane %v1154, 4
  %v1157 = vshrl.u32 %v1009, 16
  %v1159 = vrot.slane %v1157, 5
  %v1160 = vshll.u32 %v1009, 16
  %v1162 = vrot.slane %v1160, 6
  %v1163 = vor.u32 %v1159, %v1162
  %v1164 = vsel %vm1020, %v1155, %v1163
  %v1166 = vshrl.u32 %v685, 16
  %v1168 = vrot.slane %v1166, 5
  %v1169 = vshll.u32 %v685, 16
  %v1171 = vrot.slane %v1169, 6
  %v1172 = vor.u32 %v1168, %v1171
  %v1173 = vrot.slane %v1172, 4
  %v1175 = vshrl.u32 %v1010, 16
  %v1177 = vrot.slane %v1175, 5
  %v1178 = vshll.u32 %v1010, 16
  %v1180 = vrot.slane %v1178, 6
  %v1181 = vor.u32 %v1177, %v1180
  %v1182 = vsel %vm1020, %v1173, %v1181
  %v1184 = vshrl.u32 %v686, 16
  %v1186 = vrot.slane %v1184, 5
  %v1187 = vshll.u32 %v686, 16
  %v1189 = vrot.slane %v1187, 6
  %v1190 = vor.u32 %v1186, %v1189
  %v1191 = vrot.slane %v1190, 4
  %v1193 = vshrl.u32 %v1011, 16
  %v1195 = vrot.slane %v1193, 5
  %v1196 = vshll.u32 %v1011, 16
  %v1198 = vrot.slane %v1196, 6
  %v1199 = vor.u32 %v1195, %v1198
  %v1200 = vsel %vm1020, %v1191, %v1199
  %v1202 = vshrl.u32 %v687, 16
  %v1204 = vrot.slane %v1202, 5
  %v1205 = vshll.u32 %v687, 16
  %v1207 = vrot.slane %v1205, 6
  %v1208 = vor.u32 %v1204, %v1207
  %v1209 = vrot.slane %v1208, 4
  %v1211 = vshrl.u32 %v1012, 16
  %v1213 = vrot.slane %v1211, 5
  %v1214 = vshll.u32 %v1012, 16
  %v1216 = vrot.slane %v1214, 6
  %v1217 = vor.u32 %v1213, %v1216
  %v1218 = vsel %vm1020, %v1209, %v1217
  %v1220 = vshrl.u32 %v688, 16
  %v1222 = vrot.slane %v1220, 5
  %v1223 = vshll.u32 %v688, 16
  %v1225 = vrot.slane %v1223, 6
  %v1226 = vor.u32 %v1222, %v1225
  %v1227 = vrot.slane %v1226, 4
  %v1229 = vshrl.u32 %v1013, 16
  %v1231 = vrot.slane %v1229, 5
  %v1232 = vshll.u32 %v1013, 16
  %v1234 = vrot.slane %v1232, 6
  %v1235 = vor.u32 %v1231, %v1234
  %v1236 = vsel %vm1020, %v1227, %v1235
  %v1238 = vshrl.u32 %v689, 16
  %v1240 = vrot.slane %v1238, 5
  %v1241 = vshll.u32 %v689, 16
  %v1243 = vrot.slane %v1241, 6
  %v1244 = vor.u32 %v1240, %v1243
  %v1245 = vrot.slane %v1244, 4
  %v1247 = vshrl.u32 %v1014, 16
  %v1249 = vrot.slane %v1247, 5
  %v1250 = vshll.u32 %v1014, 16
  %v1252 = vrot.slane %v1250, 6
  %v1253 = vor.u32 %v1249, %v1252
  %v1254 = vsel %vm1020, %v1245, %v1253
  %v1256 = vshrl.u32 %v690, 16
  %v1258 = vrot.slane %v1256, 5
  %v1259 = vshll.u32 %v690, 16
  %v1261 = vrot.slane %v1259, 6
  %v1262 = vor.u32 %v1258, %v1261
  %v1263 = vrot.slane %v1262, 4
  %v1265 = vshrl.u32 %v1015, 16
  %v1267 = vrot.slane %v1265, 5
  %v1268 = vshll.u32 %v1015, 16
  %v1270 = vrot.slane %v1268, 6
  %v1271 = vor.u32 %v1267, %v1270
  %v1272 = vsel %vm1020, %v1263, %v1271
  %v1274 = vshrl.u32 %v691, 16
  %v1276 = vrot.slane %v1274, 5
  %v1277 = vshll.u32 %v691, 16
  %v1279 = vrot.slane %v1277, 6
  %v1280 = vor.u32 %v1276, %v1279
  %v1281 = vrot.slane %v1280, 4
  %v1283 = vshrl.u32 %v1016, 16
  %v1285 = vrot.slane %v1283, 5
  %v1286 = vshll.u32 %v1016, 16
  %v1288 = vrot.slane %v1286, 6
  %v1289 = vor.u32 %v1285, %v1288
  %v1290 = vsel %vm1020, %v1281, %v1289
  %v1292 = vshrl.u32 %v692, 16
  %v1294 = vrot.slane %v1292, 5
  %v1295 = vshll.u32 %v692, 16
  %v1297 = vrot.slane %v1295, 6
  %v1298 = vor.u32 %v1294, %v1297
  %v1299 = vrot.slane %v1298, 4
  %v1301 = vshrl.u32 %v1017, 16
  %v1303 = vrot.slane %v1301, 5
  %v1304 = vshll.u32 %v1017, 16
  %v1306 = vrot.slane %v1304, 6
  %v1307 = vor.u32 %v1303, %v1306
  %v1308 = vsel %vm1020, %v1299, %v1307
  %s1309 = scalar_lea.vmem %s1, 192
  %v1310 = vld [vmem:[%s1309] sm:$0xf]
  %v1311 = vld [vmem:[%s1309 + $0x4] sm:$0xf]
  %v1312 = vld [vmem:[%s1309 + $0x8] sm:$0xf]
  %v1313 = vld [vmem:[%s1309 + $0xc] sm:$0xf]
  %v1314 = vld [vmem:[%s1309 + $0x10] sm:$0xf]
  %v1315 = vld [vmem:[%s1309 + $0x14] sm:$0xf]
  %v1316 = vld [vmem:[%s1309 + $0x18] sm:$0xf]
  %v1317 = vld [vmem:[%s1309 + $0x1c] sm:$0xf]
  %v1318 = vld [vmem:[%s1309 + $0x20] sm:$0xf]
  %v1319 = vld [vmem:[%s1309 + $0x24] sm:$0xf]
  %v1320 = vld [vmem:[%s1309 + $0x28] sm:$0xf]
  %v1321 = vld [vmem:[%s1309 + $0x2c] sm:$0xf]
  %v1322 = vld [vmem:[%s1309 + $0x30] sm:$0xf]
  %v1323 = vld [vmem:[%s1309 + $0x34] sm:$0xf]
  %v1324 = vld [vmem:[%s1309 + $0x38] sm:$0xf]
  %v1325 = vld [vmem:[%s1309 + $0x3c] sm:$0xf]
  %v1326 = vunpack.c.l.b16 %v1038
  %v1327 = vunpack.c.l.b16 %v1056
  %v1328 = vunpack.c.l.b16 %v1074
  %v1329 = vunpack.c.l.b16 %v1092
  %v1330 = vunpack.c.l.b16 %v1110
  %v1331 = vunpack.c.l.b16 %v1128
  %v1332 = vunpack.c.l.b16 %v1146
  %v1333 = vunpack.c.l.b16 %v1164
  %v1334 = vunpack.c.l.b16 %v1182
  %v1335 = vunpack.c.l.b16 %v1200
  %v1336 = vunpack.c.l.b16 %v1218
  %v1337 = vunpack.c.l.b16 %v1236
  %v1338 = vunpack.c.l.b16 %v1254
  %v1339 = vunpack.c.l.b16 %v1272
  %v1340 = vunpack.c.l.b16 %v1290
  %v1341 = vunpack.c.l.b16 %v1308
  %v1342 = vpack.c.b16 %v1327, %v1326
  %v1343 = vpack.c.b16 %v1329, %v1328
  %v1344 = vpack.c.b16 %v1331, %v1330
  %v1345 = vpack.c.b16 %v1333, %v1332
  %v1346 = vpack.c.b16 %v1335, %v1334
  %v1347 = vpack.c.b16 %v1337, %v1336
  %v1348 = vpack.c.b16 %v1339, %v1338
  %v1349 = vpack.c.b16 %v1341, %v1340
  %v1374 = vunpack.c.l.b16 %v1310
  %v1375 = vunpack.c.l.b16 %v1311
  %v1376 = vunpack.c.l.b16 %v1312
  %v1377 = vunpack.c.l.b16 %v1313
  %v1378 = vunpack.c.l.b16 %v1314
  %v1379 = vunpack.c.l.b16 %v1315
  %v1380 = vunpack.c.l.b16 %v1316
  %v1381 = vunpack.c.l.b16 %v1317
  %v1382 = vunpack.c.l.b16 %v1318
  %v1383 = vunpack.c.l.b16 %v1319
  %v1384 = vunpack.c.l.b16 %v1320
  %v1385 = vunpack.c.l.b16 %v1321
  %v1386 = vunpack.c.l.b16 %v1322
  %v1387 = vunpack.c.l.b16 %v1323
  %v1388 = vunpack.c.l.b16 %v1324
  %v1389 = vunpack.c.l.b16 %v1325
  %v1390 = vpack.c.b16 %v1375, %v1374
  %v1391 = vpack.c.b16 %v1377, %v1376
  %v1392 = vpack.c.b16 %v1379, %v1378
  %v1393 = vpack.c.b16 %v1381, %v1380
  %v1394 = vpack.c.b16 %v1383, %v1382
  %v1395 = vpack.c.b16 %v1385, %v1384
  %v1396 = vpack.c.b16 %v1387, %v1386
  %v1397 = vpack.c.b16 %v1389, %v1388
  %1406 = vmatprep.subr.bf16.mxu0 0
  %1407 = vmatpush1.bf16.msra.mxu0 %v1390
  %1408 = vmatprep.subr.bf16.mxu0 0
  %1409 = vmatpush1.bf16.msra.mxu0 %v1391
  %1410 = vmatprep.subr.bf16.mxu0 0
  %1411 = vmatpush1.bf16.msra.mxu0 %v1392
  %1412 = vmatprep.subr.bf16.mxu0 0
  %1413 = vmatpush1.bf16.msra.mxu0 %v1393
  %1414 = vmatprep.subr.bf16.mxu0 0
  %1415 = vmatpush1.bf16.msra.mxu0 %v1394
  %1416 = vmatprep.subr.bf16.mxu0 0
  %1417 = vmatpush1.bf16.msra.mxu0 %v1395
  %1418 = vmatprep.subr.bf16.mxu0 0
  %1419 = vmatpush1.bf16.msra.mxu0 %v1396
  %1420 = vmatprep.subr.bf16.mxu0 0
  %1421 = vmatpush1.bf16.msra.mxu0 %v1397
  %1422 = vmatprep.subr.bf16.mxu0 0
  %1423 = vmatpush1.bf16.msra.mxu0 0
  %1424 = vmatprep.subr.bf16.mxu0 0
  %1425 = vmatpush1.bf16.msra.mxu0 0
  %1426 = vmatprep.subr.bf16.mxu0 0
  %1427 = vmatpush1.bf16.msra.mxu0 0
  %1428 = vmatprep.subr.bf16.mxu0 0
  %1429 = vmatpush1.bf16.msra.mxu0 0
  %1430 = vmatprep.subr.bf16.mxu0 0
  %1431 = vmatpush1.bf16.msra.mxu0 0
  %1432 = vmatprep.subr.bf16.mxu0 0
  %1433 = vmatpush1.bf16.msra.mxu0 0
  %1434 = vmatprep.subr.bf16.mxu0 0
  %1435 = vmatpush1.bf16.msra.mxu0 0
  %1436 = vmatprep.subr.bf16.mxu0 0
  %1437 = vmatpush1.bf16.msra.mxu0 0
  %1438 = vmatprep.mubr.bf16.mxu0 0
  %1439 = vmatmul.mubr.bf16.gmra.mrb[0].mxu0 %v1342
  %v1440 = vpop.f32.mrb[0].mxu0
  %v1441 = vadd.f32 0.0, %v1440
  %v1442 = vpop.f32.mrb[0].mxu0
  %v1443 = vpop.f32.mrb[0].mxu0
  %v1444 = vadd.f32 0.0, %v1443
  %v1445 = vpop.f32.mrb[0].mxu0
  %1446 = vmatprep.mubr.bf16.mxu0 0
  %1447 = vmatmul.mubr.bf16.gmra.mrb[0].mxu0 %v1343
  %v1448 = vpop.f32.mrb[0].mxu0
  %v1449 = vadd.f32 0.0, %v1448
  %v1450 = vpop.f32.mrb[0].mxu0
  %v1451 = vpop.f32.mrb[0].mxu0
  %v1452 = vadd.f32 0.0, %v1451
  %v1453 = vpop.f32.mrb[0].mxu0
  %1454 = vmatprep.mubr.bf16.mxu0 0
  %1455 = vmatmul.mubr.bf16.gmra.mrb[0].mxu0 %v1344
  %v1456 = vpop.f32.mrb[0].mxu0
  %v1457 = vadd.f32 0.0, %v1456
  %v1458 = vpop.f32.mrb[0].mxu0
  %v1459 = vpop.f32.mrb[0].mxu0
  %v1460 = vadd.f32 0.0, %v1459
  %v1461 = vpop.f32.mrb[0].mxu0
  %1462 = vmatprep.mubr.bf16.mxu0 0
  %1463 = vmatmul.mubr.bf16.gmra.mrb[0].mxu0 %v1345
  %v1464 = vpop.f32.mrb[0].mxu0
  %v1465 = vadd.f32 0.0, %v1464
  %v1466 = vpop.f32.mrb[0].mxu0
  %v1467 = vpop.f32.mrb[0].mxu0
  %v1468 = vadd.f32 0.0, %v1467
  %v1469 = vpop.f32.mrb[0].mxu0
  %1470 = vmatprep.mubr.bf16.mxu0 0
  %1471 = vmatmul.mubr.bf16.gmra.mrb[0].mxu0 %v1346
  %v1472 = vpop.f32.mrb[0].mxu0
  %v1473 = vadd.f32 0.0, %v1472
  %v1474 = vpop.f32.mrb[0].mxu0
  %v1475 = vpop.f32.mrb[0].mxu0
  %v1476 = vadd.f32 0.0, %v1475
  %v1477 = vpop.f32.mrb[0].mxu0
  %1478 = vmatprep.mubr.bf16.mxu0 0
  %1479 = vmatmul.mubr.bf16.gmra.mrb[0].mxu0 %v1347
  %v1480 = vpop.f32.mrb[0].mxu0
  %v1481 = vadd.f32 0.0, %v1480
  %v1482 = vpop.f32.mrb[0].mxu0
  %v1483 = vpop.f32.mrb[0].mxu0
  %v1484 = vadd.f32 0.0, %v1483
  %v1485 = vpop.f32.mrb[0].mxu0
  %1486 = vmatprep.mubr.bf16.mxu0 0
  %1487 = vmatmul.mubr.bf16.gmra.mrb[0].mxu0 %v1348
  %v1488 = vpop.f32.mrb[0].mxu0
  %v1489 = vadd.f32 0.0, %v1488
  %v1490 = vpop.f32.mrb[0].mxu0
  %v1491 = vpop.f32.mrb[0].mxu0
  %v1492 = vadd.f32 0.0, %v1491
  %v1493 = vpop.f32.mrb[0].mxu0
  %1494 = vmatprep.mubr.bf16.mxu0 0
  %1495 = vmatmul.mubr.bf16.gmra.mrb[0].mxu0 %v1349
  %v1496 = vpop.f32.mrb[0].mxu0
  %v1497 = vadd.f32 0.0, %v1496
  %v1498 = vpop.f32.mrb[0].mxu0
  %v1499 = vpop.f32.mrb[0].mxu0
  %v1500 = vadd.f32 0.0, %v1499
  %v1501 = vpop.f32.mrb[0].mxu0
  %1502 = vdwg.mxu0
  %v1503 = vadd.f32 %v986, %v1441
  %v1504 = vadd.f32 %v987, %v1444
  %v1505 = vadd.f32 %v988, %v1449
  %v1506 = vadd.f32 %v989, %v1452
  %v1507 = vadd.f32 %v990, %v1457
  %v1508 = vadd.f32 %v991, %v1460
  %v1509 = vadd.f32 %v992, %v1465
  %v1510 = vadd.f32 %v993, %v1468
  %v1511 = vadd.f32 %v994, %v1473
  %v1512 = vadd.f32 %v995, %v1476
  %v1513 = vadd.f32 %v996, %v1481
  %v1514 = vadd.f32 %v997, %v1484
  %v1515 = vadd.f32 %v998, %v1489
  %v1516 = vadd.f32 %v999, %v1492
  %v1517 = vadd.f32 %v1000, %v1497
  %v1518 = vadd.f32 %v1001, %v1500
  %v1519 = vld [vmem:[%s0] sm:$0xc]
  %v1520 = vld [vmem:[%s0 + $0x8] sm:$0xc]
  %v1521 = vld [vmem:[%s0 + $0x10] sm:$0xc]
  %v1522 = vld [vmem:[%s0 + $0x18] sm:$0xc]
  %v1523 = vld [vmem:[%s0 + $0x20] sm:$0xc]
  %v1524 = vld [vmem:[%s0 + $0x28] sm:$0xc]
  %v1525 = vld [vmem:[%s0 + $0x30] sm:$0xc]
  %v1526 = vld [vmem:[%s0 + $0x38] sm:$0xc]
  %v1527 = vld [vmem:[%s0 + $0x60] sm:$0xc]
  %v1528 = vld [vmem:[%s0 + $0x68] sm:$0xc]
  %v1529 = vld [vmem:[%s0 + $0x70] sm:$0xc]
  %v1530 = vld [vmem:[%s0 + $0x78] sm:$0xc]
  %v1531 = vld [vmem:[%s0 + $0x80] sm:$0xc]
  %v1532 = vld [vmem:[%s0 + $0x88] sm:$0xc]
  %v1533 = vld [vmem:[%s0 + $0x90] sm:$0xc]
  %v1534 = vld [vmem:[%s0 + $0x98] sm:$0xc]
  %vm1567 = vcmask 1041408
  %vm1568 = vcmask 1045508
  %vm1569 = vmor %vm1567, %vm1568
  %v1570 = vrot.slane %v1519, 6
  %v1571 = vrot.slane %v1570, 4
  %v1572 = vrot.slane %v1002, 6
  %v1573 = vsel %vm1569, %v1571, %v1572
  %v1574 = vrot.slane %v1520, 6
  %v1575 = vrot.slane %v1574, 4
  %v1576 = vrot.slane %v1003, 6
  %v1577 = vsel %vm1569, %v1575, %v1576
  %v1578 = vrot.slane %v1521, 6
  %v1579 = vrot.slane %v1578, 4
  %v1580 = vrot.slane %v1004, 6
  %v1581 = vsel %vm1569, %v1579, %v1580
  %v1582 = vrot.slane %v1522, 6
  %v1583 = vrot.slane %v1582, 4
  %v1584 = vrot.slane %v1005, 6
  %v1585 = vsel %vm1569, %v1583, %v1584
  %v1586 = vrot.slane %v1523, 6
  %v1587 = vrot.slane %v1586, 4
  %v1588 = vrot.slane %v1006, 6
  %v1589 = vsel %vm1569, %v1587, %v1588
  %v1590 = vrot.slane %v1524, 6
  %v1591 = vrot.slane %v1590, 4
  %v1592 = vrot.slane %v1007, 6
  %v1593 = vsel %vm1569, %v1591, %v1592
  %v1594 = vrot.slane %v1525, 6
  %v1595 = vrot.slane %v1594, 4
  %v1596 = vrot.slane %v1008, 6
  %v1597 = vsel %vm1569, %v1595, %v1596
  %v1598 = vrot.slane %v1526, 6
  %v1599 = vrot.slane %v1598, 4
  %v1600 = vrot.slane %v1009, 6
  %v1601 = vsel %vm1569, %v1599, %v1600
  %v1602 = vrot.slane %v1527, 6
  %v1603 = vrot.slane %v1602, 4
  %v1604 = vrot.slane %v1010, 6
  %v1605 = vsel %vm1569, %v1603, %v1604
  %v1606 = vrot.slane %v1528, 6
  %v1607 = vrot.slane %v1606, 4
  %v1608 = vrot.slane %v1011, 6
  %v1609 = vsel %vm1569, %v1607, %v1608
  %v1610 = vrot.slane %v1529, 6
  %v1611 = vrot.slane %v1610, 4
  %v1612 = vrot.slane %v1012, 6
  %v1613 = vsel %vm1569, %v1611, %v1612
  %v1614 = vrot.slane %v1530, 6
  %v1615 = vrot.slane %v1614, 4
  %v1616 = vrot.slane %v1013, 6
  %v1617 = vsel %vm1569, %v1615, %v1616
  %v1618 = vrot.slane %v1531, 6
  %v1619 = vrot.slane %v1618, 4
  %v1620 = vrot.slane %v1014, 6
  %v1621 = vsel %vm1569, %v1619, %v1620
  %v1622 = vrot.slane %v1532, 6
  %v1623 = vrot.slane %v1622, 4
  %v1624 = vrot.slane %v1015, 6
  %v1625 = vsel %vm1569, %v1623, %v1624
  %v1626 = vrot.slane %v1533, 6
  %v1627 = vrot.slane %v1626, 4
  %v1628 = vrot.slane %v1016, 6
  %v1629 = vsel %vm1569, %v1627, %v1628
  %v1630 = vrot.slane %v1534, 6
  %v1631 = vrot.slane %v1630, 4
  %v1632 = vrot.slane %v1017, 6
  %v1633 = vsel %vm1569, %v1631, %v1632
  %s1634 = scalar_lea.vmem %s1, 256
  %v1635 = vld [vmem:[%s1634] sm:$0xf]
  %v1636 = vld [vmem:[%s1634 + $0x4] sm:$0xf]
  %v1637 = vld [vmem:[%s1634 + $0x8] sm:$0xf]
  %v1638 = vld [vmem:[%s1634 + $0xc] sm:$0xf]
  %v1639 = vld [vmem:[%s1634 + $0x10] sm:$0xf]
  %v1640 = vld [vmem:[%s1634 + $0x14] sm:$0xf]
  %v1641 = vld [vmem:[%s1634 + $0x18] sm:$0xf]
  %v1642 = vld [vmem:[%s1634 + $0x1c] sm:$0xf]
  %v1643 = vld [vmem:[%s1634 + $0x20] sm:$0xf]
  %v1644 = vld [vmem:[%s1634 + $0x24] sm:$0xf]
  %v1645 = vld [vmem:[%s1634 + $0x28] sm:$0xf]
  %v1646 = vld [vmem:[%s1634 + $0x2c] sm:$0xf]
  %v1647 = vld [vmem:[%s1634 + $0x30] sm:$0xf]
  %v1648 = vld [vmem:[%s1634 + $0x34] sm:$0xf]
  %v1649 = vld [vmem:[%s1634 + $0x38] sm:$0xf]
  %v1650 = vld [vmem:[%s1634 + $0x3c] sm:$0xf]
  %v1651 = vunpack.c.l.b16 %v1573
  %v1652 = vunpack.c.l.b16 %v1577
  %v1653 = vunpack.c.l.b16 %v1581
  %v1654 = vunpack.c.l.b16 %v1585
  %v1655 = vunpack.c.l.b16 %v1589
  %v1656 = vunpack.c.l.b16 %v1593
  %v1657 = vunpack.c.l.b16 %v1597
  %v1658 = vunpack.c.l.b16 %v1601
  %v1659 = vunpack.c.l.b16 %v1605
  %v1660 = vunpack.c.l.b16 %v1609
  %v1661 = vunpack.c.l.b16 %v1613
  %v1662 = vunpack.c.l.b16 %v1617
  %v1663 = vunpack.c.l.b16 %v1621
  %v1664 = vunpack.c.l.b16 %v1625
  %v1665 = vunpack.c.l.b16 %v1629
  %v1666 = vunpack.c.l.b16 %v1633
  %v1667 = vpack.c.b16 %v1652, %v1651
  %v1668 = vpack.c.b16 %v1654, %v1653
  %v1669 = vpack.c.b16 %v1656, %v1655
  %v1670 = vpack.c.b16 %v1658, %v1657
  %v1671 = vpack.c.b16 %v1660, %v1659
  %v1672 = vpack.c.b16 %v1662, %v1661
  %v1673 = vpack.c.b16 %v1664, %v1663
  %v1674 = vpack.c.b16 %v1666, %v1665
  %v1699 = vunpack.c.l.b16 %v1635
  %v1700 = vunpack.c.l.b16 %v1636
  %v1701 = vunpack.c.l.b16 %v1637
  %v1702 = vunpack.c.l.b16 %v1638
  %v1703 = vunpack.c.l.b16 %v1639
  %v1704 = vunpack.c.l.b16 %v1640
  %v1705 = vunpack.c.l.b16 %v1641
  %v1706 = vunpack.c.l.b16 %v1642
  %v1707 = vunpack.c.l.b16 %v1643
  %v1708 = vunpack.c.l.b16 %v1644
  %v1709 = vunpack.c.l.b16 %v1645
  %v1710 = vunpack.c.l.b16 %v1646
  %v1711 = vunpack.c.l.b16 %v1647
  %v1712 = vunpack.c.l.b16 %v1648
  %v1713 = vunpack.c.l.b16 %v1649
  %v1714 = vunpack.c.l.b16 %v1650
  %v1715 = vpack.c.b16 %v1700, %v1699
  %v1716 = vpack.c.b16 %v1702, %v1701
  %v1717 = vpack.c.b16 %v1704, %v1703
  %v1718 = vpack.c.b16 %v1706, %v1705
  %v1719 = vpack.c.b16 %v1708, %v1707
  %v1720 = vpack.c.b16 %v1710, %v1709
  %v1721 = vpack.c.b16 %v1712, %v1711
  %v1722 = vpack.c.b16 %v1714, %v1713
  %1731 = vmatprep.subr.bf16.mxu0 0
  %1732 = vmatpush1.bf16.msra.mxu0 %v1715
  %1733 = vmatprep.subr.bf16.mxu0 0
  %1734 = vmatpush1.bf16.msra.mxu0 %v1716
  %1735 = vmatprep.subr.bf16.mxu0 0
  %1736 = vmatpush1.bf16.msra.mxu0 %v1717
  %1737 = vmatprep.subr.bf16.mxu0 0
  %1738 = vmatpush1.bf16.msra.mxu0 %v1718
  %1739 = vmatprep.subr.bf16.mxu0 0
  %1740 = vmatpush1.bf16.msra.mxu0 %v1719
  %1741 = vmatprep.subr.bf16.mxu0 0
  %1742 = vmatpush1.bf16.msra.mxu0 %v1720
  %1743 = vmatprep.subr.bf16.mxu0 0
  %1744 = vmatpush1.bf16.msra.mxu0 %v1721
  %1745 = vmatprep.subr.bf16.mxu0 0
  %1746 = vmatpush1.bf16.msra.mxu0 %v1722
  %1747 = vmatprep.subr.bf16.mxu0 0
  %1748 = vmatpush1.bf16.msra.mxu0 0
  %1749 = vmatprep.subr.bf16.mxu0 0
  %1750 = vmatpush1.bf16.msra.mxu0 0
  %1751 = vmatprep.subr.bf16.mxu0 0
  %1752 = vmatpush1.bf16.msra.mxu0 0
  %1753 = vmatprep.subr.bf16.mxu0 0
  %1754 = vmatpush1.bf16.msra.mxu0 0
  %1755 = vmatprep.subr.bf16.mxu0 0
  %1756 = vmatpush1.bf16.msra.mxu0 0
  %1757 = vmatprep.subr.bf16.mxu0 0
  %1758 = vmatpush1.bf16.msra.mxu0 0
  %1759 = vmatprep.subr.bf16.mxu0 0
  %1760 = vmatpush1.bf16.msra.mxu0 0
  %1761 = vmatprep.subr.bf16.mxu0 0
  %1762 = vmatpush1.bf16.msra.mxu0 0
  %1763 = vmatprep.mubr.bf16.mxu0 0
  %1764 = vmatmul.mubr.bf16.gmra.mrb[0].mxu0 %v1667
  %v1765 = vpop.f32.mrb[0].mxu0
  %v1766 = vadd.f32 0.0, %v1765
  %v1767 = vpop.f32.mrb[0].mxu0
  %v1768 = vpop.f32.mrb[0].mxu0
  %v1769 = vadd.f32 0.0, %v1768
  %v1770 = vpop.f32.mrb[0].mxu0
  %1771 = vmatprep.mubr.bf16.mxu0 0
  %1772 = vmatmul.mubr.bf16.gmra.mrb[0].mxu0 %v1668
  %v1773 = vpop.f32.mrb[0].mxu0
  %v1774 = vadd.f32 0.0, %v1773
  %v1775 = vpop.f32.mrb[0].mxu0
  %v1776 = vpop.f32.mrb[0].mxu0
  %v1777 = vadd.f32 0.0, %v1776
  %v1778 = vpop.f32.mrb[0].mxu0
  %1779 = vmatprep.mubr.bf16.mxu0 0
  %1780 = vmatmul.mubr.bf16.gmra.mrb[0].mxu0 %v1669
  %v1781 = vpop.f32.mrb[0].mxu0
  %v1782 = vadd.f32 0.0, %v1781
  %v1783 = vpop.f32.mrb[0].mxu0
  %v1784 = vpop.f32.mrb[0].mxu0
  %v1785 = vadd.f32 0.0, %v1784
  %v1786 = vpop.f32.mrb[0].mxu0
  %1787 = vmatprep.mubr.bf16.mxu0 0
  %1788 = vmatmul.mubr.bf16.gmra.mrb[0].mxu0 %v1670
  %v1789 = vpop.f32.mrb[0].mxu0
  %v1790 = vadd.f32 0.0, %v1789
  %v1791 = vpop.f32.mrb[0].mxu0
  %v1792 = vpop.f32.mrb[0].mxu0
  %v1793 = vadd.f32 0.0, %v1792
  %v1794 = vpop.f32.mrb[0].mxu0
  %1795 = vmatprep.mubr.bf16.mxu0 0
  %1796 = vmatmul.mubr.bf16.gmra.mrb[0].mxu0 %v1671
  %v1797 = vpop.f32.mrb[0].mxu0
  %v1798 = vadd.f32 0.0, %v1797
  %v1799 = vpop.f32.mrb[0].mxu0
  %v1800 = vpop.f32.mrb[0].mxu0
  %v1801 = vadd.f32 0.0, %v1800
  %v1802 = vpop.f32.mrb[0].mxu0
  %1803 = vmatprep.mubr.bf16.mxu0 0
  %1804 = vmatmul.mubr.bf16.gmra.mrb[0].mxu0 %v1672
  %v1805 = vpop.f32.mrb[0].mxu0
  %v1806 = vadd.f32 0.0, %v1805
  %v1807 = vpop.f32.mrb[0].mxu0
  %v1808 = vpop.f32.mrb[0].mxu0
  %v1809 = vadd.f32 0.0, %v1808
  %v1810 = vpop.f32.mrb[0].mxu0
  %1811 = vmatprep.mubr.bf16.mxu0 0
  %1812 = vmatmul.mubr.bf16.gmra.mrb[0].mxu0 %v1673
  %v1813 = vpop.f32.mrb[0].mxu0
  %v1814 = vadd.f32 0.0, %v1813
  %v1815 = vpop.f32.mrb[0].mxu0
  %v1816 = vpop.f32.mrb[0].mxu0
  %v1817 = vadd.f32 0.0, %v1816
  %v1818 = vpop.f32.mrb[0].mxu0
  %1819 = vmatprep.mubr.bf16.mxu0 0
  %1820 = vmatmul.mubr.bf16.gmra.mrb[0].mxu0 %v1674
  %v1821 = vpop.f32.mrb[0].mxu0
  %v1822 = vadd.f32 0.0, %v1821
  %v1823 = vpop.f32.mrb[0].mxu0
  %v1824 = vpop.f32.mrb[0].mxu0
  %v1825 = vadd.f32 0.0, %v1824
  %v1826 = vpop.f32.mrb[0].mxu0
  %1827 = vdwg.mxu0
  %v1828 = vadd.f32 %v1503, %v1766
  %v1829 = vadd.f32 %v1504, %v1769
  %v1830 = vadd.f32 %v1505, %v1774
  %v1831 = vadd.f32 %v1506, %v1777
  %v1832 = vadd.f32 %v1507, %v1782
  %v1833 = vadd.f32 %v1508, %v1785
  %v1834 = vadd.f32 %v1509, %v1790
  %v1835 = vadd.f32 %v1510, %v1793
  %v1836 = vadd.f32 %v1511, %v1798
  %v1837 = vadd.f32 %v1512, %v1801
  %v1838 = vadd.f32 %v1513, %v1806
  %v1839 = vadd.f32 %v1514, %v1809
  %v1840 = vadd.f32 %v1515, %v1814
  %v1841 = vadd.f32 %v1516, %v1817
  %v1842 = vadd.f32 %v1517, %v1822
  %v1843 = vadd.f32 %v1518, %v1825
  %s1844 = scalar_lea.vmem %s0, 8
  %v1845 = vld [vmem:[%s1844] sm:$0xf]
  %v1846 = vld [vmem:[%s1844 + $0x8] sm:$0xf]
  %v1847 = vld [vmem:[%s1844 + $0x10] sm:$0xf]
  %v1848 = vld [vmem:[%s1844 + $0x18] sm:$0xf]
  %v1849 = vld [vmem:[%s1844 + $0x20] sm:$0xf]
  %v1850 = vld [vmem:[%s1844 + $0x28] sm:$0xf]
  %v1851 = vld [vmem:[%s1844 + $0x30] sm:$0xf]
  %v1852 = vld [vmem:[%s1844 + $0x38] sm:$0xf]
  %v1853 = vld [vmem:[%s1844 + $0x60] sm:$0xf]
  %v1854 = vld [vmem:[%s1844 + $0x68] sm:$0xf]
  %v1855 = vld [vmem:[%s1844 + $0x70] sm:$0xf]
  %v1856 = vld [vmem:[%s1844 + $0x78] sm:$0xf]
  %v1857 = vld [vmem:[%s1844 + $0x80] sm:$0xf]
  %v1858 = vld [vmem:[%s1844 + $0x88] sm:$0xf]
  %v1859 = vld [vmem:[%s1844 + $0x90] sm:$0xf]
  %v1860 = vld [vmem:[%s1844 + $0x98] sm:$0xf]
  %s1861 = scalar_lea.vmem %s1, 320
  %v1862 = vld [vmem:[%s1861] sm:$0xf]
  %v1863 = vld [vmem:[%s1861 + $0x4] sm:$0xf]
  %v1864 = vld [vmem:[%s1861 + $0x8] sm:$0xf]
  %v1865 = vld [vmem:[%s1861 + $0xc] sm:$0xf]
  %v1866 = vld [vmem:[%s1861 + $0x10] sm:$0xf]
  %v1867 = vld [vmem:[%s1861 + $0x14] sm:$0xf]
  %v1868 = vld [vmem:[%s1861 + $0x18] sm:$0xf]
  %v1869 = vld [vmem:[%s1861 + $0x1c] sm:$0xf]
  %v1870 = vld [vmem:[%s1861 + $0x20] sm:$0xf]
  %v1871 = vld [vmem:[%s1861 + $0x24] sm:$0xf]
  %v1872 = vld [vmem:[%s1861 + $0x28] sm:$0xf]
  %v1873 = vld [vmem:[%s1861 + $0x2c] sm:$0xf]
  %v1874 = vld [vmem:[%s1861 + $0x30] sm:$0xf]
  %v1875 = vld [vmem:[%s1861 + $0x34] sm:$0xf]
  %v1876 = vld [vmem:[%s1861 + $0x38] sm:$0xf]
  %v1877 = vld [vmem:[%s1861 + $0x3c] sm:$0xf]
  %v1894 = vunpack.c.l.b16 %v1845
  %v1895 = vunpack.c.l.b16 %v1846
  %v1896 = vunpack.c.l.b16 %v1847
  %v1897 = vunpack.c.l.b16 %v1848
  %v1898 = vunpack.c.l.b16 %v1849
  %v1899 = vunpack.c.l.b16 %v1850
  %v1900 = vunpack.c.l.b16 %v1851
  %v1901 = vunpack.c.l.b16 %v1852
  %v1902 = vunpack.c.l.b16 %v1853
  %v1903 = vunpack.c.l.b16 %v1854
  %v1904 = vunpack.c.l.b16 %v1855
  %v1905 = vunpack.c.l.b16 %v1856
  %v1906 = vunpack.c.l.b16 %v1857
  %v1907 = vunpack.c.l.b16 %v1858
  %v1908 = vunpack.c.l.b16 %v1859
  %v1909 = vunpack.c.l.b16 %v1860
  %v1910 = vpack.c.b16 %v1895, %v1894
  %v1911 = vpack.c.b16 %v1897, %v1896
  %v1912 = vpack.c.b16 %v1899, %v1898
  %v1913 = vpack.c.b16 %v1901, %v1900
  %v1914 = vpack.c.b16 %v1903, %v1902
  %v1915 = vpack.c.b16 %v1905, %v1904
  %v1916 = vpack.c.b16 %v1907, %v1906
  %v1917 = vpack.c.b16 %v1909, %v1908
  %v1942 = vunpack.c.l.b16 %v1862
  %v1943 = vunpack.c.l.b16 %v1863
  %v1944 = vunpack.c.l.b16 %v1864
  %v1945 = vunpack.c.l.b16 %v1865
  %v1946 = vunpack.c.l.b16 %v1866
  %v1947 = vunpack.c.l.b16 %v1867
  %v1948 = vunpack.c.l.b16 %v1868
  %v1949 = vunpack.c.l.b16 %v1869
  %v1950 = vunpack.c.l.b16 %v1870
  %v1951 = vunpack.c.l.b16 %v1871
  %v1952 = vunpack.c.l.b16 %v1872
  %v1953 = vunpack.c.l.b16 %v1873
  %v1954 = vunpack.c.l.b16 %v1874
  %v1955 = vunpack.c.l.b16 %v1875
  %v1956 = vunpack.c.l.b16 %v1876
  %v1957 = vunpack.c.l.b16 %v1877
  %v1958 = vpack.c.b16 %v1943, %v1942
  %v1959 = vpack.c.b16 %v1945, %v1944
  %v1960 = vpack.c.b16 %v1947, %v1946
  %v1961 = vpack.c.b16 %v1949, %v1948
  %v1962 = vpack.c.b16 %v1951, %v1950
  %v1963 = vpack.c.b16 %v1953, %v1952
  %v1964 = vpack.c.b16 %v1955, %v1954
  %v1965 = vpack.c.b16 %v1957, %v1956
  %1974 = vmatprep.subr.bf16.mxu0 0
  %1975 = vmatpush1.bf16.msra.mxu0 %v1958
  %1976 = vmatprep.subr.bf16.mxu0 0
  %1977 = vmatpush1.bf16.msra.mxu0 %v1959
  %1978 = vmatprep.subr.bf16.mxu0 0
  %1979 = vmatpush1.bf16.msra.mxu0 %v1960
  %1980 = vmatprep.subr.bf16.mxu0 0
  %1981 = vmatpush1.bf16.msra.mxu0 %v1961
  %1982 = vmatprep.subr.bf16.mxu0 0
  %1983 = vmatpush1.bf16.msra.mxu0 %v1962
  %1984 = vmatprep.subr.bf16.mxu0 0
  %1985 = vmatpush1.bf16.msra.mxu0 %v1963
  %1986 = vmatprep.subr.bf16.mxu0 0
  %1987 = vmatpush1.bf16.msra.mxu0 %v1964
  %1988 = vmatprep.subr.bf16.mxu0 0
  %1989 = vmatpush1.bf16.msra.mxu0 %v1965
  %1990 = vmatprep.subr.bf16.mxu0 0
  %1991 = vmatpush1.bf16.msra.mxu0 0
  %1992 = vmatprep.subr.bf16.mxu0 0
  %1993 = vmatpush1.bf16.msra.mxu0 0
  %1994 = vmatprep.subr.bf16.mxu0 0
  %1995 = vmatpush1.bf16.msra.mxu0 0
  %1996 = vmatprep.subr.bf16.mxu0 0
  %1997 = vmatpush1.bf16.msra.mxu0 0
  %1998 = vmatprep.subr.bf16.mxu0 0
  %1999 = vmatpush1.bf16.msra.mxu0 0
  %2000 = vmatprep.subr.bf16.mxu0 0
  %2001 = vmatpush1.bf16.msra.mxu0 0
  %2002 = vmatprep.subr.bf16.mxu0 0
  %2003 = vmatpush1.bf16.msra.mxu0 0
  %2004 = vmatprep.subr.bf16.mxu0 0
  %2005 = vmatpush1.bf16.msra.mxu0 0
  %2006 = vmatprep.mubr.bf16.mxu0 0
  %2007 = vmatmul.mubr.bf16.gmra.mrb[0].mxu0 %v1910
  %v2008 = vpop.f32.mrb[0].mxu0
  %v2009 = vadd.f32 0.0, %v2008
  %v2010 = vpop.f32.mrb[0].mxu0
  %v2011 = vpop.f32.mrb[0].mxu0
  %v2012 = vadd.f32 0.0, %v2011
  %v2013 = vpop.f32.mrb[0].mxu0
  %2014 = vmatprep.mubr.bf16.mxu0 0
  %2015 = vmatmul.mubr.bf16.gmra.mrb[0].mxu0 %v1911
  %v2016 = vpop.f32.mrb[0].mxu0
  %v2017 = vadd.f32 0.0, %v2016
  %v2018 = vpop.f32.mrb[0].mxu0
  %v2019 = vpop.f32.mrb[0].mxu0
  %v2020 = vadd.f32 0.0, %v2019
  %v2021 = vpop.f32.mrb[0].mxu0
  %2022 = vmatprep.mubr.bf16.mxu0 0
  %2023 = vmatmul.mubr.bf16.gmra.mrb[0].mxu0 %v1912
  %v2024 = vpop.f32.mrb[0].mxu0
  %v2025 = vadd.f32 0.0, %v2024
  %v2026 = vpop.f32.mrb[0].mxu0
  %v2027 = vpop.f32.mrb[0].mxu0
  %v2028 = vadd.f32 0.0, %v2027
  %v2029 = vpop.f32.mrb[0].mxu0
  %2030 = vmatprep.mubr.bf16.mxu0 0
  %2031 = vmatmul.mubr.bf16.gmra.mrb[0].mxu0 %v1913
  %v2032 = vpop.f32.mrb[0].mxu0
  %v2033 = vadd.f32 0.0, %v2032
  %v2034 = vpop.f32.mrb[0].mxu0
  %v2035 = vpop.f32.mrb[0].mxu0
  %v2036 = vadd.f32 0.0, %v2035
  %v2037 = vpop.f32.mrb[0].mxu0
  %2038 = vmatprep.mubr.bf16.mxu0 0
  %2039 = vmatmul.mubr.bf16.gmra.mrb[0].mxu0 %v1914
  %v2040 = vpop.f32.mrb[0].mxu0
  %v2041 = vadd.f32 0.0, %v2040
  %v2042 = vpop.f32.mrb[0].mxu0
  %v2043 = vpop.f32.mrb[0].mxu0
  %v2044 = vadd.f32 0.0, %v2043
  %v2045 = vpop.f32.mrb[0].mxu0
  %2046 = vmatprep.mubr.bf16.mxu0 0
  %2047 = vmatmul.mubr.bf16.gmra.mrb[0].mxu0 %v1915
  %v2048 = vpop.f32.mrb[0].mxu0
  %v2049 = vadd.f32 0.0, %v2048
  %v2050 = vpop.f32.mrb[0].mxu0
  %v2051 = vpop.f32.mrb[0].mxu0
  %v2052 = vadd.f32 0.0, %v2051
  %v2053 = vpop.f32.mrb[0].mxu0
  %2054 = vmatprep.mubr.bf16.mxu0 0
  %2055 = vmatmul.mubr.bf16.gmra.mrb[0].mxu0 %v1916
  %v2056 = vpop.f32.mrb[0].mxu0
  %v2057 = vadd.f32 0.0, %v2056
  %v2058 = vpop.f32.mrb[0].mxu0
  %v2059 = vpop.f32.mrb[0].mxu0
  %v2060 = vadd.f32 0.0, %v2059
  %v2061 = vpop.f32.mrb[0].mxu0
  %2062 = vmatprep.mubr.bf16.mxu0 0
  %2063 = vmatmul.mubr.bf16.gmra.mrb[0].mxu0 %v1917
  %v2064 = vpop.f32.mrb[0].mxu0
  %v2065 = vadd.f32 0.0, %v2064
  %v2066 = vpop.f32.mrb[0].mxu0
  %v2067 = vpop.f32.mrb[0].mxu0
  %v2068 = vadd.f32 0.0, %v2067
  %v2069 = vpop.f32.mrb[0].mxu0
  %2070 = vdwg.mxu0
  %v2071 = vadd.f32 %v1828, %v2009
  %v2072 = vadd.f32 %v1829, %v2012
  %v2073 = vadd.f32 %v1830, %v2017
  %v2074 = vadd.f32 %v1831, %v2020
  %v2075 = vadd.f32 %v1832, %v2025
  %v2076 = vadd.f32 %v1833, %v2028
  %v2077 = vadd.f32 %v1834, %v2033
  %v2078 = vadd.f32 %v1835, %v2036
  %v2079 = vadd.f32 %v1836, %v2041
  %v2080 = vadd.f32 %v1837, %v2044
  %v2081 = vadd.f32 %v1838, %v2049
  %v2082 = vadd.f32 %v1839, %v2052
  %v2083 = vadd.f32 %v1840, %v2057
  %v2084 = vadd.f32 %v1841, %v2060
  %v2085 = vadd.f32 %v1842, %v2065
  %v2086 = vadd.f32 %v1843, %v2068
  %v2087 = vld [vmem:[%s1844] sm:$0xf]
  %v2088 = vld [vmem:[%s1844 + $0x4] sm:$0x1]
  %v2089 = vld [vmem:[%s1844 + $0x8] sm:$0xf]
  %v2090 = vld [vmem:[%s1844 + $0xc] sm:$0x1]
  %v2091 = vld [vmem:[%s1844 + $0x10] sm:$0xf]
  %v2092 = vld [vmem:[%s1844 + $0x14] sm:$0x1]
  %v2093 = vld [vmem:[%s1844 + $0x18] sm:$0xf]
  %v2094 = vld [vmem:[%s1844 + $0x1c] sm:$0x1]
  %v2095 = vld [vmem:[%s1844 + $0x20] sm:$0xf]
  %v2096 = vld [vmem:[%s1844 + $0x24] sm:$0x1]
  %v2097 = vld [vmem:[%s1844 + $0x28] sm:$0xf]
  %v2098 = vld [vmem:[%s1844 + $0x2c] sm:$0x1]
  %v2099 = vld [vmem:[%s1844 + $0x30] sm:$0xf]
  %v2100 = vld [vmem:[%s1844 + $0x34] sm:$0x1]
  %v2101 = vld [vmem:[%s1844 + $0x38] sm:$0xf]
  %v2102 = vld [vmem:[%s1844 + $0x3c] sm:$0x1]
  %v2103 = vld [vmem:[%s1844 + $0x60] sm:$0xf]
  %v2104 = vld [vmem:[%s1844 + $0x64] sm:$0x1]
  %v2105 = vld [vmem:[%s1844 + $0x68] sm:$0xf]
  %v2106 = vld [vmem:[%s1844 + $0x6c] sm:$0x1]
  %v2107 = vld [vmem:[%s1844 + $0x70] sm:$0xf]
  %v2108 = vld [vmem:[%s1844 + $0x74] sm:$0x1]
  %v2109 = vld [vmem:[%s1844 + $0x78] sm:$0xf]
  %v2110 = vld [vmem:[%s1844 + $0x7c] sm:$0x1]
  %v2111 = vld [vmem:[%s1844 + $0x80] sm:$0xf]
  %v2112 = vld [vmem:[%s1844 + $0x84] sm:$0x1]
  %v2113 = vld [vmem:[%s1844 + $0x88] sm:$0xf]
  %v2114 = vld [vmem:[%s1844 + $0x8c] sm:$0x1]
  %v2115 = vld [vmem:[%s1844 + $0x90] sm:$0xf]
  %v2116 = vld [vmem:[%s1844 + $0x94] sm:$0x1]
  %v2117 = vld [vmem:[%s1844 + $0x98] sm:$0xf]
  %v2118 = vld [vmem:[%s1844 + $0x9c] sm:$0x1]
  %v2120 = vshrl.u32 %v2087, 16
  %v2122 = vrot.slane %v2120, 4
  %v2123 = vshll.u32 %v2087, 16
  %v2125 = vrot.slane %v2123, 5
  %v2126 = vor.u32 %v2122, %v2125
  %v2127 = vrot.slane %v2126, 4
  %v2129 = vshll.u32 %v2088, 16
  %v2131 = vrot.slane %v2129, 5
  %v2132 = vsel %vm65, %v2127, %v2131
  %v2134 = vshrl.u32 %v2089, 16
  %v2136 = vrot.slane %v2134, 4
  %v2137 = vshll.u32 %v2089, 16
  %v2139 = vrot.slane %v2137, 5
  %v2140 = vor.u32 %v2136, %v2139
  %v2141 = vrot.slane %v2140, 4
  %v2143 = vshll.u32 %v2090, 16
  %v2145 = vrot.slane %v2143, 5
  %v2146 = vsel %vm65, %v2141, %v2145
  %v2148 = vshrl.u32 %v2091, 16
  %v2150 = vrot.slane %v2148, 4
  %v2151 = vshll.u32 %v2091, 16
  %v2153 = vrot.slane %v2151, 5
  %v2154 = vor.u32 %v2150, %v2153
  %v2155 = vrot.slane %v2154, 4
  %v2157 = vshll.u32 %v2092, 16
  %v2159 = vrot.slane %v2157, 5
  %v2160 = vsel %vm65, %v2155, %v2159
  %v2162 = vshrl.u32 %v2093, 16
  %v2164 = vrot.slane %v2162, 4
  %v2165 = vshll.u32 %v2093, 16
  %v2167 = vrot.slane %v2165, 5
  %v2168 = vor.u32 %v2164, %v2167
  %v2169 = vrot.slane %v2168, 4
  %v2171 = vshll.u32 %v2094, 16
  %v2173 = vrot.slane %v2171, 5
  %v2174 = vsel %vm65, %v2169, %v2173
  %v2176 = vshrl.u32 %v2095, 16
  %v2178 = vrot.slane %v2176, 4
  %v2179 = vshll.u32 %v2095, 16
  %v2181 = vrot.slane %v2179, 5
  %v2182 = vor.u32 %v2178, %v2181
  %v2183 = vrot.slane %v2182, 4
  %v2185 = vshll.u32 %v2096, 16
  %v2187 = vrot.slane %v2185, 5
  %v2188 = vsel %vm65, %v2183, %v2187
  %v2190 = vshrl.u32 %v2097, 16
  %v2192 = vrot.slane %v2190, 4
  %v2193 = vshll.u32 %v2097, 16
  %v2195 = vrot.slane %v2193, 5
  %v2196 = vor.u32 %v2192, %v2195
  %v2197 = vrot.slane %v2196, 4
  %v2199 = vshll.u32 %v2098, 16
  %v2201 = vrot.slane %v2199, 5
  %v2202 = vsel %vm65, %v2197, %v2201
  %v2204 = vshrl.u32 %v2099, 16
  %v2206 = vrot.slane %v2204, 4
  %v2207 = vshll.u32 %v2099, 16
  %v2209 = vrot.slane %v2207, 5
  %v2210 = vor.u32 %v2206, %v2209
  %v2211 = vrot.slane %v2210, 4
  %v2213 = vshll.u32 %v2100, 16
  %v2215 = vrot.slane %v2213, 5
  %v2216 = vsel %vm65, %v2211, %v2215
  %v2218 = vshrl.u32 %v2101, 16
  %v2220 = vrot.slane %v2218, 4
  %v2221 = vshll.u32 %v2101, 16
  %v2223 = vrot.slane %v2221, 5
  %v2224 = vor.u32 %v2220, %v2223
  %v2225 = vrot.slane %v2224, 4
  %v2227 = vshll.u32 %v2102, 16
  %v2229 = vrot.slane %v2227, 5
  %v2230 = vsel %vm65, %v2225, %v2229
  %v2232 = vshrl.u32 %v2103, 16
  %v2234 = vrot.slane %v2232, 4
  %v2235 = vshll.u32 %v2103, 16
  %v2237 = vrot.slane %v2235, 5
  %v2238 = vor.u32 %v2234, %v2237
  %v2239 = vrot.slane %v2238, 4
  %v2241 = vshll.u32 %v2104, 16
  %v2243 = vrot.slane %v2241, 5
  %v2244 = vsel %vm65, %v2239, %v2243
  %v2246 = vshrl.u32 %v2105, 16
  %v2248 = vrot.slane %v2246, 4
  %v2249 = vshll.u32 %v2105, 16
  %v2251 = vrot.slane %v2249, 5
  %v2252 = vor.u32 %v2248, %v2251
  %v2253 = vrot.slane %v2252, 4
  %v2255 = vshll.u32 %v2106, 16
  %v2257 = vrot.slane %v2255, 5
  %v2258 = vsel %vm65, %v2253, %v2257
  %v2260 = vshrl.u32 %v2107, 16
  %v2262 = vrot.slane %v2260, 4
  %v2263 = vshll.u32 %v2107, 16
  %v2265 = vrot.slane %v2263, 5
  %v2266 = vor.u32 %v2262, %v2265
  %v2267 = vrot.slane %v2266, 4
  %v2269 = vshll.u32 %v2108, 16
  %v2271 = vrot.slane %v2269, 5
  %v2272 = vsel %vm65, %v2267, %v2271
  %v2274 = vshrl.u32 %v2109, 16
  %v2276 = vrot.slane %v2274, 4
  %v2277 = vshll.u32 %v2109, 16
  %v2279 = vrot.slane %v2277, 5
  %v2280 = vor.u32 %v2276, %v2279
  %v2281 = vrot.slane %v2280, 4
  %v2283 = vshll.u32 %v2110, 16
  %v2285 = vrot.slane %v2283, 5
  %v2286 = vsel %vm65, %v2281, %v2285
  %v2288 = vshrl.u32 %v2111, 16
  %v2290 = vrot.slane %v2288, 4
  %v2291 = vshll.u32 %v2111, 16
  %v2293 = vrot.slane %v2291, 5
  %v2294 = vor.u32 %v2290, %v2293
  %v2295 = vrot.slane %v2294, 4
  %v2297 = vshll.u32 %v2112, 16
  %v2299 = vrot.slane %v2297, 5
  %v2300 = vsel %vm65, %v2295, %v2299
  %v2302 = vshrl.u32 %v2113, 16
  %v2304 = vrot.slane %v2302, 4
  %v2305 = vshll.u32 %v2113, 16
  %v2307 = vrot.slane %v2305, 5
  %v2308 = vor.u32 %v2304, %v2307
  %v2309 = vrot.slane %v2308, 4
  %v2311 = vshll.u32 %v2114, 16
  %v2313 = vrot.slane %v2311, 5
  %v2314 = vsel %vm65, %v2309, %v2313
  %v2316 = vshrl.u32 %v2115, 16
  %v2318 = vrot.slane %v2316, 4
  %v2319 = vshll.u32 %v2115, 16
  %v2321 = vrot.slane %v2319, 5
  %v2322 = vor.u32 %v2318, %v2321
  %v2323 = vrot.slane %v2322, 4
  %v2325 = vshll.u32 %v2116, 16
  %v2327 = vrot.slane %v2325, 5
  %v2328 = vsel %vm65, %v2323, %v2327
  %v2330 = vshrl.u32 %v2117, 16
  %v2332 = vrot.slane %v2330, 4
  %v2333 = vshll.u32 %v2117, 16
  %v2335 = vrot.slane %v2333, 5
  %v2336 = vor.u32 %v2332, %v2335
  %v2337 = vrot.slane %v2336, 4
  %v2339 = vshll.u32 %v2118, 16
  %v2341 = vrot.slane %v2339, 5
  %v2342 = vsel %vm65, %v2337, %v2341
  %s2343 = scalar_lea.vmem %s1, 384
  %v2344 = vld [vmem:[%s2343] sm:$0xf]
  %v2345 = vld [vmem:[%s2343 + $0x4] sm:$0xf]
  %v2346 = vld [vmem:[%s2343 + $0x8] sm:$0xf]
  %v2347 = vld [vmem:[%s2343 + $0xc] sm:$0xf]
  %v2348 = vld [vmem:[%s2343 + $0x10] sm:$0xf]
  %v2349 = vld [vmem:[%s2343 + $0x14] sm:$0xf]
  %v2350 = vld [vmem:[%s2343 + $0x18] sm:$0xf]
  %v2351 = vld [vmem:[%s2343 + $0x1c] sm:$0xf]
  %v2352 = vld [vmem:[%s2343 + $0x20] sm:$0xf]
  %v2353 = vld [vmem:[%s2343 + $0x24] sm:$0xf]
  %v2354 = vld [vmem:[%s2343 + $0x28] sm:$0xf]
  %v2355 = vld [vmem:[%s2343 + $0x2c] sm:$0xf]
  %v2356 = vld [vmem:[%s2343 + $0x30] sm:$0xf]
  %v2357 = vld [vmem:[%s2343 + $0x34] sm:$0xf]
  %v2358 = vld [vmem:[%s2343 + $0x38] sm:$0xf]
  %v2359 = vld [vmem:[%s2343 + $0x3c] sm:$0xf]
  %v2360 = vunpack.c.l.b16 %v2132
  %v2361 = vunpack.c.l.b16 %v2146
  %v2362 = vunpack.c.l.b16 %v2160
  %v2363 = vunpack.c.l.b16 %v2174
  %v2364 = vunpack.c.l.b16 %v2188
  %v2365 = vunpack.c.l.b16 %v2202
  %v2366 = vunpack.c.l.b16 %v2216
  %v2367 = vunpack.c.l.b16 %v2230
  %v2368 = vunpack.c.l.b16 %v2244
  %v2369 = vunpack.c.l.b16 %v2258
  %v2370 = vunpack.c.l.b16 %v2272
  %v2371 = vunpack.c.l.b16 %v2286
  %v2372 = vunpack.c.l.b16 %v2300
  %v2373 = vunpack.c.l.b16 %v2314
  %v2374 = vunpack.c.l.b16 %v2328
  %v2375 = vunpack.c.l.b16 %v2342
  %v2376 = vpack.c.b16 %v2361, %v2360
  %v2377 = vpack.c.b16 %v2363, %v2362
  %v2378 = vpack.c.b16 %v2365, %v2364
  %v2379 = vpack.c.b16 %v2367, %v2366
  %v2380 = vpack.c.b16 %v2369, %v2368
  %v2381 = vpack.c.b16 %v2371, %v2370
  %v2382 = vpack.c.b16 %v2373, %v2372
  %v2383 = vpack.c.b16 %v2375, %v2374
  %v2408 = vunpack.c.l.b16 %v2344
  %v2409 = vunpack.c.l.b16 %v2345
  %v2410 = vunpack.c.l.b16 %v2346
  %v2411 = vunpack.c.l.b16 %v2347
  %v2412 = vunpack.c.l.b16 %v2348
  %v2413 = vunpack.c.l.b16 %v2349
  %v2414 = vunpack.c.l.b16 %v2350
  %v2415 = vunpack.c.l.b16 %v2351
  %v2416 = vunpack.c.l.b16 %v2352
  %v2417 = vunpack.c.l.b16 %v2353
  %v2418 = vunpack.c.l.b16 %v2354
  %v2419 = vunpack.c.l.b16 %v2355
  %v2420 = vunpack.c.l.b16 %v2356
  %v2421 = vunpack.c.l.b16 %v2357
  %v2422 = vunpack.c.l.b16 %v2358
  %v2423 = vunpack.c.l.b16 %v2359
  %v2424 = vpack.c.b16 %v2409, %v2408
  %v2425 = vpack.c.b16 %v2411, %v2410
  %v2426 = vpack.c.b16 %v2413, %v2412
  %v2427 = vpack.c.b16 %v2415, %v2414
  %v2428 = vpack.c.b16 %v2417, %v2416
  %v2429 = vpack.c.b16 %v2419, %v2418
  %v2430 = vpack.c.b16 %v2421, %v2420
  %v2431 = vpack.c.b16 %v2423, %v2422
  %2440 = vmatprep.subr.bf16.mxu0 0
  %2441 = vmatpush1.bf16.msra.mxu0 %v2424
  %2442 = vmatprep.subr.bf16.mxu0 0
  %2443 = vmatpush1.bf16.msra.mxu0 %v2425
  %2444 = vmatprep.subr.bf16.mxu0 0
  %2445 = vmatpush1.bf16.msra.mxu0 %v2426
  %2446 = vmatprep.subr.bf16.mxu0 0
  %2447 = vmatpush1.bf16.msra.mxu0 %v2427
  %2448 = vmatprep.subr.bf16.mxu0 0
  %2449 = vmatpush1.bf16.msra.mxu0 %v2428
  %2450 = vmatprep.subr.bf16.mxu0 0
  %2451 = vmatpush1.bf16.msra.mxu0 %v2429
  %2452 = vmatprep.subr.bf16.mxu0 0
  %2453 = vmatpush1.bf16.msra.mxu0 %v2430
  %2454 = vmatprep.subr.bf16.mxu0 0
  %2455 = vmatpush1.bf16.msra.mxu0 %v2431
  %2456 = vmatprep.subr.bf16.mxu0 0
  %2457 = vmatpush1.bf16.msra.mxu0 0
  %2458 = vmatprep.subr.bf16.mxu0 0
  %2459 = vmatpush1.bf16.msra.mxu0 0
  %2460 = vmatprep.subr.bf16.mxu0 0
  %2461 = vmatpush1.bf16.msra.mxu0 0
  %2462 = vmatprep.subr.bf16.mxu0 0
  %2463 = vmatpush1.bf16.msra.mxu0 0
  %2464 = vmatprep.subr.bf16.mxu0 0
  %2465 = vmatpush1.bf16.msra.mxu0 0
  %2466 = vmatprep.subr.bf16.mxu0 0
  %2467 = vmatpush1.bf16.msra.mxu0 0
  %2468 = vmatprep.subr.bf16.mxu0 0
  %2469 = vmatpush1.bf16.msra.mxu0 0
  %2470 = vmatprep.subr.bf16.mxu0 0
  %2471 = vmatpush1.bf16.msra.mxu0 0
  %2472 = vmatprep.mubr.bf16.mxu0 0
  %2473 = vmatmul.mubr.bf16.gmra.mrb[0].mxu0 %v2376
  %v2474 = vpop.f32.mrb[0].mxu0
  %v2475 = vadd.f32 0.0, %v2474
  %v2476 = vpop.f32.mrb[0].mxu0
  %v2477 = vpop.f32.mrb[0].mxu0
  %v2478 = vadd.f32 0.0, %v2477
  %v2479 = vpop.f32.mrb[0].mxu0
  %2480 = vmatprep.mubr.bf16.mxu0 0
  %2481 = vmatmul.mubr.bf16.gmra.mrb[0].mxu0 %v2377
  %v2482 = vpop.f32.mrb[0].mxu0
  %v2483 = vadd.f32 0.0, %v2482
  %v2484 = vpop.f32.mrb[0].mxu0
  %v2485 = vpop.f32.mrb[0].mxu0
  %v2486 = vadd.f32 0.0, %v2485
  %v2487 = vpop.f32.mrb[0].mxu0
  %2488 = vmatprep.mubr.bf16.mxu0 0
  %2489 = vmatmul.mubr.bf16.gmra.mrb[0].mxu0 %v2378
  %v2490 = vpop.f32.mrb[0].mxu0
  %v2491 = vadd.f32 0.0, %v2490
  %v2492 = vpop.f32.mrb[0].mxu0
  %v2493 = vpop.f32.mrb[0].mxu0
  %v2494 = vadd.f32 0.0, %v2493
  %v2495 = vpop.f32.mrb[0].mxu0
  %2496 = vmatprep.mubr.bf16.mxu0 0
  %2497 = vmatmul.mubr.bf16.gmra.mrb[0].mxu0 %v2379
  %v2498 = vpop.f32.mrb[0].mxu0
  %v2499 = vadd.f32 0.0, %v2498
  %v2500 = vpop.f32.mrb[0].mxu0
  %v2501 = vpop.f32.mrb[0].mxu0
  %v2502 = vadd.f32 0.0, %v2501
  %v2503 = vpop.f32.mrb[0].mxu0
  %2504 = vmatprep.mubr.bf16.mxu0 0
  %2505 = vmatmul.mubr.bf16.gmra.mrb[0].mxu0 %v2380
  %v2506 = vpop.f32.mrb[0].mxu0
  %v2507 = vadd.f32 0.0, %v2506
  %v2508 = vpop.f32.mrb[0].mxu0
  %v2509 = vpop.f32.mrb[0].mxu0
  %v2510 = vadd.f32 0.0, %v2509
  %v2511 = vpop.f32.mrb[0].mxu0
  %2512 = vmatprep.mubr.bf16.mxu0 0
  %2513 = vmatmul.mubr.bf16.gmra.mrb[0].mxu0 %v2381
  %v2514 = vpop.f32.mrb[0].mxu0
  %v2515 = vadd.f32 0.0, %v2514
  %v2516 = vpop.f32.mrb[0].mxu0
  %v2517 = vpop.f32.mrb[0].mxu0
  %v2518 = vadd.f32 0.0, %v2517
  %v2519 = vpop.f32.mrb[0].mxu0
  %2520 = vmatprep.mubr.bf16.mxu0 0
  %2521 = vmatmul.mubr.bf16.gmra.mrb[0].mxu0 %v2382
  %v2522 = vpop.f32.mrb[0].mxu0
  %v2523 = vadd.f32 0.0, %v2522
  %v2524 = vpop.f32.mrb[0].mxu0
  %v2525 = vpop.f32.mrb[0].mxu0
  %v2526 = vadd.f32 0.0, %v2525
  %v2527 = vpop.f32.mrb[0].mxu0
  %2528 = vmatprep.mubr.bf16.mxu0 0
  %2529 = vmatmul.mubr.bf16.gmra.mrb[0].mxu0 %v2383
  %v2530 = vpop.f32.mrb[0].mxu0
  %v2531 = vadd.f32 0.0, %v2530
  %v2532 = vpop.f32.mrb[0].mxu0
  %v2533 = vpop.f32.mrb[0].mxu0
  %v2534 = vadd.f32 0.0, %v2533
  %v2535 = vpop.f32.mrb[0].mxu0
  %2536 = vdwg.mxu0
  %v2537 = vadd.f32 %v2071, %v2475
  %v2538 = vadd.f32 %v2072, %v2478
  %v2539 = vadd.f32 %v2073, %v2483
  %v2540 = vadd.f32 %v2074, %v2486
  %v2541 = vadd.f32 %v2075, %v2491
  %v2542 = vadd.f32 %v2076, %v2494
  %v2543 = vadd.f32 %v2077, %v2499
  %v2544 = vadd.f32 %v2078, %v2502
  %v2545 = vadd.f32 %v2079, %v2507
  %v2546 = vadd.f32 %v2080, %v2510
  %v2547 = vadd.f32 %v2081, %v2515
  %v2548 = vadd.f32 %v2082, %v2518
  %v2549 = vadd.f32 %v2083, %v2523
  %v2550 = vadd.f32 %v2084, %v2526
  %v2551 = vadd.f32 %v2085, %v2531
  %v2552 = vadd.f32 %v2086, %v2534
  %v2553 = vld [vmem:[%s1844] sm:$0xe]
  %v2554 = vld [vmem:[%s1844 + $0x8] sm:$0xe]
  %v2555 = vld [vmem:[%s1844 + $0x10] sm:$0xe]
  %v2556 = vld [vmem:[%s1844 + $0x18] sm:$0xe]
  %v2557 = vld [vmem:[%s1844 + $0x20] sm:$0xe]
  %v2558 = vld [vmem:[%s1844 + $0x28] sm:$0xe]
  %v2559 = vld [vmem:[%s1844 + $0x30] sm:$0xe]
  %v2560 = vld [vmem:[%s1844 + $0x38] sm:$0xe]
  %v2561 = vld [vmem:[%s1844 + $0x60] sm:$0xe]
  %v2562 = vld [vmem:[%s1844 + $0x68] sm:$0xe]
  %v2563 = vld [vmem:[%s1844 + $0x70] sm:$0xe]
  %v2564 = vld [vmem:[%s1844 + $0x78] sm:$0xe]
  %v2565 = vld [vmem:[%s1844 + $0x80] sm:$0xe]
  %v2566 = vld [vmem:[%s1844 + $0x88] sm:$0xe]
  %v2567 = vld [vmem:[%s1844 + $0x90] sm:$0xe]
  %v2568 = vld [vmem:[%s1844 + $0x98] sm:$0xe]
  %v2601 = vrot.slane %v2553, 5
  %v2602 = vrot.slane %v2601, 4
  %v2603 = vrot.slane %v2088, 5
  %v2604 = vsel %vm727, %v2602, %v2603
  %v2605 = vrot.slane %v2554, 5
  %v2606 = vrot.slane %v2605, 4
  %v2607 = vrot.slane %v2090, 5
  %v2608 = vsel %vm727, %v2606, %v2607
  %v2609 = vrot.slane %v2555, 5
  %v2610 = vrot.slane %v2609, 4
  %v2611 = vrot.slane %v2092, 5
  %v2612 = vsel %vm727, %v2610, %v2611
  %v2613 = vrot.slane %v2556, 5
  %v2614 = vrot.slane %v2613, 4
  %v2615 = vrot.slane %v2094, 5
  %v2616 = vsel %vm727, %v2614, %v2615
  %v2617 = vrot.slane %v2557, 5
  %v2618 = vrot.slane %v2617, 4
  %v2619 = vrot.slane %v2096, 5
  %v2620 = vsel %vm727, %v2618, %v2619
  %v2621 = vrot.slane %v2558, 5
  %v2622 = vrot.slane %v2621, 4
  %v2623 = vrot.slane %v2098, 5
  %v2624 = vsel %vm727, %v2622, %v2623
  %v2625 = vrot.slane %v2559, 5
  %v2626 = vrot.slane %v2625, 4
  %v2627 = vrot.slane %v2100, 5
  %v2628 = vsel %vm727, %v2626, %v2627
  %v2629 = vrot.slane %v2560, 5
  %v2630 = vrot.slane %v2629, 4
  %v2631 = vrot.slane %v2102, 5
  %v2632 = vsel %vm727, %v2630, %v2631
  %v2633 = vrot.slane %v2561, 5
  %v2634 = vrot.slane %v2633, 4
  %v2635 = vrot.slane %v2104, 5
  %v2636 = vsel %vm727, %v2634, %v2635
  %v2637 = vrot.slane %v2562, 5
  %v2638 = vrot.slane %v2637, 4
  %v2639 = vrot.slane %v2106, 5
  %v2640 = vsel %vm727, %v2638, %v2639
  %v2641 = vrot.slane %v2563, 5
  %v2642 = vrot.slane %v2641, 4
  %v2643 = vrot.slane %v2108, 5
  %v2644 = vsel %vm727, %v2642, %v2643
  %v2645 = vrot.slane %v2564, 5
  %v2646 = vrot.slane %v2645, 4
  %v2647 = vrot.slane %v2110, 5
  %v2648 = vsel %vm727, %v2646, %v2647
  %v2649 = vrot.slane %v2565, 5
  %v2650 = vrot.slane %v2649, 4
  %v2651 = vrot.slane %v2112, 5
  %v2652 = vsel %vm727, %v2650, %v2651
  %v2653 = vrot.slane %v2566, 5
  %v2654 = vrot.slane %v2653, 4
  %v2655 = vrot.slane %v2114, 5
  %v2656 = vsel %vm727, %v2654, %v2655
  %v2657 = vrot.slane %v2567, 5
  %v2658 = vrot.slane %v2657, 4
  %v2659 = vrot.slane %v2116, 5
  %v2660 = vsel %vm727, %v2658, %v2659
  %v2661 = vrot.slane %v2568, 5
  %v2662 = vrot.slane %v2661, 4
  %v2663 = vrot.slane %v2118, 5
  %v2664 = vsel %vm727, %v2662, %v2663
  %s2665 = scalar_lea.vmem %s1, 448
  %v2666 = vld [vmem:[%s2665] sm:$0xf]
  %v2667 = vld [vmem:[%s2665 + $0x4] sm:$0xf]
  %v2668 = vld [vmem:[%s2665 + $0x8] sm:$0xf]
  %v2669 = vld [vmem:[%s2665 + $0xc] sm:$0xf]
  %v2670 = vld [vmem:[%s2665 + $0x10] sm:$0xf]
  %v2671 = vld [vmem:[%s2665 + $0x14] sm:$0xf]
  %v2672 = vld [vmem:[%s2665 + $0x18] sm:$0xf]
  %v2673 = vld [vmem:[%s2665 + $0x1c] sm:$0xf]
  %v2674 = vld [vmem:[%s2665 + $0x20] sm:$0xf]
  %v2675 = vld [vmem:[%s2665 + $0x24] sm:$0xf]
  %v2676 = vld [vmem:[%s2665 + $0x28] sm:$0xf]
  %v2677 = vld [vmem:[%s2665 + $0x2c] sm:$0xf]
  %v2678 = vld [vmem:[%s2665 + $0x30] sm:$0xf]
  %v2679 = vld [vmem:[%s2665 + $0x34] sm:$0xf]
  %v2680 = vld [vmem:[%s2665 + $0x38] sm:$0xf]
  %v2681 = vld [vmem:[%s2665 + $0x3c] sm:$0xf]
  %v2682 = vunpack.c.l.b16 %v2604
  %v2683 = vunpack.c.l.b16 %v2608
  %v2684 = vunpack.c.l.b16 %v2612
  %v2685 = vunpack.c.l.b16 %v2616
  %v2686 = vunpack.c.l.b16 %v2620
  %v2687 = vunpack.c.l.b16 %v2624
  %v2688 = vunpack.c.l.b16 %v2628
  %v2689 = vunpack.c.l.b16 %v2632
  %v2690 = vunpack.c.l.b16 %v2636
  %v2691 = vunpack.c.l.b16 %v2640
  %v2692 = vunpack.c.l.b16 %v2644
  %v2693 = vunpack.c.l.b16 %v2648
  %v2694 = vunpack.c.l.b16 %v2652
  %v2695 = vunpack.c.l.b16 %v2656
  %v2696 = vunpack.c.l.b16 %v2660
  %v2697 = vunpack.c.l.b16 %v2664
  %v2698 = vpack.c.b16 %v2683, %v2682
  %v2699 = vpack.c.b16 %v2685, %v2684
  %v2700 = vpack.c.b16 %v2687, %v2686
  %v2701 = vpack.c.b16 %v2689, %v2688
  %v2702 = vpack.c.b16 %v2691, %v2690
  %v2703 = vpack.c.b16 %v2693, %v2692
  %v2704 = vpack.c.b16 %v2695, %v2694
  %v2705 = vpack.c.b16 %v2697, %v2696
  %v2730 = vunpack.c.l.b16 %v2666
  %v2731 = vunpack.c.l.b16 %v2667
  %v2732 = vunpack.c.l.b16 %v2668
  %v2733 = vunpack.c.l.b16 %v2669
  %v2734 = vunpack.c.l.b16 %v2670
  %v2735 = vunpack.c.l.b16 %v2671
  %v2736 = vunpack.c.l.b16 %v2672
  %v2737 = vunpack.c.l.b16 %v2673
  %v2738 = vunpack.c.l.b16 %v2674
  %v2739 = vunpack.c.l.b16 %v2675
  %v2740 = vunpack.c.l.b16 %v2676
  %v2741 = vunpack.c.l.b16 %v2677
  %v2742 = vunpack.c.l.b16 %v2678
  %v2743 = vunpack.c.l.b16 %v2679
  %v2744 = vunpack.c.l.b16 %v2680
  %v2745 = vunpack.c.l.b16 %v2681
  %v2746 = vpack.c.b16 %v2731, %v2730
  %v2747 = vpack.c.b16 %v2733, %v2732
  %v2748 = vpack.c.b16 %v2735, %v2734
  %v2749 = vpack.c.b16 %v2737, %v2736
  %v2750 = vpack.c.b16 %v2739, %v2738
  %v2751 = vpack.c.b16 %v2741, %v2740
  %v2752 = vpack.c.b16 %v2743, %v2742
  %v2753 = vpack.c.b16 %v2745, %v2744
  %2762 = vmatprep.subr.bf16.mxu0 0
  %2763 = vmatpush1.bf16.msra.mxu0 %v2746
  %2764 = vmatprep.subr.bf16.mxu0 0
  %2765 = vmatpush1.bf16.msra.mxu0 %v2747
  %2766 = vmatprep.subr.bf16.mxu0 0
  %2767 = vmatpush1.bf16.msra.mxu0 %v2748
  %2768 = vmatprep.subr.bf16.mxu0 0
  %2769 = vmatpush1.bf16.msra.mxu0 %v2749
  %2770 = vmatprep.subr.bf16.mxu0 0
  %2771 = vmatpush1.bf16.msra.mxu0 %v2750
  %2772 = vmatprep.subr.bf16.mxu0 0
  %2773 = vmatpush1.bf16.msra.mxu0 %v2751
  %2774 = vmatprep.subr.bf16.mxu0 0
  %2775 = vmatpush1.bf16.msra.mxu0 %v2752
  %2776 = vmatprep.subr.bf16.mxu0 0
  %2777 = vmatpush1.bf16.msra.mxu0 %v2753
  %2778 = vmatprep.subr.bf16.mxu0 0
  %2779 = vmatpush1.bf16.msra.mxu0 0
  %2780 = vmatprep.subr.bf16.mxu0 0
  %2781 = vmatpush1.bf16.msra.mxu0 0
  %2782 = vmatprep.subr.bf16.mxu0 0
  %2783 = vmatpush1.bf16.msra.mxu0 0
  %2784 = vmatprep.subr.bf16.mxu0 0
  %2785 = vmatpush1.bf16.msra.mxu0 0
  %2786 = vmatprep.subr.bf16.mxu0 0
  %2787 = vmatpush1.bf16.msra.mxu0 0
  %2788 = vmatprep.subr.bf16.mxu0 0
  %2789 = vmatpush1.bf16.msra.mxu0 0
  %2790 = vmatprep.subr.bf16.mxu0 0
  %2791 = vmatpush1.bf16.msra.mxu0 0
  %2792 = vmatprep.subr.bf16.mxu0 0
  %2793 = vmatpush1.bf16.msra.mxu0 0
  %2794 = vmatprep.mubr.bf16.mxu0 0
  %2795 = vmatmul.mubr.bf16.gmra.mrb[0].mxu0 %v2698
  %v2796 = vpop.f32.mrb[0].mxu0
  %v2797 = vadd.f32 0.0, %v2796
  %v2798 = vpop.f32.mrb[0].mxu0
  %v2799 = vpop.f32.mrb[0].mxu0
  %v2800 = vadd.f32 0.0, %v2799
  %v2801 = vpop.f32.mrb[0].mxu0
  %2802 = vmatprep.mubr.bf16.mxu0 0
  %2803 = vmatmul.mubr.bf16.gmra.mrb[0].mxu0 %v2699
  %v2804 = vpop.f32.mrb[0].mxu0
  %v2805 = vadd.f32 0.0, %v2804
  %v2806 = vpop.f32.mrb[0].mxu0
  %v2807 = vpop.f32.mrb[0].mxu0
  %v2808 = vadd.f32 0.0, %v2807
  %v2809 = vpop.f32.mrb[0].mxu0
  %2810 = vmatprep.mubr.bf16.mxu0 0
  %2811 = vmatmul.mubr.bf16.gmra.mrb[0].mxu0 %v2700
  %v2812 = vpop.f32.mrb[0].mxu0
  %v2813 = vadd.f32 0.0, %v2812
  %v2814 = vpop.f32.mrb[0].mxu0
  %v2815 = vpop.f32.mrb[0].mxu0
  %v2816 = vadd.f32 0.0, %v2815
  %v2817 = vpop.f32.mrb[0].mxu0
  %2818 = vmatprep.mubr.bf16.mxu0 0
  %2819 = vmatmul.mubr.bf16.gmra.mrb[0].mxu0 %v2701
  %v2820 = vpop.f32.mrb[0].mxu0
  %v2821 = vadd.f32 0.0, %v2820
  %v2822 = vpop.f32.mrb[0].mxu0
  %v2823 = vpop.f32.mrb[0].mxu0
  %v2824 = vadd.f32 0.0, %v2823
  %v2825 = vpop.f32.mrb[0].mxu0
  %2826 = vmatprep.mubr.bf16.mxu0 0
  %2827 = vmatmul.mubr.bf16.gmra.mrb[0].mxu0 %v2702
  %v2828 = vpop.f32.mrb[0].mxu0
  %v2829 = vadd.f32 0.0, %v2828
  %v2830 = vpop.f32.mrb[0].mxu0
  %v2831 = vpop.f32.mrb[0].mxu0
  %v2832 = vadd.f32 0.0, %v2831
  %v2833 = vpop.f32.mrb[0].mxu0
  %2834 = vmatprep.mubr.bf16.mxu0 0
  %2835 = vmatmul.mubr.bf16.gmra.mrb[0].mxu0 %v2703
  %v2836 = vpop.f32.mrb[0].mxu0
  %v2837 = vadd.f32 0.0, %v2836
  %v2838 = vpop.f32.mrb[0].mxu0
  %v2839 = vpop.f32.mrb[0].mxu0
  %v2840 = vadd.f32 0.0, %v2839
  %v2841 = vpop.f32.mrb[0].mxu0
  %2842 = vmatprep.mubr.bf16.mxu0 0
  %2843 = vmatmul.mubr.bf16.gmra.mrb[0].mxu0 %v2704
  %v2844 = vpop.f32.mrb[0].mxu0
  %v2845 = vadd.f32 0.0, %v2844
  %v2846 = vpop.f32.mrb[0].mxu0
  %v2847 = vpop.f32.mrb[0].mxu0
  %v2848 = vadd.f32 0.0, %v2847
  %v2849 = vpop.f32.mrb[0].mxu0
  %2850 = vmatprep.mubr.bf16.mxu0 0
  %2851 = vmatmul.mubr.bf16.gmra.mrb[0].mxu0 %v2705
  %v2852 = vpop.f32.mrb[0].mxu0
  %v2853 = vadd.f32 0.0, %v2852
  %v2854 = vpop.f32.mrb[0].mxu0
  %v2855 = vpop.f32.mrb[0].mxu0
  %v2856 = vadd.f32 0.0, %v2855
  %v2857 = vpop.f32.mrb[0].mxu0
  %2858 = vdwg.mxu0
  %v2859 = vadd.f32 %v2537, %v2797
  %v2860 = vadd.f32 %v2538, %v2800
  %v2861 = vadd.f32 %v2539, %v2805
  %v2862 = vadd.f32 %v2540, %v2808
  %v2863 = vadd.f32 %v2541, %v2813
  %v2864 = vadd.f32 %v2542, %v2816
  %v2865 = vadd.f32 %v2543, %v2821
  %v2866 = vadd.f32 %v2544, %v2824
  %v2867 = vadd.f32 %v2545, %v2829
  %v2868 = vadd.f32 %v2546, %v2832
  %v2869 = vadd.f32 %v2547, %v2837
  %v2870 = vadd.f32 %v2548, %v2840
  %v2871 = vadd.f32 %v2549, %v2845
  %v2872 = vadd.f32 %v2550, %v2848
  %v2873 = vadd.f32 %v2551, %v2853
  %v2874 = vadd.f32 %v2552, %v2856
  %v2875 = vld [vmem:[%s1844 + $0x4] sm:$0x3]
  %v2876 = vld [vmem:[%s1844 + $0xc] sm:$0x3]
  %v2877 = vld [vmem:[%s1844 + $0x14] sm:$0x3]
  %v2878 = vld [vmem:[%s1844 + $0x1c] sm:$0x3]
  %v2879 = vld [vmem:[%s1844 + $0x24] sm:$0x3]
  %v2880 = vld [vmem:[%s1844 + $0x2c] sm:$0x3]
  %v2881 = vld [vmem:[%s1844 + $0x34] sm:$0x3]
  %v2882 = vld [vmem:[%s1844 + $0x3c] sm:$0x3]
  %v2883 = vld [vmem:[%s1844 + $0x64] sm:$0x3]
  %v2884 = vld [vmem:[%s1844 + $0x6c] sm:$0x3]
  %v2885 = vld [vmem:[%s1844 + $0x74] sm:$0x3]
  %v2886 = vld [vmem:[%s1844 + $0x7c] sm:$0x3]
  %v2887 = vld [vmem:[%s1844 + $0x84] sm:$0x3]
  %v2888 = vld [vmem:[%s1844 + $0x8c] sm:$0x3]
  %v2889 = vld [vmem:[%s1844 + $0x94] sm:$0x3]
  %v2890 = vld [vmem:[%s1844 + $0x9c] sm:$0x3]
  %v2892 = vshrl.u32 %v2553, 16
  %v2894 = vrot.slane %v2892, 5
  %v2895 = vshll.u32 %v2553, 16
  %v2897 = vrot.slane %v2895, 6
  %v2898 = vor.u32 %v2894, %v2897
  %v2899 = vrot.slane %v2898, 4
  %v2901 = vshrl.u32 %v2875, 16
  %v2903 = vrot.slane %v2901, 5
  %v2904 = vshll.u32 %v2875, 16
  %v2906 = vrot.slane %v2904, 6
  %v2907 = vor.u32 %v2903, %v2906
  %v2908 = vsel %vm1020, %v2899, %v2907
  %v2910 = vshrl.u32 %v2554, 16
  %v2912 = vrot.slane %v2910, 5
  %v2913 = vshll.u32 %v2554, 16
  %v2915 = vrot.slane %v2913, 6
  %v2916 = vor.u32 %v2912, %v2915
  %v2917 = vrot.slane %v2916, 4
  %v2919 = vshrl.u32 %v2876, 16
  %v2921 = vrot.slane %v2919, 5
  %v2922 = vshll.u32 %v2876, 16
  %v2924 = vrot.slane %v2922, 6
  %v2925 = vor.u32 %v2921, %v2924
  %v2926 = vsel %vm1020, %v2917, %v2925
  %v2928 = vshrl.u32 %v2555, 16
  %v2930 = vrot.slane %v2928, 5
  %v2931 = vshll.u32 %v2555, 16
  %v2933 = vrot.slane %v2931, 6
  %v2934 = vor.u32 %v2930, %v2933
  %v2935 = vrot.slane %v2934, 4
  %v2937 = vshrl.u32 %v2877, 16
  %v2939 = vrot.slane %v2937, 5
  %v2940 = vshll.u32 %v2877, 16
  %v2942 = vrot.slane %v2940, 6
  %v2943 = vor.u32 %v2939, %v2942
  %v2944 = vsel %vm1020, %v2935, %v2943
  %v2946 = vshrl.u32 %v2556, 16
  %v2948 = vrot.slane %v2946, 5
  %v2949 = vshll.u32 %v2556, 16
  %v2951 = vrot.slane %v2949, 6
  %v2952 = vor.u32 %v2948, %v2951
  %v2953 = vrot.slane %v2952, 4
  %v2955 = vshrl.u32 %v2878, 16
  %v2957 = vrot.slane %v2955, 5
  %v2958 = vshll.u32 %v2878, 16
  %v2960 = vrot.slane %v2958, 6
  %v2961 = vor.u32 %v2957, %v2960
  %v2962 = vsel %vm1020, %v2953, %v2961
  %v2964 = vshrl.u32 %v2557, 16
  %v2966 = vrot.slane %v2964, 5
  %v2967 = vshll.u32 %v2557, 16
  %v2969 = vrot.slane %v2967, 6
  %v2970 = vor.u32 %v2966, %v2969
  %v2971 = vrot.slane %v2970, 4
  %v2973 = vshrl.u32 %v2879, 16
  %v2975 = vrot.slane %v2973, 5
  %v2976 = vshll.u32 %v2879, 16
  %v2978 = vrot.slane %v2976, 6
  %v2979 = vor.u32 %v2975, %v2978
  %v2980 = vsel %vm1020, %v2971, %v2979
  %v2982 = vshrl.u32 %v2558, 16
  %v2984 = vrot.slane %v2982, 5
  %v2985 = vshll.u32 %v2558, 16
  %v2987 = vrot.slane %v2985, 6
  %v2988 = vor.u32 %v2984, %v2987
  %v2989 = vrot.slane %v2988, 4
  %v2991 = vshrl.u32 %v2880, 16
  %v2993 = vrot.slane %v2991, 5
  %v2994 = vshll.u32 %v2880, 16
  %v2996 = vrot.slane %v2994, 6
  %v2997 = vor.u32 %v2993, %v2996
  %v2998 = vsel %vm1020, %v2989, %v2997
  %v3000 = vshrl.u32 %v2559, 16
  %v3002 = vrot.slane %v3000, 5
  %v3003 = vshll.u32 %v2559, 16
  %v3005 = vrot.slane %v3003, 6
  %v3006 = vor.u32 %v3002, %v3005
  %v3007 = vrot.slane %v3006, 4
  %v3009 = vshrl.u32 %v2881, 16
  %v3011 = vrot.slane %v3009, 5
  %v3012 = vshll.u32 %v2881, 16
  %v3014 = vrot.slane %v3012, 6
  %v3015 = vor.u32 %v3011, %v3014
  %v3016 = vsel %vm1020, %v3007, %v3015
  %v3018 = vshrl.u32 %v2560, 16
  %v3020 = vrot.slane %v3018, 5
  %v3021 = vshll.u32 %v2560, 16
  %v3023 = vrot.slane %v3021, 6
  %v3024 = vor.u32 %v3020, %v3023
  %v3025 = vrot.slane %v3024, 4
  %v3027 = vshrl.u32 %v2882, 16
  %v3029 = vrot.slane %v3027, 5
  %v3030 = vshll.u32 %v2882, 16
  %v3032 = vrot.slane %v3030, 6
  %v3033 = vor.u32 %v3029, %v3032
  %v3034 = vsel %vm1020, %v3025, %v3033
  %v3036 = vshrl.u32 %v2561, 16
  %v3038 = vrot.slane %v3036, 5
  %v3039 = vshll.u32 %v2561, 16
  %v3041 = vrot.slane %v3039, 6
  %v3042 = vor.u32 %v3038, %v3041
  %v3043 = vrot.slane %v3042, 4
  %v3045 = vshrl.u32 %v2883, 16
  %v3047 = vrot.slane %v3045, 5
  %v3048 = vshll.u32 %v2883, 16
  %v3050 = vrot.slane %v3048, 6
  %v3051 = vor.u32 %v3047, %v3050
  %v3052 = vsel %vm1020, %v3043, %v3051
  %v3054 = vshrl.u32 %v2562, 16
  %v3056 = vrot.slane %v3054, 5
  %v3057 = vshll.u32 %v2562, 16
  %v3059 = vrot.slane %v3057, 6
  %v3060 = vor.u32 %v3056, %v3059
  %v3061 = vrot.slane %v3060, 4
  %v3063 = vshrl.u32 %v2884, 16
  %v3065 = vrot.slane %v3063, 5
  %v3066 = vshll.u32 %v2884, 16
  %v3068 = vrot.slane %v3066, 6
  %v3069 = vor.u32 %v3065, %v3068
  %v3070 = vsel %vm1020, %v3061, %v3069
  %v3072 = vshrl.u32 %v2563, 16
  %v3074 = vrot.slane %v3072, 5
  %v3075 = vshll.u32 %v2563, 16
  %v3077 = vrot.slane %v3075, 6
  %v3078 = vor.u32 %v3074, %v3077
  %v3079 = vrot.slane %v3078, 4
  %v3081 = vshrl.u32 %v2885, 16
  %v3083 = vrot.slane %v3081, 5
  %v3084 = vshll.u32 %v2885, 16
  %v3086 = vrot.slane %v3084, 6
  %v3087 = vor.u32 %v3083, %v3086
  %v3088 = vsel %vm1020, %v3079, %v3087
  %v3090 = vshrl.u32 %v2564, 16
  %v3092 = vrot.slane %v3090, 5
  %v3093 = vshll.u32 %v2564, 16
  %v3095 = vrot.slane %v3093, 6
  %v3096 = vor.u32 %v3092, %v3095
  %v3097 = vrot.slane %v3096, 4
  %v3099 = vshrl.u32 %v2886, 16
  %v3101 = vrot.slane %v3099, 5
  %v3102 = vshll.u32 %v2886, 16
  %v3104 = vrot.slane %v3102, 6
  %v3105 = vor.u32 %v3101, %v3104
  %v3106 = vsel %vm1020, %v3097, %v3105
  %v3108 = vshrl.u32 %v2565, 16
  %v3110 = vrot.slane %v3108, 5
  %v3111 = vshll.u32 %v2565, 16
  %v3113 = vrot.slane %v3111, 6
  %v3114 = vor.u32 %v3110, %v3113
  %v3115 = vrot.slane %v3114, 4
  %v3117 = vshrl.u32 %v2887, 16
  %v3119 = vrot.slane %v3117, 5
  %v3120 = vshll.u32 %v2887, 16
  %v3122 = vrot.slane %v3120, 6
  %v3123 = vor.u32 %v3119, %v3122
  %v3124 = vsel %vm1020, %v3115, %v3123
  %v3126 = vshrl.u32 %v2566, 16
  %v3128 = vrot.slane %v3126, 5
  %v3129 = vshll.u32 %v2566, 16
  %v3131 = vrot.slane %v3129, 6
  %v3132 = vor.u32 %v3128, %v3131
  %v3133 = vrot.slane %v3132, 4
  %v3135 = vshrl.u32 %v2888, 16
  %v3137 = vrot.slane %v3135, 5
  %v3138 = vshll.u32 %v2888, 16
  %v3140 = vrot.slane %v3138, 6
  %v3141 = vor.u32 %v3137, %v3140
  %v3142 = vsel %vm1020, %v3133, %v3141
  %v3144 = vshrl.u32 %v2567, 16
  %v3146 = vrot.slane %v3144, 5
  %v3147 = vshll.u32 %v2567, 16
  %v3149 = vrot.slane %v3147, 6
  %v3150 = vor.u32 %v3146, %v3149
  %v3151 = vrot.slane %v3150, 4
  %v3153 = vshrl.u32 %v2889, 16
  %v3155 = vrot.slane %v3153, 5
  %v3156 = vshll.u32 %v2889, 16
  %v3158 = vrot.slane %v3156, 6
  %v3159 = vor.u32 %v3155, %v3158
  %v3160 = vsel %vm1020, %v3151, %v3159
  %v3162 = vshrl.u32 %v2568, 16
  %v3164 = vrot.slane %v3162, 5
  %v3165 = vshll.u32 %v2568, 16
  %v3167 = vrot.slane %v3165, 6
  %v3168 = vor.u32 %v3164, %v3167
  %v3169 = vrot.slane %v3168, 4
  %v3171 = vshrl.u32 %v2890, 16
  %v3173 = vrot.slane %v3171, 5
  %v3174 = vshll.u32 %v2890, 16
  %v3176 = vrot.slane %v3174, 6
  %v3177 = vor.u32 %v3173, %v3176
  %v3178 = vsel %vm1020, %v3169, %v3177
  %s3179 = scalar_lea.vmem %s1, 512
  %v3180 = vld [vmem:[%s3179] sm:$0xf]
  %v3181 = vld [vmem:[%s3179 + $0x4] sm:$0xf]
  %v3182 = vld [vmem:[%s3179 + $0x8] sm:$0xf]
  %v3183 = vld [vmem:[%s3179 + $0xc] sm:$0xf]
  %v3184 = vld [vmem:[%s3179 + $0x10] sm:$0xf]
  %v3185 = vld [vmem:[%s3179 + $0x14] sm:$0xf]
  %v3186 = vld [vmem:[%s3179 + $0x18] sm:$0xf]
  %v3187 = vld [vmem:[%s3179 + $0x1c] sm:$0xf]
  %v3188 = vld [vmem:[%s3179 + $0x20] sm:$0xf]
  %v3189 = vld [vmem:[%s3179 + $0x24] sm:$0xf]
  %v3190 = vld [vmem:[%s3179 + $0x28] sm:$0xf]
  %v3191 = vld [vmem:[%s3179 + $0x2c] sm:$0xf]
  %v3192 = vld [vmem:[%s3179 + $0x30] sm:$0xf]
  %v3193 = vld [vmem:[%s3179 + $0x34] sm:$0xf]
  %v3194 = vld [vmem:[%s3179 + $0x38] sm:$0xf]
  %v3195 = vld [vmem:[%s3179 + $0x3c] sm:$0xf]
  %v3196 = vunpack.c.l.b16 %v2908
  %v3197 = vunpack.c.l.b16 %v2926
  %v3198 = vunpack.c.l.b16 %v2944
  %v3199 = vunpack.c.l.b16 %v2962
  %v3200 = vunpack.c.l.b16 %v2980
  %v3201 = vunpack.c.l.b16 %v2998
  %v3202 = vunpack.c.l.b16 %v3016
  %v3203 = vunpack.c.l.b16 %v3034
  %v3204 = vunpack.c.l.b16 %v3052
  %v3205 = vunpack.c.l.b16 %v3070
  %v3206 = vunpack.c.l.b16 %v3088
  %v3207 = vunpack.c.l.b16 %v3106
  %v3208 = vunpack.c.l.b16 %v3124
  %v3209 = vunpack.c.l.b16 %v3142
  %v3210 = vunpack.c.l.b16 %v3160
  %v3211 = vunpack.c.l.b16 %v3178
  %v3212 = vpack.c.b16 %v3197, %v3196
  %v3213 = vpack.c.b16 %v3199, %v3198
  %v3214 = vpack.c.b16 %v3201, %v3200
  %v3215 = vpack.c.b16 %v3203, %v3202
  %v3216 = vpack.c.b16 %v3205, %v3204
  %v3217 = vpack.c.b16 %v3207, %v3206
  %v3218 = vpack.c.b16 %v3209, %v3208
  %v3219 = vpack.c.b16 %v3211, %v3210
  %v3244 = vunpack.c.l.b16 %v3180
  %v3245 = vunpack.c.l.b16 %v3181
  %v3246 = vunpack.c.l.b16 %v3182
  %v3247 = vunpack.c.l.b16 %v3183
  %v3248 = vunpack.c.l.b16 %v3184
  %v3249 = vunpack.c.l.b16 %v3185
  %v3250 = vunpack.c.l.b16 %v3186
  %v3251 = vunpack.c.l.b16 %v3187
  %v3252 = vunpack.c.l.b16 %v3188
  %v3253 = vunpack.c.l.b16 %v3189
  %v3254 = vunpack.c.l.b16 %v3190
  %v3255 = vunpack.c.l.b16 %v3191
  %v3256 = vunpack.c.l.b16 %v3192
  %v3257 = vunpack.c.l.b16 %v3193
  %v3258 = vunpack.c.l.b16 %v3194
  %v3259 = vunpack.c.l.b16 %v3195
  %v3260 = vpack.c.b16 %v3245, %v3244
  %v3261 = vpack.c.b16 %v3247, %v3246
  %v3262 = vpack.c.b16 %v3249, %v3248
  %v3263 = vpack.c.b16 %v3251, %v3250
  %v3264 = vpack.c.b16 %v3253, %v3252
  %v3265 = vpack.c.b16 %v3255, %v3254
  %v3266 = vpack.c.b16 %v3257, %v3256
  %v3267 = vpack.c.b16 %v3259, %v3258
  %3276 = vmatprep.subr.bf16.mxu0 0
  %3277 = vmatpush1.bf16.msra.mxu0 %v3260
  %3278 = vmatprep.subr.bf16.mxu0 0
  %3279 = vmatpush1.bf16.msra.mxu0 %v3261
  %3280 = vmatprep.subr.bf16.mxu0 0
  %3281 = vmatpush1.bf16.msra.mxu0 %v3262
  %3282 = vmatprep.subr.bf16.mxu0 0
  %3283 = vmatpush1.bf16.msra.mxu0 %v3263
  %3284 = vmatprep.subr.bf16.mxu0 0
  %3285 = vmatpush1.bf16.msra.mxu0 %v3264
  %3286 = vmatprep.subr.bf16.mxu0 0
  %3287 = vmatpush1.bf16.msra.mxu0 %v3265
  %3288 = vmatprep.subr.bf16.mxu0 0
  %3289 = vmatpush1.bf16.msra.mxu0 %v3266
  %3290 = vmatprep.subr.bf16.mxu0 0
  %3291 = vmatpush1.bf16.msra.mxu0 %v3267
  %3292 = vmatprep.subr.bf16.mxu0 0
  %3293 = vmatpush1.bf16.msra.mxu0 0
  %3294 = vmatprep.subr.bf16.mxu0 0
  %3295 = vmatpush1.bf16.msra.mxu0 0
  %3296 = vmatprep.subr.bf16.mxu0 0
  %3297 = vmatpush1.bf16.msra.mxu0 0
  %3298 = vmatprep.subr.bf16.mxu0 0
  %3299 = vmatpush1.bf16.msra.mxu0 0
  %3300 = vmatprep.subr.bf16.mxu0 0
  %3301 = vmatpush1.bf16.msra.mxu0 0
  %3302 = vmatprep.subr.bf16.mxu0 0
  %3303 = vmatpush1.bf16.msra.mxu0 0
  %3304 = vmatprep.subr.bf16.mxu0 0
  %3305 = vmatpush1.bf16.msra.mxu0 0
  %3306 = vmatprep.subr.bf16.mxu0 0
  %3307 = vmatpush1.bf16.msra.mxu0 0
  %3308 = vmatprep.mubr.bf16.mxu0 0
  %3309 = vmatmul.mubr.bf16.gmra.mrb[0].mxu0 %v3212
  %v3310 = vpop.f32.mrb[0].mxu0
  %v3311 = vadd.f32 0.0, %v3310
  %v3312 = vpop.f32.mrb[0].mxu0
  %v3313 = vpop.f32.mrb[0].mxu0
  %v3314 = vadd.f32 0.0, %v3313
  %v3315 = vpop.f32.mrb[0].mxu0
  %3316 = vmatprep.mubr.bf16.mxu0 0
  %3317 = vmatmul.mubr.bf16.gmra.mrb[0].mxu0 %v3213
  %v3318 = vpop.f32.mrb[0].mxu0
  %v3319 = vadd.f32 0.0, %v3318
  %v3320 = vpop.f32.mrb[0].mxu0
  %v3321 = vpop.f32.mrb[0].mxu0
  %v3322 = vadd.f32 0.0, %v3321
  %v3323 = vpop.f32.mrb[0].mxu0
  %3324 = vmatprep.mubr.bf16.mxu0 0
  %3325 = vmatmul.mubr.bf16.gmra.mrb[0].mxu0 %v3214
  %v3326 = vpop.f32.mrb[0].mxu0
  %v3327 = vadd.f32 0.0, %v3326
  %v3328 = vpop.f32.mrb[0].mxu0
  %v3329 = vpop.f32.mrb[0].mxu0
  %v3330 = vadd.f32 0.0, %v3329
  %v3331 = vpop.f32.mrb[0].mxu0
  %3332 = vmatprep.mubr.bf16.mxu0 0
  %3333 = vmatmul.mubr.bf16.gmra.mrb[0].mxu0 %v3215
  %v3334 = vpop.f32.mrb[0].mxu0
  %v3335 = vadd.f32 0.0, %v3334
  %v3336 = vpop.f32.mrb[0].mxu0
  %v3337 = vpop.f32.mrb[0].mxu0
  %v3338 = vadd.f32 0.0, %v3337
  %v3339 = vpop.f32.mrb[0].mxu0
  %3340 = vmatprep.mubr.bf16.mxu0 0
  %3341 = vmatmul.mubr.bf16.gmra.mrb[0].mxu0 %v3216
  %v3342 = vpop.f32.mrb[0].mxu0
  %v3343 = vadd.f32 0.0, %v3342
  %v3344 = vpop.f32.mrb[0].mxu0
  %v3345 = vpop.f32.mrb[0].mxu0
  %v3346 = vadd.f32 0.0, %v3345
  %v3347 = vpop.f32.mrb[0].mxu0
  %3348 = vmatprep.mubr.bf16.mxu0 0
  %3349 = vmatmul.mubr.bf16.gmra.mrb[0].mxu0 %v3217
  %v3350 = vpop.f32.mrb[0].mxu0
  %v3351 = vadd.f32 0.0, %v3350
  %v3352 = vpop.f32.mrb[0].mxu0
  %v3353 = vpop.f32.mrb[0].mxu0
  %v3354 = vadd.f32 0.0, %v3353
  %v3355 = vpop.f32.mrb[0].mxu0
  %3356 = vmatprep.mubr.bf16.mxu0 0
  %3357 = vmatmul.mubr.bf16.gmra.mrb[0].mxu0 %v3218
  %v3358 = vpop.f32.mrb[0].mxu0
  %v3359 = vadd.f32 0.0, %v3358
  %v3360 = vpop.f32.mrb[0].mxu0
  %v3361 = vpop.f32.mrb[0].mxu0
  %v3362 = vadd.f32 0.0, %v3361
  %v3363 = vpop.f32.mrb[0].mxu0
  %3364 = vmatprep.mubr.bf16.mxu0 0
  %3365 = vmatmul.mubr.bf16.gmra.mrb[0].mxu0 %v3219
  %v3366 = vpop.f32.mrb[0].mxu0
  %v3367 = vadd.f32 0.0, %v3366
  %v3368 = vpop.f32.mrb[0].mxu0
  %v3369 = vpop.f32.mrb[0].mxu0
  %v3370 = vadd.f32 0.0, %v3369
  %v3371 = vpop.f32.mrb[0].mxu0
  %3372 = vdwg.mxu0
  %v3373 = vadd.f32 %v2859, %v3311
  %v3374 = vadd.f32 %v2860, %v3314
  %v3375 = vadd.f32 %v2861, %v3319
  %v3376 = vadd.f32 %v2862, %v3322
  %v3377 = vadd.f32 %v2863, %v3327
  %v3378 = vadd.f32 %v2864, %v3330
  %v3379 = vadd.f32 %v2865, %v3335
  %v3380 = vadd.f32 %v2866, %v3338
  %v3381 = vadd.f32 %v2867, %v3343
  %v3382 = vadd.f32 %v2868, %v3346
  %v3383 = vadd.f32 %v2869, %v3351
  %v3384 = vadd.f32 %v2870, %v3354
  %v3385 = vadd.f32 %v2871, %v3359
  %v3386 = vadd.f32 %v2872, %v3362
  %v3387 = vadd.f32 %v2873, %v3367
  %v3388 = vadd.f32 %v2874, %v3370
  %v3389 = vld [vmem:[%s1844] sm:$0xc]
  %v3390 = vld [vmem:[%s1844 + $0x8] sm:$0xc]
  %v3391 = vld [vmem:[%s1844 + $0x10] sm:$0xc]
  %v3392 = vld [vmem:[%s1844 + $0x18] sm:$0xc]
  %v3393 = vld [vmem:[%s1844 + $0x20] sm:$0xc]
  %v3394 = vld [vmem:[%s1844 + $0x28] sm:$0xc]
  %v3395 = vld [vmem:[%s1844 + $0x30] sm:$0xc]
  %v3396 = vld [vmem:[%s1844 + $0x38] sm:$0xc]
  %v3397 = vld [vmem:[%s1844 + $0x60] sm:$0xc]
  %v3398 = vld [vmem:[%s1844 + $0x68] sm:$0xc]
  %v3399 = vld [vmem:[%s1844 + $0x70] sm:$0xc]
  %v3400 = vld [vmem:[%s1844 + $0x78] sm:$0xc]
  %v3401 = vld [vmem:[%s1844 + $0x80] sm:$0xc]
  %v3402 = vld [vmem:[%s1844 + $0x88] sm:$0xc]
  %v3403 = vld [vmem:[%s1844 + $0x90] sm:$0xc]
  %v3404 = vld [vmem:[%s1844 + $0x98] sm:$0xc]
  %v3437 = vrot.slane %v3389, 6
  %v3438 = vrot.slane %v3437, 4
  %v3439 = vrot.slane %v2875, 6
  %v3440 = vsel %vm1569, %v3438, %v3439
  %v3441 = vrot.slane %v3390, 6
  %v3442 = vrot.slane %v3441, 4
  %v3443 = vrot.slane %v2876, 6
  %v3444 = vsel %vm1569, %v3442, %v3443
  %v3445 = vrot.slane %v3391, 6
  %v3446 = vrot.slane %v3445, 4
  %v3447 = vrot.slane %v2877, 6
  %v3448 = vsel %vm1569, %v3446, %v3447
  %v3449 = vrot.slane %v3392, 6
  %v3450 = vrot.slane %v3449, 4
  %v3451 = vrot.slane %v2878, 6
  %v3452 = vsel %vm1569, %v3450, %v3451
  %v3453 = vrot.slane %v3393, 6
  %v3454 = vrot.slane %v3453, 4
  %v3455 = vrot.slane %v2879, 6
  %v3456 = vsel %vm1569, %v3454, %v3455
  %v3457 = vrot.slane %v3394, 6
  %v3458 = vrot.slane %v3457, 4
  %v3459 = vrot.slane %v2880, 6
  %v3460 = vsel %vm1569, %v3458, %v3459
  %v3461 = vrot.slane %v3395, 6
  %v3462 = vrot.slane %v3461, 4
  %v3463 = vrot.slane %v2881, 6
  %v3464 = vsel %vm1569, %v3462, %v3463
  %v3465 = vrot.slane %v3396, 6
  %v3466 = vrot.slane %v3465, 4
  %v3467 = vrot.slane %v2882, 6
  %v3468 = vsel %vm1569, %v3466, %v3467
  %v3469 = vrot.slane %v3397, 6
  %v3470 = vrot.slane %v3469, 4
  %v3471 = vrot.slane %v2883, 6
  %v3472 = vsel %vm1569, %v3470, %v3471
  %v3473 = vrot.slane %v3398, 6
  %v3474 = vrot.slane %v3473, 4
  %v3475 = vrot.slane %v2884, 6
  %v3476 = vsel %vm1569, %v3474, %v3475
  %v3477 = vrot.slane %v3399, 6
  %v3478 = vrot.slane %v3477, 4
  %v3479 = vrot.slane %v2885, 6
  %v3480 = vsel %vm1569, %v3478, %v3479
  %v3481 = vrot.slane %v3400, 6
  %v3482 = vrot.slane %v3481, 4
  %v3483 = vrot.slane %v2886, 6
  %v3484 = vsel %vm1569, %v3482, %v3483
  %v3485 = vrot.slane %v3401, 6
  %v3486 = vrot.slane %v3485, 4
  %v3487 = vrot.slane %v2887, 6
  %v3488 = vsel %vm1569, %v3486, %v3487
  %v3489 = vrot.slane %v3402, 6
  %v3490 = vrot.slane %v3489, 4
  %v3491 = vrot.slane %v2888, 6
  %v3492 = vsel %vm1569, %v3490, %v3491
  %v3493 = vrot.slane %v3403, 6
  %v3494 = vrot.slane %v3493, 4
  %v3495 = vrot.slane %v2889, 6
  %v3496 = vsel %vm1569, %v3494, %v3495
  %v3497 = vrot.slane %v3404, 6
  %v3498 = vrot.slane %v3497, 4
  %v3499 = vrot.slane %v2890, 6
  %v3500 = vsel %vm1569, %v3498, %v3499
  %s3501 = scalar_lea.vmem %s1, 576
  %v3502 = vld [vmem:[%s3501] sm:$0xf]
  %v3503 = vld [vmem:[%s3501 + $0x4] sm:$0xf]
  %v3504 = vld [vmem:[%s3501 + $0x8] sm:$0xf]
  %v3505 = vld [vmem:[%s3501 + $0xc] sm:$0xf]
  %v3506 = vld [vmem:[%s3501 + $0x10] sm:$0xf]
  %v3507 = vld [vmem:[%s3501 + $0x14] sm:$0xf]
  %v3508 = vld [vmem:[%s3501 + $0x18] sm:$0xf]
  %v3509 = vld [vmem:[%s3501 + $0x1c] sm:$0xf]
  %v3510 = vld [vmem:[%s3501 + $0x20] sm:$0xf]
  %v3511 = vld [vmem:[%s3501 + $0x24] sm:$0xf]
  %v3512 = vld [vmem:[%s3501 + $0x28] sm:$0xf]
  %v3513 = vld [vmem:[%s3501 + $0x2c] sm:$0xf]
  %v3514 = vld [vmem:[%s3501 + $0x30] sm:$0xf]
  %v3515 = vld [vmem:[%s3501 + $0x34] sm:$0xf]
  %v3516 = vld [vmem:[%s3501 + $0x38] sm:$0xf]
  %v3517 = vld [vmem:[%s3501 + $0x3c] sm:$0xf]
  %v3518 = vunpack.c.l.b16 %v3440
  %v3519 = vunpack.c.l.b16 %v3444
  %v3520 = vunpack.c.l.b16 %v3448
  %v3521 = vunpack.c.l.b16 %v3452
  %v3522 = vunpack.c.l.b16 %v3456
  %v3523 = vunpack.c.l.b16 %v3460
  %v3524 = vunpack.c.l.b16 %v3464
  %v3525 = vunpack.c.l.b16 %v3468
  %v3526 = vunpack.c.l.b16 %v3472
  %v3527 = vunpack.c.l.b16 %v3476
  %v3528 = vunpack.c.l.b16 %v3480
  %v3529 = vunpack.c.l.b16 %v3484
  %v3530 = vunpack.c.l.b16 %v3488
  %v3531 = vunpack.c.l.b16 %v3492
  %v3532 = vunpack.c.l.b16 %v3496
  %v3533 = vunpack.c.l.b16 %v3500
  %v3534 = vpack.c.b16 %v3519, %v3518
  %v3535 = vpack.c.b16 %v3521, %v3520
  %v3536 = vpack.c.b16 %v3523, %v3522
  %v3537 = vpack.c.b16 %v3525, %v3524
  %v3538 = vpack.c.b16 %v3527, %v3526
  %v3539 = vpack.c.b16 %v3529, %v3528
  %v3540 = vpack.c.b16 %v3531, %v3530
  %v3541 = vpack.c.b16 %v3533, %v3532
  %v3566 = vunpack.c.l.b16 %v3502
  %v3567 = vunpack.c.l.b16 %v3503
  %v3568 = vunpack.c.l.b16 %v3504
  %v3569 = vunpack.c.l.b16 %v3505
  %v3570 = vunpack.c.l.b16 %v3506
  %v3571 = vunpack.c.l.b16 %v3507
  %v3572 = vunpack.c.l.b16 %v3508
  %v3573 = vunpack.c.l.b16 %v3509
  %v3574 = vunpack.c.l.b16 %v3510
  %v3575 = vunpack.c.l.b16 %v3511
  %v3576 = vunpack.c.l.b16 %v3512
  %v3577 = vunpack.c.l.b16 %v3513
  %v3578 = vunpack.c.l.b16 %v3514
  %v3579 = vunpack.c.l.b16 %v3515
  %v3580 = vunpack.c.l.b16 %v3516
  %v3581 = vunpack.c.l.b16 %v3517
  %v3582 = vpack.c.b16 %v3567, %v3566
  %v3583 = vpack.c.b16 %v3569, %v3568
  %v3584 = vpack.c.b16 %v3571, %v3570
  %v3585 = vpack.c.b16 %v3573, %v3572
  %v3586 = vpack.c.b16 %v3575, %v3574
  %v3587 = vpack.c.b16 %v3577, %v3576
  %v3588 = vpack.c.b16 %v3579, %v3578
  %v3589 = vpack.c.b16 %v3581, %v3580
  %3598 = vmatprep.subr.bf16.mxu0 0
  %3599 = vmatpush1.bf16.msra.mxu0 %v3582
  %3600 = vmatprep.subr.bf16.mxu0 0
  %3601 = vmatpush1.bf16.msra.mxu0 %v3583
  %3602 = vmatprep.subr.bf16.mxu0 0
  %3603 = vmatpush1.bf16.msra.mxu0 %v3584
  %3604 = vmatprep.subr.bf16.mxu0 0
  %3605 = vmatpush1.bf16.msra.mxu0 %v3585
  %3606 = vmatprep.subr.bf16.mxu0 0
  %3607 = vmatpush1.bf16.msra.mxu0 %v3586
  %3608 = vmatprep.subr.bf16.mxu0 0
  %3609 = vmatpush1.bf16.msra.mxu0 %v3587
  %3610 = vmatprep.subr.bf16.mxu0 0
  %3611 = vmatpush1.bf16.msra.mxu0 %v3588
  %3612 = vmatprep.subr.bf16.mxu0 0
  %3613 = vmatpush1.bf16.msra.mxu0 %v3589
  %3614 = vmatprep.subr.bf16.mxu0 0
  %3615 = vmatpush1.bf16.msra.mxu0 0
  %3616 = vmatprep.subr.bf16.mxu0 0
  %3617 = vmatpush1.bf16.msra.mxu0 0
  %3618 = vmatprep.subr.bf16.mxu0 0
  %3619 = vmatpush1.bf16.msra.mxu0 0
  %3620 = vmatprep.subr.bf16.mxu0 0
  %3621 = vmatpush1.bf16.msra.mxu0 0
  %3622 = vmatprep.subr.bf16.mxu0 0
  %3623 = vmatpush1.bf16.msra.mxu0 0
  %3624 = vmatprep.subr.bf16.mxu0 0
  %3625 = vmatpush1.bf16.msra.mxu0 0
  %3626 = vmatprep.subr.bf16.mxu0 0
  %3627 = vmatpush1.bf16.msra.mxu0 0
  %3628 = vmatprep.subr.bf16.mxu0 0
  %3629 = vmatpush1.bf16.msra.mxu0 0
  %3630 = vmatprep.mubr.bf16.mxu0 0
  %3631 = vmatmul.mubr.bf16.gmra.mrb[0].mxu0 %v3534
  %v3632 = vpop.f32.mrb[0].mxu0
  %v3633 = vadd.f32 0.0, %v3632
  %v3634 = vpop.f32.mrb[0].mxu0
  %v3635 = vpop.f32.mrb[0].mxu0
  %v3636 = vadd.f32 0.0, %v3635
  %v3637 = vpop.f32.mrb[0].mxu0
  %3638 = vmatprep.mubr.bf16.mxu0 0
  %3639 = vmatmul.mubr.bf16.gmra.mrb[0].mxu0 %v3535
  %v3640 = vpop.f32.mrb[0].mxu0
  %v3641 = vadd.f32 0.0, %v3640
  %v3642 = vpop.f32.mrb[0].mxu0
  %v3643 = vpop.f32.mrb[0].mxu0
  %v3644 = vadd.f32 0.0, %v3643
  %v3645 = vpop.f32.mrb[0].mxu0
  %3646 = vmatprep.mubr.bf16.mxu0 0
  %3647 = vmatmul.mubr.bf16.gmra.mrb[0].mxu0 %v3536
  %v3648 = vpop.f32.mrb[0].mxu0
  %v3649 = vadd.f32 0.0, %v3648
  %v3650 = vpop.f32.mrb[0].mxu0
  %v3651 = vpop.f32.mrb[0].mxu0
  %v3652 = vadd.f32 0.0, %v3651
  %v3653 = vpop.f32.mrb[0].mxu0
  %3654 = vmatprep.mubr.bf16.mxu0 0
  %3655 = vmatmul.mubr.bf16.gmra.mrb[0].mxu0 %v3537
  %v3656 = vpop.f32.mrb[0].mxu0
  %v3657 = vadd.f32 0.0, %v3656
  %v3658 = vpop.f32.mrb[0].mxu0
  %v3659 = vpop.f32.mrb[0].mxu0
  %v3660 = vadd.f32 0.0, %v3659
  %v3661 = vpop.f32.mrb[0].mxu0
  %3662 = vmatprep.mubr.bf16.mxu0 0
  %3663 = vmatmul.mubr.bf16.gmra.mrb[0].mxu0 %v3538
  %v3664 = vpop.f32.mrb[0].mxu0
  %v3665 = vadd.f32 0.0, %v3664
  %v3666 = vpop.f32.mrb[0].mxu0
  %v3667 = vpop.f32.mrb[0].mxu0
  %v3668 = vadd.f32 0.0, %v3667
  %v3669 = vpop.f32.mrb[0].mxu0
  %3670 = vmatprep.mubr.bf16.mxu0 0
  %3671 = vmatmul.mubr.bf16.gmra.mrb[0].mxu0 %v3539
  %v3672 = vpop.f32.mrb[0].mxu0
  %v3673 = vadd.f32 0.0, %v3672
  %v3674 = vpop.f32.mrb[0].mxu0
  %v3675 = vpop.f32.mrb[0].mxu0
  %v3676 = vadd.f32 0.0, %v3675
  %v3677 = vpop.f32.mrb[0].mxu0
  %3678 = vmatprep.mubr.bf16.mxu0 0
  %3679 = vmatmul.mubr.bf16.gmra.mrb[0].mxu0 %v3540
  %v3680 = vpop.f32.mrb[0].mxu0
  %v3681 = vadd.f32 0.0, %v3680
  %v3682 = vpop.f32.mrb[0].mxu0
  %v3683 = vpop.f32.mrb[0].mxu0
  %v3684 = vadd.f32 0.0, %v3683
  %v3685 = vpop.f32.mrb[0].mxu0
  %3686 = vmatprep.mubr.bf16.mxu0 0
  %3687 = vmatmul.mubr.bf16.gmra.mrb[0].mxu0 %v3541
  %v3688 = vpop.f32.mrb[0].mxu0
  %v3689 = vadd.f32 0.0, %v3688
  %v3690 = vpop.f32.mrb[0].mxu0
  %v3691 = vpop.f32.mrb[0].mxu0
  %v3692 = vadd.f32 0.0, %v3691
  %v3693 = vpop.f32.mrb[0].mxu0
  %3694 = vdwg.mxu0
  %v3695 = vadd.f32 %v3373, %v3633
  %v3696 = vadd.f32 %v3374, %v3636
  %v3697 = vadd.f32 %v3375, %v3641
  %v3698 = vadd.f32 %v3376, %v3644
  %v3699 = vadd.f32 %v3377, %v3649
  %v3700 = vadd.f32 %v3378, %v3652
  %v3701 = vadd.f32 %v3379, %v3657
  %v3702 = vadd.f32 %v3380, %v3660
  %v3703 = vadd.f32 %v3381, %v3665
  %v3704 = vadd.f32 %v3382, %v3668
  %v3705 = vadd.f32 %v3383, %v3673
  %v3706 = vadd.f32 %v3384, %v3676
  %v3707 = vadd.f32 %v3385, %v3681
  %v3708 = vadd.f32 %v3386, %v3684
  %v3709 = vadd.f32 %v3387, %v3689
  %v3710 = vadd.f32 %v3388, %v3692
  %s3711 = scalar_lea.vmem %s0, 16
  %v3712 = vld [vmem:[%s3711] sm:$0xf]
  %v3713 = vld [vmem:[%s3711 + $0x8] sm:$0xf]
  %v3714 = vld [vmem:[%s3711 + $0x10] sm:$0xf]
  %v3715 = vld [vmem:[%s3711 + $0x18] sm:$0xf]
  %v3716 = vld [vmem:[%s3711 + $0x20] sm:$0xf]
  %v3717 = vld [vmem:[%s3711 + $0x28] sm:$0xf]
  %v3718 = vld [vmem:[%s3711 + $0x30] sm:$0xf]
  %v3719 = vld [vmem:[%s3711 + $0x38] sm:$0xf]
  %v3720 = vld [vmem:[%s3711 + $0x60] sm:$0xf]
  %v3721 = vld [vmem:[%s3711 + $0x68] sm:$0xf]
  %v3722 = vld [vmem:[%s3711 + $0x70] sm:$0xf]
  %v3723 = vld [vmem:[%s3711 + $0x78] sm:$0xf]
  %v3724 = vld [vmem:[%s3711 + $0x80] sm:$0xf]
  %v3725 = vld [vmem:[%s3711 + $0x88] sm:$0xf]
  %v3726 = vld [vmem:[%s3711 + $0x90] sm:$0xf]
  %v3727 = vld [vmem:[%s3711 + $0x98] sm:$0xf]
  %s3728 = scalar_lea.vmem %s1, 640
  %v3729 = vld [vmem:[%s3728] sm:$0xf]
  %v3730 = vld [vmem:[%s3728 + $0x4] sm:$0xf]
  %v3731 = vld [vmem:[%s3728 + $0x8] sm:$0xf]
  %v3732 = vld [vmem:[%s3728 + $0xc] sm:$0xf]
  %v3733 = vld [vmem:[%s3728 + $0x10] sm:$0xf]
  %v3734 = vld [vmem:[%s3728 + $0x14] sm:$0xf]
  %v3735 = vld [vmem:[%s3728 + $0x18] sm:$0xf]
  %v3736 = vld [vmem:[%s3728 + $0x1c] sm:$0xf]
  %v3737 = vld [vmem:[%s3728 + $0x20] sm:$0xf]
  %v3738 = vld [vmem:[%s3728 + $0x24] sm:$0xf]
  %v3739 = vld [vmem:[%s3728 + $0x28] sm:$0xf]
  %v3740 = vld [vmem:[%s3728 + $0x2c] sm:$0xf]
  %v3741 = vld [vmem:[%s3728 + $0x30] sm:$0xf]
  %v3742 = vld [vmem:[%s3728 + $0x34] sm:$0xf]
  %v3743 = vld [vmem:[%s3728 + $0x38] sm:$0xf]
  %v3744 = vld [vmem:[%s3728 + $0x3c] sm:$0xf]
  %v3761 = vunpack.c.l.b16 %v3712
  %v3762 = vunpack.c.l.b16 %v3713
  %v3763 = vunpack.c.l.b16 %v3714
  %v3764 = vunpack.c.l.b16 %v3715
  %v3765 = vunpack.c.l.b16 %v3716
  %v3766 = vunpack.c.l.b16 %v3717
  %v3767 = vunpack.c.l.b16 %v3718
  %v3768 = vunpack.c.l.b16 %v3719
  %v3769 = vunpack.c.l.b16 %v3720
  %v3770 = vunpack.c.l.b16 %v3721
  %v3771 = vunpack.c.l.b16 %v3722
  %v3772 = vunpack.c.l.b16 %v3723
  %v3773 = vunpack.c.l.b16 %v3724
  %v3774 = vunpack.c.l.b16 %v3725
  %v3775 = vunpack.c.l.b16 %v3726
  %v3776 = vunpack.c.l.b16 %v3727
  %v3777 = vpack.c.b16 %v3762, %v3761
  %v3778 = vpack.c.b16 %v3764, %v3763
  %v3779 = vpack.c.b16 %v3766, %v3765
  %v3780 = vpack.c.b16 %v3768, %v3767
  %v3781 = vpack.c.b16 %v3770, %v3769
  %v3782 = vpack.c.b16 %v3772, %v3771
  %v3783 = vpack.c.b16 %v3774, %v3773
  %v3784 = vpack.c.b16 %v3776, %v3775
  %v3809 = vunpack.c.l.b16 %v3729
  %v3810 = vunpack.c.l.b16 %v3730
  %v3811 = vunpack.c.l.b16 %v3731
  %v3812 = vunpack.c.l.b16 %v3732
  %v3813 = vunpack.c.l.b16 %v3733
  %v3814 = vunpack.c.l.b16 %v3734
  %v3815 = vunpack.c.l.b16 %v3735
  %v3816 = vunpack.c.l.b16 %v3736
  %v3817 = vunpack.c.l.b16 %v3737
  %v3818 = vunpack.c.l.b16 %v3738
  %v3819 = vunpack.c.l.b16 %v3739
  %v3820 = vunpack.c.l.b16 %v3740
  %v3821 = vunpack.c.l.b16 %v3741
  %v3822 = vunpack.c.l.b16 %v3742
  %v3823 = vunpack.c.l.b16 %v3743
  %v3824 = vunpack.c.l.b16 %v3744
  %v3825 = vpack.c.b16 %v3810, %v3809
  %v3826 = vpack.c.b16 %v3812, %v3811
  %v3827 = vpack.c.b16 %v3814, %v3813
  %v3828 = vpack.c.b16 %v3816, %v3815
  %v3829 = vpack.c.b16 %v3818, %v3817
  %v3830 = vpack.c.b16 %v3820, %v3819
  %v3831 = vpack.c.b16 %v3822, %v3821
  %v3832 = vpack.c.b16 %v3824, %v3823
  %3841 = vmatprep.subr.bf16.mxu0 0
  %3842 = vmatpush1.bf16.msra.mxu0 %v3825
  %3843 = vmatprep.subr.bf16.mxu0 0
  %3844 = vmatpush1.bf16.msra.mxu0 %v3826
  %3845 = vmatprep.subr.bf16.mxu0 0
  %3846 = vmatpush1.bf16.msra.mxu0 %v3827
  %3847 = vmatprep.subr.bf16.mxu0 0
  %3848 = vmatpush1.bf16.msra.mxu0 %v3828
  %3849 = vmatprep.subr.bf16.mxu0 0
  %3850 = vmatpush1.bf16.msra.mxu0 %v3829
  %3851 = vmatprep.subr.bf16.mxu0 0
  %3852 = vmatpush1.bf16.msra.mxu0 %v3830
  %3853 = vmatprep.subr.bf16.mxu0 0
  %3854 = vmatpush1.bf16.msra.mxu0 %v3831
  %3855 = vmatprep.subr.bf16.mxu0 0
  %3856 = vmatpush1.bf16.msra.mxu0 %v3832
  %3857 = vmatprep.subr.bf16.mxu0 0
  %3858 = vmatpush1.bf16.msra.mxu0 0
  %3859 = vmatprep.subr.bf16.mxu0 0
  %3860 = vmatpush1.bf16.msra.mxu0 0
  %3861 = vmatprep.subr.bf16.mxu0 0
  %3862 = vmatpush1.bf16.msra.mxu0 0
  %3863 = vmatprep.subr.bf16.mxu0 0
  %3864 = vmatpush1.bf16.msra.mxu0 0
  %3865 = vmatprep.subr.bf16.mxu0 0
  %3866 = vmatpush1.bf16.msra.mxu0 0
  %3867 = vmatprep.subr.bf16.mxu0 0
  %3868 = vmatpush1.bf16.msra.mxu0 0
  %3869 = vmatprep.subr.bf16.mxu0 0
  %3870 = vmatpush1.bf16.msra.mxu0 0
  %3871 = vmatprep.subr.bf16.mxu0 0
  %3872 = vmatpush1.bf16.msra.mxu0 0
  %3873 = vmatprep.mubr.bf16.mxu0 0
  %3874 = vmatmul.mubr.bf16.gmra.mrb[0].mxu0 %v3777
  %v3875 = vpop.f32.mrb[0].mxu0
  %v3876 = vadd.f32 0.0, %v3875
  %v3877 = vpop.f32.mrb[0].mxu0
  %v3878 = vpop.f32.mrb[0].mxu0
  %v3879 = vadd.f32 0.0, %v3878
  %v3880 = vpop.f32.mrb[0].mxu0
  %3881 = vmatprep.mubr.bf16.mxu0 0
  %3882 = vmatmul.mubr.bf16.gmra.mrb[0].mxu0 %v3778
  %v3883 = vpop.f32.mrb[0].mxu0
  %v3884 = vadd.f32 0.0, %v3883
  %v3885 = vpop.f32.mrb[0].mxu0
  %v3886 = vpop.f32.mrb[0].mxu0
  %v3887 = vadd.f32 0.0, %v3886
  %v3888 = vpop.f32.mrb[0].mxu0
  %3889 = vmatprep.mubr.bf16.mxu0 0
  %3890 = vmatmul.mubr.bf16.gmra.mrb[0].mxu0 %v3779
  %v3891 = vpop.f32.mrb[0].mxu0
  %v3892 = vadd.f32 0.0, %v3891
  %v3893 = vpop.f32.mrb[0].mxu0
  %v3894 = vpop.f32.mrb[0].mxu0
  %v3895 = vadd.f32 0.0, %v3894
  %v3896 = vpop.f32.mrb[0].mxu0
  %3897 = vmatprep.mubr.bf16.mxu0 0
  %3898 = vmatmul.mubr.bf16.gmra.mrb[0].mxu0 %v3780
  %v3899 = vpop.f32.mrb[0].mxu0
  %v3900 = vadd.f32 0.0, %v3899
  %v3901 = vpop.f32.mrb[0].mxu0
  %v3902 = vpop.f32.mrb[0].mxu0
  %v3903 = vadd.f32 0.0, %v3902
  %v3904 = vpop.f32.mrb[0].mxu0
  %3905 = vmatprep.mubr.bf16.mxu0 0
  %3906 = vmatmul.mubr.bf16.gmra.mrb[0].mxu0 %v3781
  %v3907 = vpop.f32.mrb[0].mxu0
  %v3908 = vadd.f32 0.0, %v3907
  %v3909 = vpop.f32.mrb[0].mxu0
  %v3910 = vpop.f32.mrb[0].mxu0
  %v3911 = vadd.f32 0.0, %v3910
  %v3912 = vpop.f32.mrb[0].mxu0
  %3913 = vmatprep.mubr.bf16.mxu0 0
  %3914 = vmatmul.mubr.bf16.gmra.mrb[0].mxu0 %v3782
  %v3915 = vpop.f32.mrb[0].mxu0
  %v3916 = vadd.f32 0.0, %v3915
  %v3917 = vpop.f32.mrb[0].mxu0
  %v3918 = vpop.f32.mrb[0].mxu0
  %v3919 = vadd.f32 0.0, %v3918
  %v3920 = vpop.f32.mrb[0].mxu0
  %3921 = vmatprep.mubr.bf16.mxu0 0
  %3922 = vmatmul.mubr.bf16.gmra.mrb[0].mxu0 %v3783
  %v3923 = vpop.f32.mrb[0].mxu0
  %v3924 = vadd.f32 0.0, %v3923
  %v3925 = vpop.f32.mrb[0].mxu0
  %v3926 = vpop.f32.mrb[0].mxu0
  %v3927 = vadd.f32 0.0, %v3926
  %v3928 = vpop.f32.mrb[0].mxu0
  %3929 = vmatprep.mubr.bf16.mxu0 0
  %3930 = vmatmul.mubr.bf16.gmra.mrb[0].mxu0 %v3784
  %v3931 = vpop.f32.mrb[0].mxu0
  %v3932 = vadd.f32 0.0, %v3931
  %v3933 = vpop.f32.mrb[0].mxu0
  %v3934 = vpop.f32.mrb[0].mxu0
  %v3935 = vadd.f32 0.0, %v3934
  %v3936 = vpop.f32.mrb[0].mxu0
  %3937 = vdwg.mxu0
  %v3938 = vadd.f32 %v3695, %v3876
  %v3939 = vadd.f32 %v3696, %v3879
  %v3940 = vadd.f32 %v3697, %v3884
  %v3941 = vadd.f32 %v3698, %v3887
  %v3942 = vadd.f32 %v3699, %v3892
  %v3943 = vadd.f32 %v3700, %v3895
  %v3944 = vadd.f32 %v3701, %v3900
  %v3945 = vadd.f32 %v3702, %v3903
  %v3946 = vadd.f32 %v3703, %v3908
  %v3947 = vadd.f32 %v3704, %v3911
  %v3948 = vadd.f32 %v3705, %v3916
  %v3949 = vadd.f32 %v3706, %v3919
  %v3950 = vadd.f32 %v3707, %v3924
  %v3951 = vadd.f32 %v3708, %v3927
  %v3952 = vadd.f32 %v3709, %v3932
  %v3953 = vadd.f32 %v3710, %v3935
  %v3954 = vld [vmem:[%s3711] sm:$0xf]
  %v3955 = vld [vmem:[%s3711 + $0x4] sm:$0x1]
  %v3956 = vld [vmem:[%s3711 + $0x8] sm:$0xf]
  %v3957 = vld [vmem:[%s3711 + $0xc] sm:$0x1]
  %v3958 = vld [vmem:[%s3711 + $0x10] sm:$0xf]
  %v3959 = vld [vmem:[%s3711 + $0x14] sm:$0x1]
  %v3960 = vld [vmem:[%s3711 + $0x18] sm:$0xf]
  %v3961 = vld [vmem:[%s3711 + $0x1c] sm:$0x1]
  %v3962 = vld [vmem:[%s3711 + $0x20] sm:$0xf]
  %v3963 = vld [vmem:[%s3711 + $0x24] sm:$0x1]
  %v3964 = vld [vmem:[%s3711 + $0x28] sm:$0xf]
  %v3965 = vld [vmem:[%s3711 + $0x2c] sm:$0x1]
  %v3966 = vld [vmem:[%s3711 + $0x30] sm:$0xf]
  %v3967 = vld [vmem:[%s3711 + $0x34] sm:$0x1]
  %v3968 = vld [vmem:[%s3711 + $0x38] sm:$0xf]
  %v3969 = vld [vmem:[%s3711 + $0x3c] sm:$0x1]
  %v3970 = vld [vmem:[%s3711 + $0x60] sm:$0xf]
  %v3971 = vld [vmem:[%s3711 + $0x64] sm:$0x1]
  %v3972 = vld [vmem:[%s3711 + $0x68] sm:$0xf]
  %v3973 = vld [vmem:[%s3711 + $0x6c] sm:$0x1]
  %v3974 = vld [vmem:[%s3711 + $0x70] sm:$0xf]
  %v3975 = vld [vmem:[%s3711 + $0x74] sm:$0x1]
  %v3976 = vld [vmem:[%s3711 + $0x78] sm:$0xf]
  %v3977 = vld [vmem:[%s3711 + $0x7c] sm:$0x1]
  %v3978 = vld [vmem:[%s3711 + $0x80] sm:$0xf]
  %v3979 = vld [vmem:[%s3711 + $0x84] sm:$0x1]
  %v3980 = vld [vmem:[%s3711 + $0x88] sm:$0xf]
  %v3981 = vld [vmem:[%s3711 + $0x8c] sm:$0x1]
  %v3982 = vld [vmem:[%s3711 + $0x90] sm:$0xf]
  %v3983 = vld [vmem:[%s3711 + $0x94] sm:$0x1]
  %v3984 = vld [vmem:[%s3711 + $0x98] sm:$0xf]
  %v3985 = vld [vmem:[%s3711 + $0x9c] sm:$0x1]
  %v3987 = vshrl.u32 %v3954, 16
  %v3989 = vrot.slane %v3987, 4
  %v3990 = vshll.u32 %v3954, 16
  %v3992 = vrot.slane %v3990, 5
  %v3993 = vor.u32 %v3989, %v3992
  %v3994 = vrot.slane %v3993, 4
  %v3996 = vshll.u32 %v3955, 16
  %v3998 = vrot.slane %v3996, 5
  %v3999 = vsel %vm65, %v3994, %v3998
  %v4001 = vshrl.u32 %v3956, 16
  %v4003 = vrot.slane %v4001, 4
  %v4004 = vshll.u32 %v3956, 16
  %v4006 = vrot.slane %v4004, 5
  %v4007 = vor.u32 %v4003, %v4006
  %v4008 = vrot.slane %v4007, 4
  %v4010 = vshll.u32 %v3957, 16
  %v4012 = vrot.slane %v4010, 5
  %v4013 = vsel %vm65, %v4008, %v4012
  %v4015 = vshrl.u32 %v3958, 16
  %v4017 = vrot.slane %v4015, 4
  %v4018 = vshll.u32 %v3958, 16
  %v4020 = vrot.slane %v4018, 5
  %v4021 = vor.u32 %v4017, %v4020
  %v4022 = vrot.slane %v4021, 4
  %v4024 = vshll.u32 %v3959, 16
  %v4026 = vrot.slane %v4024, 5
  %v4027 = vsel %vm65, %v4022, %v4026
  %v4029 = vshrl.u32 %v3960, 16
  %v4031 = vrot.slane %v4029, 4
  %v4032 = vshll.u32 %v3960, 16
  %v4034 = vrot.slane %v4032, 5
  %v4035 = vor.u32 %v4031, %v4034
  %v4036 = vrot.slane %v4035, 4
  %v4038 = vshll.u32 %v3961, 16
  %v4040 = vrot.slane %v4038, 5
  %v4041 = vsel %vm65, %v4036, %v4040
  %v4043 = vshrl.u32 %v3962, 16
  %v4045 = vrot.slane %v4043, 4
  %v4046 = vshll.u32 %v3962, 16
  %v4048 = vrot.slane %v4046, 5
  %v4049 = vor.u32 %v4045, %v4048
  %v4050 = vrot.slane %v4049, 4
  %v4052 = vshll.u32 %v3963, 16
  %v4054 = vrot.slane %v4052, 5
  %v4055 = vsel %vm65, %v4050, %v4054
  %v4057 = vshrl.u32 %v3964, 16
  %v4059 = vrot.slane %v4057, 4
  %v4060 = vshll.u32 %v3964, 16
  %v4062 = vrot.slane %v4060, 5
  %v4063 = vor.u32 %v4059, %v4062
  %v4064 = vrot.slane %v4063, 4
  %v4066 = vshll.u32 %v3965, 16
  %v4068 = vrot.slane %v4066, 5
  %v4069 = vsel %vm65, %v4064, %v4068
  %v4071 = vshrl.u32 %v3966, 16
  %v4073 = vrot.slane %v4071, 4
  %v4074 = vshll.u32 %v3966, 16
  %v4076 = vrot.slane %v4074, 5
  %v4077 = vor.u32 %v4073, %v4076
  %v4078 = vrot.slane %v4077, 4
  %v4080 = vshll.u32 %v3967, 16
  %v4082 = vrot.slane %v4080, 5
  %v4083 = vsel %vm65, %v4078, %v4082
  %v4085 = vshrl.u32 %v3968, 16
  %v4087 = vrot.slane %v4085, 4
  %v4088 = vshll.u32 %v3968, 16
  %v4090 = vrot.slane %v4088, 5
  %v4091 = vor.u32 %v4087, %v4090
  %v4092 = vrot.slane %v4091, 4
  %v4094 = vshll.u32 %v3969, 16
  %v4096 = vrot.slane %v4094, 5
  %v4097 = vsel %vm65, %v4092, %v4096
  %v4099 = vshrl.u32 %v3970, 16
  %v4101 = vrot.slane %v4099, 4
  %v4102 = vshll.u32 %v3970, 16
  %v4104 = vrot.slane %v4102, 5
  %v4105 = vor.u32 %v4101, %v4104
  %v4106 = vrot.slane %v4105, 4
  %v4108 = vshll.u32 %v3971, 16
  %v4110 = vrot.slane %v4108, 5
  %v4111 = vsel %vm65, %v4106, %v4110
  %v4113 = vshrl.u32 %v3972, 16
  %v4115 = vrot.slane %v4113, 4
  %v4116 = vshll.u32 %v3972, 16
  %v4118 = vrot.slane %v4116, 5
  %v4119 = vor.u32 %v4115, %v4118
  %v4120 = vrot.slane %v4119, 4
  %v4122 = vshll.u32 %v3973, 16
  %v4124 = vrot.slane %v4122, 5
  %v4125 = vsel %vm65, %v4120, %v4124
  %v4127 = vshrl.u32 %v3974, 16
  %v4129 = vrot.slane %v4127, 4
  %v4130 = vshll.u32 %v3974, 16
  %v4132 = vrot.slane %v4130, 5
  %v4133 = vor.u32 %v4129, %v4132
  %v4134 = vrot.slane %v4133, 4
  %v4136 = vshll.u32 %v3975, 16
  %v4138 = vrot.slane %v4136, 5
  %v4139 = vsel %vm65, %v4134, %v4138
  %v4141 = vshrl.u32 %v3976, 16
  %v4143 = vrot.slane %v4141, 4
  %v4144 = vshll.u32 %v3976, 16
  %v4146 = vrot.slane %v4144, 5
  %v4147 = vor.u32 %v4143, %v4146
  %v4148 = vrot.slane %v4147, 4
  %v4150 = vshll.u32 %v3977, 16
  %v4152 = vrot.slane %v4150, 5
  %v4153 = vsel %vm65, %v4148, %v4152
  %v4155 = vshrl.u32 %v3978, 16
  %v4157 = vrot.slane %v4155, 4
  %v4158 = vshll.u32 %v3978, 16
  %v4160 = vrot.slane %v4158, 5
  %v4161 = vor.u32 %v4157, %v4160
  %v4162 = vrot.slane %v4161, 4
  %v4164 = vshll.u32 %v3979, 16
  %v4166 = vrot.slane %v4164, 5
  %v4167 = vsel %vm65, %v4162, %v4166
  %v4169 = vshrl.u32 %v3980, 16
  %v4171 = vrot.slane %v4169, 4
  %v4172 = vshll.u32 %v3980, 16
  %v4174 = vrot.slane %v4172, 5
  %v4175 = vor.u32 %v4171, %v4174
  %v4176 = vrot.slane %v4175, 4
  %v4178 = vshll.u32 %v3981, 16
  %v4180 = vrot.slane %v4178, 5
  %v4181 = vsel %vm65, %v4176, %v4180
  %v4183 = vshrl.u32 %v3982, 16
  %v4185 = vrot.slane %v4183, 4
  %v4186 = vshll.u32 %v3982, 16
  %v4188 = vrot.slane %v4186, 5
  %v4189 = vor.u32 %v4185, %v4188
  %v4190 = vrot.slane %v4189, 4
  %v4192 = vshll.u32 %v3983, 16
  %v4194 = vrot.slane %v4192, 5
  %v4195 = vsel %vm65, %v4190, %v4194
  %v4197 = vshrl.u32 %v3984, 16
  %v4199 = vrot.slane %v4197, 4
  %v4200 = vshll.u32 %v3984, 16
  %v4202 = vrot.slane %v4200, 5
  %v4203 = vor.u32 %v4199, %v4202
  %v4204 = vrot.slane %v4203, 4
  %v4206 = vshll.u32 %v3985, 16
  %v4208 = vrot.slane %v4206, 5
  %v4209 = vsel %vm65, %v4204, %v4208
  %s4210 = scalar_lea.vmem %s1, 704
  %v4211 = vld [vmem:[%s4210] sm:$0xf]
  %v4212 = vld [vmem:[%s4210 + $0x4] sm:$0xf]
  %v4213 = vld [vmem:[%s4210 + $0x8] sm:$0xf]
  %v4214 = vld [vmem:[%s4210 + $0xc] sm:$0xf]
  %v4215 = vld [vmem:[%s4210 + $0x10] sm:$0xf]
  %v4216 = vld [vmem:[%s4210 + $0x14] sm:$0xf]
  %v4217 = vld [vmem:[%s4210 + $0x18] sm:$0xf]
  %v4218 = vld [vmem:[%s4210 + $0x1c] sm:$0xf]
  %v4219 = vld [vmem:[%s4210 + $0x20] sm:$0xf]
  %v4220 = vld [vmem:[%s4210 + $0x24] sm:$0xf]
  %v4221 = vld [vmem:[%s4210 + $0x28] sm:$0xf]
  %v4222 = vld [vmem:[%s4210 + $0x2c] sm:$0xf]
  %v4223 = vld [vmem:[%s4210 + $0x30] sm:$0xf]
  %v4224 = vld [vmem:[%s4210 + $0x34] sm:$0xf]
  %v4225 = vld [vmem:[%s4210 + $0x38] sm:$0xf]
  %v4226 = vld [vmem:[%s4210 + $0x3c] sm:$0xf]
  %v4227 = vunpack.c.l.b16 %v3999
  %v4228 = vunpack.c.l.b16 %v4013
  %v4229 = vunpack.c.l.b16 %v4027
  %v4230 = vunpack.c.l.b16 %v4041
  %v4231 = vunpack.c.l.b16 %v4055
  %v4232 = vunpack.c.l.b16 %v4069
  %v4233 = vunpack.c.l.b16 %v4083
  %v4234 = vunpack.c.l.b16 %v4097
  %v4235 = vunpack.c.l.b16 %v4111
  %v4236 = vunpack.c.l.b16 %v4125
  %v4237 = vunpack.c.l.b16 %v4139
  %v4238 = vunpack.c.l.b16 %v4153
  %v4239 = vunpack.c.l.b16 %v4167
  %v4240 = vunpack.c.l.b16 %v4181
  %v4241 = vunpack.c.l.b16 %v4195
  %v4242 = vunpack.c.l.b16 %v4209
  %v4243 = vpack.c.b16 %v4228, %v4227
  %v4244 = vpack.c.b16 %v4230, %v4229
  %v4245 = vpack.c.b16 %v4232, %v4231
  %v4246 = vpack.c.b16 %v4234, %v4233
  %v4247 = vpack.c.b16 %v4236, %v4235
  %v4248 = vpack.c.b16 %v4238, %v4237
  %v4249 = vpack.c.b16 %v4240, %v4239
  %v4250 = vpack.c.b16 %v4242, %v4241
  %v4275 = vunpack.c.l.b16 %v4211
  %v4276 = vunpack.c.l.b16 %v4212
  %v4277 = vunpack.c.l.b16 %v4213
  %v4278 = vunpack.c.l.b16 %v4214
  %v4279 = vunpack.c.l.b16 %v4215
  %v4280 = vunpack.c.l.b16 %v4216
  %v4281 = vunpack.c.l.b16 %v4217
  %v4282 = vunpack.c.l.b16 %v4218
  %v4283 = vunpack.c.l.b16 %v4219
  %v4284 = vunpack.c.l.b16 %v4220
  %v4285 = vunpack.c.l.b16 %v4221
  %v4286 = vunpack.c.l.b16 %v4222
  %v4287 = vunpack.c.l.b16 %v4223
  %v4288 = vunpack.c.l.b16 %v4224
  %v4289 = vunpack.c.l.b16 %v4225
  %v4290 = vunpack.c.l.b16 %v4226
  %v4291 = vpack.c.b16 %v4276, %v4275
  %v4292 = vpack.c.b16 %v4278, %v4277
  %v4293 = vpack.c.b16 %v4280, %v4279
  %v4294 = vpack.c.b16 %v4282, %v4281
  %v4295 = vpack.c.b16 %v4284, %v4283
  %v4296 = vpack.c.b16 %v4286, %v4285
  %v4297 = vpack.c.b16 %v4288, %v4287
  %v4298 = vpack.c.b16 %v4290, %v4289
  %4307 = vmatprep.subr.bf16.mxu0 0
  %4308 = vmatpush1.bf16.msra.mxu0 %v4291
  %4309 = vmatprep.subr.bf16.mxu0 0
  %4310 = vmatpush1.bf16.msra.mxu0 %v4292
  %4311 = vmatprep.subr.bf16.mxu0 0
  %4312 = vmatpush1.bf16.msra.mxu0 %v4293
  %4313 = vmatprep.subr.bf16.mxu0 0
  %4314 = vmatpush1.bf16.msra.mxu0 %v4294
  %4315 = vmatprep.subr.bf16.mxu0 0
  %4316 = vmatpush1.bf16.msra.mxu0 %v4295
  %4317 = vmatprep.subr.bf16.mxu0 0
  %4318 = vmatpush1.bf16.msra.mxu0 %v4296
  %4319 = vmatprep.subr.bf16.mxu0 0
  %4320 = vmatpush1.bf16.msra.mxu0 %v4297
  %4321 = vmatprep.subr.bf16.mxu0 0
  %4322 = vmatpush1.bf16.msra.mxu0 %v4298
  %4323 = vmatprep.subr.bf16.mxu0 0
  %4324 = vmatpush1.bf16.msra.mxu0 0
  %4325 = vmatprep.subr.bf16.mxu0 0
  %4326 = vmatpush1.bf16.msra.mxu0 0
  %4327 = vmatprep.subr.bf16.mxu0 0
  %4328 = vmatpush1.bf16.msra.mxu0 0
  %4329 = vmatprep.subr.bf16.mxu0 0
  %4330 = vmatpush1.bf16.msra.mxu0 0
  %4331 = vmatprep.subr.bf16.mxu0 0
  %4332 = vmatpush1.bf16.msra.mxu0 0
  %4333 = vmatprep.subr.bf16.mxu0 0
  %4334 = vmatpush1.bf16.msra.mxu0 0
  %4335 = vmatprep.subr.bf16.mxu0 0
  %4336 = vmatpush1.bf16.msra.mxu0 0
  %4337 = vmatprep.subr.bf16.mxu0 0
  %4338 = vmatpush1.bf16.msra.mxu0 0
  %4339 = vmatprep.mubr.bf16.mxu0 0
  %4340 = vmatmul.mubr.bf16.gmra.mrb[0].mxu0 %v4243
  %v4341 = vpop.f32.mrb[0].mxu0
  %v4342 = vadd.f32 0.0, %v4341
  %v4343 = vpop.f32.mrb[0].mxu0
  %v4344 = vpop.f32.mrb[0].mxu0
  %v4345 = vadd.f32 0.0, %v4344
  %v4346 = vpop.f32.mrb[0].mxu0
  %4347 = vmatprep.mubr.bf16.mxu0 0
  %4348 = vmatmul.mubr.bf16.gmra.mrb[0].mxu0 %v4244
  %v4349 = vpop.f32.mrb[0].mxu0
  %v4350 = vadd.f32 0.0, %v4349
  %v4351 = vpop.f32.mrb[0].mxu0
  %v4352 = vpop.f32.mrb[0].mxu0
  %v4353 = vadd.f32 0.0, %v4352
  %v4354 = vpop.f32.mrb[0].mxu0
  %4355 = vmatprep.mubr.bf16.mxu0 0
  %4356 = vmatmul.mubr.bf16.gmra.mrb[0].mxu0 %v4245
  %v4357 = vpop.f32.mrb[0].mxu0
  %v4358 = vadd.f32 0.0, %v4357
  %v4359 = vpop.f32.mrb[0].mxu0
  %v4360 = vpop.f32.mrb[0].mxu0
  %v4361 = vadd.f32 0.0, %v4360
  %v4362 = vpop.f32.mrb[0].mxu0
  %4363 = vmatprep.mubr.bf16.mxu0 0
  %4364 = vmatmul.mubr.bf16.gmra.mrb[0].mxu0 %v4246
  %v4365 = vpop.f32.mrb[0].mxu0
  %v4366 = vadd.f32 0.0, %v4365
  %v4367 = vpop.f32.mrb[0].mxu0
  %v4368 = vpop.f32.mrb[0].mxu0
  %v4369 = vadd.f32 0.0, %v4368
  %v4370 = vpop.f32.mrb[0].mxu0
  %4371 = vmatprep.mubr.bf16.mxu0 0
  %4372 = vmatmul.mubr.bf16.gmra.mrb[0].mxu0 %v4247
  %v4373 = vpop.f32.mrb[0].mxu0
  %v4374 = vadd.f32 0.0, %v4373
  %v4375 = vpop.f32.mrb[0].mxu0
  %v4376 = vpop.f32.mrb[0].mxu0
  %v4377 = vadd.f32 0.0, %v4376
  %v4378 = vpop.f32.mrb[0].mxu0
  %4379 = vmatprep.mubr.bf16.mxu0 0
  %4380 = vmatmul.mubr.bf16.gmra.mrb[0].mxu0 %v4248
  %v4381 = vpop.f32.mrb[0].mxu0
  %v4382 = vadd.f32 0.0, %v4381
  %v4383 = vpop.f32.mrb[0].mxu0
  %v4384 = vpop.f32.mrb[0].mxu0
  %v4385 = vadd.f32 0.0, %v4384
  %v4386 = vpop.f32.mrb[0].mxu0
  %4387 = vmatprep.mubr.bf16.mxu0 0
  %4388 = vmatmul.mubr.bf16.gmra.mrb[0].mxu0 %v4249
  %v4389 = vpop.f32.mrb[0].mxu0
  %v4390 = vadd.f32 0.0, %v4389
  %v4391 = vpop.f32.mrb[0].mxu0
  %v4392 = vpop.f32.mrb[0].mxu0
  %v4393 = vadd.f32 0.0, %v4392
  %v4394 = vpop.f32.mrb[0].mxu0
  %4395 = vmatprep.mubr.bf16.mxu0 0
  %4396 = vmatmul.mubr.bf16.gmra.mrb[0].mxu0 %v4250
  %v4397 = vpop.f32.mrb[0].mxu0
  %v4398 = vadd.f32 0.0, %v4397
  %v4399 = vpop.f32.mrb[0].mxu0
  %v4400 = vpop.f32.mrb[0].mxu0
  %v4401 = vadd.f32 0.0, %v4400
  %v4402 = vpop.f32.mrb[0].mxu0
  %4403 = vdwg.mxu0
  %v4404 = vadd.f32 %v3938, %v4342
  %v4405 = vadd.f32 %v3939, %v4345
  %v4406 = vadd.f32 %v3940, %v4350
  %v4407 = vadd.f32 %v3941, %v4353
  %v4408 = vadd.f32 %v3942, %v4358
  %v4409 = vadd.f32 %v3943, %v4361
  %v4410 = vadd.f32 %v3944, %v4366
  %v4411 = vadd.f32 %v3945, %v4369
  %v4412 = vadd.f32 %v3946, %v4374
  %v4413 = vadd.f32 %v3947, %v4377
  %v4414 = vadd.f32 %v3948, %v4382
  %v4415 = vadd.f32 %v3949, %v4385
  %v4416 = vadd.f32 %v3950, %v4390
  %v4417 = vadd.f32 %v3951, %v4393
  %v4418 = vadd.f32 %v3952, %v4398
  %v4419 = vadd.f32 %v3953, %v4401
  %v4420 = vld [vmem:[%s3711] sm:$0xe]
  %v4421 = vld [vmem:[%s3711 + $0x8] sm:$0xe]
  %v4422 = vld [vmem:[%s3711 + $0x10] sm:$0xe]
  %v4423 = vld [vmem:[%s3711 + $0x18] sm:$0xe]
  %v4424 = vld [vmem:[%s3711 + $0x20] sm:$0xe]
  %v4425 = vld [vmem:[%s3711 + $0x28] sm:$0xe]
  %v4426 = vld [vmem:[%s3711 + $0x30] sm:$0xe]
  %v4427 = vld [vmem:[%s3711 + $0x38] sm:$0xe]
  %v4428 = vld [vmem:[%s3711 + $0x60] sm:$0xe]
  %v4429 = vld [vmem:[%s3711 + $0x68] sm:$0xe]
  %v4430 = vld [vmem:[%s3711 + $0x70] sm:$0xe]
  %v4431 = vld [vmem:[%s3711 + $0x78] sm:$0xe]
  %v4432 = vld [vmem:[%s3711 + $0x80] sm:$0xe]
  %v4433 = vld [vmem:[%s3711 + $0x88] sm:$0xe]
  %v4434 = vld [vmem:[%s3711 + $0x90] sm:$0xe]
  %v4435 = vld [vmem:[%s3711 + $0x98] sm:$0xe]
  %v4468 = vrot.slane %v4420, 5
  %v4469 = vrot.slane %v4468, 4
  %v4470 = vrot.slane %v3955, 5
  %v4471 = vsel %vm727, %v4469, %v4470
  %v4472 = vrot.slane %v4421, 5
  %v4473 = vrot.slane %v4472, 4
  %v4474 = vrot.slane %v3957, 5
  %v4475 = vsel %vm727, %v4473, %v4474
  %v4476 = vrot.slane %v4422, 5
  %v4477 = vrot.slane %v4476, 4
  %v4478 = vrot.slane %v3959, 5
  %v4479 = vsel %vm727, %v4477, %v4478
  %v4480 = vrot.slane %v4423, 5
  %v4481 = vrot.slane %v4480, 4
  %v4482 = vrot.slane %v3961, 5
  %v4483 = vsel %vm727, %v4481, %v4482
  %v4484 = vrot.slane %v4424, 5
  %v4485 = vrot.slane %v4484, 4
  %v4486 = vrot.slane %v3963, 5
  %v4487 = vsel %vm727, %v4485, %v4486
  %v4488 = vrot.slane %v4425, 5
  %v4489 = vrot.slane %v4488, 4
  %v4490 = vrot.slane %v3965, 5
  %v4491 = vsel %vm727, %v4489, %v4490
  %v4492 = vrot.slane %v4426, 5
  %v4493 = vrot.slane %v4492, 4
  %v4494 = vrot.slane %v3967, 5
  %v4495 = vsel %vm727, %v4493, %v4494
  %v4496 = vrot.slane %v4427, 5
  %v4497 = vrot.slane %v4496, 4
  %v4498 = vrot.slane %v3969, 5
  %v4499 = vsel %vm727, %v4497, %v4498
  %v4500 = vrot.slane %v4428, 5
  %v4501 = vrot.slane %v4500, 4
  %v4502 = vrot.slane %v3971, 5
  %v4503 = vsel %vm727, %v4501, %v4502
  %v4504 = vrot.slane %v4429, 5
  %v4505 = vrot.slane %v4504, 4
  %v4506 = vrot.slane %v3973, 5
  %v4507 = vsel %vm727, %v4505, %v4506
  %v4508 = vrot.slane %v4430, 5
  %v4509 = vrot.slane %v4508, 4
  %v4510 = vrot.slane %v3975, 5
  %v4511 = vsel %vm727, %v4509, %v4510
  %v4512 = vrot.slane %v4431, 5
  %v4513 = vrot.slane %v4512, 4
  %v4514 = vrot.slane %v3977, 5
  %v4515 = vsel %vm727, %v4513, %v4514
  %v4516 = vrot.slane %v4432, 5
  %v4517 = vrot.slane %v4516, 4
  %v4518 = vrot.slane %v3979, 5
  %v4519 = vsel %vm727, %v4517, %v4518
  %v4520 = vrot.slane %v4433, 5
  %v4521 = vrot.slane %v4520, 4
  %v4522 = vrot.slane %v3981, 5
  %v4523 = vsel %vm727, %v4521, %v4522
  %v4524 = vrot.slane %v4434, 5
  %v4525 = vrot.slane %v4524, 4
  %v4526 = vrot.slane %v3983, 5
  %v4527 = vsel %vm727, %v4525, %v4526
  %v4528 = vrot.slane %v4435, 5
  %v4529 = vrot.slane %v4528, 4
  %v4530 = vrot.slane %v3985, 5
  %v4531 = vsel %vm727, %v4529, %v4530
  %s4532 = scalar_lea.vmem %s1, 768
  %v4533 = vld [vmem:[%s4532] sm:$0xf]
  %v4534 = vld [vmem:[%s4532 + $0x4] sm:$0xf]
  %v4535 = vld [vmem:[%s4532 + $0x8] sm:$0xf]
  %v4536 = vld [vmem:[%s4532 + $0xc] sm:$0xf]
  %v4537 = vld [vmem:[%s4532 + $0x10] sm:$0xf]
  %v4538 = vld [vmem:[%s4532 + $0x14] sm:$0xf]
  %v4539 = vld [vmem:[%s4532 + $0x18] sm:$0xf]
  %v4540 = vld [vmem:[%s4532 + $0x1c] sm:$0xf]
  %v4541 = vld [vmem:[%s4532 + $0x20] sm:$0xf]
  %v4542 = vld [vmem:[%s4532 + $0x24] sm:$0xf]
  %v4543 = vld [vmem:[%s4532 + $0x28] sm:$0xf]
  %v4544 = vld [vmem:[%s4532 + $0x2c] sm:$0xf]
  %v4545 = vld [vmem:[%s4532 + $0x30] sm:$0xf]
  %v4546 = vld [vmem:[%s4532 + $0x34] sm:$0xf]
  %v4547 = vld [vmem:[%s4532 + $0x38] sm:$0xf]
  %v4548 = vld [vmem:[%s4532 + $0x3c] sm:$0xf]
  %v4549 = vunpack.c.l.b16 %v4471
  %v4550 = vunpack.c.l.b16 %v4475
  %v4551 = vunpack.c.l.b16 %v4479
  %v4552 = vunpack.c.l.b16 %v4483
  %v4553 = vunpack.c.l.b16 %v4487
  %v4554 = vunpack.c.l.b16 %v4491
  %v4555 = vunpack.c.l.b16 %v4495
  %v4556 = vunpack.c.l.b16 %v4499
  %v4557 = vunpack.c.l.b16 %v4503
  %v4558 = vunpack.c.l.b16 %v4507
  %v4559 = vunpack.c.l.b16 %v4511
  %v4560 = vunpack.c.l.b16 %v4515
  %v4561 = vunpack.c.l.b16 %v4519
  %v4562 = vunpack.c.l.b16 %v4523
  %v4563 = vunpack.c.l.b16 %v4527
  %v4564 = vunpack.c.l.b16 %v4531
  %v4565 = vpack.c.b16 %v4550, %v4549
  %v4566 = vpack.c.b16 %v4552, %v4551
  %v4567 = vpack.c.b16 %v4554, %v4553
  %v4568 = vpack.c.b16 %v4556, %v4555
  %v4569 = vpack.c.b16 %v4558, %v4557
  %v4570 = vpack.c.b16 %v4560, %v4559
  %v4571 = vpack.c.b16 %v4562, %v4561
  %v4572 = vpack.c.b16 %v4564, %v4563
  %v4597 = vunpack.c.l.b16 %v4533
  %v4598 = vunpack.c.l.b16 %v4534
  %v4599 = vunpack.c.l.b16 %v4535
  %v4600 = vunpack.c.l.b16 %v4536
  %v4601 = vunpack.c.l.b16 %v4537
  %v4602 = vunpack.c.l.b16 %v4538
  %v4603 = vunpack.c.l.b16 %v4539
  %v4604 = vunpack.c.l.b16 %v4540
  %v4605 = vunpack.c.l.b16 %v4541
  %v4606 = vunpack.c.l.b16 %v4542
  %v4607 = vunpack.c.l.b16 %v4543
  %v4608 = vunpack.c.l.b16 %v4544
  %v4609 = vunpack.c.l.b16 %v4545
  %v4610 = vunpack.c.l.b16 %v4546
  %v4611 = vunpack.c.l.b16 %v4547
  %v4612 = vunpack.c.l.b16 %v4548
  %v4613 = vpack.c.b16 %v4598, %v4597
  %v4614 = vpack.c.b16 %v4600, %v4599
  %v4615 = vpack.c.b16 %v4602, %v4601
  %v4616 = vpack.c.b16 %v4604, %v4603
  %v4617 = vpack.c.b16 %v4606, %v4605
  %v4618 = vpack.c.b16 %v4608, %v4607
  %v4619 = vpack.c.b16 %v4610, %v4609
  %v4620 = vpack.c.b16 %v4612, %v4611
  %4629 = vmatprep.subr.bf16.mxu0 0
  %4630 = vmatpush1.bf16.msra.mxu0 %v4613
  %4631 = vmatprep.subr.bf16.mxu0 0
  %4632 = vmatpush1.bf16.msra.mxu0 %v4614
  %4633 = vmatprep.subr.bf16.mxu0 0
  %4634 = vmatpush1.bf16.msra.mxu0 %v4615
  %4635 = vmatprep.subr.bf16.mxu0 0
  %4636 = vmatpush1.bf16.msra.mxu0 %v4616
  %4637 = vmatprep.subr.bf16.mxu0 0
  %4638 = vmatpush1.bf16.msra.mxu0 %v4617
  %4639 = vmatprep.subr.bf16.mxu0 0
  %4640 = vmatpush1.bf16.msra.mxu0 %v4618
  %4641 = vmatprep.subr.bf16.mxu0 0
  %4642 = vmatpush1.bf16.msra.mxu0 %v4619
  %4643 = vmatprep.subr.bf16.mxu0 0
  %4644 = vmatpush1.bf16.msra.mxu0 %v4620
  %4645 = vmatprep.subr.bf16.mxu0 0
  %4646 = vmatpush1.bf16.msra.mxu0 0
  %4647 = vmatprep.subr.bf16.mxu0 0
  %4648 = vmatpush1.bf16.msra.mxu0 0
  %4649 = vmatprep.subr.bf16.mxu0 0
  %4650 = vmatpush1.bf16.msra.mxu0 0
  %4651 = vmatprep.subr.bf16.mxu0 0
  %4652 = vmatpush1.bf16.msra.mxu0 0
  %4653 = vmatprep.subr.bf16.mxu0 0
  %4654 = vmatpush1.bf16.msra.mxu0 0
  %4655 = vmatprep.subr.bf16.mxu0 0
  %4656 = vmatpush1.bf16.msra.mxu0 0
  %4657 = vmatprep.subr.bf16.mxu0 0
  %4658 = vmatpush1.bf16.msra.mxu0 0
  %4659 = vmatprep.subr.bf16.mxu0 0
  %4660 = vmatpush1.bf16.msra.mxu0 0
  %4661 = vmatprep.mubr.bf16.mxu0 0
  %4662 = vmatmul.mubr.bf16.gmra.mrb[0].mxu0 %v4565
  %v4663 = vpop.f32.mrb[0].mxu0
  %v4664 = vadd.f32 0.0, %v4663
  %v4665 = vpop.f32.mrb[0].mxu0
  %v4666 = vpop.f32.mrb[0].mxu0
  %v4667 = vadd.f32 0.0, %v4666
  %v4668 = vpop.f32.mrb[0].mxu0
  %4669 = vmatprep.mubr.bf16.mxu0 0
  %4670 = vmatmul.mubr.bf16.gmra.mrb[0].mxu0 %v4566
  %v4671 = vpop.f32.mrb[0].mxu0
  %v4672 = vadd.f32 0.0, %v4671
  %v4673 = vpop.f32.mrb[0].mxu0
  %v4674 = vpop.f32.mrb[0].mxu0
  %v4675 = vadd.f32 0.0, %v4674
  %v4676 = vpop.f32.mrb[0].mxu0
  %4677 = vmatprep.mubr.bf16.mxu0 0
  %4678 = vmatmul.mubr.bf16.gmra.mrb[0].mxu0 %v4567
  %v4679 = vpop.f32.mrb[0].mxu0
  %v4680 = vadd.f32 0.0, %v4679
  %v4681 = vpop.f32.mrb[0].mxu0
  %v4682 = vpop.f32.mrb[0].mxu0
  %v4683 = vadd.f32 0.0, %v4682
  %v4684 = vpop.f32.mrb[0].mxu0
  %4685 = vmatprep.mubr.bf16.mxu0 0
  %4686 = vmatmul.mubr.bf16.gmra.mrb[0].mxu0 %v4568
  %v4687 = vpop.f32.mrb[0].mxu0
  %v4688 = vadd.f32 0.0, %v4687
  %v4689 = vpop.f32.mrb[0].mxu0
  %v4690 = vpop.f32.mrb[0].mxu0
  %v4691 = vadd.f32 0.0, %v4690
  %v4692 = vpop.f32.mrb[0].mxu0
  %4693 = vmatprep.mubr.bf16.mxu0 0
  %4694 = vmatmul.mubr.bf16.gmra.mrb[0].mxu0 %v4569
  %v4695 = vpop.f32.mrb[0].mxu0
  %v4696 = vadd.f32 0.0, %v4695
  %v4697 = vpop.f32.mrb[0].mxu0
  %v4698 = vpop.f32.mrb[0].mxu0
  %v4699 = vadd.f32 0.0, %v4698
  %v4700 = vpop.f32.mrb[0].mxu0
  %4701 = vmatprep.mubr.bf16.mxu0 0
  %4702 = vmatmul.mubr.bf16.gmra.mrb[0].mxu0 %v4570
  %v4703 = vpop.f32.mrb[0].mxu0
  %v4704 = vadd.f32 0.0, %v4703
  %v4705 = vpop.f32.mrb[0].mxu0
  %v4706 = vpop.f32.mrb[0].mxu0
  %v4707 = vadd.f32 0.0, %v4706
  %v4708 = vpop.f32.mrb[0].mxu0
  %4709 = vmatprep.mubr.bf16.mxu0 0
  %4710 = vmatmul.mubr.bf16.gmra.mrb[0].mxu0 %v4571
  %v4711 = vpop.f32.mrb[0].mxu0
  %v4712 = vadd.f32 0.0, %v4711
  %v4713 = vpop.f32.mrb[0].mxu0
  %v4714 = vpop.f32.mrb[0].mxu0
  %v4715 = vadd.f32 0.0, %v4714
  %v4716 = vpop.f32.mrb[0].mxu0
  %4717 = vmatprep.mubr.bf16.mxu0 0
  %4718 = vmatmul.mubr.bf16.gmra.mrb[0].mxu0 %v4572
  %v4719 = vpop.f32.mrb[0].mxu0
  %v4720 = vadd.f32 0.0, %v4719
  %v4721 = vpop.f32.mrb[0].mxu0
  %v4722 = vpop.f32.mrb[0].mxu0
  %v4723 = vadd.f32 0.0, %v4722
  %v4724 = vpop.f32.mrb[0].mxu0
  %4725 = vdwg.mxu0
  %v4726 = vadd.f32 %v4404, %v4664
  %v4727 = vadd.f32 %v4405, %v4667
  %v4728 = vadd.f32 %v4406, %v4672
  %v4729 = vadd.f32 %v4407, %v4675
  %v4730 = vadd.f32 %v4408, %v4680
  %v4731 = vadd.f32 %v4409, %v4683
  %v4732 = vadd.f32 %v4410, %v4688
  %v4733 = vadd.f32 %v4411, %v4691
  %v4734 = vadd.f32 %v4412, %v4696
  %v4735 = vadd.f32 %v4413, %v4699
  %v4736 = vadd.f32 %v4414, %v4704
  %v4737 = vadd.f32 %v4415, %v4707
  %v4738 = vadd.f32 %v4416, %v4712
  %v4739 = vadd.f32 %v4417, %v4715
  %v4740 = vadd.f32 %v4418, %v4720
  %v4741 = vadd.f32 %v4419, %v4723
  %v4742 = vld [vmem:[%s3711 + $0x4] sm:$0x3]
  %v4743 = vld [vmem:[%s3711 + $0xc] sm:$0x3]
  %v4744 = vld [vmem:[%s3711 + $0x14] sm:$0x3]
  %v4745 = vld [vmem:[%s3711 + $0x1c] sm:$0x3]
  %v4746 = vld [vmem:[%s3711 + $0x24] sm:$0x3]
  %v4747 = vld [vmem:[%s3711 + $0x2c] sm:$0x3]
  %v4748 = vld [vmem:[%s3711 + $0x34] sm:$0x3]
  %v4749 = vld [vmem:[%s3711 + $0x3c] sm:$0x3]
  %v4750 = vld [vmem:[%s3711 + $0x64] sm:$0x3]
  %v4751 = vld [vmem:[%s3711 + $0x6c] sm:$0x3]
  %v4752 = vld [vmem:[%s3711 + $0x74] sm:$0x3]
  %v4753 = vld [vmem:[%s3711 + $0x7c] sm:$0x3]
  %v4754 = vld [vmem:[%s3711 + $0x84] sm:$0x3]
  %v4755 = vld [vmem:[%s3711 + $0x8c] sm:$0x3]
  %v4756 = vld [vmem:[%s3711 + $0x94] sm:$0x3]
  %v4757 = vld [vmem:[%s3711 + $0x9c] sm:$0x3]
  %v4759 = vshrl.u32 %v4420, 16
  %v4761 = vrot.slane %v4759, 5
  %v4762 = vshll.u32 %v4420, 16
  %v4764 = vrot.slane %v4762, 6
  %v4765 = vor.u32 %v4761, %v4764
  %v4766 = vrot.slane %v4765, 4
  %v4768 = vshrl.u32 %v4742, 16
  %v4770 = vrot.slane %v4768, 5
  %v4771 = vshll.u32 %v4742, 16
  %v4773 = vrot.slane %v4771, 6
  %v4774 = vor.u32 %v4770, %v4773
  %v4775 = vsel %vm1020, %v4766, %v4774
  %v4777 = vshrl.u32 %v4421, 16
  %v4779 = vrot.slane %v4777, 5
  %v4780 = vshll.u32 %v4421, 16
  %v4782 = vrot.slane %v4780, 6
  %v4783 = vor.u32 %v4779, %v4782
  %v4784 = vrot.slane %v4783, 4
  %v4786 = vshrl.u32 %v4743, 16
  %v4788 = vrot.slane %v4786, 5
  %v4789 = vshll.u32 %v4743, 16
  %v4791 = vrot.slane %v4789, 6
  %v4792 = vor.u32 %v4788, %v4791
  %v4793 = vsel %vm1020, %v4784, %v4792
  %v4795 = vshrl.u32 %v4422, 16
  %v4797 = vrot.slane %v4795, 5
  %v4798 = vshll.u32 %v4422, 16
  %v4800 = vrot.slane %v4798, 6
  %v4801 = vor.u32 %v4797, %v4800
  %v4802 = vrot.slane %v4801, 4
  %v4804 = vshrl.u32 %v4744, 16
  %v4806 = vrot.slane %v4804, 5
  %v4807 = vshll.u32 %v4744, 16
  %v4809 = vrot.slane %v4807, 6
  %v4810 = vor.u32 %v4806, %v4809
  %v4811 = vsel %vm1020, %v4802, %v4810
  %v4813 = vshrl.u32 %v4423, 16
  %v4815 = vrot.slane %v4813, 5
  %v4816 = vshll.u32 %v4423, 16
  %v4818 = vrot.slane %v4816, 6
  %v4819 = vor.u32 %v4815, %v4818
  %v4820 = vrot.slane %v4819, 4
  %v4822 = vshrl.u32 %v4745, 16
  %v4824 = vrot.slane %v4822, 5
  %v4825 = vshll.u32 %v4745, 16
  %v4827 = vrot.slane %v4825, 6
  %v4828 = vor.u32 %v4824, %v4827
  %v4829 = vsel %vm1020, %v4820, %v4828
  %v4831 = vshrl.u32 %v4424, 16
  %v4833 = vrot.slane %v4831, 5
  %v4834 = vshll.u32 %v4424, 16
  %v4836 = vrot.slane %v4834, 6
  %v4837 = vor.u32 %v4833, %v4836
  %v4838 = vrot.slane %v4837, 4
  %v4840 = vshrl.u32 %v4746, 16
  %v4842 = vrot.slane %v4840, 5
  %v4843 = vshll.u32 %v4746, 16
  %v4845 = vrot.slane %v4843, 6
  %v4846 = vor.u32 %v4842, %v4845
  %v4847 = vsel %vm1020, %v4838, %v4846
  %v4849 = vshrl.u32 %v4425, 16
  %v4851 = vrot.slane %v4849, 5
  %v4852 = vshll.u32 %v4425, 16
  %v4854 = vrot.slane %v4852, 6
  %v4855 = vor.u32 %v4851, %v4854
  %v4856 = vrot.slane %v4855, 4
  %v4858 = vshrl.u32 %v4747, 16
  %v4860 = vrot.slane %v4858, 5
  %v4861 = vshll.u32 %v4747, 16
  %v4863 = vrot.slane %v4861, 6
  %v4864 = vor.u32 %v4860, %v4863
  %v4865 = vsel %vm1020, %v4856, %v4864
  %v4867 = vshrl.u32 %v4426, 16
  %v4869 = vrot.slane %v4867, 5
  %v4870 = vshll.u32 %v4426, 16
  %v4872 = vrot.slane %v4870, 6
  %v4873 = vor.u32 %v4869, %v4872
  %v4874 = vrot.slane %v4873, 4
  %v4876 = vshrl.u32 %v4748, 16
  %v4878 = vrot.slane %v4876, 5
  %v4879 = vshll.u32 %v4748, 16
  %v4881 = vrot.slane %v4879, 6
  %v4882 = vor.u32 %v4878, %v4881
  %v4883 = vsel %vm1020, %v4874, %v4882
  %v4885 = vshrl.u32 %v4427, 16
  %v4887 = vrot.slane %v4885, 5
  %v4888 = vshll.u32 %v4427, 16
  %v4890 = vrot.slane %v4888, 6
  %v4891 = vor.u32 %v4887, %v4890
  %v4892 = vrot.slane %v4891, 4
  %v4894 = vshrl.u32 %v4749, 16
  %v4896 = vrot.slane %v4894, 5
  %v4897 = vshll.u32 %v4749, 16
  %v4899 = vrot.slane %v4897, 6
  %v4900 = vor.u32 %v4896, %v4899
  %v4901 = vsel %vm1020, %v4892, %v4900
  %v4903 = vshrl.u32 %v4428, 16
  %v4905 = vrot.slane %v4903, 5
  %v4906 = vshll.u32 %v4428, 16
  %v4908 = vrot.slane %v4906, 6
  %v4909 = vor.u32 %v4905, %v4908
  %v4910 = vrot.slane %v4909, 4
  %v4912 = vshrl.u32 %v4750, 16
  %v4914 = vrot.slane %v4912, 5
  %v4915 = vshll.u32 %v4750, 16
  %v4917 = vrot.slane %v4915, 6
  %v4918 = vor.u32 %v4914, %v4917
  %v4919 = vsel %vm1020, %v4910, %v4918
  %v4921 = vshrl.u32 %v4429, 16
  %v4923 = vrot.slane %v4921, 5
  %v4924 = vshll.u32 %v4429, 16
  %v4926 = vrot.slane %v4924, 6
  %v4927 = vor.u32 %v4923, %v4926
  %v4928 = vrot.slane %v4927, 4
  %v4930 = vshrl.u32 %v4751, 16
  %v4932 = vrot.slane %v4930, 5
  %v4933 = vshll.u32 %v4751, 16
  %v4935 = vrot.slane %v4933, 6
  %v4936 = vor.u32 %v4932, %v4935
  %v4937 = vsel %vm1020, %v4928, %v4936
  %v4939 = vshrl.u32 %v4430, 16
  %v4941 = vrot.slane %v4939, 5
  %v4942 = vshll.u32 %v4430, 16
  %v4944 = vrot.slane %v4942, 6
  %v4945 = vor.u32 %v4941, %v4944
  %v4946 = vrot.slane %v4945, 4
  %v4948 = vshrl.u32 %v4752, 16
  %v4950 = vrot.slane %v4948, 5
  %v4951 = vshll.u32 %v4752, 16
  %v4953 = vrot.slane %v4951, 6
  %v4954 = vor.u32 %v4950, %v4953
  %v4955 = vsel %vm1020, %v4946, %v4954
  %v4957 = vshrl.u32 %v4431, 16
  %v4959 = vrot.slane %v4957, 5
  %v4960 = vshll.u32 %v4431, 16
  %v4962 = vrot.slane %v4960, 6
  %v4963 = vor.u32 %v4959, %v4962
  %v4964 = vrot.slane %v4963, 4
  %v4966 = vshrl.u32 %v4753, 16
  %v4968 = vrot.slane %v4966, 5
  %v4969 = vshll.u32 %v4753, 16
  %v4971 = vrot.slane %v4969, 6
  %v4972 = vor.u32 %v4968, %v4971
  %v4973 = vsel %vm1020, %v4964, %v4972
  %v4975 = vshrl.u32 %v4432, 16
  %v4977 = vrot.slane %v4975, 5
  %v4978 = vshll.u32 %v4432, 16
  %v4980 = vrot.slane %v4978, 6
  %v4981 = vor.u32 %v4977, %v4980
  %v4982 = vrot.slane %v4981, 4
  %v4984 = vshrl.u32 %v4754, 16
  %v4986 = vrot.slane %v4984, 5
  %v4987 = vshll.u32 %v4754, 16
  %v4989 = vrot.slane %v4987, 6
  %v4990 = vor.u32 %v4986, %v4989
  %v4991 = vsel %vm1020, %v4982, %v4990
  %v4993 = vshrl.u32 %v4433, 16
  %v4995 = vrot.slane %v4993, 5
  %v4996 = vshll.u32 %v4433, 16
  %v4998 = vrot.slane %v4996, 6
  %v4999 = vor.u32 %v4995, %v4998
  %v5000 = vrot.slane %v4999, 4
  %v5002 = vshrl.u32 %v4755, 16
  %v5004 = vrot.slane %v5002, 5
  %v5005 = vshll.u32 %v4755, 16
  %v5007 = vrot.slane %v5005, 6
  %v5008 = vor.u32 %v5004, %v5007
  %v5009 = vsel %vm1020, %v5000, %v5008
  %v5011 = vshrl.u32 %v4434, 16
  %v5013 = vrot.slane %v5011, 5
  %v5014 = vshll.u32 %v4434, 16
  %v5016 = vrot.slane %v5014, 6
  %v5017 = vor.u32 %v5013, %v5016
  %v5018 = vrot.slane %v5017, 4
  %v5020 = vshrl.u32 %v4756, 16
  %v5022 = vrot.slane %v5020, 5
  %v5023 = vshll.u32 %v4756, 16
  %v5025 = vrot.slane %v5023, 6
  %v5026 = vor.u32 %v5022, %v5025
  %v5027 = vsel %vm1020, %v5018, %v5026
  %v5029 = vshrl.u32 %v4435, 16
  %v5031 = vrot.slane %v5029, 5
  %v5032 = vshll.u32 %v4435, 16
  %v5034 = vrot.slane %v5032, 6
  %v5035 = vor.u32 %v5031, %v5034
  %v5036 = vrot.slane %v5035, 4
  %v5038 = vshrl.u32 %v4757, 16
  %v5040 = vrot.slane %v5038, 5
  %v5041 = vshll.u32 %v4757, 16
  %v5043 = vrot.slane %v5041, 6
  %v5044 = vor.u32 %v5040, %v5043
  %v5045 = vsel %vm1020, %v5036, %v5044
  %s5046 = scalar_lea.vmem %s1, 832
  %v5047 = vld [vmem:[%s5046] sm:$0xf]
  %v5048 = vld [vmem:[%s5046 + $0x4] sm:$0xf]
  %v5049 = vld [vmem:[%s5046 + $0x8] sm:$0xf]
  %v5050 = vld [vmem:[%s5046 + $0xc] sm:$0xf]
  %v5051 = vld [vmem:[%s5046 + $0x10] sm:$0xf]
  %v5052 = vld [vmem:[%s5046 + $0x14] sm:$0xf]
  %v5053 = vld [vmem:[%s5046 + $0x18] sm:$0xf]
  %v5054 = vld [vmem:[%s5046 + $0x1c] sm:$0xf]
  %v5055 = vld [vmem:[%s5046 + $0x20] sm:$0xf]
  %v5056 = vld [vmem:[%s5046 + $0x24] sm:$0xf]
  %v5057 = vld [vmem:[%s5046 + $0x28] sm:$0xf]
  %v5058 = vld [vmem:[%s5046 + $0x2c] sm:$0xf]
  %v5059 = vld [vmem:[%s5046 + $0x30] sm:$0xf]
  %v5060 = vld [vmem:[%s5046 + $0x34] sm:$0xf]
  %v5061 = vld [vmem:[%s5046 + $0x38] sm:$0xf]
  %v5062 = vld [vmem:[%s5046 + $0x3c] sm:$0xf]
  %v5063 = vunpack.c.l.b16 %v4775
  %v5064 = vunpack.c.l.b16 %v4793
  %v5065 = vunpack.c.l.b16 %v4811
  %v5066 = vunpack.c.l.b16 %v4829
  %v5067 = vunpack.c.l.b16 %v4847
  %v5068 = vunpack.c.l.b16 %v4865
  %v5069 = vunpack.c.l.b16 %v4883
  %v5070 = vunpack.c.l.b16 %v4901
  %v5071 = vunpack.c.l.b16 %v4919
  %v5072 = vunpack.c.l.b16 %v4937
  %v5073 = vunpack.c.l.b16 %v4955
  %v5074 = vunpack.c.l.b16 %v4973
  %v5075 = vunpack.c.l.b16 %v4991
  %v5076 = vunpack.c.l.b16 %v5009
  %v5077 = vunpack.c.l.b16 %v5027
  %v5078 = vunpack.c.l.b16 %v5045
  %v5079 = vpack.c.b16 %v5064, %v5063
  %v5080 = vpack.c.b16 %v5066, %v5065
  %v5081 = vpack.c.b16 %v5068, %v5067
  %v5082 = vpack.c.b16 %v5070, %v5069
  %v5083 = vpack.c.b16 %v5072, %v5071
  %v5084 = vpack.c.b16 %v5074, %v5073
  %v5085 = vpack.c.b16 %v5076, %v5075
  %v5086 = vpack.c.b16 %v5078, %v5077
  %v5111 = vunpack.c.l.b16 %v5047
  %v5112 = vunpack.c.l.b16 %v5048
  %v5113 = vunpack.c.l.b16 %v5049
  %v5114 = vunpack.c.l.b16 %v5050
  %v5115 = vunpack.c.l.b16 %v5051
  %v5116 = vunpack.c.l.b16 %v5052
  %v5117 = vunpack.c.l.b16 %v5053
  %v5118 = vunpack.c.l.b16 %v5054
  %v5119 = vunpack.c.l.b16 %v5055
  %v5120 = vunpack.c.l.b16 %v5056
  %v5121 = vunpack.c.l.b16 %v5057
  %v5122 = vunpack.c.l.b16 %v5058
  %v5123 = vunpack.c.l.b16 %v5059
  %v5124 = vunpack.c.l.b16 %v5060
  %v5125 = vunpack.c.l.b16 %v5061
  %v5126 = vunpack.c.l.b16 %v5062
  %v5127 = vpack.c.b16 %v5112, %v5111
  %v5128 = vpack.c.b16 %v5114, %v5113
  %v5129 = vpack.c.b16 %v5116, %v5115
  %v5130 = vpack.c.b16 %v5118, %v5117
  %v5131 = vpack.c.b16 %v5120, %v5119
  %v5132 = vpack.c.b16 %v5122, %v5121
  %v5133 = vpack.c.b16 %v5124, %v5123
  %v5134 = vpack.c.b16 %v5126, %v5125
  %5143 = vmatprep.subr.bf16.mxu0 0
  %5144 = vmatpush1.bf16.msra.mxu0 %v5127
  %5145 = vmatprep.subr.bf16.mxu0 0
  %5146 = vmatpush1.bf16.msra.mxu0 %v5128
  %5147 = vmatprep.subr.bf16.mxu0 0
  %5148 = vmatpush1.bf16.msra.mxu0 %v5129
  %5149 = vmatprep.subr.bf16.mxu0 0
  %5150 = vmatpush1.bf16.msra.mxu0 %v5130
  %5151 = vmatprep.subr.bf16.mxu0 0
  %5152 = vmatpush1.bf16.msra.mxu0 %v5131
  %5153 = vmatprep.subr.bf16.mxu0 0
  %5154 = vmatpush1.bf16.msra.mxu0 %v5132
  %5155 = vmatprep.subr.bf16.mxu0 0
  %5156 = vmatpush1.bf16.msra.mxu0 %v5133
  %5157 = vmatprep.subr.bf16.mxu0 0
  %5158 = vmatpush1.bf16.msra.mxu0 %v5134
  %5159 = vmatprep.subr.bf16.mxu0 0
  %5160 = vmatpush1.bf16.msra.mxu0 0
  %5161 = vmatprep.subr.bf16.mxu0 0
  %5162 = vmatpush1.bf16.msra.mxu0 0
  %5163 = vmatprep.subr.bf16.mxu0 0
  %5164 = vmatpush1.bf16.msra.mxu0 0
  %5165 = vmatprep.subr.bf16.mxu0 0
  %5166 = vmatpush1.bf16.msra.mxu0 0
  %5167 = vmatprep.subr.bf16.mxu0 0
  %5168 = vmatpush1.bf16.msra.mxu0 0
  %5169 = vmatprep.subr.bf16.mxu0 0
  %5170 = vmatpush1.bf16.msra.mxu0 0
  %5171 = vmatprep.subr.bf16.mxu0 0
  %5172 = vmatpush1.bf16.msra.mxu0 0
  %5173 = vmatprep.subr.bf16.mxu0 0
  %5174 = vmatpush1.bf16.msra.mxu0 0
  %5175 = vmatprep.mubr.bf16.mxu0 0
  %5176 = vmatmul.mubr.bf16.gmra.mrb[0].mxu0 %v5079
  %v5177 = vpop.f32.mrb[0].mxu0
  %v5178 = vadd.f32 0.0, %v5177
  %v5179 = vpop.f32.mrb[0].mxu0
  %v5180 = vpop.f32.mrb[0].mxu0
  %v5181 = vadd.f32 0.0, %v5180
  %v5182 = vpop.f32.mrb[0].mxu0
  %5183 = vmatprep.mubr.bf16.mxu0 0
  %5184 = vmatmul.mubr.bf16.gmra.mrb[0].mxu0 %v5080
  %v5185 = vpop.f32.mrb[0].mxu0
  %v5186 = vadd.f32 0.0, %v5185
  %v5187 = vpop.f32.mrb[0].mxu0
  %v5188 = vpop.f32.mrb[0].mxu0
  %v5189 = vadd.f32 0.0, %v5188
  %v5190 = vpop.f32.mrb[0].mxu0
  %5191 = vmatprep.mubr.bf16.mxu0 0
  %5192 = vmatmul.mubr.bf16.gmra.mrb[0].mxu0 %v5081
  %v5193 = vpop.f32.mrb[0].mxu0
  %v5194 = vadd.f32 0.0, %v5193
  %v5195 = vpop.f32.mrb[0].mxu0
  %v5196 = vpop.f32.mrb[0].mxu0
  %v5197 = vadd.f32 0.0, %v5196
  %v5198 = vpop.f32.mrb[0].mxu0
  %5199 = vmatprep.mubr.bf16.mxu0 0
  %5200 = vmatmul.mubr.bf16.gmra.mrb[0].mxu0 %v5082
  %v5201 = vpop.f32.mrb[0].mxu0
  %v5202 = vadd.f32 0.0, %v5201
  %v5203 = vpop.f32.mrb[0].mxu0
  %v5204 = vpop.f32.mrb[0].mxu0
  %v5205 = vadd.f32 0.0, %v5204
  %v5206 = vpop.f32.mrb[0].mxu0
  %5207 = vmatprep.mubr.bf16.mxu0 0
  %5208 = vmatmul.mubr.bf16.gmra.mrb[0].mxu0 %v5083
  %v5209 = vpop.f32.mrb[0].mxu0
  %v5210 = vadd.f32 0.0, %v5209
  %v5211 = vpop.f32.mrb[0].mxu0
  %v5212 = vpop.f32.mrb[0].mxu0
  %v5213 = vadd.f32 0.0, %v5212
  %v5214 = vpop.f32.mrb[0].mxu0
  %5215 = vmatprep.mubr.bf16.mxu0 0
  %5216 = vmatmul.mubr.bf16.gmra.mrb[0].mxu0 %v5084
  %v5217 = vpop.f32.mrb[0].mxu0
  %v5218 = vadd.f32 0.0, %v5217
  %v5219 = vpop.f32.mrb[0].mxu0
  %v5220 = vpop.f32.mrb[0].mxu0
  %v5221 = vadd.f32 0.0, %v5220
  %v5222 = vpop.f32.mrb[0].mxu0
  %5223 = vmatprep.mubr.bf16.mxu0 0
  %5224 = vmatmul.mubr.bf16.gmra.mrb[0].mxu0 %v5085
  %v5225 = vpop.f32.mrb[0].mxu0
  %v5226 = vadd.f32 0.0, %v5225
  %v5227 = vpop.f32.mrb[0].mxu0
  %v5228 = vpop.f32.mrb[0].mxu0
  %v5229 = vadd.f32 0.0, %v5228
  %v5230 = vpop.f32.mrb[0].mxu0
  %5231 = vmatprep.mubr.bf16.mxu0 0
  %5232 = vmatmul.mubr.bf16.gmra.mrb[0].mxu0 %v5086
  %v5233 = vpop.f32.mrb[0].mxu0
  %v5234 = vadd.f32 0.0, %v5233
  %v5235 = vpop.f32.mrb[0].mxu0
  %v5236 = vpop.f32.mrb[0].mxu0
  %v5237 = vadd.f32 0.0, %v5236
  %v5238 = vpop.f32.mrb[0].mxu0
  %5239 = vdwg.mxu0
  %v5240 = vadd.f32 %v4726, %v5178
  %v5241 = vadd.f32 %v4727, %v5181
  %v5242 = vadd.f32 %v4728, %v5186
  %v5243 = vadd.f32 %v4729, %v5189
  %v5244 = vadd.f32 %v4730, %v5194
  %v5245 = vadd.f32 %v4731, %v5197
  %v5246 = vadd.f32 %v4732, %v5202
  %v5247 = vadd.f32 %v4733, %v5205
  %v5248 = vadd.f32 %v4734, %v5210
  %v5249 = vadd.f32 %v4735, %v5213
  %v5250 = vadd.f32 %v4736, %v5218
  %v5251 = vadd.f32 %v4737, %v5221
  %v5252 = vadd.f32 %v4738, %v5226
  %v5253 = vadd.f32 %v4739, %v5229
  %v5254 = vadd.f32 %v4740, %v5234
  %v5255 = vadd.f32 %v4741, %v5237
  %v5256 = vld [vmem:[%s3711] sm:$0xc]
  %v5257 = vld [vmem:[%s3711 + $0x8] sm:$0xc]
  %v5258 = vld [vmem:[%s3711 + $0x10] sm:$0xc]
  %v5259 = vld [vmem:[%s3711 + $0x18] sm:$0xc]
  %v5260 = vld [vmem:[%s3711 + $0x20] sm:$0xc]
  %v5261 = vld [vmem:[%s3711 + $0x28] sm:$0xc]
  %v5262 = vld [vmem:[%s3711 + $0x30] sm:$0xc]
  %v5263 = vld [vmem:[%s3711 + $0x38] sm:$0xc]
  %v5264 = vld [vmem:[%s3711 + $0x60] sm:$0xc]
  %v5265 = vld [vmem:[%s3711 + $0x68] sm:$0xc]
  %v5266 = vld [vmem:[%s3711 + $0x70] sm:$0xc]
  %v5267 = vld [vmem:[%s3711 + $0x78] sm:$0xc]
  %v5268 = vld [vmem:[%s3711 + $0x80] sm:$0xc]
  %v5269 = vld [vmem:[%s3711 + $0x88] sm:$0xc]
  %v5270 = vld [vmem:[%s3711 + $0x90] sm:$0xc]
  %v5271 = vld [vmem:[%s3711 + $0x98] sm:$0xc]
  %v5304 = vrot.slane %v5256, 6
  %v5305 = vrot.slane %v5304, 4
  %v5306 = vrot.slane %v4742, 6
  %v5307 = vsel %vm1569, %v5305, %v5306
  %v5308 = vrot.slane %v5257, 6
  %v5309 = vrot.slane %v5308, 4
  %v5310 = vrot.slane %v4743, 6
  %v5311 = vsel %vm1569, %v5309, %v5310
  %v5312 = vrot.slane %v5258, 6
  %v5313 = vrot.slane %v5312, 4
  %v5314 = vrot.slane %v4744, 6
  %v5315 = vsel %vm1569, %v5313, %v5314
  %v5316 = vrot.slane %v5259, 6
  %v5317 = vrot.slane %v5316, 4
  %v5318 = vrot.slane %v4745, 6
  %v5319 = vsel %vm1569, %v5317, %v5318
  %v5320 = vrot.slane %v5260, 6
  %v5321 = vrot.slane %v5320, 4
  %v5322 = vrot.slane %v4746, 6
  %v5323 = vsel %vm1569, %v5321, %v5322
  %v5324 = vrot.slane %v5261, 6
  %v5325 = vrot.slane %v5324, 4
  %v5326 = vrot.slane %v4747, 6
  %v5327 = vsel %vm1569, %v5325, %v5326
  %v5328 = vrot.slane %v5262, 6
  %v5329 = vrot.slane %v5328, 4
  %v5330 = vrot.slane %v4748, 6
  %v5331 = vsel %vm1569, %v5329, %v5330
  %v5332 = vrot.slane %v5263, 6
  %v5333 = vrot.slane %v5332, 4
  %v5334 = vrot.slane %v4749, 6
  %v5335 = vsel %vm1569, %v5333, %v5334
  %v5336 = vrot.slane %v5264, 6
  %v5337 = vrot.slane %v5336, 4
  %v5338 = vrot.slane %v4750, 6
  %v5339 = vsel %vm1569, %v5337, %v5338
  %v5340 = vrot.slane %v5265, 6
  %v5341 = vrot.slane %v5340, 4
  %v5342 = vrot.slane %v4751, 6
  %v5343 = vsel %vm1569, %v5341, %v5342
  %v5344 = vrot.slane %v5266, 6
  %v5345 = vrot.slane %v5344, 4
  %v5346 = vrot.slane %v4752, 6
  %v5347 = vsel %vm1569, %v5345, %v5346
  %v5348 = vrot.slane %v5267, 6
  %v5349 = vrot.slane %v5348, 4
  %v5350 = vrot.slane %v4753, 6
  %v5351 = vsel %vm1569, %v5349, %v5350
  %v5352 = vrot.slane %v5268, 6
  %v5353 = vrot.slane %v5352, 4
  %v5354 = vrot.slane %v4754, 6
  %v5355 = vsel %vm1569, %v5353, %v5354
  %v5356 = vrot.slane %v5269, 6
  %v5357 = vrot.slane %v5356, 4
  %v5358 = vrot.slane %v4755, 6
  %v5359 = vsel %vm1569, %v5357, %v5358
  %v5360 = vrot.slane %v5270, 6
  %v5361 = vrot.slane %v5360, 4
  %v5362 = vrot.slane %v4756, 6
  %v5363 = vsel %vm1569, %v5361, %v5362
  %v5364 = vrot.slane %v5271, 6
  %v5365 = vrot.slane %v5364, 4
  %v5366 = vrot.slane %v4757, 6
  %v5367 = vsel %vm1569, %v5365, %v5366
  %s5368 = scalar_lea.vmem %s1, 896
  %v5369 = vld [vmem:[%s5368] sm:$0xf]
  %v5370 = vld [vmem:[%s5368 + $0x4] sm:$0xf]
  %v5371 = vld [vmem:[%s5368 + $0x8] sm:$0xf]
  %v5372 = vld [vmem:[%s5368 + $0xc] sm:$0xf]
  %v5373 = vld [vmem:[%s5368 + $0x10] sm:$0xf]
  %v5374 = vld [vmem:[%s5368 + $0x14] sm:$0xf]
  %v5375 = vld [vmem:[%s5368 + $0x18] sm:$0xf]
  %v5376 = vld [vmem:[%s5368 + $0x1c] sm:$0xf]
  %v5377 = vld [vmem:[%s5368 + $0x20] sm:$0xf]
  %v5378 = vld [vmem:[%s5368 + $0x24] sm:$0xf]
  %v5379 = vld [vmem:[%s5368 + $0x28] sm:$0xf]
  %v5380 = vld [vmem:[%s5368 + $0x2c] sm:$0xf]
  %v5381 = vld [vmem:[%s5368 + $0x30] sm:$0xf]
  %v5382 = vld [vmem:[%s5368 + $0x34] sm:$0xf]
  %v5383 = vld [vmem:[%s5368 + $0x38] sm:$0xf]
  %v5384 = vld [vmem:[%s5368 + $0x3c] sm:$0xf]
  %v5385 = vunpack.c.l.b16 %v5307
  %v5386 = vunpack.c.l.b16 %v5311
  %v5387 = vunpack.c.l.b16 %v5315
  %v5388 = vunpack.c.l.b16 %v5319
  %v5389 = vunpack.c.l.b16 %v5323
  %v5390 = vunpack.c.l.b16 %v5327
  %v5391 = vunpack.c.l.b16 %v5331
  %v5392 = vunpack.c.l.b16 %v5335
  %v5393 = vunpack.c.l.b16 %v5339
  %v5394 = vunpack.c.l.b16 %v5343
  %v5395 = vunpack.c.l.b16 %v5347
  %v5396 = vunpack.c.l.b16 %v5351
  %v5397 = vunpack.c.l.b16 %v5355
  %v5398 = vunpack.c.l.b16 %v5359
  %v5399 = vunpack.c.l.b16 %v5363
  %v5400 = vunpack.c.l.b16 %v5367
  %v5401 = vpack.c.b16 %v5386, %v5385
  %v5402 = vpack.c.b16 %v5388, %v5387
  %v5403 = vpack.c.b16 %v5390, %v5389
  %v5404 = vpack.c.b16 %v5392, %v5391
  %v5405 = vpack.c.b16 %v5394, %v5393
  %v5406 = vpack.c.b16 %v5396, %v5395
  %v5407 = vpack.c.b16 %v5398, %v5397
  %v5408 = vpack.c.b16 %v5400, %v5399
  %v5433 = vunpack.c.l.b16 %v5369
  %v5434 = vunpack.c.l.b16 %v5370
  %v5435 = vunpack.c.l.b16 %v5371
  %v5436 = vunpack.c.l.b16 %v5372
  %v5437 = vunpack.c.l.b16 %v5373
  %v5438 = vunpack.c.l.b16 %v5374
  %v5439 = vunpack.c.l.b16 %v5375
  %v5440 = vunpack.c.l.b16 %v5376
  %v5441 = vunpack.c.l.b16 %v5377
  %v5442 = vunpack.c.l.b16 %v5378
  %v5443 = vunpack.c.l.b16 %v5379
  %v5444 = vunpack.c.l.b16 %v5380
  %v5445 = vunpack.c.l.b16 %v5381
  %v5446 = vunpack.c.l.b16 %v5382
  %v5447 = vunpack.c.l.b16 %v5383
  %v5448 = vunpack.c.l.b16 %v5384
  %v5449 = vpack.c.b16 %v5434, %v5433
  %v5450 = vpack.c.b16 %v5436, %v5435
  %v5451 = vpack.c.b16 %v5438, %v5437
  %v5452 = vpack.c.b16 %v5440, %v5439
  %v5453 = vpack.c.b16 %v5442, %v5441
  %v5454 = vpack.c.b16 %v5444, %v5443
  %v5455 = vpack.c.b16 %v5446, %v5445
  %v5456 = vpack.c.b16 %v5448, %v5447
  %5465 = vmatprep.subr.bf16.mxu0 0
  %5466 = vmatpush1.bf16.msra.mxu0 %v5449
  %5467 = vmatprep.subr.bf16.mxu0 0
  %5468 = vmatpush1.bf16.msra.mxu0 %v5450
  %5469 = vmatprep.subr.bf16.mxu0 0
  %5470 = vmatpush1.bf16.msra.mxu0 %v5451
  %5471 = vmatprep.subr.bf16.mxu0 0
  %5472 = vmatpush1.bf16.msra.mxu0 %v5452
  %5473 = vmatprep.subr.bf16.mxu0 0
  %5474 = vmatpush1.bf16.msra.mxu0 %v5453
  %5475 = vmatprep.subr.bf16.mxu0 0
  %5476 = vmatpush1.bf16.msra.mxu0 %v5454
  %5477 = vmatprep.subr.bf16.mxu0 0
  %5478 = vmatpush1.bf16.msra.mxu0 %v5455
  %5479 = vmatprep.subr.bf16.mxu0 0
  %5480 = vmatpush1.bf16.msra.mxu0 %v5456
  %5481 = vmatprep.subr.bf16.mxu0 0
  %5482 = vmatpush1.bf16.msra.mxu0 0
  %5483 = vmatprep.subr.bf16.mxu0 0
  %5484 = vmatpush1.bf16.msra.mxu0 0
  %5485 = vmatprep.subr.bf16.mxu0 0
  %5486 = vmatpush1.bf16.msra.mxu0 0
  %5487 = vmatprep.subr.bf16.mxu0 0
  %5488 = vmatpush1.bf16.msra.mxu0 0
  %5489 = vmatprep.subr.bf16.mxu0 0
  %5490 = vmatpush1.bf16.msra.mxu0 0
  %5491 = vmatprep.subr.bf16.mxu0 0
  %5492 = vmatpush1.bf16.msra.mxu0 0
  %5493 = vmatprep.subr.bf16.mxu0 0
  %5494 = vmatpush1.bf16.msra.mxu0 0
  %5495 = vmatprep.subr.bf16.mxu0 0
  %5496 = vmatpush1.bf16.msra.mxu0 0
  %5497 = vmatprep.mubr.bf16.mxu0 0
  %5498 = vmatmul.mubr.bf16.gmra.mrb[0].mxu0 %v5401
  %v5499 = vpop.f32.mrb[0].mxu0
  %v5500 = vadd.f32 0.0, %v5499
  %v5501 = vpop.f32.mrb[0].mxu0
  %v5502 = vpop.f32.mrb[0].mxu0
  %v5503 = vadd.f32 0.0, %v5502
  %v5504 = vpop.f32.mrb[0].mxu0
  %5505 = vmatprep.mubr.bf16.mxu0 0
  %5506 = vmatmul.mubr.bf16.gmra.mrb[0].mxu0 %v5402
  %v5507 = vpop.f32.mrb[0].mxu0
  %v5508 = vadd.f32 0.0, %v5507
  %v5509 = vpop.f32.mrb[0].mxu0
  %v5510 = vpop.f32.mrb[0].mxu0
  %v5511 = vadd.f32 0.0, %v5510
  %v5512 = vpop.f32.mrb[0].mxu0
  %5513 = vmatprep.mubr.bf16.mxu0 0
  %5514 = vmatmul.mubr.bf16.gmra.mrb[0].mxu0 %v5403
  %v5515 = vpop.f32.mrb[0].mxu0
  %v5516 = vadd.f32 0.0, %v5515
  %v5517 = vpop.f32.mrb[0].mxu0
  %v5518 = vpop.f32.mrb[0].mxu0
  %v5519 = vadd.f32 0.0, %v5518
  %v5520 = vpop.f32.mrb[0].mxu0
  %5521 = vmatprep.mubr.bf16.mxu0 0
  %5522 = vmatmul.mubr.bf16.gmra.mrb[0].mxu0 %v5404
  %v5523 = vpop.f32.mrb[0].mxu0
  %v5524 = vadd.f32 0.0, %v5523
  %v5525 = vpop.f32.mrb[0].mxu0
  %v5526 = vpop.f32.mrb[0].mxu0
  %v5527 = vadd.f32 0.0, %v5526
  %v5528 = vpop.f32.mrb[0].mxu0
  %5529 = vmatprep.mubr.bf16.mxu0 0
  %5530 = vmatmul.mubr.bf16.gmra.mrb[0].mxu0 %v5405
  %v5531 = vpop.f32.mrb[0].mxu0
  %v5532 = vadd.f32 0.0, %v5531
  %v5533 = vpop.f32.mrb[0].mxu0
  %v5534 = vpop.f32.mrb[0].mxu0
  %v5535 = vadd.f32 0.0, %v5534
  %v5536 = vpop.f32.mrb[0].mxu0
  %5537 = vmatprep.mubr.bf16.mxu0 0
  %5538 = vmatmul.mubr.bf16.gmra.mrb[0].mxu0 %v5406
  %v5539 = vpop.f32.mrb[0].mxu0
  %v5540 = vadd.f32 0.0, %v5539
  %v5541 = vpop.f32.mrb[0].mxu0
  %v5542 = vpop.f32.mrb[0].mxu0
  %v5543 = vadd.f32 0.0, %v5542
  %v5544 = vpop.f32.mrb[0].mxu0
  %5545 = vmatprep.mubr.bf16.mxu0 0
  %5546 = vmatmul.mubr.bf16.gmra.mrb[0].mxu0 %v5407
  %v5547 = vpop.f32.mrb[0].mxu0
  %v5548 = vadd.f32 0.0, %v5547
  %v5549 = vpop.f32.mrb[0].mxu0
  %v5550 = vpop.f32.mrb[0].mxu0
  %v5551 = vadd.f32 0.0, %v5550
  %v5552 = vpop.f32.mrb[0].mxu0
  %5553 = vmatprep.mubr.bf16.mxu0 0
  %5554 = vmatmul.mubr.bf16.gmra.mrb[0].mxu0 %v5408
  %v5555 = vpop.f32.mrb[0].mxu0
  %v5556 = vadd.f32 0.0, %v5555
  %v5557 = vpop.f32.mrb[0].mxu0
  %v5558 = vpop.f32.mrb[0].mxu0
  %v5559 = vadd.f32 0.0, %v5558
  %v5560 = vpop.f32.mrb[0].mxu0
  %5561 = vdwg.mxu0
  %v5562 = vadd.f32 %v5240, %v5500
  %v5563 = vadd.f32 %v5241, %v5503
  %v5564 = vadd.f32 %v5242, %v5508
  %v5565 = vadd.f32 %v5243, %v5511
  %v5566 = vadd.f32 %v5244, %v5516
  %v5567 = vadd.f32 %v5245, %v5519
  %v5568 = vadd.f32 %v5246, %v5524
  %v5569 = vadd.f32 %v5247, %v5527
  %v5570 = vadd.f32 %v5248, %v5532
  %v5571 = vadd.f32 %v5249, %v5535
  %v5572 = vadd.f32 %v5250, %v5540
  %v5573 = vadd.f32 %v5251, %v5543
  %v5574 = vadd.f32 %v5252, %v5548
  %v5575 = vadd.f32 %v5253, %v5551
  %v5576 = vadd.f32 %v5254, %v5556
  %v5577 = vadd.f32 %v5255, %v5559
  %s5578 = scalar_lea.vmem %s0, 24
  %v5579 = vld [vmem:[%s5578] sm:$0xf]
  %v5580 = vld [vmem:[%s5578 + $0x8] sm:$0xf]
  %v5581 = vld [vmem:[%s5578 + $0x10] sm:$0xf]
  %v5582 = vld [vmem:[%s5578 + $0x18] sm:$0xf]
  %v5583 = vld [vmem:[%s5578 + $0x20] sm:$0xf]
  %v5584 = vld [vmem:[%s5578 + $0x28] sm:$0xf]
  %v5585 = vld [vmem:[%s5578 + $0x30] sm:$0xf]
  %v5586 = vld [vmem:[%s5578 + $0x38] sm:$0xf]
  %v5587 = vld [vmem:[%s5578 + $0x60] sm:$0xf]
  %v5588 = vld [vmem:[%s5578 + $0x68] sm:$0xf]
  %v5589 = vld [vmem:[%s5578 + $0x70] sm:$0xf]
  %v5590 = vld [vmem:[%s5578 + $0x78] sm:$0xf]
  %v5591 = vld [vmem:[%s5578 + $0x80] sm:$0xf]
  %v5592 = vld [vmem:[%s5578 + $0x88] sm:$0xf]
  %v5593 = vld [vmem:[%s5578 + $0x90] sm:$0xf]
  %v5594 = vld [vmem:[%s5578 + $0x98] sm:$0xf]
  %s5595 = scalar_lea.vmem %s1, 960
  %v5596 = vld [vmem:[%s5595] sm:$0xf]
  %v5597 = vld [vmem:[%s5595 + $0x4] sm:$0xf]
  %v5598 = vld [vmem:[%s5595 + $0x8] sm:$0xf]
  %v5599 = vld [vmem:[%s5595 + $0xc] sm:$0xf]
  %v5600 = vld [vmem:[%s5595 + $0x10] sm:$0xf]
  %v5601 = vld [vmem:[%s5595 + $0x14] sm:$0xf]
  %v5602 = vld [vmem:[%s5595 + $0x18] sm:$0xf]
  %v5603 = vld [vmem:[%s5595 + $0x1c] sm:$0xf]
  %v5604 = vld [vmem:[%s5595 + $0x20] sm:$0xf]
  %v5605 = vld [vmem:[%s5595 + $0x24] sm:$0xf]
  %v5606 = vld [vmem:[%s5595 + $0x28] sm:$0xf]
  %v5607 = vld [vmem:[%s5595 + $0x2c] sm:$0xf]
  %v5608 = vld [vmem:[%s5595 + $0x30] sm:$0xf]
  %v5609 = vld [vmem:[%s5595 + $0x34] sm:$0xf]
  %v5610 = vld [vmem:[%s5595 + $0x38] sm:$0xf]
  %v5611 = vld [vmem:[%s5595 + $0x3c] sm:$0xf]
  %v5628 = vunpack.c.l.b16 %v5579
  %v5629 = vunpack.c.l.b16 %v5580
  %v5630 = vunpack.c.l.b16 %v5581
  %v5631 = vunpack.c.l.b16 %v5582
  %v5632 = vunpack.c.l.b16 %v5583
  %v5633 = vunpack.c.l.b16 %v5584
  %v5634 = vunpack.c.l.b16 %v5585
  %v5635 = vunpack.c.l.b16 %v5586
  %v5636 = vunpack.c.l.b16 %v5587
  %v5637 = vunpack.c.l.b16 %v5588
  %v5638 = vunpack.c.l.b16 %v5589
  %v5639 = vunpack.c.l.b16 %v5590
  %v5640 = vunpack.c.l.b16 %v5591
  %v5641 = vunpack.c.l.b16 %v5592
  %v5642 = vunpack.c.l.b16 %v5593
  %v5643 = vunpack.c.l.b16 %v5594
  %v5644 = vpack.c.b16 %v5629, %v5628
  %v5645 = vpack.c.b16 %v5631, %v5630
  %v5646 = vpack.c.b16 %v5633, %v5632
  %v5647 = vpack.c.b16 %v5635, %v5634
  %v5648 = vpack.c.b16 %v5637, %v5636
  %v5649 = vpack.c.b16 %v5639, %v5638
  %v5650 = vpack.c.b16 %v5641, %v5640
  %v5651 = vpack.c.b16 %v5643, %v5642
  %v5676 = vunpack.c.l.b16 %v5596
  %v5677 = vunpack.c.l.b16 %v5597
  %v5678 = vunpack.c.l.b16 %v5598
  %v5679 = vunpack.c.l.b16 %v5599
  %v5680 = vunpack.c.l.b16 %v5600
  %v5681 = vunpack.c.l.b16 %v5601
  %v5682 = vunpack.c.l.b16 %v5602
  %v5683 = vunpack.c.l.b16 %v5603
  %v5684 = vunpack.c.l.b16 %v5604
  %v5685 = vunpack.c.l.b16 %v5605
  %v5686 = vunpack.c.l.b16 %v5606
  %v5687 = vunpack.c.l.b16 %v5607
  %v5688 = vunpack.c.l.b16 %v5608
  %v5689 = vunpack.c.l.b16 %v5609
  %v5690 = vunpack.c.l.b16 %v5610
  %v5691 = vunpack.c.l.b16 %v5611
  %v5692 = vpack.c.b16 %v5677, %v5676
  %v5693 = vpack.c.b16 %v5679, %v5678
  %v5694 = vpack.c.b16 %v5681, %v5680
  %v5695 = vpack.c.b16 %v5683, %v5682
  %v5696 = vpack.c.b16 %v5685, %v5684
  %v5697 = vpack.c.b16 %v5687, %v5686
  %v5698 = vpack.c.b16 %v5689, %v5688
  %v5699 = vpack.c.b16 %v5691, %v5690
  %5708 = vmatprep.subr.bf16.mxu0 0
  %5709 = vmatpush1.bf16.msra.mxu0 %v5692
  %5710 = vmatprep.subr.bf16.mxu0 0
  %5711 = vmatpush1.bf16.msra.mxu0 %v5693
  %5712 = vmatprep.subr.bf16.mxu0 0
  %5713 = vmatpush1.bf16.msra.mxu0 %v5694
  %5714 = vmatprep.subr.bf16.mxu0 0
  %5715 = vmatpush1.bf16.msra.mxu0 %v5695
  %5716 = vmatprep.subr.bf16.mxu0 0
  %5717 = vmatpush1.bf16.msra.mxu0 %v5696
  %5718 = vmatprep.subr.bf16.mxu0 0
  %5719 = vmatpush1.bf16.msra.mxu0 %v5697
  %5720 = vmatprep.subr.bf16.mxu0 0
  %5721 = vmatpush1.bf16.msra.mxu0 %v5698
  %5722 = vmatprep.subr.bf16.mxu0 0
  %5723 = vmatpush1.bf16.msra.mxu0 %v5699
  %5724 = vmatprep.subr.bf16.mxu0 0
  %5725 = vmatpush1.bf16.msra.mxu0 0
  %5726 = vmatprep.subr.bf16.mxu0 0
  %5727 = vmatpush1.bf16.msra.mxu0 0
  %5728 = vmatprep.subr.bf16.mxu0 0
  %5729 = vmatpush1.bf16.msra.mxu0 0
  %5730 = vmatprep.subr.bf16.mxu0 0
  %5731 = vmatpush1.bf16.msra.mxu0 0
  %5732 = vmatprep.subr.bf16.mxu0 0
  %5733 = vmatpush1.bf16.msra.mxu0 0
  %5734 = vmatprep.subr.bf16.mxu0 0
  %5735 = vmatpush1.bf16.msra.mxu0 0
  %5736 = vmatprep.subr.bf16.mxu0 0
  %5737 = vmatpush1.bf16.msra.mxu0 0
  %5738 = vmatprep.subr.bf16.mxu0 0
  %5739 = vmatpush1.bf16.msra.mxu0 0
  %5740 = vmatprep.mubr.bf16.mxu0 0
  %5741 = vmatmul.mubr.bf16.gmra.mrb[0].mxu0 %v5644
  %v5742 = vpop.f32.mrb[0].mxu0
  %v5743 = vadd.f32 0.0, %v5742
  %v5744 = vpop.f32.mrb[0].mxu0
  %v5745 = vpop.f32.mrb[0].mxu0
  %v5746 = vadd.f32 0.0, %v5745
  %v5747 = vpop.f32.mrb[0].mxu0
  %5748 = vmatprep.mubr.bf16.mxu0 0
  %5749 = vmatmul.mubr.bf16.gmra.mrb[0].mxu0 %v5645
  %v5750 = vpop.f32.mrb[0].mxu0
  %v5751 = vadd.f32 0.0, %v5750
  %v5752 = vpop.f32.mrb[0].mxu0
  %v5753 = vpop.f32.mrb[0].mxu0
  %v5754 = vadd.f32 0.0, %v5753
  %v5755 = vpop.f32.mrb[0].mxu0
  %5756 = vmatprep.mubr.bf16.mxu0 0
  %5757 = vmatmul.mubr.bf16.gmra.mrb[0].mxu0 %v5646
  %v5758 = vpop.f32.mrb[0].mxu0
  %v5759 = vadd.f32 0.0, %v5758
  %v5760 = vpop.f32.mrb[0].mxu0
  %v5761 = vpop.f32.mrb[0].mxu0
  %v5762 = vadd.f32 0.0, %v5761
  %v5763 = vpop.f32.mrb[0].mxu0
  %5764 = vmatprep.mubr.bf16.mxu0 0
  %5765 = vmatmul.mubr.bf16.gmra.mrb[0].mxu0 %v5647
  %v5766 = vpop.f32.mrb[0].mxu0
  %v5767 = vadd.f32 0.0, %v5766
  %v5768 = vpop.f32.mrb[0].mxu0
  %v5769 = vpop.f32.mrb[0].mxu0
  %v5770 = vadd.f32 0.0, %v5769
  %v5771 = vpop.f32.mrb[0].mxu0
  %5772 = vmatprep.mubr.bf16.mxu0 0
  %5773 = vmatmul.mubr.bf16.gmra.mrb[0].mxu0 %v5648
  %v5774 = vpop.f32.mrb[0].mxu0
  %v5775 = vadd.f32 0.0, %v5774
  %v5776 = vpop.f32.mrb[0].mxu0
  %v5777 = vpop.f32.mrb[0].mxu0
  %v5778 = vadd.f32 0.0, %v5777
  %v5779 = vpop.f32.mrb[0].mxu0
  %5780 = vmatprep.mubr.bf16.mxu0 0
  %5781 = vmatmul.mubr.bf16.gmra.mrb[0].mxu0 %v5649
  %v5782 = vpop.f32.mrb[0].mxu0
  %v5783 = vadd.f32 0.0, %v5782
  %v5784 = vpop.f32.mrb[0].mxu0
  %v5785 = vpop.f32.mrb[0].mxu0
  %v5786 = vadd.f32 0.0, %v5785
  %v5787 = vpop.f32.mrb[0].mxu0
  %5788 = vmatprep.mubr.bf16.mxu0 0
  %5789 = vmatmul.mubr.bf16.gmra.mrb[0].mxu0 %v5650
  %v5790 = vpop.f32.mrb[0].mxu0
  %v5791 = vadd.f32 0.0, %v5790
  %v5792 = vpop.f32.mrb[0].mxu0
  %v5793 = vpop.f32.mrb[0].mxu0
  %v5794 = vadd.f32 0.0, %v5793
  %v5795 = vpop.f32.mrb[0].mxu0
  %5796 = vmatprep.mubr.bf16.mxu0 0
  %5797 = vmatmul.mubr.bf16.gmra.mrb[0].mxu0 %v5651
  %v5798 = vpop.f32.mrb[0].mxu0
  %v5799 = vadd.f32 0.0, %v5798
  %v5800 = vpop.f32.mrb[0].mxu0
  %v5801 = vpop.f32.mrb[0].mxu0
  %v5802 = vadd.f32 0.0, %v5801
  %v5803 = vpop.f32.mrb[0].mxu0
  %5804 = vdwg.mxu0
  %v5805 = vadd.f32 %v5562, %v5743
  %v5806 = vadd.f32 %v5563, %v5746
  %v5807 = vadd.f32 %v5564, %v5751
  %v5808 = vadd.f32 %v5565, %v5754
  %v5809 = vadd.f32 %v5566, %v5759
  %v5810 = vadd.f32 %v5567, %v5762
  %v5811 = vadd.f32 %v5568, %v5767
  %v5812 = vadd.f32 %v5569, %v5770
  %v5813 = vadd.f32 %v5570, %v5775
  %v5814 = vadd.f32 %v5571, %v5778
  %v5815 = vadd.f32 %v5572, %v5783
  %v5816 = vadd.f32 %v5573, %v5786
  %v5817 = vadd.f32 %v5574, %v5791
  %v5818 = vadd.f32 %v5575, %v5794
  %v5819 = vadd.f32 %v5576, %v5799
  %v5820 = vadd.f32 %v5577, %v5802
  %v5821 = vld [vmem:[%s5578] sm:$0xf]
  %v5822 = vld [vmem:[%s5578 + $0x4] sm:$0x1]
  %v5823 = vld [vmem:[%s5578 + $0x8] sm:$0xf]
  %v5824 = vld [vmem:[%s5578 + $0xc] sm:$0x1]
  %v5825 = vld [vmem:[%s5578 + $0x10] sm:$0xf]
  %v5826 = vld [vmem:[%s5578 + $0x14] sm:$0x1]
  %v5827 = vld [vmem:[%s5578 + $0x18] sm:$0xf]
  %v5828 = vld [vmem:[%s5578 + $0x1c] sm:$0x1]
  %v5829 = vld [vmem:[%s5578 + $0x20] sm:$0xf]
  %v5830 = vld [vmem:[%s5578 + $0x24] sm:$0x1]
  %v5831 = vld [vmem:[%s5578 + $0x28] sm:$0xf]
  %v5832 = vld [vmem:[%s5578 + $0x2c] sm:$0x1]
  %v5833 = vld [vmem:[%s5578 + $0x30] sm:$0xf]
  %v5834 = vld [vmem:[%s5578 + $0x34] sm:$0x1]
  %v5835 = vld [vmem:[%s5578 + $0x38] sm:$0xf]
  %v5836 = vld [vmem:[%s5578 + $0x3c] sm:$0x1]
  %v5837 = vld [vmem:[%s5578 + $0x60] sm:$0xf]
  %v5838 = vld [vmem:[%s5578 + $0x64] sm:$0x1]
  %v5839 = vld [vmem:[%s5578 + $0x68] sm:$0xf]
  %v5840 = vld [vmem:[%s5578 + $0x6c] sm:$0x1]
  %v5841 = vld [vmem:[%s5578 + $0x70] sm:$0xf]
  %v5842 = vld [vmem:[%s5578 + $0x74] sm:$0x1]
  %v5843 = vld [vmem:[%s5578 + $0x78] sm:$0xf]
  %v5844 = vld [vmem:[%s5578 + $0x7c] sm:$0x1]
  %v5845 = vld [vmem:[%s5578 + $0x80] sm:$0xf]
  %v5846 = vld [vmem:[%s5578 + $0x84] sm:$0x1]
  %v5847 = vld [vmem:[%s5578 + $0x88] sm:$0xf]
  %v5848 = vld [vmem:[%s5578 + $0x8c] sm:$0x1]
  %v5849 = vld [vmem:[%s5578 + $0x90] sm:$0xf]
  %v5850 = vld [vmem:[%s5578 + $0x94] sm:$0x1]
  %v5851 = vld [vmem:[%s5578 + $0x98] sm:$0xf]
  %v5852 = vld [vmem:[%s5578 + $0x9c] sm:$0x1]
  %v5854 = vshrl.u32 %v5821, 16
  %v5856 = vrot.slane %v5854, 4
  %v5857 = vshll.u32 %v5821, 16
  %v5859 = vrot.slane %v5857, 5
  %v5860 = vor.u32 %v5856, %v5859
  %v5861 = vrot.slane %v5860, 4
  %v5863 = vshll.u32 %v5822, 16
  %v5865 = vrot.slane %v5863, 5
  %v5866 = vsel %vm65, %v5861, %v5865
  %v5868 = vshrl.u32 %v5823, 16
  %v5870 = vrot.slane %v5868, 4
  %v5871 = vshll.u32 %v5823, 16
  %v5873 = vrot.slane %v5871, 5
  %v5874 = vor.u32 %v5870, %v5873
  %v5875 = vrot.slane %v5874, 4
  %v5877 = vshll.u32 %v5824, 16
  %v5879 = vrot.slane %v5877, 5
  %v5880 = vsel %vm65, %v5875, %v5879
  %v5882 = vshrl.u32 %v5825, 16
  %v5884 = vrot.slane %v5882, 4
  %v5885 = vshll.u32 %v5825, 16
  %v5887 = vrot.slane %v5885, 5
  %v5888 = vor.u32 %v5884, %v5887
  %v5889 = vrot.slane %v5888, 4
  %v5891 = vshll.u32 %v5826, 16
  %v5893 = vrot.slane %v5891, 5
  %v5894 = vsel %vm65, %v5889, %v5893
  %v5896 = vshrl.u32 %v5827, 16
  %v5898 = vrot.slane %v5896, 4
  %v5899 = vshll.u32 %v5827, 16
  %v5901 = vrot.slane %v5899, 5
  %v5902 = vor.u32 %v5898, %v5901
  %v5903 = vrot.slane %v5902, 4
  %v5905 = vshll.u32 %v5828, 16
  %v5907 = vrot.slane %v5905, 5
  %v5908 = vsel %vm65, %v5903, %v5907
  %v5910 = vshrl.u32 %v5829, 16
  %v5912 = vrot.slane %v5910, 4
  %v5913 = vshll.u32 %v5829, 16
  %v5915 = vrot.slane %v5913, 5
  %v5916 = vor.u32 %v5912, %v5915
  %v5917 = vrot.slane %v5916, 4
  %v5919 = vshll.u32 %v5830, 16
  %v5921 = vrot.slane %v5919, 5
  %v5922 = vsel %vm65, %v5917, %v5921
  %v5924 = vshrl.u32 %v5831, 16
  %v5926 = vrot.slane %v5924, 4
  %v5927 = vshll.u32 %v5831, 16
  %v5929 = vrot.slane %v5927, 5
  %v5930 = vor.u32 %v5926, %v5929
  %v5931 = vrot.slane %v5930, 4
  %v5933 = vshll.u32 %v5832, 16
  %v5935 = vrot.slane %v5933, 5
  %v5936 = vsel %vm65, %v5931, %v5935
  %v5938 = vshrl.u32 %v5833, 16
  %v5940 = vrot.slane %v5938, 4
  %v5941 = vshll.u32 %v5833, 16
  %v5943 = vrot.slane %v5941, 5
  %v5944 = vor.u32 %v5940, %v5943
  %v5945 = vrot.slane %v5944, 4
  %v5947 = vshll.u32 %v5834, 16
  %v5949 = vrot.slane %v5947, 5
  %v5950 = vsel %vm65, %v5945, %v5949
  %v5952 = vshrl.u32 %v5835, 16
  %v5954 = vrot.slane %v5952, 4
  %v5955 = vshll.u32 %v5835, 16
  %v5957 = vrot.slane %v5955, 5
  %v5958 = vor.u32 %v5954, %v5957
  %v5959 = vrot.slane %v5958, 4
  %v5961 = vshll.u32 %v5836, 16
  %v5963 = vrot.slane %v5961, 5
  %v5964 = vsel %vm65, %v5959, %v5963
  %v5966 = vshrl.u32 %v5837, 16
  %v5968 = vrot.slane %v5966, 4
  %v5969 = vshll.u32 %v5837, 16
  %v5971 = vrot.slane %v5969, 5
  %v5972 = vor.u32 %v5968, %v5971
  %v5973 = vrot.slane %v5972, 4
  %v5975 = vshll.u32 %v5838, 16
  %v5977 = vrot.slane %v5975, 5
  %v5978 = vsel %vm65, %v5973, %v5977
  %v5980 = vshrl.u32 %v5839, 16
  %v5982 = vrot.slane %v5980, 4
  %v5983 = vshll.u32 %v5839, 16
  %v5985 = vrot.slane %v5983, 5
  %v5986 = vor.u32 %v5982, %v5985
  %v5987 = vrot.slane %v5986, 4
  %v5989 = vshll.u32 %v5840, 16
  %v5991 = vrot.slane %v5989, 5
  %v5992 = vsel %vm65, %v5987, %v5991
  %v5994 = vshrl.u32 %v5841, 16
  %v5996 = vrot.slane %v5994, 4
  %v5997 = vshll.u32 %v5841, 16
  %v5999 = vrot.slane %v5997, 5
  %v6000 = vor.u32 %v5996, %v5999
  %v6001 = vrot.slane %v6000, 4
  %v6003 = vshll.u32 %v5842, 16
  %v6005 = vrot.slane %v6003, 5
  %v6006 = vsel %vm65, %v6001, %v6005
  %v6008 = vshrl.u32 %v5843, 16
  %v6010 = vrot.slane %v6008, 4
  %v6011 = vshll.u32 %v5843, 16
  %v6013 = vrot.slane %v6011, 5
  %v6014 = vor.u32 %v6010, %v6013
  %v6015 = vrot.slane %v6014, 4
  %v6017 = vshll.u32 %v5844, 16
  %v6019 = vrot.slane %v6017, 5
  %v6020 = vsel %vm65, %v6015, %v6019
  %v6022 = vshrl.u32 %v5845, 16
  %v6024 = vrot.slane %v6022, 4
  %v6025 = vshll.u32 %v5845, 16
  %v6027 = vrot.slane %v6025, 5
  %v6028 = vor.u32 %v6024, %v6027
  %v6029 = vrot.slane %v6028, 4
  %v6031 = vshll.u32 %v5846, 16
  %v6033 = vrot.slane %v6031, 5
  %v6034 = vsel %vm65, %v6029, %v6033
  %v6036 = vshrl.u32 %v5847, 16
  %v6038 = vrot.slane %v6036, 4
  %v6039 = vshll.u32 %v5847, 16
  %v6041 = vrot.slane %v6039, 5
  %v6042 = vor.u32 %v6038, %v6041
  %v6043 = vrot.slane %v6042, 4
  %v6045 = vshll.u32 %v5848, 16
  %v6047 = vrot.slane %v6045, 5
  %v6048 = vsel %vm65, %v6043, %v6047
  %v6050 = vshrl.u32 %v5849, 16
  %v6052 = vrot.slane %v6050, 4
  %v6053 = vshll.u32 %v5849, 16
  %v6055 = vrot.slane %v6053, 5
  %v6056 = vor.u32 %v6052, %v6055
  %v6057 = vrot.slane %v6056, 4
  %v6059 = vshll.u32 %v5850, 16
  %v6061 = vrot.slane %v6059, 5
  %v6062 = vsel %vm65, %v6057, %v6061
  %v6064 = vshrl.u32 %v5851, 16
  %v6066 = vrot.slane %v6064, 4
  %v6067 = vshll.u32 %v5851, 16
  %v6069 = vrot.slane %v6067, 5
  %v6070 = vor.u32 %v6066, %v6069
  %v6071 = vrot.slane %v6070, 4
  %v6073 = vshll.u32 %v5852, 16
  %v6075 = vrot.slane %v6073, 5
  %v6076 = vsel %vm65, %v6071, %v6075
  %s6077 = scalar_lea.vmem %s1, 1024
  %v6078 = vld [vmem:[%s6077] sm:$0xf]
  %v6079 = vld [vmem:[%s6077 + $0x4] sm:$0xf]
  %v6080 = vld [vmem:[%s6077 + $0x8] sm:$0xf]
  %v6081 = vld [vmem:[%s6077 + $0xc] sm:$0xf]
  %v6082 = vld [vmem:[%s6077 + $0x10] sm:$0xf]
  %v6083 = vld [vmem:[%s6077 + $0x14] sm:$0xf]
  %v6084 = vld [vmem:[%s6077 + $0x18] sm:$0xf]
  %v6085 = vld [vmem:[%s6077 + $0x1c] sm:$0xf]
  %v6086 = vld [vmem:[%s6077 + $0x20] sm:$0xf]
  %v6087 = vld [vmem:[%s6077 + $0x24] sm:$0xf]
  %v6088 = vld [vmem:[%s6077 + $0x28] sm:$0xf]
  %v6089 = vld [vmem:[%s6077 + $0x2c] sm:$0xf]
  %v6090 = vld [vmem:[%s6077 + $0x30] sm:$0xf]
  %v6091 = vld [vmem:[%s6077 + $0x34] sm:$0xf]
  %v6092 = vld [vmem:[%s6077 + $0x38] sm:$0xf]
  %v6093 = vld [vmem:[%s6077 + $0x3c] sm:$0xf]
  %v6094 = vunpack.c.l.b16 %v5866
  %v6095 = vunpack.c.l.b16 %v5880
  %v6096 = vunpack.c.l.b16 %v5894
  %v6097 = vunpack.c.l.b16 %v5908
  %v6098 = vunpack.c.l.b16 %v5922
  %v6099 = vunpack.c.l.b16 %v5936
  %v6100 = vunpack.c.l.b16 %v5950
  %v6101 = vunpack.c.l.b16 %v5964
  %v6102 = vunpack.c.l.b16 %v5978
  %v6103 = vunpack.c.l.b16 %v5992
  %v6104 = vunpack.c.l.b16 %v6006
  %v6105 = vunpack.c.l.b16 %v6020
  %v6106 = vunpack.c.l.b16 %v6034
  %v6107 = vunpack.c.l.b16 %v6048
  %v6108 = vunpack.c.l.b16 %v6062
  %v6109 = vunpack.c.l.b16 %v6076
  %v6110 = vpack.c.b16 %v6095, %v6094
  %v6111 = vpack.c.b16 %v6097, %v6096
  %v6112 = vpack.c.b16 %v6099, %v6098
  %v6113 = vpack.c.b16 %v6101, %v6100
  %v6114 = vpack.c.b16 %v6103, %v6102
  %v6115 = vpack.c.b16 %v6105, %v6104
  %v6116 = vpack.c.b16 %v6107, %v6106
  %v6117 = vpack.c.b16 %v6109, %v6108
  %v6142 = vunpack.c.l.b16 %v6078
  %v6143 = vunpack.c.l.b16 %v6079
  %v6144 = vunpack.c.l.b16 %v6080
  %v6145 = vunpack.c.l.b16 %v6081
  %v6146 = vunpack.c.l.b16 %v6082
  %v6147 = vunpack.c.l.b16 %v6083
  %v6148 = vunpack.c.l.b16 %v6084
  %v6149 = vunpack.c.l.b16 %v6085
  %v6150 = vunpack.c.l.b16 %v6086
  %v6151 = vunpack.c.l.b16 %v6087
  %v6152 = vunpack.c.l.b16 %v6088
  %v6153 = vunpack.c.l.b16 %v6089
  %v6154 = vunpack.c.l.b16 %v6090
  %v6155 = vunpack.c.l.b16 %v6091
  %v6156 = vunpack.c.l.b16 %v6092
  %v6157 = vunpack.c.l.b16 %v6093
  %v6158 = vpack.c.b16 %v6143, %v6142
  %v6159 = vpack.c.b16 %v6145, %v6144
  %v6160 = vpack.c.b16 %v6147, %v6146
  %v6161 = vpack.c.b16 %v6149, %v6148
  %v6162 = vpack.c.b16 %v6151, %v6150
  %v6163 = vpack.c.b16 %v6153, %v6152
  %v6164 = vpack.c.b16 %v6155, %v6154
  %v6165 = vpack.c.b16 %v6157, %v6156
  %6174 = vmatprep.subr.bf16.mxu0 0
  %6175 = vmatpush1.bf16.msra.mxu0 %v6158
  %6176 = vmatprep.subr.bf16.mxu0 0
  %6177 = vmatpush1.bf16.msra.mxu0 %v6159
  %6178 = vmatprep.subr.bf16.mxu0 0
  %6179 = vmatpush1.bf16.msra.mxu0 %v6160
  %6180 = vmatprep.subr.bf16.mxu0 0
  %6181 = vmatpush1.bf16.msra.mxu0 %v6161
  %6182 = vmatprep.subr.bf16.mxu0 0
  %6183 = vmatpush1.bf16.msra.mxu0 %v6162
  %6184 = vmatprep.subr.bf16.mxu0 0
  %6185 = vmatpush1.bf16.msra.mxu0 %v6163
  %6186 = vmatprep.subr.bf16.mxu0 0
  %6187 = vmatpush1.bf16.msra.mxu0 %v6164
  %6188 = vmatprep.subr.bf16.mxu0 0
  %6189 = vmatpush1.bf16.msra.mxu0 %v6165
  %6190 = vmatprep.subr.bf16.mxu0 0
  %6191 = vmatpush1.bf16.msra.mxu0 0
  %6192 = vmatprep.subr.bf16.mxu0 0
  %6193 = vmatpush1.bf16.msra.mxu0 0
  %6194 = vmatprep.subr.bf16.mxu0 0
  %6195 = vmatpush1.bf16.msra.mxu0 0
  %6196 = vmatprep.subr.bf16.mxu0 0
  %6197 = vmatpush1.bf16.msra.mxu0 0
  %6198 = vmatprep.subr.bf16.mxu0 0
  %6199 = vmatpush1.bf16.msra.mxu0 0
  %6200 = vmatprep.subr.bf16.mxu0 0
  %6201 = vmatpush1.bf16.msra.mxu0 0
  %6202 = vmatprep.subr.bf16.mxu0 0
  %6203 = vmatpush1.bf16.msra.mxu0 0
  %6204 = vmatprep.subr.bf16.mxu0 0
  %6205 = vmatpush1.bf16.msra.mxu0 0
  %6206 = vmatprep.mubr.bf16.mxu0 0
  %6207 = vmatmul.mubr.bf16.gmra.mrb[0].mxu0 %v6110
  %v6208 = vpop.f32.mrb[0].mxu0
  %v6209 = vadd.f32 0.0, %v6208
  %v6210 = vpop.f32.mrb[0].mxu0
  %v6211 = vpop.f32.mrb[0].mxu0
  %v6212 = vadd.f32 0.0, %v6211
  %v6213 = vpop.f32.mrb[0].mxu0
  %6214 = vmatprep.mubr.bf16.mxu0 0
  %6215 = vmatmul.mubr.bf16.gmra.mrb[0].mxu0 %v6111
  %v6216 = vpop.f32.mrb[0].mxu0
  %v6217 = vadd.f32 0.0, %v6216
  %v6218 = vpop.f32.mrb[0].mxu0
  %v6219 = vpop.f32.mrb[0].mxu0
  %v6220 = vadd.f32 0.0, %v6219
  %v6221 = vpop.f32.mrb[0].mxu0
  %6222 = vmatprep.mubr.bf16.mxu0 0
  %6223 = vmatmul.mubr.bf16.gmra.mrb[0].mxu0 %v6112
  %v6224 = vpop.f32.mrb[0].mxu0
  %v6225 = vadd.f32 0.0, %v6224
  %v6226 = vpop.f32.mrb[0].mxu0
  %v6227 = vpop.f32.mrb[0].mxu0
  %v6228 = vadd.f32 0.0, %v6227
  %v6229 = vpop.f32.mrb[0].mxu0
  %6230 = vmatprep.mubr.bf16.mxu0 0
  %6231 = vmatmul.mubr.bf16.gmra.mrb[0].mxu0 %v6113
  %v6232 = vpop.f32.mrb[0].mxu0
  %v6233 = vadd.f32 0.0, %v6232
  %v6234 = vpop.f32.mrb[0].mxu0
  %v6235 = vpop.f32.mrb[0].mxu0
  %v6236 = vadd.f32 0.0, %v6235
  %v6237 = vpop.f32.mrb[0].mxu0
  %6238 = vmatprep.mubr.bf16.mxu0 0
  %6239 = vmatmul.mubr.bf16.gmra.mrb[0].mxu0 %v6114
  %v6240 = vpop.f32.mrb[0].mxu0
  %v6241 = vadd.f32 0.0, %v6240
  %v6242 = vpop.f32.mrb[0].mxu0
  %v6243 = vpop.f32.mrb[0].mxu0
  %v6244 = vadd.f32 0.0, %v6243
  %v6245 = vpop.f32.mrb[0].mxu0
  %6246 = vmatprep.mubr.bf16.mxu0 0
  %6247 = vmatmul.mubr.bf16.gmra.mrb[0].mxu0 %v6115
  %v6248 = vpop.f32.mrb[0].mxu0
  %v6249 = vadd.f32 0.0, %v6248
  %v6250 = vpop.f32.mrb[0].mxu0
  %v6251 = vpop.f32.mrb[0].mxu0
  %v6252 = vadd.f32 0.0, %v6251
  %v6253 = vpop.f32.mrb[0].mxu0
  %6254 = vmatprep.mubr.bf16.mxu0 0
  %6255 = vmatmul.mubr.bf16.gmra.mrb[0].mxu0 %v6116
  %v6256 = vpop.f32.mrb[0].mxu0
  %v6257 = vadd.f32 0.0, %v6256
  %v6258 = vpop.f32.mrb[0].mxu0
  %v6259 = vpop.f32.mrb[0].mxu0
  %v6260 = vadd.f32 0.0, %v6259
  %v6261 = vpop.f32.mrb[0].mxu0
  %6262 = vmatprep.mubr.bf16.mxu0 0
  %6263 = vmatmul.mubr.bf16.gmra.mrb[0].mxu0 %v6117
  %v6264 = vpop.f32.mrb[0].mxu0
  %v6265 = vadd.f32 0.0, %v6264
  %v6266 = vpop.f32.mrb[0].mxu0
  %v6267 = vpop.f32.mrb[0].mxu0
  %v6268 = vadd.f32 0.0, %v6267
  %v6269 = vpop.f32.mrb[0].mxu0
  %6270 = vdwg.mxu0
  %v6271 = vadd.f32 %v5805, %v6209
  %v6272 = vadd.f32 %v5806, %v6212
  %v6273 = vadd.f32 %v5807, %v6217
  %v6274 = vadd.f32 %v5808, %v6220
  %v6275 = vadd.f32 %v5809, %v6225
  %v6276 = vadd.f32 %v5810, %v6228
  %v6277 = vadd.f32 %v5811, %v6233
  %v6278 = vadd.f32 %v5812, %v6236
  %v6279 = vadd.f32 %v5813, %v6241
  %v6280 = vadd.f32 %v5814, %v6244
  %v6281 = vadd.f32 %v5815, %v6249
  %v6282 = vadd.f32 %v5816, %v6252
  %v6283 = vadd.f32 %v5817, %v6257
  %v6284 = vadd.f32 %v5818, %v6260
  %v6285 = vadd.f32 %v5819, %v6265
  %v6286 = vadd.f32 %v5820, %v6268
  %v6287 = vld [vmem:[%s5578] sm:$0xe]
  %v6288 = vld [vmem:[%s5578 + $0x8] sm:$0xe]
  %v6289 = vld [vmem:[%s5578 + $0x10] sm:$0xe]
  %v6290 = vld [vmem:[%s5578 + $0x18] sm:$0xe]
  %v6291 = vld [vmem:[%s5578 + $0x20] sm:$0xe]
  %v6292 = vld [vmem:[%s5578 + $0x28] sm:$0xe]
  %v6293 = vld [vmem:[%s5578 + $0x30] sm:$0xe]
  %v6294 = vld [vmem:[%s5578 + $0x38] sm:$0xe]
  %v6295 = vld [vmem:[%s5578 + $0x60] sm:$0xe]
  %v6296 = vld [vmem:[%s5578 + $0x68] sm:$0xe]
  %v6297 = vld [vmem:[%s5578 + $0x70] sm:$0xe]
  %v6298 = vld [vmem:[%s5578 + $0x78] sm:$0xe]
  %v6299 = vld [vmem:[%s5578 + $0x80] sm:$0xe]
  %v6300 = vld [vmem:[%s5578 + $0x88] sm:$0xe]
  %v6301 = vld [vmem:[%s5578 + $0x90] sm:$0xe]
  %v6302 = vld [vmem:[%s5578 + $0x98] sm:$0xe]
  %v6335 = vrot.slane %v6287, 5
  %v6336 = vrot.slane %v6335, 4
  %v6337 = vrot.slane %v5822, 5
  %v6338 = vsel %vm727, %v6336, %v6337
  %v6339 = vrot.slane %v6288, 5
  %v6340 = vrot.slane %v6339, 4
  %v6341 = vrot.slane %v5824, 5
  %v6342 = vsel %vm727, %v6340, %v6341
  %v6343 = vrot.slane %v6289, 5
  %v6344 = vrot.slane %v6343, 4
  %v6345 = vrot.slane %v5826, 5
  %v6346 = vsel %vm727, %v6344, %v6345
  %v6347 = vrot.slane %v6290, 5
  %v6348 = vrot.slane %v6347, 4
  %v6349 = vrot.slane %v5828, 5
  %v6350 = vsel %vm727, %v6348, %v6349
  %v6351 = vrot.slane %v6291, 5
  %v6352 = vrot.slane %v6351, 4
  %v6353 = vrot.slane %v5830, 5
  %v6354 = vsel %vm727, %v6352, %v6353
  %v6355 = vrot.slane %v6292, 5
  %v6356 = vrot.slane %v6355, 4
  %v6357 = vrot.slane %v5832, 5
  %v6358 = vsel %vm727, %v6356, %v6357
  %v6359 = vrot.slane %v6293, 5
  %v6360 = vrot.slane %v6359, 4
  %v6361 = vrot.slane %v5834, 5
  %v6362 = vsel %vm727, %v6360, %v6361
  %v6363 = vrot.slane %v6294, 5
  %v6364 = vrot.slane %v6363, 4
  %v6365 = vrot.slane %v5836, 5
  %v6366 = vsel %vm727, %v6364, %v6365
  %v6367 = vrot.slane %v6295, 5
  %v6368 = vrot.slane %v6367, 4
  %v6369 = vrot.slane %v5838, 5
  %v6370 = vsel %vm727, %v6368, %v6369
  %v6371 = vrot.slane %v6296, 5
  %v6372 = vrot.slane %v6371, 4
  %v6373 = vrot.slane %v5840, 5
  %v6374 = vsel %vm727, %v6372, %v6373
  %v6375 = vrot.slane %v6297, 5
  %v6376 = vrot.slane %v6375, 4
  %v6377 = vrot.slane %v5842, 5
  %v6378 = vsel %vm727, %v6376, %v6377
  %v6379 = vrot.slane %v6298, 5
  %v6380 = vrot.slane %v6379, 4
  %v6381 = vrot.slane %v5844, 5
  %v6382 = vsel %vm727, %v6380, %v6381
  %v6383 = vrot.slane %v6299, 5
  %v6384 = vrot.slane %v6383, 4
  %v6385 = vrot.slane %v5846, 5
  %v6386 = vsel %vm727, %v6384, %v6385
  %v6387 = vrot.slane %v6300, 5
  %v6388 = vrot.slane %v6387, 4
  %v6389 = vrot.slane %v5848, 5
  %v6390 = vsel %vm727, %v6388, %v6389
  %v6391 = vrot.slane %v6301, 5
  %v6392 = vrot.slane %v6391, 4
  %v6393 = vrot.slane %v5850, 5
  %v6394 = vsel %vm727, %v6392, %v6393
  %v6395 = vrot.slane %v6302, 5
  %v6396 = vrot.slane %v6395, 4
  %v6397 = vrot.slane %v5852, 5
  %v6398 = vsel %vm727, %v6396, %v6397
  %s6399 = scalar_lea.vmem %s1, 1088
  %v6400 = vld [vmem:[%s6399] sm:$0xf]
  %v6401 = vld [vmem:[%s6399 + $0x4] sm:$0xf]
  %v6402 = vld [vmem:[%s6399 + $0x8] sm:$0xf]
  %v6403 = vld [vmem:[%s6399 + $0xc] sm:$0xf]
  %v6404 = vld [vmem:[%s6399 + $0x10] sm:$0xf]
  %v6405 = vld [vmem:[%s6399 + $0x14] sm:$0xf]
  %v6406 = vld [vmem:[%s6399 + $0x18] sm:$0xf]
  %v6407 = vld [vmem:[%s6399 + $0x1c] sm:$0xf]
  %v6408 = vld [vmem:[%s6399 + $0x20] sm:$0xf]
  %v6409 = vld [vmem:[%s6399 + $0x24] sm:$0xf]
  %v6410 = vld [vmem:[%s6399 + $0x28] sm:$0xf]
  %v6411 = vld [vmem:[%s6399 + $0x2c] sm:$0xf]
  %v6412 = vld [vmem:[%s6399 + $0x30] sm:$0xf]
  %v6413 = vld [vmem:[%s6399 + $0x34] sm:$0xf]
  %v6414 = vld [vmem:[%s6399 + $0x38] sm:$0xf]
  %v6415 = vld [vmem:[%s6399 + $0x3c] sm:$0xf]
  %v6416 = vunpack.c.l.b16 %v6338
  %v6417 = vunpack.c.l.b16 %v6342
  %v6418 = vunpack.c.l.b16 %v6346
  %v6419 = vunpack.c.l.b16 %v6350
  %v6420 = vunpack.c.l.b16 %v6354
  %v6421 = vunpack.c.l.b16 %v6358
  %v6422 = vunpack.c.l.b16 %v6362
  %v6423 = vunpack.c.l.b16 %v6366
  %v6424 = vunpack.c.l.b16 %v6370
  %v6425 = vunpack.c.l.b16 %v6374
  %v6426 = vunpack.c.l.b16 %v6378
  %v6427 = vunpack.c.l.b16 %v6382
  %v6428 = vunpack.c.l.b16 %v6386
  %v6429 = vunpack.c.l.b16 %v6390
  %v6430 = vunpack.c.l.b16 %v6394
  %v6431 = vunpack.c.l.b16 %v6398
  %v6432 = vpack.c.b16 %v6417, %v6416
  %v6433 = vpack.c.b16 %v6419, %v6418
  %v6434 = vpack.c.b16 %v6421, %v6420
  %v6435 = vpack.c.b16 %v6423, %v6422
  %v6436 = vpack.c.b16 %v6425, %v6424
  %v6437 = vpack.c.b16 %v6427, %v6426
  %v6438 = vpack.c.b16 %v6429, %v6428
  %v6439 = vpack.c.b16 %v6431, %v6430
  %v6464 = vunpack.c.l.b16 %v6400
  %v6465 = vunpack.c.l.b16 %v6401
  %v6466 = vunpack.c.l.b16 %v6402
  %v6467 = vunpack.c.l.b16 %v6403
  %v6468 = vunpack.c.l.b16 %v6404
  %v6469 = vunpack.c.l.b16 %v6405
  %v6470 = vunpack.c.l.b16 %v6406
  %v6471 = vunpack.c.l.b16 %v6407
  %v6472 = vunpack.c.l.b16 %v6408
  %v6473 = vunpack.c.l.b16 %v6409
  %v6474 = vunpack.c.l.b16 %v6410
  %v6475 = vunpack.c.l.b16 %v6411
  %v6476 = vunpack.c.l.b16 %v6412
  %v6477 = vunpack.c.l.b16 %v6413
  %v6478 = vunpack.c.l.b16 %v6414
  %v6479 = vunpack.c.l.b16 %v6415
  %v6480 = vpack.c.b16 %v6465, %v6464
  %v6481 = vpack.c.b16 %v6467, %v6466
  %v6482 = vpack.c.b16 %v6469, %v6468
  %v6483 = vpack.c.b16 %v6471, %v6470
  %v6484 = vpack.c.b16 %v6473, %v6472
  %v6485 = vpack.c.b16 %v6475, %v6474
  %v6486 = vpack.c.b16 %v6477, %v6476
  %v6487 = vpack.c.b16 %v6479, %v6478
  %6496 = vmatprep.subr.bf16.mxu0 0
  %6497 = vmatpush1.bf16.msra.mxu0 %v6480
  %6498 = vmatprep.subr.bf16.mxu0 0
  %6499 = vmatpush1.bf16.msra.mxu0 %v6481
  %6500 = vmatprep.subr.bf16.mxu0 0
  %6501 = vmatpush1.bf16.msra.mxu0 %v6482
  %6502 = vmatprep.subr.bf16.mxu0 0
  %6503 = vmatpush1.bf16.msra.mxu0 %v6483
  %6504 = vmatprep.subr.bf16.mxu0 0
  %6505 = vmatpush1.bf16.msra.mxu0 %v6484
  %6506 = vmatprep.subr.bf16.mxu0 0
  %6507 = vmatpush1.bf16.msra.mxu0 %v6485
  %6508 = vmatprep.subr.bf16.mxu0 0
  %6509 = vmatpush1.bf16.msra.mxu0 %v6486
  %6510 = vmatprep.subr.bf16.mxu0 0
  %6511 = vmatpush1.bf16.msra.mxu0 %v6487
  %6512 = vmatprep.subr.bf16.mxu0 0
  %6513 = vmatpush1.bf16.msra.mxu0 0
  %6514 = vmatprep.subr.bf16.mxu0 0
  %6515 = vmatpush1.bf16.msra.mxu0 0
  %6516 = vmatprep.subr.bf16.mxu0 0
  %6517 = vmatpush1.bf16.msra.mxu0 0
  %6518 = vmatprep.subr.bf16.mxu0 0
  %6519 = vmatpush1.bf16.msra.mxu0 0
  %6520 = vmatprep.subr.bf16.mxu0 0
  %6521 = vmatpush1.bf16.msra.mxu0 0
  %6522 = vmatprep.subr.bf16.mxu0 0
  %6523 = vmatpush1.bf16.msra.mxu0 0
  %6524 = vmatprep.subr.bf16.mxu0 0
  %6525 = vmatpush1.bf16.msra.mxu0 0
  %6526 = vmatprep.subr.bf16.mxu0 0
  %6527 = vmatpush1.bf16.msra.mxu0 0
  %6528 = vmatprep.mubr.bf16.mxu0 0
  %6529 = vmatmul.mubr.bf16.gmra.mrb[0].mxu0 %v6432
  %v6530 = vpop.f32.mrb[0].mxu0
  %v6531 = vadd.f32 0.0, %v6530
  %v6532 = vpop.f32.mrb[0].mxu0
  %v6533 = vpop.f32.mrb[0].mxu0
  %v6534 = vadd.f32 0.0, %v6533
  %v6535 = vpop.f32.mrb[0].mxu0
  %6536 = vmatprep.mubr.bf16.mxu0 0
  %6537 = vmatmul.mubr.bf16.gmra.mrb[0].mxu0 %v6433
  %v6538 = vpop.f32.mrb[0].mxu0
  %v6539 = vadd.f32 0.0, %v6538
  %v6540 = vpop.f32.mrb[0].mxu0
  %v6541 = vpop.f32.mrb[0].mxu0
  %v6542 = vadd.f32 0.0, %v6541
  %v6543 = vpop.f32.mrb[0].mxu0
  %6544 = vmatprep.mubr.bf16.mxu0 0
  %6545 = vmatmul.mubr.bf16.gmra.mrb[0].mxu0 %v6434
  %v6546 = vpop.f32.mrb[0].mxu0
  %v6547 = vadd.f32 0.0, %v6546
  %v6548 = vpop.f32.mrb[0].mxu0
  %v6549 = vpop.f32.mrb[0].mxu0
  %v6550 = vadd.f32 0.0, %v6549
  %v6551 = vpop.f32.mrb[0].mxu0
  %6552 = vmatprep.mubr.bf16.mxu0 0
  %6553 = vmatmul.mubr.bf16.gmra.mrb[0].mxu0 %v6435
  %v6554 = vpop.f32.mrb[0].mxu0
  %v6555 = vadd.f32 0.0, %v6554
  %v6556 = vpop.f32.mrb[0].mxu0
  %v6557 = vpop.f32.mrb[0].mxu0
  %v6558 = vadd.f32 0.0, %v6557
  %v6559 = vpop.f32.mrb[0].mxu0
  %6560 = vmatprep.mubr.bf16.mxu0 0
  %6561 = vmatmul.mubr.bf16.gmra.mrb[0].mxu0 %v6436
  %v6562 = vpop.f32.mrb[0].mxu0
  %v6563 = vadd.f32 0.0, %v6562
  %v6564 = vpop.f32.mrb[0].mxu0
  %v6565 = vpop.f32.mrb[0].mxu0
  %v6566 = vadd.f32 0.0, %v6565
  %v6567 = vpop.f32.mrb[0].mxu0
  %6568 = vmatprep.mubr.bf16.mxu0 0
  %6569 = vmatmul.mubr.bf16.gmra.mrb[0].mxu0 %v6437
  %v6570 = vpop.f32.mrb[0].mxu0
  %v6571 = vadd.f32 0.0, %v6570
  %v6572 = vpop.f32.mrb[0].mxu0
  %v6573 = vpop.f32.mrb[0].mxu0
  %v6574 = vadd.f32 0.0, %v6573
  %v6575 = vpop.f32.mrb[0].mxu0
  %6576 = vmatprep.mubr.bf16.mxu0 0
  %6577 = vmatmul.mubr.bf16.gmra.mrb[0].mxu0 %v6438
  %v6578 = vpop.f32.mrb[0].mxu0
  %v6579 = vadd.f32 0.0, %v6578
  %v6580 = vpop.f32.mrb[0].mxu0
  %v6581 = vpop.f32.mrb[0].mxu0
  %v6582 = vadd.f32 0.0, %v6581
  %v6583 = vpop.f32.mrb[0].mxu0
  %6584 = vmatprep.mubr.bf16.mxu0 0
  %6585 = vmatmul.mubr.bf16.gmra.mrb[0].mxu0 %v6439
  %v6586 = vpop.f32.mrb[0].mxu0
  %v6587 = vadd.f32 0.0, %v6586
  %v6588 = vpop.f32.mrb[0].mxu0
  %v6589 = vpop.f32.mrb[0].mxu0
  %v6590 = vadd.f32 0.0, %v6589
  %v6591 = vpop.f32.mrb[0].mxu0
  %6592 = vdwg.mxu0
  %v6593 = vadd.f32 %v6271, %v6531
  %v6594 = vadd.f32 %v6272, %v6534
  %v6595 = vadd.f32 %v6273, %v6539
  %v6596 = vadd.f32 %v6274, %v6542
  %v6597 = vadd.f32 %v6275, %v6547
  %v6598 = vadd.f32 %v6276, %v6550
  %v6599 = vadd.f32 %v6277, %v6555
  %v6600 = vadd.f32 %v6278, %v6558
  %v6601 = vadd.f32 %v6279, %v6563
  %v6602 = vadd.f32 %v6280, %v6566
  %v6603 = vadd.f32 %v6281, %v6571
  %v6604 = vadd.f32 %v6282, %v6574
  %v6605 = vadd.f32 %v6283, %v6579
  %v6606 = vadd.f32 %v6284, %v6582
  %v6607 = vadd.f32 %v6285, %v6587
  %v6608 = vadd.f32 %v6286, %v6590
  %v6609 = vld [vmem:[%s5578 + $0x4] sm:$0x3]
  %v6610 = vld [vmem:[%s5578 + $0xc] sm:$0x3]
  %v6611 = vld [vmem:[%s5578 + $0x14] sm:$0x3]
  %v6612 = vld [vmem:[%s5578 + $0x1c] sm:$0x3]
  %v6613 = vld [vmem:[%s5578 + $0x24] sm:$0x3]
  %v6614 = vld [vmem:[%s5578 + $0x2c] sm:$0x3]
  %v6615 = vld [vmem:[%s5578 + $0x34] sm:$0x3]
  %v6616 = vld [vmem:[%s5578 + $0x3c] sm:$0x3]
  %v6617 = vld [vmem:[%s5578 + $0x64] sm:$0x3]
  %v6618 = vld [vmem:[%s5578 + $0x6c] sm:$0x3]
  %v6619 = vld [vmem:[%s5578 + $0x74] sm:$0x3]
  %v6620 = vld [vmem:[%s5578 + $0x7c] sm:$0x3]
  %v6621 = vld [vmem:[%s5578 + $0x84] sm:$0x3]
  %v6622 = vld [vmem:[%s5578 + $0x8c] sm:$0x3]
  %v6623 = vld [vmem:[%s5578 + $0x94] sm:$0x3]
  %v6624 = vld [vmem:[%s5578 + $0x9c] sm:$0x3]
  %v6626 = vshrl.u32 %v6287, 16
  %v6628 = vrot.slane %v6626, 5
  %v6629 = vshll.u32 %v6287, 16
  %v6631 = vrot.slane %v6629, 6
  %v6632 = vor.u32 %v6628, %v6631
  %v6633 = vrot.slane %v6632, 4
  %v6635 = vshrl.u32 %v6609, 16
  %v6637 = vrot.slane %v6635, 5
  %v6638 = vshll.u32 %v6609, 16
  %v6640 = vrot.slane %v6638, 6
  %v6641 = vor.u32 %v6637, %v6640
  %v6642 = vsel %vm1020, %v6633, %v6641
  %v6644 = vshrl.u32 %v6288, 16
  %v6646 = vrot.slane %v6644, 5
  %v6647 = vshll.u32 %v6288, 16
  %v6649 = vrot.slane %v6647, 6
  %v6650 = vor.u32 %v6646, %v6649
  %v6651 = vrot.slane %v6650, 4
  %v6653 = vshrl.u32 %v6610, 16
  %v6655 = vrot.slane %v6653, 5
  %v6656 = vshll.u32 %v6610, 16
  %v6658 = vrot.slane %v6656, 6
  %v6659 = vor.u32 %v6655, %v6658
  %v6660 = vsel %vm1020, %v6651, %v6659
  %v6662 = vshrl.u32 %v6289, 16
  %v6664 = vrot.slane %v6662, 5
  %v6665 = vshll.u32 %v6289, 16
  %v6667 = vrot.slane %v6665, 6
  %v6668 = vor.u32 %v6664, %v6667
  %v6669 = vrot.slane %v6668, 4
  %v6671 = vshrl.u32 %v6611, 16
  %v6673 = vrot.slane %v6671, 5
  %v6674 = vshll.u32 %v6611, 16
  %v6676 = vrot.slane %v6674, 6
  %v6677 = vor.u32 %v6673, %v6676
  %v6678 = vsel %vm1020, %v6669, %v6677
  %v6680 = vshrl.u32 %v6290, 16
  %v6682 = vrot.slane %v6680, 5
  %v6683 = vshll.u32 %v6290, 16
  %v6685 = vrot.slane %v6683, 6
  %v6686 = vor.u32 %v6682, %v6685
  %v6687 = vrot.slane %v6686, 4
  %v6689 = vshrl.u32 %v6612, 16
  %v6691 = vrot.slane %v6689, 5
  %v6692 = vshll.u32 %v6612, 16
  %v6694 = vrot.slane %v6692, 6
  %v6695 = vor.u32 %v6691, %v6694
  %v6696 = vsel %vm1020, %v6687, %v6695
  %v6698 = vshrl.u32 %v6291, 16
  %v6700 = vrot.slane %v6698, 5
  %v6701 = vshll.u32 %v6291, 16
  %v6703 = vrot.slane %v6701, 6
  %v6704 = vor.u32 %v6700, %v6703
  %v6705 = vrot.slane %v6704, 4
  %v6707 = vshrl.u32 %v6613, 16
  %v6709 = vrot.slane %v6707, 5
  %v6710 = vshll.u32 %v6613, 16
  %v6712 = vrot.slane %v6710, 6
  %v6713 = vor.u32 %v6709, %v6712
  %v6714 = vsel %vm1020, %v6705, %v6713
  %v6716 = vshrl.u32 %v6292, 16
  %v6718 = vrot.slane %v6716, 5
  %v6719 = vshll.u32 %v6292, 16
  %v6721 = vrot.slane %v6719, 6
  %v6722 = vor.u32 %v6718, %v6721
  %v6723 = vrot.slane %v6722, 4
  %v6725 = vshrl.u32 %v6614, 16
  %v6727 = vrot.slane %v6725, 5
  %v6728 = vshll.u32 %v6614, 16
  %v6730 = vrot.slane %v6728, 6
  %v6731 = vor.u32 %v6727, %v6730
  %v6732 = vsel %vm1020, %v6723, %v6731
  %v6734 = vshrl.u32 %v6293, 16
  %v6736 = vrot.slane %v6734, 5
  %v6737 = vshll.u32 %v6293, 16
  %v6739 = vrot.slane %v6737, 6
  %v6740 = vor.u32 %v6736, %v6739
  %v6741 = vrot.slane %v6740, 4
  %v6743 = vshrl.u32 %v6615, 16
  %v6745 = vrot.slane %v6743, 5
  %v6746 = vshll.u32 %v6615, 16
  %v6748 = vrot.slane %v6746, 6
  %v6749 = vor.u32 %v6745, %v6748
  %v6750 = vsel %vm1020, %v6741, %v6749
  %v6752 = vshrl.u32 %v6294, 16
  %v6754 = vrot.slane %v6752, 5
  %v6755 = vshll.u32 %v6294, 16
  %v6757 = vrot.slane %v6755, 6
  %v6758 = vor.u32 %v6754, %v6757
  %v6759 = vrot.slane %v6758, 4
  %v6761 = vshrl.u32 %v6616, 16
  %v6763 = vrot.slane %v6761, 5
  %v6764 = vshll.u32 %v6616, 16
  %v6766 = vrot.slane %v6764, 6
  %v6767 = vor.u32 %v6763, %v6766
  %v6768 = vsel %vm1020, %v6759, %v6767
  %v6770 = vshrl.u32 %v6295, 16
  %v6772 = vrot.slane %v6770, 5
  %v6773 = vshll.u32 %v6295, 16
  %v6775 = vrot.slane %v6773, 6
  %v6776 = vor.u32 %v6772, %v6775
  %v6777 = vrot.slane %v6776, 4
  %v6779 = vshrl.u32 %v6617, 16
  %v6781 = vrot.slane %v6779, 5
  %v6782 = vshll.u32 %v6617, 16
  %v6784 = vrot.slane %v6782, 6
  %v6785 = vor.u32 %v6781, %v6784
  %v6786 = vsel %vm1020, %v6777, %v6785
  %v6788 = vshrl.u32 %v6296, 16
  %v6790 = vrot.slane %v6788, 5
  %v6791 = vshll.u32 %v6296, 16
  %v6793 = vrot.slane %v6791, 6
  %v6794 = vor.u32 %v6790, %v6793
  %v6795 = vrot.slane %v6794, 4
  %v6797 = vshrl.u32 %v6618, 16
  %v6799 = vrot.slane %v6797, 5
  %v6800 = vshll.u32 %v6618, 16
  %v6802 = vrot.slane %v6800, 6
  %v6803 = vor.u32 %v6799, %v6802
  %v6804 = vsel %vm1020, %v6795, %v6803
  %v6806 = vshrl.u32 %v6297, 16
  %v6808 = vrot.slane %v6806, 5
  %v6809 = vshll.u32 %v6297, 16
  %v6811 = vrot.slane %v6809, 6
  %v6812 = vor.u32 %v6808, %v6811
  %v6813 = vrot.slane %v6812, 4
  %v6815 = vshrl.u32 %v6619, 16
  %v6817 = vrot.slane %v6815, 5
  %v6818 = vshll.u32 %v6619, 16
  %v6820 = vrot.slane %v6818, 6
  %v6821 = vor.u32 %v6817, %v6820
  %v6822 = vsel %vm1020, %v6813, %v6821
  %v6824 = vshrl.u32 %v6298, 16
  %v6826 = vrot.slane %v6824, 5
  %v6827 = vshll.u32 %v6298, 16
  %v6829 = vrot.slane %v6827, 6
  %v6830 = vor.u32 %v6826, %v6829
  %v6831 = vrot.slane %v6830, 4
  %v6833 = vshrl.u32 %v6620, 16
  %v6835 = vrot.slane %v6833, 5
  %v6836 = vshll.u32 %v6620, 16
  %v6838 = vrot.slane %v6836, 6
  %v6839 = vor.u32 %v6835, %v6838
  %v6840 = vsel %vm1020, %v6831, %v6839
  %v6842 = vshrl.u32 %v6299, 16
  %v6844 = vrot.slane %v6842, 5
  %v6845 = vshll.u32 %v6299, 16
  %v6847 = vrot.slane %v6845, 6
  %v6848 = vor.u32 %v6844, %v6847
  %v6849 = vrot.slane %v6848, 4
  %v6851 = vshrl.u32 %v6621, 16
  %v6853 = vrot.slane %v6851, 5
  %v6854 = vshll.u32 %v6621, 16
  %v6856 = vrot.slane %v6854, 6
  %v6857 = vor.u32 %v6853, %v6856
  %v6858 = vsel %vm1020, %v6849, %v6857
  %v6860 = vshrl.u32 %v6300, 16
  %v6862 = vrot.slane %v6860, 5
  %v6863 = vshll.u32 %v6300, 16
  %v6865 = vrot.slane %v6863, 6
  %v6866 = vor.u32 %v6862, %v6865
  %v6867 = vrot.slane %v6866, 4
  %v6869 = vshrl.u32 %v6622, 16
  %v6871 = vrot.slane %v6869, 5
  %v6872 = vshll.u32 %v6622, 16
  %v6874 = vrot.slane %v6872, 6
  %v6875 = vor.u32 %v6871, %v6874
  %v6876 = vsel %vm1020, %v6867, %v6875
  %v6878 = vshrl.u32 %v6301, 16
  %v6880 = vrot.slane %v6878, 5
  %v6881 = vshll.u32 %v6301, 16
  %v6883 = vrot.slane %v6881, 6
  %v6884 = vor.u32 %v6880, %v6883
  %v6885 = vrot.slane %v6884, 4
  %v6887 = vshrl.u32 %v6623, 16
  %v6889 = vrot.slane %v6887, 5
  %v6890 = vshll.u32 %v6623, 16
  %v6892 = vrot.slane %v6890, 6
  %v6893 = vor.u32 %v6889, %v6892
  %v6894 = vsel %vm1020, %v6885, %v6893
  %v6896 = vshrl.u32 %v6302, 16
  %v6898 = vrot.slane %v6896, 5
  %v6899 = vshll.u32 %v6302, 16
  %v6901 = vrot.slane %v6899, 6
  %v6902 = vor.u32 %v6898, %v6901
  %v6903 = vrot.slane %v6902, 4
  %v6905 = vshrl.u32 %v6624, 16
  %v6907 = vrot.slane %v6905, 5
  %v6908 = vshll.u32 %v6624, 16
  %v6910 = vrot.slane %v6908, 6
  %v6911 = vor.u32 %v6907, %v6910
  %v6912 = vsel %vm1020, %v6903, %v6911
  %s6913 = scalar_lea.vmem %s1, 1152
  %v6914 = vld [vmem:[%s6913] sm:$0xf]
  %v6915 = vld [vmem:[%s6913 + $0x4] sm:$0xf]
  %v6916 = vld [vmem:[%s6913 + $0x8] sm:$0xf]
  %v6917 = vld [vmem:[%s6913 + $0xc] sm:$0xf]
  %v6918 = vld [vmem:[%s6913 + $0x10] sm:$0xf]
  %v6919 = vld [vmem:[%s6913 + $0x14] sm:$0xf]
  %v6920 = vld [vmem:[%s6913 + $0x18] sm:$0xf]
  %v6921 = vld [vmem:[%s6913 + $0x1c] sm:$0xf]
  %v6922 = vld [vmem:[%s6913 + $0x20] sm:$0xf]
  %v6923 = vld [vmem:[%s6913 + $0x24] sm:$0xf]
  %v6924 = vld [vmem:[%s6913 + $0x28] sm:$0xf]
  %v6925 = vld [vmem:[%s6913 + $0x2c] sm:$0xf]
  %v6926 = vld [vmem:[%s6913 + $0x30] sm:$0xf]
  %v6927 = vld [vmem:[%s6913 + $0x34] sm:$0xf]
  %v6928 = vld [vmem:[%s6913 + $0x38] sm:$0xf]
  %v6929 = vld [vmem:[%s6913 + $0x3c] sm:$0xf]
  %v6930 = vunpack.c.l.b16 %v6642
  %v6931 = vunpack.c.l.b16 %v6660
  %v6932 = vunpack.c.l.b16 %v6678
  %v6933 = vunpack.c.l.b16 %v6696
  %v6934 = vunpack.c.l.b16 %v6714
  %v6935 = vunpack.c.l.b16 %v6732
  %v6936 = vunpack.c.l.b16 %v6750
  %v6937 = vunpack.c.l.b16 %v6768
  %v6938 = vunpack.c.l.b16 %v6786
  %v6939 = vunpack.c.l.b16 %v6804
  %v6940 = vunpack.c.l.b16 %v6822
  %v6941 = vunpack.c.l.b16 %v6840
  %v6942 = vunpack.c.l.b16 %v6858
  %v6943 = vunpack.c.l.b16 %v6876
  %v6944 = vunpack.c.l.b16 %v6894
  %v6945 = vunpack.c.l.b16 %v6912
  %v6946 = vpack.c.b16 %v6931, %v6930
  %v6947 = vpack.c.b16 %v6933, %v6932
  %v6948 = vpack.c.b16 %v6935, %v6934
  %v6949 = vpack.c.b16 %v6937, %v6936
  %v6950 = vpack.c.b16 %v6939, %v6938
  %v6951 = vpack.c.b16 %v6941, %v6940
  %v6952 = vpack.c.b16 %v6943, %v6942
  %v6953 = vpack.c.b16 %v6945, %v6944
  %v6978 = vunpack.c.l.b16 %v6914
  %v6979 = vunpack.c.l.b16 %v6915
  %v6980 = vunpack.c.l.b16 %v6916
  %v6981 = vunpack.c.l.b16 %v6917
  %v6982 = vunpack.c.l.b16 %v6918
  %v6983 = vunpack.c.l.b16 %v6919
  %v6984 = vunpack.c.l.b16 %v6920
  %v6985 = vunpack.c.l.b16 %v6921
  %v6986 = vunpack.c.l.b16 %v6922
  %v6987 = vunpack.c.l.b16 %v6923
  %v6988 = vunpack.c.l.b16 %v6924
  %v6989 = vunpack.c.l.b16 %v6925
  %v6990 = vunpack.c.l.b16 %v6926
  %v6991 = vunpack.c.l.b16 %v6927
  %v6992 = vunpack.c.l.b16 %v6928
  %v6993 = vunpack.c.l.b16 %v6929
  %v6994 = vpack.c.b16 %v6979, %v6978
  %v6995 = vpack.c.b16 %v6981, %v6980
  %v6996 = vpack.c.b16 %v6983, %v6982
  %v6997 = vpack.c.b16 %v6985, %v6984
  %v6998 = vpack.c.b16 %v6987, %v6986
  %v6999 = vpack.c.b16 %v6989, %v6988
  %v7000 = vpack.c.b16 %v6991, %v6990
  %v7001 = vpack.c.b16 %v6993, %v6992
  %7010 = vmatprep.subr.bf16.mxu0 0
  %7011 = vmatpush1.bf16.msra.mxu0 %v6994
  %7012 = vmatprep.subr.bf16.mxu0 0
  %7013 = vmatpush1.bf16.msra.mxu0 %v6995
  %7014 = vmatprep.subr.bf16.mxu0 0
  %7015 = vmatpush1.bf16.msra.mxu0 %v6996
  %7016 = vmatprep.subr.bf16.mxu0 0
  %7017 = vmatpush1.bf16.msra.mxu0 %v6997
  %7018 = vmatprep.subr.bf16.mxu0 0
  %7019 = vmatpush1.bf16.msra.mxu0 %v6998
  %7020 = vmatprep.subr.bf16.mxu0 0
  %7021 = vmatpush1.bf16.msra.mxu0 %v6999
  %7022 = vmatprep.subr.bf16.mxu0 0
  %7023 = vmatpush1.bf16.msra.mxu0 %v7000
  %7024 = vmatprep.subr.bf16.mxu0 0
  %7025 = vmatpush1.bf16.msra.mxu0 %v7001
  %7026 = vmatprep.subr.bf16.mxu0 0
  %7027 = vmatpush1.bf16.msra.mxu0 0
  %7028 = vmatprep.subr.bf16.mxu0 0
  %7029 = vmatpush1.bf16.msra.mxu0 0
  %7030 = vmatprep.subr.bf16.mxu0 0
  %7031 = vmatpush1.bf16.msra.mxu0 0
  %7032 = vmatprep.subr.bf16.mxu0 0
  %7033 = vmatpush1.bf16.msra.mxu0 0
  %7034 = vmatprep.subr.bf16.mxu0 0
  %7035 = vmatpush1.bf16.msra.mxu0 0
  %7036 = vmatprep.subr.bf16.mxu0 0
  %7037 = vmatpush1.bf16.msra.mxu0 0
  %7038 = vmatprep.subr.bf16.mxu0 0
  %7039 = vmatpush1.bf16.msra.mxu0 0
  %7040 = vmatprep.subr.bf16.mxu0 0
  %7041 = vmatpush1.bf16.msra.mxu0 0
  %7042 = vmatprep.mubr.bf16.mxu0 0
  %7043 = vmatmul.mubr.bf16.gmra.mrb[0].mxu0 %v6946
  %v7044 = vpop.f32.mrb[0].mxu0
  %v7045 = vadd.f32 0.0, %v7044
  %v7046 = vpop.f32.mrb[0].mxu0
  %v7047 = vpop.f32.mrb[0].mxu0
  %v7048 = vadd.f32 0.0, %v7047
  %v7049 = vpop.f32.mrb[0].mxu0
  %7050 = vmatprep.mubr.bf16.mxu0 0
  %7051 = vmatmul.mubr.bf16.gmra.mrb[0].mxu0 %v6947
  %v7052 = vpop.f32.mrb[0].mxu0
  %v7053 = vadd.f32 0.0, %v7052
  %v7054 = vpop.f32.mrb[0].mxu0
  %v7055 = vpop.f32.mrb[0].mxu0
  %v7056 = vadd.f32 0.0, %v7055
  %v7057 = vpop.f32.mrb[0].mxu0
  %7058 = vmatprep.mubr.bf16.mxu0 0
  %7059 = vmatmul.mubr.bf16.gmra.mrb[0].mxu0 %v6948
  %v7060 = vpop.f32.mrb[0].mxu0
  %v7061 = vadd.f32 0.0, %v7060
  %v7062 = vpop.f32.mrb[0].mxu0
  %v7063 = vpop.f32.mrb[0].mxu0
  %v7064 = vadd.f32 0.0, %v7063
  %v7065 = vpop.f32.mrb[0].mxu0
  %7066 = vmatprep.mubr.bf16.mxu0 0
  %7067 = vmatmul.mubr.bf16.gmra.mrb[0].mxu0 %v6949
  %v7068 = vpop.f32.mrb[0].mxu0
  %v7069 = vadd.f32 0.0, %v7068
  %v7070 = vpop.f32.mrb[0].mxu0
  %v7071 = vpop.f32.mrb[0].mxu0
  %v7072 = vadd.f32 0.0, %v7071
  %v7073 = vpop.f32.mrb[0].mxu0
  %7074 = vmatprep.mubr.bf16.mxu0 0
  %7075 = vmatmul.mubr.bf16.gmra.mrb[0].mxu0 %v6950
  %v7076 = vpop.f32.mrb[0].mxu0
  %v7077 = vadd.f32 0.0, %v7076
  %v7078 = vpop.f32.mrb[0].mxu0
  %v7079 = vpop.f32.mrb[0].mxu0
  %v7080 = vadd.f32 0.0, %v7079
  %v7081 = vpop.f32.mrb[0].mxu0
  %7082 = vmatprep.mubr.bf16.mxu0 0
  %7083 = vmatmul.mubr.bf16.gmra.mrb[0].mxu0 %v6951
  %v7084 = vpop.f32.mrb[0].mxu0
  %v7085 = vadd.f32 0.0, %v7084
  %v7086 = vpop.f32.mrb[0].mxu0
  %v7087 = vpop.f32.mrb[0].mxu0
  %v7088 = vadd.f32 0.0, %v7087
  %v7089 = vpop.f32.mrb[0].mxu0
  %7090 = vmatprep.mubr.bf16.mxu0 0
  %7091 = vmatmul.mubr.bf16.gmra.mrb[0].mxu0 %v6952
  %v7092 = vpop.f32.mrb[0].mxu0
  %v7093 = vadd.f32 0.0, %v7092
  %v7094 = vpop.f32.mrb[0].mxu0
  %v7095 = vpop.f32.mrb[0].mxu0
  %v7096 = vadd.f32 0.0, %v7095
  %v7097 = vpop.f32.mrb[0].mxu0
  %7098 = vmatprep.mubr.bf16.mxu0 0
  %7099 = vmatmul.mubr.bf16.gmra.mrb[0].mxu0 %v6953
  %v7100 = vpop.f32.mrb[0].mxu0
  %v7101 = vadd.f32 0.0, %v7100
  %v7102 = vpop.f32.mrb[0].mxu0
  %v7103 = vpop.f32.mrb[0].mxu0
  %v7104 = vadd.f32 0.0, %v7103
  %v7105 = vpop.f32.mrb[0].mxu0
  %7106 = vdwg.mxu0
  %v7107 = vadd.f32 %v6593, %v7045
  %v7108 = vadd.f32 %v6594, %v7048
  %v7109 = vadd.f32 %v6595, %v7053
  %v7110 = vadd.f32 %v6596, %v7056
  %v7111 = vadd.f32 %v6597, %v7061
  %v7112 = vadd.f32 %v6598, %v7064
  %v7113 = vadd.f32 %v6599, %v7069
  %v7114 = vadd.f32 %v6600, %v7072
  %v7115 = vadd.f32 %v6601, %v7077
  %v7116 = vadd.f32 %v6602, %v7080
  %v7117 = vadd.f32 %v6603, %v7085
  %v7118 = vadd.f32 %v6604, %v7088
  %v7119 = vadd.f32 %v6605, %v7093
  %v7120 = vadd.f32 %v6606, %v7096
  %v7121 = vadd.f32 %v6607, %v7101
  %v7122 = vadd.f32 %v6608, %v7104
  %v7123 = vld [vmem:[%s5578] sm:$0xc]
  %v7124 = vld [vmem:[%s5578 + $0x8] sm:$0xc]
  %v7125 = vld [vmem:[%s5578 + $0x10] sm:$0xc]
  %v7126 = vld [vmem:[%s5578 + $0x18] sm:$0xc]
  %v7127 = vld [vmem:[%s5578 + $0x20] sm:$0xc]
  %v7128 = vld [vmem:[%s5578 + $0x28] sm:$0xc]
  %v7129 = vld [vmem:[%s5578 + $0x30] sm:$0xc]
  %v7130 = vld [vmem:[%s5578 + $0x38] sm:$0xc]
  %v7131 = vld [vmem:[%s5578 + $0x60] sm:$0xc]
  %v7132 = vld [vmem:[%s5578 + $0x68] sm:$0xc]
  %v7133 = vld [vmem:[%s5578 + $0x70] sm:$0xc]
  %v7134 = vld [vmem:[%s5578 + $0x78] sm:$0xc]
  %v7135 = vld [vmem:[%s5578 + $0x80] sm:$0xc]
  %v7136 = vld [vmem:[%s5578 + $0x88] sm:$0xc]
  %v7137 = vld [vmem:[%s5578 + $0x90] sm:$0xc]
  %v7138 = vld [vmem:[%s5578 + $0x98] sm:$0xc]
  %v7171 = vrot.slane %v7123, 6
  %v7172 = vrot.slane %v7171, 4
  %v7173 = vrot.slane %v6609, 6
  %v7174 = vsel %vm1569, %v7172, %v7173
  %v7175 = vrot.slane %v7124, 6
  %v7176 = vrot.slane %v7175, 4
  %v7177 = vrot.slane %v6610, 6
  %v7178 = vsel %vm1569, %v7176, %v7177
  %v7179 = vrot.slane %v7125, 6
  %v7180 = vrot.slane %v7179, 4
  %v7181 = vrot.slane %v6611, 6
  %v7182 = vsel %vm1569, %v7180, %v7181
  %v7183 = vrot.slane %v7126, 6
  %v7184 = vrot.slane %v7183, 4
  %v7185 = vrot.slane %v6612, 6
  %v7186 = vsel %vm1569, %v7184, %v7185
  %v7187 = vrot.slane %v7127, 6
  %v7188 = vrot.slane %v7187, 4
  %v7189 = vrot.slane %v6613, 6
  %v7190 = vsel %vm1569, %v7188, %v7189
  %v7191 = vrot.slane %v7128, 6
  %v7192 = vrot.slane %v7191, 4
  %v7193 = vrot.slane %v6614, 6
  %v7194 = vsel %vm1569, %v7192, %v7193
  %v7195 = vrot.slane %v7129, 6
  %v7196 = vrot.slane %v7195, 4
  %v7197 = vrot.slane %v6615, 6
  %v7198 = vsel %vm1569, %v7196, %v7197
  %v7199 = vrot.slane %v7130, 6
  %v7200 = vrot.slane %v7199, 4
  %v7201 = vrot.slane %v6616, 6
  %v7202 = vsel %vm1569, %v7200, %v7201
  %v7203 = vrot.slane %v7131, 6
  %v7204 = vrot.slane %v7203, 4
  %v7205 = vrot.slane %v6617, 6
  %v7206 = vsel %vm1569, %v7204, %v7205
  %v7207 = vrot.slane %v7132, 6
  %v7208 = vrot.slane %v7207, 4
  %v7209 = vrot.slane %v6618, 6
  %v7210 = vsel %vm1569, %v7208, %v7209
  %v7211 = vrot.slane %v7133, 6
  %v7212 = vrot.slane %v7211, 4
  %v7213 = vrot.slane %v6619, 6
  %v7214 = vsel %vm1569, %v7212, %v7213
  %v7215 = vrot.slane %v7134, 6
  %v7216 = vrot.slane %v7215, 4
  %v7217 = vrot.slane %v6620, 6
  %v7218 = vsel %vm1569, %v7216, %v7217
  %v7219 = vrot.slane %v7135, 6
  %v7220 = vrot.slane %v7219, 4
  %v7221 = vrot.slane %v6621, 6
  %v7222 = vsel %vm1569, %v7220, %v7221
  %v7223 = vrot.slane %v7136, 6
  %v7224 = vrot.slane %v7223, 4
  %v7225 = vrot.slane %v6622, 6
  %v7226 = vsel %vm1569, %v7224, %v7225
  %v7227 = vrot.slane %v7137, 6
  %v7228 = vrot.slane %v7227, 4
  %v7229 = vrot.slane %v6623, 6
  %v7230 = vsel %vm1569, %v7228, %v7229
  %v7231 = vrot.slane %v7138, 6
  %v7232 = vrot.slane %v7231, 4
  %v7233 = vrot.slane %v6624, 6
  %v7234 = vsel %vm1569, %v7232, %v7233
  %s7235 = scalar_lea.vmem %s1, 1216
  %v7236 = vld [vmem:[%s7235] sm:$0xf]
  %v7237 = vld [vmem:[%s7235 + $0x4] sm:$0xf]
  %v7238 = vld [vmem:[%s7235 + $0x8] sm:$0xf]
  %v7239 = vld [vmem:[%s7235 + $0xc] sm:$0xf]
  %v7240 = vld [vmem:[%s7235 + $0x10] sm:$0xf]
  %v7241 = vld [vmem:[%s7235 + $0x14] sm:$0xf]
  %v7242 = vld [vmem:[%s7235 + $0x18] sm:$0xf]
  %v7243 = vld [vmem:[%s7235 + $0x1c] sm:$0xf]
  %v7244 = vld [vmem:[%s7235 + $0x20] sm:$0xf]
  %v7245 = vld [vmem:[%s7235 + $0x24] sm:$0xf]
  %v7246 = vld [vmem:[%s7235 + $0x28] sm:$0xf]
  %v7247 = vld [vmem:[%s7235 + $0x2c] sm:$0xf]
  %v7248 = vld [vmem:[%s7235 + $0x30] sm:$0xf]
  %v7249 = vld [vmem:[%s7235 + $0x34] sm:$0xf]
  %v7250 = vld [vmem:[%s7235 + $0x38] sm:$0xf]
  %v7251 = vld [vmem:[%s7235 + $0x3c] sm:$0xf]
  %v7252 = vunpack.c.l.b16 %v7174
  %v7253 = vunpack.c.l.b16 %v7178
  %v7254 = vunpack.c.l.b16 %v7182
  %v7255 = vunpack.c.l.b16 %v7186
  %v7256 = vunpack.c.l.b16 %v7190
  %v7257 = vunpack.c.l.b16 %v7194
  %v7258 = vunpack.c.l.b16 %v7198
  %v7259 = vunpack.c.l.b16 %v7202
  %v7260 = vunpack.c.l.b16 %v7206
  %v7261 = vunpack.c.l.b16 %v7210
  %v7262 = vunpack.c.l.b16 %v7214
  %v7263 = vunpack.c.l.b16 %v7218
  %v7264 = vunpack.c.l.b16 %v7222
  %v7265 = vunpack.c.l.b16 %v7226
  %v7266 = vunpack.c.l.b16 %v7230
  %v7267 = vunpack.c.l.b16 %v7234
  %v7268 = vpack.c.b16 %v7253, %v7252
  %v7269 = vpack.c.b16 %v7255, %v7254
  %v7270 = vpack.c.b16 %v7257, %v7256
  %v7271 = vpack.c.b16 %v7259, %v7258
  %v7272 = vpack.c.b16 %v7261, %v7260
  %v7273 = vpack.c.b16 %v7263, %v7262
  %v7274 = vpack.c.b16 %v7265, %v7264
  %v7275 = vpack.c.b16 %v7267, %v7266
  %v7300 = vunpack.c.l.b16 %v7236
  %v7301 = vunpack.c.l.b16 %v7237
  %v7302 = vunpack.c.l.b16 %v7238
  %v7303 = vunpack.c.l.b16 %v7239
  %v7304 = vunpack.c.l.b16 %v7240
  %v7305 = vunpack.c.l.b16 %v7241
  %v7306 = vunpack.c.l.b16 %v7242
  %v7307 = vunpack.c.l.b16 %v7243
  %v7308 = vunpack.c.l.b16 %v7244
  %v7309 = vunpack.c.l.b16 %v7245
  %v7310 = vunpack.c.l.b16 %v7246
  %v7311 = vunpack.c.l.b16 %v7247
  %v7312 = vunpack.c.l.b16 %v7248
  %v7313 = vunpack.c.l.b16 %v7249
  %v7314 = vunpack.c.l.b16 %v7250
  %v7315 = vunpack.c.l.b16 %v7251
  %v7316 = vpack.c.b16 %v7301, %v7300
  %v7317 = vpack.c.b16 %v7303, %v7302
  %v7318 = vpack.c.b16 %v7305, %v7304
  %v7319 = vpack.c.b16 %v7307, %v7306
  %v7320 = vpack.c.b16 %v7309, %v7308
  %v7321 = vpack.c.b16 %v7311, %v7310
  %v7322 = vpack.c.b16 %v7313, %v7312
  %v7323 = vpack.c.b16 %v7315, %v7314
  %7332 = vmatprep.subr.bf16.mxu0 0
  %7333 = vmatpush1.bf16.msra.mxu0 %v7316
  %7334 = vmatprep.subr.bf16.mxu0 0
  %7335 = vmatpush1.bf16.msra.mxu0 %v7317
  %7336 = vmatprep.subr.bf16.mxu0 0
  %7337 = vmatpush1.bf16.msra.mxu0 %v7318
  %7338 = vmatprep.subr.bf16.mxu0 0
  %7339 = vmatpush1.bf16.msra.mxu0 %v7319
  %7340 = vmatprep.subr.bf16.mxu0 0
  %7341 = vmatpush1.bf16.msra.mxu0 %v7320
  %7342 = vmatprep.subr.bf16.mxu0 0
  %7343 = vmatpush1.bf16.msra.mxu0 %v7321
  %7344 = vmatprep.subr.bf16.mxu0 0
  %7345 = vmatpush1.bf16.msra.mxu0 %v7322
  %7346 = vmatprep.subr.bf16.mxu0 0
  %7347 = vmatpush1.bf16.msra.mxu0 %v7323
  %7348 = vmatprep.subr.bf16.mxu0 0
  %7349 = vmatpush1.bf16.msra.mxu0 0
  %7350 = vmatprep.subr.bf16.mxu0 0
  %7351 = vmatpush1.bf16.msra.mxu0 0
  %7352 = vmatprep.subr.bf16.mxu0 0
  %7353 = vmatpush1.bf16.msra.mxu0 0
  %7354 = vmatprep.subr.bf16.mxu0 0
  %7355 = vmatpush1.bf16.msra.mxu0 0
  %7356 = vmatprep.subr.bf16.mxu0 0
  %7357 = vmatpush1.bf16.msra.mxu0 0
  %7358 = vmatprep.subr.bf16.mxu0 0
  %7359 = vmatpush1.bf16.msra.mxu0 0
  %7360 = vmatprep.subr.bf16.mxu0 0
  %7361 = vmatpush1.bf16.msra.mxu0 0
  %7362 = vmatprep.subr.bf16.mxu0 0
  %7363 = vmatpush1.bf16.msra.mxu0 0
  %7364 = vmatprep.mubr.bf16.mxu0 0
  %7365 = vmatmul.mubr.bf16.gmra.mrb[0].mxu0 %v7268
  %v7366 = vpop.f32.mrb[0].mxu0
  %v7367 = vadd.f32 0.0, %v7366
  %v7368 = vpop.f32.mrb[0].mxu0
  %v7369 = vpop.f32.mrb[0].mxu0
  %v7370 = vadd.f32 0.0, %v7369
  %v7371 = vpop.f32.mrb[0].mxu0
  %7372 = vmatprep.mubr.bf16.mxu0 0
  %7373 = vmatmul.mubr.bf16.gmra.mrb[0].mxu0 %v7269
  %v7374 = vpop.f32.mrb[0].mxu0
  %v7375 = vadd.f32 0.0, %v7374
  %v7376 = vpop.f32.mrb[0].mxu0
  %v7377 = vpop.f32.mrb[0].mxu0
  %v7378 = vadd.f32 0.0, %v7377
  %v7379 = vpop.f32.mrb[0].mxu0
  %7380 = vmatprep.mubr.bf16.mxu0 0
  %7381 = vmatmul.mubr.bf16.gmra.mrb[0].mxu0 %v7270
  %v7382 = vpop.f32.mrb[0].mxu0
  %v7383 = vadd.f32 0.0, %v7382
  %v7384 = vpop.f32.mrb[0].mxu0
  %v7385 = vpop.f32.mrb[0].mxu0
  %v7386 = vadd.f32 0.0, %v7385
  %v7387 = vpop.f32.mrb[0].mxu0
  %7388 = vmatprep.mubr.bf16.mxu0 0
  %7389 = vmatmul.mubr.bf16.gmra.mrb[0].mxu0 %v7271
  %v7390 = vpop.f32.mrb[0].mxu0
  %v7391 = vadd.f32 0.0, %v7390
  %v7392 = vpop.f32.mrb[0].mxu0
  %v7393 = vpop.f32.mrb[0].mxu0
  %v7394 = vadd.f32 0.0, %v7393
  %v7395 = vpop.f32.mrb[0].mxu0
  %7396 = vmatprep.mubr.bf16.mxu0 0
  %7397 = vmatmul.mubr.bf16.gmra.mrb[0].mxu0 %v7272
  %v7398 = vpop.f32.mrb[0].mxu0
  %v7399 = vadd.f32 0.0, %v7398
  %v7400 = vpop.f32.mrb[0].mxu0
  %v7401 = vpop.f32.mrb[0].mxu0
  %v7402 = vadd.f32 0.0, %v7401
  %v7403 = vpop.f32.mrb[0].mxu0
  %7404 = vmatprep.mubr.bf16.mxu0 0
  %7405 = vmatmul.mubr.bf16.gmra.mrb[0].mxu0 %v7273
  %v7406 = vpop.f32.mrb[0].mxu0
  %v7407 = vadd.f32 0.0, %v7406
  %v7408 = vpop.f32.mrb[0].mxu0
  %v7409 = vpop.f32.mrb[0].mxu0
  %v7410 = vadd.f32 0.0, %v7409
  %v7411 = vpop.f32.mrb[0].mxu0
  %7412 = vmatprep.mubr.bf16.mxu0 0
  %7413 = vmatmul.mubr.bf16.gmra.mrb[0].mxu0 %v7274
  %v7414 = vpop.f32.mrb[0].mxu0
  %v7415 = vadd.f32 0.0, %v7414
  %v7416 = vpop.f32.mrb[0].mxu0
  %v7417 = vpop.f32.mrb[0].mxu0
  %v7418 = vadd.f32 0.0, %v7417
  %v7419 = vpop.f32.mrb[0].mxu0
  %7420 = vmatprep.mubr.bf16.mxu0 0
  %7421 = vmatmul.mubr.bf16.gmra.mrb[0].mxu0 %v7275
  %v7422 = vpop.f32.mrb[0].mxu0
  %v7423 = vadd.f32 0.0, %v7422
  %v7424 = vpop.f32.mrb[0].mxu0
  %v7425 = vpop.f32.mrb[0].mxu0
  %v7426 = vadd.f32 0.0, %v7425
  %v7427 = vpop.f32.mrb[0].mxu0
  %7428 = vdwg.mxu0
  %v7429 = vadd.f32 %v7107, %v7367
  %v7430 = vadd.f32 %v7108, %v7370
  %v7431 = vadd.f32 %v7109, %v7375
  %v7432 = vadd.f32 %v7110, %v7378
  %v7433 = vadd.f32 %v7111, %v7383
  %v7434 = vadd.f32 %v7112, %v7386
  %v7435 = vadd.f32 %v7113, %v7391
  %v7436 = vadd.f32 %v7114, %v7394
  %v7437 = vadd.f32 %v7115, %v7399
  %v7438 = vadd.f32 %v7116, %v7402
  %v7439 = vadd.f32 %v7117, %v7407
  %v7440 = vadd.f32 %v7118, %v7410
  %v7441 = vadd.f32 %v7119, %v7415
  %v7442 = vadd.f32 %v7120, %v7418
  %v7443 = vadd.f32 %v7121, %v7423
  %v7444 = vadd.f32 %v7122, %v7426
  %s7445 = scalar_lea.vmem %s0, 32
  %v7446 = vld [vmem:[%s7445] sm:$0xf]
  %v7447 = vld [vmem:[%s7445 + $0x8] sm:$0xf]
  %v7448 = vld [vmem:[%s7445 + $0x10] sm:$0xf]
  %v7449 = vld [vmem:[%s7445 + $0x18] sm:$0xf]
  %v7450 = vld [vmem:[%s7445 + $0x20] sm:$0xf]
  %v7451 = vld [vmem:[%s7445 + $0x28] sm:$0xf]
  %v7452 = vld [vmem:[%s7445 + $0x30] sm:$0xf]
  %v7453 = vld [vmem:[%s7445 + $0x38] sm:$0xf]
  %v7454 = vld [vmem:[%s7445 + $0x60] sm:$0xf]
  %v7455 = vld [vmem:[%s7445 + $0x68] sm:$0xf]
  %v7456 = vld [vmem:[%s7445 + $0x70] sm:$0xf]
  %v7457 = vld [vmem:[%s7445 + $0x78] sm:$0xf]
  %v7458 = vld [vmem:[%s7445 + $0x80] sm:$0xf]
  %v7459 = vld [vmem:[%s7445 + $0x88] sm:$0xf]
  %v7460 = vld [vmem:[%s7445 + $0x90] sm:$0xf]
  %v7461 = vld [vmem:[%s7445 + $0x98] sm:$0xf]
  %s7462 = scalar_lea.vmem %s1, 1280
  %v7463 = vld [vmem:[%s7462] sm:$0xf]
  %v7464 = vld [vmem:[%s7462 + $0x4] sm:$0xf]
  %v7465 = vld [vmem:[%s7462 + $0x8] sm:$0xf]
  %v7466 = vld [vmem:[%s7462 + $0xc] sm:$0xf]
  %v7467 = vld [vmem:[%s7462 + $0x10] sm:$0xf]
  %v7468 = vld [vmem:[%s7462 + $0x14] sm:$0xf]
  %v7469 = vld [vmem:[%s7462 + $0x18] sm:$0xf]
  %v7470 = vld [vmem:[%s7462 + $0x1c] sm:$0xf]
  %v7471 = vld [vmem:[%s7462 + $0x20] sm:$0xf]
  %v7472 = vld [vmem:[%s7462 + $0x24] sm:$0xf]
  %v7473 = vld [vmem:[%s7462 + $0x28] sm:$0xf]
  %v7474 = vld [vmem:[%s7462 + $0x2c] sm:$0xf]
  %v7475 = vld [vmem:[%s7462 + $0x30] sm:$0xf]
  %v7476 = vld [vmem:[%s7462 + $0x34] sm:$0xf]
  %v7477 = vld [vmem:[%s7462 + $0x38] sm:$0xf]
  %v7478 = vld [vmem:[%s7462 + $0x3c] sm:$0xf]
  %v7495 = vunpack.c.l.b16 %v7446
  %v7496 = vunpack.c.l.b16 %v7447
  %v7497 = vunpack.c.l.b16 %v7448
  %v7498 = vunpack.c.l.b16 %v7449
  %v7499 = vunpack.c.l.b16 %v7450
  %v7500 = vunpack.c.l.b16 %v7451
  %v7501 = vunpack.c.l.b16 %v7452
  %v7502 = vunpack.c.l.b16 %v7453
  %v7503 = vunpack.c.l.b16 %v7454
  %v7504 = vunpack.c.l.b16 %v7455
  %v7505 = vunpack.c.l.b16 %v7456
  %v7506 = vunpack.c.l.b16 %v7457
  %v7507 = vunpack.c.l.b16 %v7458
  %v7508 = vunpack.c.l.b16 %v7459
  %v7509 = vunpack.c.l.b16 %v7460
  %v7510 = vunpack.c.l.b16 %v7461
  %v7511 = vpack.c.b16 %v7496, %v7495
  %v7512 = vpack.c.b16 %v7498, %v7497
  %v7513 = vpack.c.b16 %v7500, %v7499
  %v7514 = vpack.c.b16 %v7502, %v7501
  %v7515 = vpack.c.b16 %v7504, %v7503
  %v7516 = vpack.c.b16 %v7506, %v7505
  %v7517 = vpack.c.b16 %v7508, %v7507
  %v7518 = vpack.c.b16 %v7510, %v7509
  %v7543 = vunpack.c.l.b16 %v7463
  %v7544 = vunpack.c.l.b16 %v7464
  %v7545 = vunpack.c.l.b16 %v7465
  %v7546 = vunpack.c.l.b16 %v7466
  %v7547 = vunpack.c.l.b16 %v7467
  %v7548 = vunpack.c.l.b16 %v7468
  %v7549 = vunpack.c.l.b16 %v7469
  %v7550 = vunpack.c.l.b16 %v7470
  %v7551 = vunpack.c.l.b16 %v7471
  %v7552 = vunpack.c.l.b16 %v7472
  %v7553 = vunpack.c.l.b16 %v7473
  %v7554 = vunpack.c.l.b16 %v7474
  %v7555 = vunpack.c.l.b16 %v7475
  %v7556 = vunpack.c.l.b16 %v7476
  %v7557 = vunpack.c.l.b16 %v7477
  %v7558 = vunpack.c.l.b16 %v7478
  %v7559 = vpack.c.b16 %v7544, %v7543
  %v7560 = vpack.c.b16 %v7546, %v7545
  %v7561 = vpack.c.b16 %v7548, %v7547
  %v7562 = vpack.c.b16 %v7550, %v7549
  %v7563 = vpack.c.b16 %v7552, %v7551
  %v7564 = vpack.c.b16 %v7554, %v7553
  %v7565 = vpack.c.b16 %v7556, %v7555
  %v7566 = vpack.c.b16 %v7558, %v7557
  %7575 = vmatprep.subr.bf16.mxu0 0
  %7576 = vmatpush1.bf16.msra.mxu0 %v7559
  %7577 = vmatprep.subr.bf16.mxu0 0
  %7578 = vmatpush1.bf16.msra.mxu0 %v7560
  %7579 = vmatprep.subr.bf16.mxu0 0
  %7580 = vmatpush1.bf16.msra.mxu0 %v7561
  %7581 = vmatprep.subr.bf16.mxu0 0
  %7582 = vmatpush1.bf16.msra.mxu0 %v7562
  %7583 = vmatprep.subr.bf16.mxu0 0
  %7584 = vmatpush1.bf16.msra.mxu0 %v7563
  %7585 = vmatprep.subr.bf16.mxu0 0
  %7586 = vmatpush1.bf16.msra.mxu0 %v7564
  %7587 = vmatprep.subr.bf16.mxu0 0
  %7588 = vmatpush1.bf16.msra.mxu0 %v7565
  %7589 = vmatprep.subr.bf16.mxu0 0
  %7590 = vmatpush1.bf16.msra.mxu0 %v7566
  %7591 = vmatprep.subr.bf16.mxu0 0
  %7592 = vmatpush1.bf16.msra.mxu0 0
  %7593 = vmatprep.subr.bf16.mxu0 0
  %7594 = vmatpush1.bf16.msra.mxu0 0
  %7595 = vmatprep.subr.bf16.mxu0 0
  %7596 = vmatpush1.bf16.msra.mxu0 0
  %7597 = vmatprep.subr.bf16.mxu0 0
  %7598 = vmatpush1.bf16.msra.mxu0 0
  %7599 = vmatprep.subr.bf16.mxu0 0
  %7600 = vmatpush1.bf16.msra.mxu0 0
  %7601 = vmatprep.subr.bf16.mxu0 0
  %7602 = vmatpush1.bf16.msra.mxu0 0
  %7603 = vmatprep.subr.bf16.mxu0 0
  %7604 = vmatpush1.bf16.msra.mxu0 0
  %7605 = vmatprep.subr.bf16.mxu0 0
  %7606 = vmatpush1.bf16.msra.mxu0 0
  %7607 = vmatprep.mubr.bf16.mxu0 0
  %7608 = vmatmul.mubr.bf16.gmra.mrb[0].mxu0 %v7511
  %v7609 = vpop.f32.mrb[0].mxu0
  %v7610 = vadd.f32 0.0, %v7609
  %v7611 = vpop.f32.mrb[0].mxu0
  %v7612 = vpop.f32.mrb[0].mxu0
  %v7613 = vadd.f32 0.0, %v7612
  %v7614 = vpop.f32.mrb[0].mxu0
  %7615 = vmatprep.mubr.bf16.mxu0 0
  %7616 = vmatmul.mubr.bf16.gmra.mrb[0].mxu0 %v7512
  %v7617 = vpop.f32.mrb[0].mxu0
  %v7618 = vadd.f32 0.0, %v7617
  %v7619 = vpop.f32.mrb[0].mxu0
  %v7620 = vpop.f32.mrb[0].mxu0
  %v7621 = vadd.f32 0.0, %v7620
  %v7622 = vpop.f32.mrb[0].mxu0
  %7623 = vmatprep.mubr.bf16.mxu0 0
  %7624 = vmatmul.mubr.bf16.gmra.mrb[0].mxu0 %v7513
  %v7625 = vpop.f32.mrb[0].mxu0
  %v7626 = vadd.f32 0.0, %v7625
  %v7627 = vpop.f32.mrb[0].mxu0
  %v7628 = vpop.f32.mrb[0].mxu0
  %v7629 = vadd.f32 0.0, %v7628
  %v7630 = vpop.f32.mrb[0].mxu0
  %7631 = vmatprep.mubr.bf16.mxu0 0
  %7632 = vmatmul.mubr.bf16.gmra.mrb[0].mxu0 %v7514
  %v7633 = vpop.f32.mrb[0].mxu0
  %v7634 = vadd.f32 0.0, %v7633
  %v7635 = vpop.f32.mrb[0].mxu0
  %v7636 = vpop.f32.mrb[0].mxu0
  %v7637 = vadd.f32 0.0, %v7636
  %v7638 = vpop.f32.mrb[0].mxu0
  %7639 = vmatprep.mubr.bf16.mxu0 0
  %7640 = vmatmul.mubr.bf16.gmra.mrb[0].mxu0 %v7515
  %v7641 = vpop.f32.mrb[0].mxu0
  %v7642 = vadd.f32 0.0, %v7641
  %v7643 = vpop.f32.mrb[0].mxu0
  %v7644 = vpop.f32.mrb[0].mxu0
  %v7645 = vadd.f32 0.0, %v7644
  %v7646 = vpop.f32.mrb[0].mxu0
  %7647 = vmatprep.mubr.bf16.mxu0 0
  %7648 = vmatmul.mubr.bf16.gmra.mrb[0].mxu0 %v7516
  %v7649 = vpop.f32.mrb[0].mxu0
  %v7650 = vadd.f32 0.0, %v7649
  %v7651 = vpop.f32.mrb[0].mxu0
  %v7652 = vpop.f32.mrb[0].mxu0
  %v7653 = vadd.f32 0.0, %v7652
  %v7654 = vpop.f32.mrb[0].mxu0
  %7655 = vmatprep.mubr.bf16.mxu0 0
  %7656 = vmatmul.mubr.bf16.gmra.mrb[0].mxu0 %v7517
  %v7657 = vpop.f32.mrb[0].mxu0
  %v7658 = vadd.f32 0.0, %v7657
  %v7659 = vpop.f32.mrb[0].mxu0
  %v7660 = vpop.f32.mrb[0].mxu0
  %v7661 = vadd.f32 0.0, %v7660
  %v7662 = vpop.f32.mrb[0].mxu0
  %7663 = vmatprep.mubr.bf16.mxu0 0
  %7664 = vmatmul.mubr.bf16.gmra.mrb[0].mxu0 %v7518
  %v7665 = vpop.f32.mrb[0].mxu0
  %v7666 = vadd.f32 0.0, %v7665
  %v7667 = vpop.f32.mrb[0].mxu0
  %v7668 = vpop.f32.mrb[0].mxu0
  %v7669 = vadd.f32 0.0, %v7668
  %v7670 = vpop.f32.mrb[0].mxu0
  %7671 = vdwg.mxu0
  %v7672 = vadd.f32 %v7429, %v7610
  %v7673 = vadd.f32 %v7430, %v7613
  %v7674 = vadd.f32 %v7431, %v7618
  %v7675 = vadd.f32 %v7432, %v7621
  %v7676 = vadd.f32 %v7433, %v7626
  %v7677 = vadd.f32 %v7434, %v7629
  %v7678 = vadd.f32 %v7435, %v7634
  %v7679 = vadd.f32 %v7436, %v7637
  %v7680 = vadd.f32 %v7437, %v7642
  %v7681 = vadd.f32 %v7438, %v7645
  %v7682 = vadd.f32 %v7439, %v7650
  %v7683 = vadd.f32 %v7440, %v7653
  %v7684 = vadd.f32 %v7441, %v7658
  %v7685 = vadd.f32 %v7442, %v7661
  %v7686 = vadd.f32 %v7443, %v7666
  %v7687 = vadd.f32 %v7444, %v7669
  %v7688 = vld [vmem:[%s7445] sm:$0xf]
  %v7689 = vld [vmem:[%s7445 + $0x4] sm:$0x1]
  %v7690 = vld [vmem:[%s7445 + $0x8] sm:$0xf]
  %v7691 = vld [vmem:[%s7445 + $0xc] sm:$0x1]
  %v7692 = vld [vmem:[%s7445 + $0x10] sm:$0xf]
  %v7693 = vld [vmem:[%s7445 + $0x14] sm:$0x1]
  %v7694 = vld [vmem:[%s7445 + $0x18] sm:$0xf]
  %v7695 = vld [vmem:[%s7445 + $0x1c] sm:$0x1]
  %v7696 = vld [vmem:[%s7445 + $0x20] sm:$0xf]
  %v7697 = vld [vmem:[%s7445 + $0x24] sm:$0x1]
  %v7698 = vld [vmem:[%s7445 + $0x28] sm:$0xf]
  %v7699 = vld [vmem:[%s7445 + $0x2c] sm:$0x1]
  %v7700 = vld [vmem:[%s7445 + $0x30] sm:$0xf]
  %v7701 = vld [vmem:[%s7445 + $0x34] sm:$0x1]
  %v7702 = vld [vmem:[%s7445 + $0x38] sm:$0xf]
  %v7703 = vld [vmem:[%s7445 + $0x3c] sm:$0x1]
  %v7704 = vld [vmem:[%s7445 + $0x60] sm:$0xf]
  %v7705 = vld [vmem:[%s7445 + $0x64] sm:$0x1]
  %v7706 = vld [vmem:[%s7445 + $0x68] sm:$0xf]
  %v7707 = vld [vmem:[%s7445 + $0x6c] sm:$0x1]
  %v7708 = vld [vmem:[%s7445 + $0x70] sm:$0xf]
  %v7709 = vld [vmem:[%s7445 + $0x74] sm:$0x1]
  %v7710 = vld [vmem:[%s7445 + $0x78] sm:$0xf]
  %v7711 = vld [vmem:[%s7445 + $0x7c] sm:$0x1]
  %v7712 = vld [vmem:[%s7445 + $0x80] sm:$0xf]
  %v7713 = vld [vmem:[%s7445 + $0x84] sm:$0x1]
  %v7714 = vld [vmem:[%s7445 + $0x88] sm:$0xf]
  %v7715 = vld [vmem:[%s7445 + $0x8c] sm:$0x1]
  %v7716 = vld [vmem:[%s7445 + $0x90] sm:$0xf]
  %v7717 = vld [vmem:[%s7445 + $0x94] sm:$0x1]
  %v7718 = vld [vmem:[%s7445 + $0x98] sm:$0xf]
  %v7719 = vld [vmem:[%s7445 + $0x9c] sm:$0x1]
  %v7721 = vshrl.u32 %v7688, 16
  %v7723 = vrot.slane %v7721, 4
  %v7724 = vshll.u32 %v7688, 16
  %v7726 = vrot.slane %v7724, 5
  %v7727 = vor.u32 %v7723, %v7726
  %v7728 = vrot.slane %v7727, 4
  %v7730 = vshll.u32 %v7689, 16
  %v7732 = vrot.slane %v7730, 5
  %v7733 = vsel %vm65, %v7728, %v7732
  %v7735 = vshrl.u32 %v7690, 16
  %v7737 = vrot.slane %v7735, 4
  %v7738 = vshll.u32 %v7690, 16
  %v7740 = vrot.slane %v7738, 5
  %v7741 = vor.u32 %v7737, %v7740
  %v7742 = vrot.slane %v7741, 4
  %v7744 = vshll.u32 %v7691, 16
  %v7746 = vrot.slane %v7744, 5
  %v7747 = vsel %vm65, %v7742, %v7746
  %v7749 = vshrl.u32 %v7692, 16
  %v7751 = vrot.slane %v7749, 4
  %v7752 = vshll.u32 %v7692, 16
  %v7754 = vrot.slane %v7752, 5
  %v7755 = vor.u32 %v7751, %v7754
  %v7756 = vrot.slane %v7755, 4
  %v7758 = vshll.u32 %v7693, 16
  %v7760 = vrot.slane %v7758, 5
  %v7761 = vsel %vm65, %v7756, %v7760
  %v7763 = vshrl.u32 %v7694, 16
  %v7765 = vrot.slane %v7763, 4
  %v7766 = vshll.u32 %v7694, 16
  %v7768 = vrot.slane %v7766, 5
  %v7769 = vor.u32 %v7765, %v7768
  %v7770 = vrot.slane %v7769, 4
  %v7772 = vshll.u32 %v7695, 16
  %v7774 = vrot.slane %v7772, 5
  %v7775 = vsel %vm65, %v7770, %v7774
  %v7777 = vshrl.u32 %v7696, 16
  %v7779 = vrot.slane %v7777, 4
  %v7780 = vshll.u32 %v7696, 16
  %v7782 = vrot.slane %v7780, 5
  %v7783 = vor.u32 %v7779, %v7782
  %v7784 = vrot.slane %v7783, 4
  %v7786 = vshll.u32 %v7697, 16
  %v7788 = vrot.slane %v7786, 5
  %v7789 = vsel %vm65, %v7784, %v7788
  %v7791 = vshrl.u32 %v7698, 16
  %v7793 = vrot.slane %v7791, 4
  %v7794 = vshll.u32 %v7698, 16
  %v7796 = vrot.slane %v7794, 5
  %v7797 = vor.u32 %v7793, %v7796
  %v7798 = vrot.slane %v7797, 4
  %v7800 = vshll.u32 %v7699, 16
  %v7802 = vrot.slane %v7800, 5
  %v7803 = vsel %vm65, %v7798, %v7802
  %v7805 = vshrl.u32 %v7700, 16
  %v7807 = vrot.slane %v7805, 4
  %v7808 = vshll.u32 %v7700, 16
  %v7810 = vrot.slane %v7808, 5
  %v7811 = vor.u32 %v7807, %v7810
  %v7812 = vrot.slane %v7811, 4
  %v7814 = vshll.u32 %v7701, 16
  %v7816 = vrot.slane %v7814, 5
  %v7817 = vsel %vm65, %v7812, %v7816
  %v7819 = vshrl.u32 %v7702, 16
  %v7821 = vrot.slane %v7819, 4
  %v7822 = vshll.u32 %v7702, 16
  %v7824 = vrot.slane %v7822, 5
  %v7825 = vor.u32 %v7821, %v7824
  %v7826 = vrot.slane %v7825, 4
  %v7828 = vshll.u32 %v7703, 16
  %v7830 = vrot.slane %v7828, 5
  %v7831 = vsel %vm65, %v7826, %v7830
  %v7833 = vshrl.u32 %v7704, 16
  %v7835 = vrot.slane %v7833, 4
  %v7836 = vshll.u32 %v7704, 16
  %v7838 = vrot.slane %v7836, 5
  %v7839 = vor.u32 %v7835, %v7838
  %v7840 = vrot.slane %v7839, 4
  %v7842 = vshll.u32 %v7705, 16
  %v7844 = vrot.slane %v7842, 5
  %v7845 = vsel %vm65, %v7840, %v7844
  %v7847 = vshrl.u32 %v7706, 16
  %v7849 = vrot.slane %v7847, 4
  %v7850 = vshll.u32 %v7706, 16
  %v7852 = vrot.slane %v7850, 5
  %v7853 = vor.u32 %v7849, %v7852
  %v7854 = vrot.slane %v7853, 4
  %v7856 = vshll.u32 %v7707, 16
  %v7858 = vrot.slane %v7856, 5
  %v7859 = vsel %vm65, %v7854, %v7858
  %v7861 = vshrl.u32 %v7708, 16
  %v7863 = vrot.slane %v7861, 4
  %v7864 = vshll.u32 %v7708, 16
  %v7866 = vrot.slane %v7864, 5
  %v7867 = vor.u32 %v7863, %v7866
  %v7868 = vrot.slane %v7867, 4
  %v7870 = vshll.u32 %v7709, 16
  %v7872 = vrot.slane %v7870, 5
  %v7873 = vsel %vm65, %v7868, %v7872
  %v7875 = vshrl.u32 %v7710, 16
  %v7877 = vrot.slane %v7875, 4
  %v7878 = vshll.u32 %v7710, 16
  %v7880 = vrot.slane %v7878, 5
  %v7881 = vor.u32 %v7877, %v7880
  %v7882 = vrot.slane %v7881, 4
  %v7884 = vshll.u32 %v7711, 16
  %v7886 = vrot.slane %v7884, 5
  %v7887 = vsel %vm65, %v7882, %v7886
  %v7889 = vshrl.u32 %v7712, 16
  %v7891 = vrot.slane %v7889, 4
  %v7892 = vshll.u32 %v7712, 16
  %v7894 = vrot.slane %v7892, 5
  %v7895 = vor.u32 %v7891, %v7894
  %v7896 = vrot.slane %v7895, 4
  %v7898 = vshll.u32 %v7713, 16
  %v7900 = vrot.slane %v7898, 5
  %v7901 = vsel %vm65, %v7896, %v7900
  %v7903 = vshrl.u32 %v7714, 16
  %v7905 = vrot.slane %v7903, 4
  %v7906 = vshll.u32 %v7714, 16
  %v7908 = vrot.slane %v7906, 5
  %v7909 = vor.u32 %v7905, %v7908
  %v7910 = vrot.slane %v7909, 4
  %v7912 = vshll.u32 %v7715, 16
  %v7914 = vrot.slane %v7912, 5
  %v7915 = vsel %vm65, %v7910, %v7914
  %v7917 = vshrl.u32 %v7716, 16
  %v7919 = vrot.slane %v7917, 4
  %v7920 = vshll.u32 %v7716, 16
  %v7922 = vrot.slane %v7920, 5
  %v7923 = vor.u32 %v7919, %v7922
  %v7924 = vrot.slane %v7923, 4
  %v7926 = vshll.u32 %v7717, 16
  %v7928 = vrot.slane %v7926, 5
  %v7929 = vsel %vm65, %v7924, %v7928
  %v7931 = vshrl.u32 %v7718, 16
  %v7933 = vrot.slane %v7931, 4
  %v7934 = vshll.u32 %v7718, 16
  %v7936 = vrot.slane %v7934, 5
  %v7937 = vor.u32 %v7933, %v7936
  %v7938 = vrot.slane %v7937, 4
  %v7940 = vshll.u32 %v7719, 16
  %v7942 = vrot.slane %v7940, 5
  %v7943 = vsel %vm65, %v7938, %v7942
  %s7944 = scalar_lea.vmem %s1, 1344
  %v7945 = vld [vmem:[%s7944] sm:$0xf]
  %v7946 = vld [vmem:[%s7944 + $0x4] sm:$0xf]
  %v7947 = vld [vmem:[%s7944 + $0x8] sm:$0xf]
  %v7948 = vld [vmem:[%s7944 + $0xc] sm:$0xf]
  %v7949 = vld [vmem:[%s7944 + $0x10] sm:$0xf]
  %v7950 = vld [vmem:[%s7944 + $0x14] sm:$0xf]
  %v7951 = vld [vmem:[%s7944 + $0x18] sm:$0xf]
  %v7952 = vld [vmem:[%s7944 + $0x1c] sm:$0xf]
  %v7953 = vld [vmem:[%s7944 + $0x20] sm:$0xf]
  %v7954 = vld [vmem:[%s7944 + $0x24] sm:$0xf]
  %v7955 = vld [vmem:[%s7944 + $0x28] sm:$0xf]
  %v7956 = vld [vmem:[%s7944 + $0x2c] sm:$0xf]
  %v7957 = vld [vmem:[%s7944 + $0x30] sm:$0xf]
  %v7958 = vld [vmem:[%s7944 + $0x34] sm:$0xf]
  %v7959 = vld [vmem:[%s7944 + $0x38] sm:$0xf]
  %v7960 = vld [vmem:[%s7944 + $0x3c] sm:$0xf]
  %v7961 = vunpack.c.l.b16 %v7733
  %v7962 = vunpack.c.l.b16 %v7747
  %v7963 = vunpack.c.l.b16 %v7761
  %v7964 = vunpack.c.l.b16 %v7775
  %v7965 = vunpack.c.l.b16 %v7789
  %v7966 = vunpack.c.l.b16 %v7803
  %v7967 = vunpack.c.l.b16 %v7817
  %v7968 = vunpack.c.l.b16 %v7831
  %v7969 = vunpack.c.l.b16 %v7845
  %v7970 = vunpack.c.l.b16 %v7859
  %v7971 = vunpack.c.l.b16 %v7873
  %v7972 = vunpack.c.l.b16 %v7887
  %v7973 = vunpack.c.l.b16 %v7901
  %v7974 = vunpack.c.l.b16 %v7915
  %v7975 = vunpack.c.l.b16 %v7929
  %v7976 = vunpack.c.l.b16 %v7943
  %v7977 = vpack.c.b16 %v7962, %v7961
  %v7978 = vpack.c.b16 %v7964, %v7963
  %v7979 = vpack.c.b16 %v7966, %v7965
  %v7980 = vpack.c.b16 %v7968, %v7967
  %v7981 = vpack.c.b16 %v7970, %v7969
  %v7982 = vpack.c.b16 %v7972, %v7971
  %v7983 = vpack.c.b16 %v7974, %v7973
  %v7984 = vpack.c.b16 %v7976, %v7975
  %v8009 = vunpack.c.l.b16 %v7945
  %v8010 = vunpack.c.l.b16 %v7946
  %v8011 = vunpack.c.l.b16 %v7947
  %v8012 = vunpack.c.l.b16 %v7948
  %v8013 = vunpack.c.l.b16 %v7949
  %v8014 = vunpack.c.l.b16 %v7950
  %v8015 = vunpack.c.l.b16 %v7951
  %v8016 = vunpack.c.l.b16 %v7952
  %v8017 = vunpack.c.l.b16 %v7953
  %v8018 = vunpack.c.l.b16 %v7954
  %v8019 = vunpack.c.l.b16 %v7955
  %v8020 = vunpack.c.l.b16 %v7956
  %v8021 = vunpack.c.l.b16 %v7957
  %v8022 = vunpack.c.l.b16 %v7958
  %v8023 = vunpack.c.l.b16 %v7959
  %v8024 = vunpack.c.l.b16 %v7960
  %v8025 = vpack.c.b16 %v8010, %v8009
  %v8026 = vpack.c.b16 %v8012, %v8011
  %v8027 = vpack.c.b16 %v8014, %v8013
  %v8028 = vpack.c.b16 %v8016, %v8015
  %v8029 = vpack.c.b16 %v8018, %v8017
  %v8030 = vpack.c.b16 %v8020, %v8019
  %v8031 = vpack.c.b16 %v8022, %v8021
  %v8032 = vpack.c.b16 %v8024, %v8023
  %8041 = vmatprep.subr.bf16.mxu0 0
  %8042 = vmatpush1.bf16.msra.mxu0 %v8025
  %8043 = vmatprep.subr.bf16.mxu0 0
  %8044 = vmatpush1.bf16.msra.mxu0 %v8026
  %8045 = vmatprep.subr.bf16.mxu0 0
  %8046 = vmatpush1.bf16.msra.mxu0 %v8027
  %8047 = vmatprep.subr.bf16.mxu0 0
  %8048 = vmatpush1.bf16.msra.mxu0 %v8028
  %8049 = vmatprep.subr.bf16.mxu0 0
  %8050 = vmatpush1.bf16.msra.mxu0 %v8029
  %8051 = vmatprep.subr.bf16.mxu0 0
  %8052 = vmatpush1.bf16.msra.mxu0 %v8030
  %8053 = vmatprep.subr.bf16.mxu0 0
  %8054 = vmatpush1.bf16.msra.mxu0 %v8031
  %8055 = vmatprep.subr.bf16.mxu0 0
  %8056 = vmatpush1.bf16.msra.mxu0 %v8032
  %8057 = vmatprep.subr.bf16.mxu0 0
  %8058 = vmatpush1.bf16.msra.mxu0 0
  %8059 = vmatprep.subr.bf16.mxu0 0
  %8060 = vmatpush1.bf16.msra.mxu0 0
  %8061 = vmatprep.subr.bf16.mxu0 0
  %8062 = vmatpush1.bf16.msra.mxu0 0
  %8063 = vmatprep.subr.bf16.mxu0 0
  %8064 = vmatpush1.bf16.msra.mxu0 0
  %8065 = vmatprep.subr.bf16.mxu0 0
  %8066 = vmatpush1.bf16.msra.mxu0 0
  %8067 = vmatprep.subr.bf16.mxu0 0
  %8068 = vmatpush1.bf16.msra.mxu0 0
  %8069 = vmatprep.subr.bf16.mxu0 0
  %8070 = vmatpush1.bf16.msra.mxu0 0
  %8071 = vmatprep.subr.bf16.mxu0 0
  %8072 = vmatpush1.bf16.msra.mxu0 0
  %8073 = vmatprep.mubr.bf16.mxu0 0
  %8074 = vmatmul.mubr.bf16.gmra.mrb[0].mxu0 %v7977
  %v8075 = vpop.f32.mrb[0].mxu0
  %v8076 = vadd.f32 0.0, %v8075
  %v8077 = vpop.f32.mrb[0].mxu0
  %v8078 = vpop.f32.mrb[0].mxu0
  %v8079 = vadd.f32 0.0, %v8078
  %v8080 = vpop.f32.mrb[0].mxu0
  %8081 = vmatprep.mubr.bf16.mxu0 0
  %8082 = vmatmul.mubr.bf16.gmra.mrb[0].mxu0 %v7978
  %v8083 = vpop.f32.mrb[0].mxu0
  %v8084 = vadd.f32 0.0, %v8083
  %v8085 = vpop.f32.mrb[0].mxu0
  %v8086 = vpop.f32.mrb[0].mxu0
  %v8087 = vadd.f32 0.0, %v8086
  %v8088 = vpop.f32.mrb[0].mxu0
  %8089 = vmatprep.mubr.bf16.mxu0 0
  %8090 = vmatmul.mubr.bf16.gmra.mrb[0].mxu0 %v7979
  %v8091 = vpop.f32.mrb[0].mxu0
  %v8092 = vadd.f32 0.0, %v8091
  %v8093 = vpop.f32.mrb[0].mxu0
  %v8094 = vpop.f32.mrb[0].mxu0
  %v8095 = vadd.f32 0.0, %v8094
  %v8096 = vpop.f32.mrb[0].mxu0
  %8097 = vmatprep.mubr.bf16.mxu0 0
  %8098 = vmatmul.mubr.bf16.gmra.mrb[0].mxu0 %v7980
  %v8099 = vpop.f32.mrb[0].mxu0
  %v8100 = vadd.f32 0.0, %v8099
  %v8101 = vpop.f32.mrb[0].mxu0
  %v8102 = vpop.f32.mrb[0].mxu0
  %v8103 = vadd.f32 0.0, %v8102
  %v8104 = vpop.f32.mrb[0].mxu0
  %8105 = vmatprep.mubr.bf16.mxu0 0
  %8106 = vmatmul.mubr.bf16.gmra.mrb[0].mxu0 %v7981
  %v8107 = vpop.f32.mrb[0].mxu0
  %v8108 = vadd.f32 0.0, %v8107
  %v8109 = vpop.f32.mrb[0].mxu0
  %v8110 = vpop.f32.mrb[0].mxu0
  %v8111 = vadd.f32 0.0, %v8110
  %v8112 = vpop.f32.mrb[0].mxu0
  %8113 = vmatprep.mubr.bf16.mxu0 0
  %8114 = vmatmul.mubr.bf16.gmra.mrb[0].mxu0 %v7982
  %v8115 = vpop.f32.mrb[0].mxu0
  %v8116 = vadd.f32 0.0, %v8115
  %v8117 = vpop.f32.mrb[0].mxu0
  %v8118 = vpop.f32.mrb[0].mxu0
  %v8119 = vadd.f32 0.0, %v8118
  %v8120 = vpop.f32.mrb[0].mxu0
  %8121 = vmatprep.mubr.bf16.mxu0 0
  %8122 = vmatmul.mubr.bf16.gmra.mrb[0].mxu0 %v7983
  %v8123 = vpop.f32.mrb[0].mxu0
  %v8124 = vadd.f32 0.0, %v8123
  %v8125 = vpop.f32.mrb[0].mxu0
  %v8126 = vpop.f32.mrb[0].mxu0
  %v8127 = vadd.f32 0.0, %v8126
  %v8128 = vpop.f32.mrb[0].mxu0
  %8129 = vmatprep.mubr.bf16.mxu0 0
  %8130 = vmatmul.mubr.bf16.gmra.mrb[0].mxu0 %v7984
  %v8131 = vpop.f32.mrb[0].mxu0
  %v8132 = vadd.f32 0.0, %v8131
  %v8133 = vpop.f32.mrb[0].mxu0
  %v8134 = vpop.f32.mrb[0].mxu0
  %v8135 = vadd.f32 0.0, %v8134
  %v8136 = vpop.f32.mrb[0].mxu0
  %8137 = vdwg.mxu0
  %v8138 = vadd.f32 %v7672, %v8076
  %v8139 = vadd.f32 %v7673, %v8079
  %v8140 = vadd.f32 %v7674, %v8084
  %v8141 = vadd.f32 %v7675, %v8087
  %v8142 = vadd.f32 %v7676, %v8092
  %v8143 = vadd.f32 %v7677, %v8095
  %v8144 = vadd.f32 %v7678, %v8100
  %v8145 = vadd.f32 %v7679, %v8103
  %v8146 = vadd.f32 %v7680, %v8108
  %v8147 = vadd.f32 %v7681, %v8111
  %v8148 = vadd.f32 %v7682, %v8116
  %v8149 = vadd.f32 %v7683, %v8119
  %v8150 = vadd.f32 %v7684, %v8124
  %v8151 = vadd.f32 %v7685, %v8127
  %v8152 = vadd.f32 %v7686, %v8132
  %v8153 = vadd.f32 %v7687, %v8135
  %v8154 = vld [vmem:[%s7445] sm:$0xe]
  %v8155 = vld [vmem:[%s7445 + $0x8] sm:$0xe]
  %v8156 = vld [vmem:[%s7445 + $0x10] sm:$0xe]
  %v8157 = vld [vmem:[%s7445 + $0x18] sm:$0xe]
  %v8158 = vld [vmem:[%s7445 + $0x20] sm:$0xe]
  %v8159 = vld [vmem:[%s7445 + $0x28] sm:$0xe]
  %v8160 = vld [vmem:[%s7445 + $0x30] sm:$0xe]
  %v8161 = vld [vmem:[%s7445 + $0x38] sm:$0xe]
  %v8162 = vld [vmem:[%s7445 + $0x60] sm:$0xe]
  %v8163 = vld [vmem:[%s7445 + $0x68] sm:$0xe]
  %v8164 = vld [vmem:[%s7445 + $0x70] sm:$0xe]
  %v8165 = vld [vmem:[%s7445 + $0x78] sm:$0xe]
  %v8166 = vld [vmem:[%s7445 + $0x80] sm:$0xe]
  %v8167 = vld [vmem:[%s7445 + $0x88] sm:$0xe]
  %v8168 = vld [vmem:[%s7445 + $0x90] sm:$0xe]
  %v8169 = vld [vmem:[%s7445 + $0x98] sm:$0xe]
  %v8202 = vrot.slane %v8154, 5
  %v8203 = vrot.slane %v8202, 4
  %v8204 = vrot.slane %v7689, 5
  %v8205 = vsel %vm727, %v8203, %v8204
  %v8206 = vrot.slane %v8155, 5
  %v8207 = vrot.slane %v8206, 4
  %v8208 = vrot.slane %v7691, 5
  %v8209 = vsel %vm727, %v8207, %v8208
  %v8210 = vrot.slane %v8156, 5
  %v8211 = vrot.slane %v8210, 4
  %v8212 = vrot.slane %v7693, 5
  %v8213 = vsel %vm727, %v8211, %v8212
  %v8214 = vrot.slane %v8157, 5
  %v8215 = vrot.slane %v8214, 4
  %v8216 = vrot.slane %v7695, 5
  %v8217 = vsel %vm727, %v8215, %v8216
  %v8218 = vrot.slane %v8158, 5
  %v8219 = vrot.slane %v8218, 4
  %v8220 = vrot.slane %v7697, 5
  %v8221 = vsel %vm727, %v8219, %v8220
  %v8222 = vrot.slane %v8159, 5
  %v8223 = vrot.slane %v8222, 4
  %v8224 = vrot.slane %v7699, 5
  %v8225 = vsel %vm727, %v8223, %v8224
  %v8226 = vrot.slane %v8160, 5
  %v8227 = vrot.slane %v8226, 4
  %v8228 = vrot.slane %v7701, 5
  %v8229 = vsel %vm727, %v8227, %v8228
  %v8230 = vrot.slane %v8161, 5
  %v8231 = vrot.slane %v8230, 4
  %v8232 = vrot.slane %v7703, 5
  %v8233 = vsel %vm727, %v8231, %v8232
  %v8234 = vrot.slane %v8162, 5
  %v8235 = vrot.slane %v8234, 4
  %v8236 = vrot.slane %v7705, 5
  %v8237 = vsel %vm727, %v8235, %v8236
  %v8238 = vrot.slane %v8163, 5
  %v8239 = vrot.slane %v8238, 4
  %v8240 = vrot.slane %v7707, 5
  %v8241 = vsel %vm727, %v8239, %v8240
  %v8242 = vrot.slane %v8164, 5
  %v8243 = vrot.slane %v8242, 4
  %v8244 = vrot.slane %v7709, 5
  %v8245 = vsel %vm727, %v8243, %v8244
  %v8246 = vrot.slane %v8165, 5
  %v8247 = vrot.slane %v8246, 4
  %v8248 = vrot.slane %v7711, 5
  %v8249 = vsel %vm727, %v8247, %v8248
  %v8250 = vrot.slane %v8166, 5
  %v8251 = vrot.slane %v8250, 4
  %v8252 = vrot.slane %v7713, 5
  %v8253 = vsel %vm727, %v8251, %v8252
  %v8254 = vrot.slane %v8167, 5
  %v8255 = vrot.slane %v8254, 4
  %v8256 = vrot.slane %v7715, 5
  %v8257 = vsel %vm727, %v8255, %v8256
  %v8258 = vrot.slane %v8168, 5
  %v8259 = vrot.slane %v8258, 4
  %v8260 = vrot.slane %v7717, 5
  %v8261 = vsel %vm727, %v8259, %v8260
  %v8262 = vrot.slane %v8169, 5
  %v8263 = vrot.slane %v8262, 4
  %v8264 = vrot.slane %v7719, 5
  %v8265 = vsel %vm727, %v8263, %v8264
  %s8266 = scalar_lea.vmem %s1, 1408
  %v8267 = vld [vmem:[%s8266] sm:$0xf]
  %v8268 = vld [vmem:[%s8266 + $0x4] sm:$0xf]
  %v8269 = vld [vmem:[%s8266 + $0x8] sm:$0xf]
  %v8270 = vld [vmem:[%s8266 + $0xc] sm:$0xf]
  %v8271 = vld [vmem:[%s8266 + $0x10] sm:$0xf]
  %v8272 = vld [vmem:[%s8266 + $0x14] sm:$0xf]
  %v8273 = vld [vmem:[%s8266 + $0x18] sm:$0xf]
  %v8274 = vld [vmem:[%s8266 + $0x1c] sm:$0xf]
  %v8275 = vld [vmem:[%s8266 + $0x20] sm:$0xf]
  %v8276 = vld [vmem:[%s8266 + $0x24] sm:$0xf]
  %v8277 = vld [vmem:[%s8266 + $0x28] sm:$0xf]
  %v8278 = vld [vmem:[%s8266 + $0x2c] sm:$0xf]
  %v8279 = vld [vmem:[%s8266 + $0x30] sm:$0xf]
  %v8280 = vld [vmem:[%s8266 + $0x34] sm:$0xf]
  %v8281 = vld [vmem:[%s8266 + $0x38] sm:$0xf]
  %v8282 = vld [vmem:[%s8266 + $0x3c] sm:$0xf]
  %v8283 = vunpack.c.l.b16 %v8205
  %v8284 = vunpack.c.l.b16 %v8209
  %v8285 = vunpack.c.l.b16 %v8213
  %v8286 = vunpack.c.l.b16 %v8217
  %v8287 = vunpack.c.l.b16 %v8221
  %v8288 = vunpack.c.l.b16 %v8225
  %v8289 = vunpack.c.l.b16 %v8229
  %v8290 = vunpack.c.l.b16 %v8233
  %v8291 = vunpack.c.l.b16 %v8237
  %v8292 = vunpack.c.l.b16 %v8241
  %v8293 = vunpack.c.l.b16 %v8245
  %v8294 = vunpack.c.l.b16 %v8249
  %v8295 = vunpack.c.l.b16 %v8253
  %v8296 = vunpack.c.l.b16 %v8257
  %v8297 = vunpack.c.l.b16 %v8261
  %v8298 = vunpack.c.l.b16 %v8265
  %v8299 = vpack.c.b16 %v8284, %v8283
  %v8300 = vpack.c.b16 %v8286, %v8285
  %v8301 = vpack.c.b16 %v8288, %v8287
  %v8302 = vpack.c.b16 %v8290, %v8289
  %v8303 = vpack.c.b16 %v8292, %v8291
  %v8304 = vpack.c.b16 %v8294, %v8293
  %v8305 = vpack.c.b16 %v8296, %v8295
  %v8306 = vpack.c.b16 %v8298, %v8297
  %v8331 = vunpack.c.l.b16 %v8267
  %v8332 = vunpack.c.l.b16 %v8268
  %v8333 = vunpack.c.l.b16 %v8269
  %v8334 = vunpack.c.l.b16 %v8270
  %v8335 = vunpack.c.l.b16 %v8271
  %v8336 = vunpack.c.l.b16 %v8272
  %v8337 = vunpack.c.l.b16 %v8273
  %v8338 = vunpack.c.l.b16 %v8274
  %v8339 = vunpack.c.l.b16 %v8275
  %v8340 = vunpack.c.l.b16 %v8276
  %v8341 = vunpack.c.l.b16 %v8277
  %v8342 = vunpack.c.l.b16 %v8278
  %v8343 = vunpack.c.l.b16 %v8279
  %v8344 = vunpack.c.l.b16 %v8280
  %v8345 = vunpack.c.l.b16 %v8281
  %v8346 = vunpack.c.l.b16 %v8282
  %v8347 = vpack.c.b16 %v8332, %v8331
  %v8348 = vpack.c.b16 %v8334, %v8333
  %v8349 = vpack.c.b16 %v8336, %v8335
  %v8350 = vpack.c.b16 %v8338, %v8337
  %v8351 = vpack.c.b16 %v8340, %v8339
  %v8352 = vpack.c.b16 %v8342, %v8341
  %v8353 = vpack.c.b16 %v8344, %v8343
  %v8354 = vpack.c.b16 %v8346, %v8345
  %8363 = vmatprep.subr.bf16.mxu0 0
  %8364 = vmatpush1.bf16.msra.mxu0 %v8347
  %8365 = vmatprep.subr.bf16.mxu0 0
  %8366 = vmatpush1.bf16.msra.mxu0 %v8348
  %8367 = vmatprep.subr.bf16.mxu0 0
  %8368 = vmatpush1.bf16.msra.mxu0 %v8349
  %8369 = vmatprep.subr.bf16.mxu0 0
  %8370 = vmatpush1.bf16.msra.mxu0 %v8350
  %8371 = vmatprep.subr.bf16.mxu0 0
  %8372 = vmatpush1.bf16.msra.mxu0 %v8351
  %8373 = vmatprep.subr.bf16.mxu0 0
  %8374 = vmatpush1.bf16.msra.mxu0 %v8352
  %8375 = vmatprep.subr.bf16.mxu0 0
  %8376 = vmatpush1.bf16.msra.mxu0 %v8353
  %8377 = vmatprep.subr.bf16.mxu0 0
  %8378 = vmatpush1.bf16.msra.mxu0 %v8354
  %8379 = vmatprep.subr.bf16.mxu0 0
  %8380 = vmatpush1.bf16.msra.mxu0 0
  %8381 = vmatprep.subr.bf16.mxu0 0
  %8382 = vmatpush1.bf16.msra.mxu0 0
  %8383 = vmatprep.subr.bf16.mxu0 0
  %8384 = vmatpush1.bf16.msra.mxu0 0
  %8385 = vmatprep.subr.bf16.mxu0 0
  %8386 = vmatpush1.bf16.msra.mxu0 0
  %8387 = vmatprep.subr.bf16.mxu0 0
  %8388 = vmatpush1.bf16.msra.mxu0 0
  %8389 = vmatprep.subr.bf16.mxu0 0
  %8390 = vmatpush1.bf16.msra.mxu0 0
  %8391 = vmatprep.subr.bf16.mxu0 0
  %8392 = vmatpush1.bf16.msra.mxu0 0
  %8393 = vmatprep.subr.bf16.mxu0 0
  %8394 = vmatpush1.bf16.msra.mxu0 0
  %8395 = vmatprep.mubr.bf16.mxu0 0
  %8396 = vmatmul.mubr.bf16.gmra.mrb[0].mxu0 %v8299
  %v8397 = vpop.f32.mrb[0].mxu0
  %v8398 = vadd.f32 0.0, %v8397
  %v8399 = vpop.f32.mrb[0].mxu0
  %v8400 = vpop.f32.mrb[0].mxu0
  %v8401 = vadd.f32 0.0, %v8400
  %v8402 = vpop.f32.mrb[0].mxu0
  %8403 = vmatprep.mubr.bf16.mxu0 0
  %8404 = vmatmul.mubr.bf16.gmra.mrb[0].mxu0 %v8300
  %v8405 = vpop.f32.mrb[0].mxu0
  %v8406 = vadd.f32 0.0, %v8405
  %v8407 = vpop.f32.mrb[0].mxu0
  %v8408 = vpop.f32.mrb[0].mxu0
  %v8409 = vadd.f32 0.0, %v8408
  %v8410 = vpop.f32.mrb[0].mxu0
  %8411 = vmatprep.mubr.bf16.mxu0 0
  %8412 = vmatmul.mubr.bf16.gmra.mrb[0].mxu0 %v8301
  %v8413 = vpop.f32.mrb[0].mxu0
  %v8414 = vadd.f32 0.0, %v8413
  %v8415 = vpop.f32.mrb[0].mxu0
  %v8416 = vpop.f32.mrb[0].mxu0
  %v8417 = vadd.f32 0.0, %v8416
  %v8418 = vpop.f32.mrb[0].mxu0
  %8419 = vmatprep.mubr.bf16.mxu0 0
  %8420 = vmatmul.mubr.bf16.gmra.mrb[0].mxu0 %v8302
  %v8421 = vpop.f32.mrb[0].mxu0
  %v8422 = vadd.f32 0.0, %v8421
  %v8423 = vpop.f32.mrb[0].mxu0
  %v8424 = vpop.f32.mrb[0].mxu0
  %v8425 = vadd.f32 0.0, %v8424
  %v8426 = vpop.f32.mrb[0].mxu0
  %8427 = vmatprep.mubr.bf16.mxu0 0
  %8428 = vmatmul.mubr.bf16.gmra.mrb[0].mxu0 %v8303
  %v8429 = vpop.f32.mrb[0].mxu0
  %v8430 = vadd.f32 0.0, %v8429
  %v8431 = vpop.f32.mrb[0].mxu0
  %v8432 = vpop.f32.mrb[0].mxu0
  %v8433 = vadd.f32 0.0, %v8432
  %v8434 = vpop.f32.mrb[0].mxu0
  %8435 = vmatprep.mubr.bf16.mxu0 0
  %8436 = vmatmul.mubr.bf16.gmra.mrb[0].mxu0 %v8304
  %v8437 = vpop.f32.mrb[0].mxu0
  %v8438 = vadd.f32 0.0, %v8437
  %v8439 = vpop.f32.mrb[0].mxu0
  %v8440 = vpop.f32.mrb[0].mxu0
  %v8441 = vadd.f32 0.0, %v8440
  %v8442 = vpop.f32.mrb[0].mxu0
  %8443 = vmatprep.mubr.bf16.mxu0 0
  %8444 = vmatmul.mubr.bf16.gmra.mrb[0].mxu0 %v8305
  %v8445 = vpop.f32.mrb[0].mxu0
  %v8446 = vadd.f32 0.0, %v8445
  %v8447 = vpop.f32.mrb[0].mxu0
  %v8448 = vpop.f32.mrb[0].mxu0
  %v8449 = vadd.f32 0.0, %v8448
  %v8450 = vpop.f32.mrb[0].mxu0
  %8451 = vmatprep.mubr.bf16.mxu0 0
  %8452 = vmatmul.mubr.bf16.gmra.mrb[0].mxu0 %v8306
  %v8453 = vpop.f32.mrb[0].mxu0
  %v8454 = vadd.f32 0.0, %v8453
  %v8455 = vpop.f32.mrb[0].mxu0
  %v8456 = vpop.f32.mrb[0].mxu0
  %v8457 = vadd.f32 0.0, %v8456
  %v8458 = vpop.f32.mrb[0].mxu0
  %8459 = vdwg.mxu0
  %v8460 = vadd.f32 %v8138, %v8398
  %v8461 = vadd.f32 %v8139, %v8401
  %v8462 = vadd.f32 %v8140, %v8406
  %v8463 = vadd.f32 %v8141, %v8409
  %v8464 = vadd.f32 %v8142, %v8414
  %v8465 = vadd.f32 %v8143, %v8417
  %v8466 = vadd.f32 %v8144, %v8422
  %v8467 = vadd.f32 %v8145, %v8425
  %v8468 = vadd.f32 %v8146, %v8430
  %v8469 = vadd.f32 %v8147, %v8433
  %v8470 = vadd.f32 %v8148, %v8438
  %v8471 = vadd.f32 %v8149, %v8441
  %v8472 = vadd.f32 %v8150, %v8446
  %v8473 = vadd.f32 %v8151, %v8449
  %v8474 = vadd.f32 %v8152, %v8454
  %v8475 = vadd.f32 %v8153, %v8457
  %v8476 = vld [vmem:[%s7445 + $0x4] sm:$0x3]
  %v8477 = vld [vmem:[%s7445 + $0xc] sm:$0x3]
  %v8478 = vld [vmem:[%s7445 + $0x14] sm:$0x3]
  %v8479 = vld [vmem:[%s7445 + $0x1c] sm:$0x3]
  %v8480 = vld [vmem:[%s7445 + $0x24] sm:$0x3]
  %v8481 = vld [vmem:[%s7445 + $0x2c] sm:$0x3]
  %v8482 = vld [vmem:[%s7445 + $0x34] sm:$0x3]
  %v8483 = vld [vmem:[%s7445 + $0x3c] sm:$0x3]
  %v8484 = vld [vmem:[%s7445 + $0x64] sm:$0x3]
  %v8485 = vld [vmem:[%s7445 + $0x6c] sm:$0x3]
  %v8486 = vld [vmem:[%s7445 + $0x74] sm:$0x3]
  %v8487 = vld [vmem:[%s7445 + $0x7c] sm:$0x3]
  %v8488 = vld [vmem:[%s7445 + $0x84] sm:$0x3]
  %v8489 = vld [vmem:[%s7445 + $0x8c] sm:$0x3]
  %v8490 = vld [vmem:[%s7445 + $0x94] sm:$0x3]
  %v8491 = vld [vmem:[%s7445 + $0x9c] sm:$0x3]
  %v8493 = vshrl.u32 %v8154, 16
  %v8495 = vrot.slane %v8493, 5
  %v8496 = vshll.u32 %v8154, 16
  %v8498 = vrot.slane %v8496, 6
  %v8499 = vor.u32 %v8495, %v8498
  %v8500 = vrot.slane %v8499, 4
  %v8502 = vshrl.u32 %v8476, 16
  %v8504 = vrot.slane %v8502, 5
  %v8505 = vshll.u32 %v8476, 16
  %v8507 = vrot.slane %v8505, 6
  %v8508 = vor.u32 %v8504, %v8507
  %v8509 = vsel %vm1020, %v8500, %v8508
  %v8511 = vshrl.u32 %v8155, 16
  %v8513 = vrot.slane %v8511, 5
  %v8514 = vshll.u32 %v8155, 16
  %v8516 = vrot.slane %v8514, 6
  %v8517 = vor.u32 %v8513, %v8516
  %v8518 = vrot.slane %v8517, 4
  %v8520 = vshrl.u32 %v8477, 16
  %v8522 = vrot.slane %v8520, 5
  %v8523 = vshll.u32 %v8477, 16
  %v8525 = vrot.slane %v8523, 6
  %v8526 = vor.u32 %v8522, %v8525
  %v8527 = vsel %vm1020, %v8518, %v8526
  %v8529 = vshrl.u32 %v8156, 16
  %v8531 = vrot.slane %v8529, 5
  %v8532 = vshll.u32 %v8156, 16
  %v8534 = vrot.slane %v8532, 6
  %v8535 = vor.u32 %v8531, %v8534
  %v8536 = vrot.slane %v8535, 4
  %v8538 = vshrl.u32 %v8478, 16
  %v8540 = vrot.slane %v8538, 5
  %v8541 = vshll.u32 %v8478, 16
  %v8543 = vrot.slane %v8541, 6
  %v8544 = vor.u32 %v8540, %v8543
  %v8545 = vsel %vm1020, %v8536, %v8544
  %v8547 = vshrl.u32 %v8157, 16
  %v8549 = vrot.slane %v8547, 5
  %v8550 = vshll.u32 %v8157, 16
  %v8552 = vrot.slane %v8550, 6
  %v8553 = vor.u32 %v8549, %v8552
  %v8554 = vrot.slane %v8553, 4
  %v8556 = vshrl.u32 %v8479, 16
  %v8558 = vrot.slane %v8556, 5
  %v8559 = vshll.u32 %v8479, 16
  %v8561 = vrot.slane %v8559, 6
  %v8562 = vor.u32 %v8558, %v8561
  %v8563 = vsel %vm1020, %v8554, %v8562
  %v8565 = vshrl.u32 %v8158, 16
  %v8567 = vrot.slane %v8565, 5
  %v8568 = vshll.u32 %v8158, 16
  %v8570 = vrot.slane %v8568, 6
  %v8571 = vor.u32 %v8567, %v8570
  %v8572 = vrot.slane %v8571, 4
  %v8574 = vshrl.u32 %v8480, 16
  %v8576 = vrot.slane %v8574, 5
  %v8577 = vshll.u32 %v8480, 16
  %v8579 = vrot.slane %v8577, 6
  %v8580 = vor.u32 %v8576, %v8579
  %v8581 = vsel %vm1020, %v8572, %v8580
  %v8583 = vshrl.u32 %v8159, 16
  %v8585 = vrot.slane %v8583, 5
  %v8586 = vshll.u32 %v8159, 16
  %v8588 = vrot.slane %v8586, 6
  %v8589 = vor.u32 %v8585, %v8588
  %v8590 = vrot.slane %v8589, 4
  %v8592 = vshrl.u32 %v8481, 16
  %v8594 = vrot.slane %v8592, 5
  %v8595 = vshll.u32 %v8481, 16
  %v8597 = vrot.slane %v8595, 6
  %v8598 = vor.u32 %v8594, %v8597
  %v8599 = vsel %vm1020, %v8590, %v8598
  %v8601 = vshrl.u32 %v8160, 16
  %v8603 = vrot.slane %v8601, 5
  %v8604 = vshll.u32 %v8160, 16
  %v8606 = vrot.slane %v8604, 6
  %v8607 = vor.u32 %v8603, %v8606
  %v8608 = vrot.slane %v8607, 4
  %v8610 = vshrl.u32 %v8482, 16
  %v8612 = vrot.slane %v8610, 5
  %v8613 = vshll.u32 %v8482, 16
  %v8615 = vrot.slane %v8613, 6
  %v8616 = vor.u32 %v8612, %v8615
  %v8617 = vsel %vm1020, %v8608, %v8616
  %v8619 = vshrl.u32 %v8161, 16
  %v8621 = vrot.slane %v8619, 5
  %v8622 = vshll.u32 %v8161, 16
  %v8624 = vrot.slane %v8622, 6
  %v8625 = vor.u32 %v8621, %v8624
  %v8626 = vrot.slane %v8625, 4
  %v8628 = vshrl.u32 %v8483, 16
  %v8630 = vrot.slane %v8628, 5
  %v8631 = vshll.u32 %v8483, 16
  %v8633 = vrot.slane %v8631, 6
  %v8634 = vor.u32 %v8630, %v8633
  %v8635 = vsel %vm1020, %v8626, %v8634
  %v8637 = vshrl.u32 %v8162, 16
  %v8639 = vrot.slane %v8637, 5
  %v8640 = vshll.u32 %v8162, 16
  %v8642 = vrot.slane %v8640, 6
  %v8643 = vor.u32 %v8639, %v8642
  %v8644 = vrot.slane %v8643, 4
  %v8646 = vshrl.u32 %v8484, 16
  %v8648 = vrot.slane %v8646, 5
  %v8649 = vshll.u32 %v8484, 16
  %v8651 = vrot.slane %v8649, 6
  %v8652 = vor.u32 %v8648, %v8651
  %v8653 = vsel %vm1020, %v8644, %v8652
  %v8655 = vshrl.u32 %v8163, 16
  %v8657 = vrot.slane %v8655, 5
  %v8658 = vshll.u32 %v8163, 16
  %v8660 = vrot.slane %v8658, 6
  %v8661 = vor.u32 %v8657, %v8660
  %v8662 = vrot.slane %v8661, 4
  %v8664 = vshrl.u32 %v8485, 16
  %v8666 = vrot.slane %v8664, 5
  %v8667 = vshll.u32 %v8485, 16
  %v8669 = vrot.slane %v8667, 6
  %v8670 = vor.u32 %v8666, %v8669
  %v8671 = vsel %vm1020, %v8662, %v8670
  %v8673 = vshrl.u32 %v8164, 16
  %v8675 = vrot.slane %v8673, 5
  %v8676 = vshll.u32 %v8164, 16
  %v8678 = vrot.slane %v8676, 6
  %v8679 = vor.u32 %v8675, %v8678
  %v8680 = vrot.slane %v8679, 4
  %v8682 = vshrl.u32 %v8486, 16
  %v8684 = vrot.slane %v8682, 5
  %v8685 = vshll.u32 %v8486, 16
  %v8687 = vrot.slane %v8685, 6
  %v8688 = vor.u32 %v8684, %v8687
  %v8689 = vsel %vm1020, %v8680, %v8688
  %v8691 = vshrl.u32 %v8165, 16
  %v8693 = vrot.slane %v8691, 5
  %v8694 = vshll.u32 %v8165, 16
  %v8696 = vrot.slane %v8694, 6
  %v8697 = vor.u32 %v8693, %v8696
  %v8698 = vrot.slane %v8697, 4
  %v8700 = vshrl.u32 %v8487, 16
  %v8702 = vrot.slane %v8700, 5
  %v8703 = vshll.u32 %v8487, 16
  %v8705 = vrot.slane %v8703, 6
  %v8706 = vor.u32 %v8702, %v8705
  %v8707 = vsel %vm1020, %v8698, %v8706
  %v8709 = vshrl.u32 %v8166, 16
  %v8711 = vrot.slane %v8709, 5
  %v8712 = vshll.u32 %v8166, 16
  %v8714 = vrot.slane %v8712, 6
  %v8715 = vor.u32 %v8711, %v8714
  %v8716 = vrot.slane %v8715, 4
  %v8718 = vshrl.u32 %v8488, 16
  %v8720 = vrot.slane %v8718, 5
  %v8721 = vshll.u32 %v8488, 16
  %v8723 = vrot.slane %v8721, 6
  %v8724 = vor.u32 %v8720, %v8723
  %v8725 = vsel %vm1020, %v8716, %v8724
  %v8727 = vshrl.u32 %v8167, 16
  %v8729 = vrot.slane %v8727, 5
  %v8730 = vshll.u32 %v8167, 16
  %v8732 = vrot.slane %v8730, 6
  %v8733 = vor.u32 %v8729, %v8732
  %v8734 = vrot.slane %v8733, 4
  %v8736 = vshrl.u32 %v8489, 16
  %v8738 = vrot.slane %v8736, 5
  %v8739 = vshll.u32 %v8489, 16
  %v8741 = vrot.slane %v8739, 6
  %v8742 = vor.u32 %v8738, %v8741
  %v8743 = vsel %vm1020, %v8734, %v8742
  %v8745 = vshrl.u32 %v8168, 16
  %v8747 = vrot.slane %v8745, 5
  %v8748 = vshll.u32 %v8168, 16
  %v8750 = vrot.slane %v8748, 6
  %v8751 = vor.u32 %v8747, %v8750
  %v8752 = vrot.slane %v8751, 4
  %v8754 = vshrl.u32 %v8490, 16
  %v8756 = vrot.slane %v8754, 5
  %v8757 = vshll.u32 %v8490, 16
  %v8759 = vrot.slane %v8757, 6
  %v8760 = vor.u32 %v8756, %v8759
  %v8761 = vsel %vm1020, %v8752, %v8760
  %v8763 = vshrl.u32 %v8169, 16
  %v8765 = vrot.slane %v8763, 5
  %v8766 = vshll.u32 %v8169, 16
  %v8768 = vrot.slane %v8766, 6
  %v8769 = vor.u32 %v8765, %v8768
  %v8770 = vrot.slane %v8769, 4
  %v8772 = vshrl.u32 %v8491, 16
  %v8774 = vrot.slane %v8772, 5
  %v8775 = vshll.u32 %v8491, 16
  %v8777 = vrot.slane %v8775, 6
  %v8778 = vor.u32 %v8774, %v8777
  %v8779 = vsel %vm1020, %v8770, %v8778
  %s8780 = scalar_lea.vmem %s1, 1472
  %v8781 = vld [vmem:[%s8780] sm:$0xf]
  %v8782 = vld [vmem:[%s8780 + $0x4] sm:$0xf]
  %v8783 = vld [vmem:[%s8780 + $0x8] sm:$0xf]
  %v8784 = vld [vmem:[%s8780 + $0xc] sm:$0xf]
  %v8785 = vld [vmem:[%s8780 + $0x10] sm:$0xf]
  %v8786 = vld [vmem:[%s8780 + $0x14] sm:$0xf]
  %v8787 = vld [vmem:[%s8780 + $0x18] sm:$0xf]
  %v8788 = vld [vmem:[%s8780 + $0x1c] sm:$0xf]
  %v8789 = vld [vmem:[%s8780 + $0x20] sm:$0xf]
  %v8790 = vld [vmem:[%s8780 + $0x24] sm:$0xf]
  %v8791 = vld [vmem:[%s8780 + $0x28] sm:$0xf]
  %v8792 = vld [vmem:[%s8780 + $0x2c] sm:$0xf]
  %v8793 = vld [vmem:[%s8780 + $0x30] sm:$0xf]
  %v8794 = vld [vmem:[%s8780 + $0x34] sm:$0xf]
  %v8795 = vld [vmem:[%s8780 + $0x38] sm:$0xf]
  %v8796 = vld [vmem:[%s8780 + $0x3c] sm:$0xf]
  %v8797 = vunpack.c.l.b16 %v8509
  %v8798 = vunpack.c.l.b16 %v8527
  %v8799 = vunpack.c.l.b16 %v8545
  %v8800 = vunpack.c.l.b16 %v8563
  %v8801 = vunpack.c.l.b16 %v8581
  %v8802 = vunpack.c.l.b16 %v8599
  %v8803 = vunpack.c.l.b16 %v8617
  %v8804 = vunpack.c.l.b16 %v8635
  %v8805 = vunpack.c.l.b16 %v8653
  %v8806 = vunpack.c.l.b16 %v8671
  %v8807 = vunpack.c.l.b16 %v8689
  %v8808 = vunpack.c.l.b16 %v8707
  %v8809 = vunpack.c.l.b16 %v8725
  %v8810 = vunpack.c.l.b16 %v8743
  %v8811 = vunpack.c.l.b16 %v8761
  %v8812 = vunpack.c.l.b16 %v8779
  %v8813 = vpack.c.b16 %v8798, %v8797
  %v8814 = vpack.c.b16 %v8800, %v8799
  %v8815 = vpack.c.b16 %v8802, %v8801
  %v8816 = vpack.c.b16 %v8804, %v8803
  %v8817 = vpack.c.b16 %v8806, %v8805
  %v8818 = vpack.c.b16 %v8808, %v8807
  %v8819 = vpack.c.b16 %v8810, %v8809
  %v8820 = vpack.c.b16 %v8812, %v8811
  %v8845 = vunpack.c.l.b16 %v8781
  %v8846 = vunpack.c.l.b16 %v8782
  %v8847 = vunpack.c.l.b16 %v8783
  %v8848 = vunpack.c.l.b16 %v8784
  %v8849 = vunpack.c.l.b16 %v8785
  %v8850 = vunpack.c.l.b16 %v8786
  %v8851 = vunpack.c.l.b16 %v8787
  %v8852 = vunpack.c.l.b16 %v8788
  %v8853 = vunpack.c.l.b16 %v8789
  %v8854 = vunpack.c.l.b16 %v8790
  %v8855 = vunpack.c.l.b16 %v8791
  %v8856 = vunpack.c.l.b16 %v8792
  %v8857 = vunpack.c.l.b16 %v8793
  %v8858 = vunpack.c.l.b16 %v8794
  %v8859 = vunpack.c.l.b16 %v8795
  %v8860 = vunpack.c.l.b16 %v8796
  %v8861 = vpack.c.b16 %v8846, %v8845
  %v8862 = vpack.c.b16 %v8848, %v8847
  %v8863 = vpack.c.b16 %v8850, %v8849
  %v8864 = vpack.c.b16 %v8852, %v8851
  %v8865 = vpack.c.b16 %v8854, %v8853
  %v8866 = vpack.c.b16 %v8856, %v8855
  %v8867 = vpack.c.b16 %v8858, %v8857
  %v8868 = vpack.c.b16 %v8860, %v8859
  %8877 = vmatprep.subr.bf16.mxu0 0
  %8878 = vmatpush1.bf16.msra.mxu0 %v8861
  %8879 = vmatprep.subr.bf16.mxu0 0
  %8880 = vmatpush1.bf16.msra.mxu0 %v8862
  %8881 = vmatprep.subr.bf16.mxu0 0
  %8882 = vmatpush1.bf16.msra.mxu0 %v8863
  %8883 = vmatprep.subr.bf16.mxu0 0
  %8884 = vmatpush1.bf16.msra.mxu0 %v8864
  %8885 = vmatprep.subr.bf16.mxu0 0
  %8886 = vmatpush1.bf16.msra.mxu0 %v8865
  %8887 = vmatprep.subr.bf16.mxu0 0
  %8888 = vmatpush1.bf16.msra.mxu0 %v8866
  %8889 = vmatprep.subr.bf16.mxu0 0
  %8890 = vmatpush1.bf16.msra.mxu0 %v8867
  %8891 = vmatprep.subr.bf16.mxu0 0
  %8892 = vmatpush1.bf16.msra.mxu0 %v8868
  %8893 = vmatprep.subr.bf16.mxu0 0
  %8894 = vmatpush1.bf16.msra.mxu0 0
  %8895 = vmatprep.subr.bf16.mxu0 0
  %8896 = vmatpush1.bf16.msra.mxu0 0
  %8897 = vmatprep.subr.bf16.mxu0 0
  %8898 = vmatpush1.bf16.msra.mxu0 0
  %8899 = vmatprep.subr.bf16.mxu0 0
  %8900 = vmatpush1.bf16.msra.mxu0 0
  %8901 = vmatprep.subr.bf16.mxu0 0
  %8902 = vmatpush1.bf16.msra.mxu0 0
  %8903 = vmatprep.subr.bf16.mxu0 0
  %8904 = vmatpush1.bf16.msra.mxu0 0
  %8905 = vmatprep.subr.bf16.mxu0 0
  %8906 = vmatpush1.bf16.msra.mxu0 0
  %8907 = vmatprep.subr.bf16.mxu0 0
  %8908 = vmatpush1.bf16.msra.mxu0 0
  %8909 = vmatprep.mubr.bf16.mxu0 0
  %8910 = vmatmul.mubr.bf16.gmra.mrb[0].mxu0 %v8813
  %v8911 = vpop.f32.mrb[0].mxu0
  %v8912 = vadd.f32 0.0, %v8911
  %v8913 = vpop.f32.mrb[0].mxu0
  %v8914 = vpop.f32.mrb[0].mxu0
  %v8915 = vadd.f32 0.0, %v8914
  %v8916 = vpop.f32.mrb[0].mxu0
  %8917 = vmatprep.mubr.bf16.mxu0 0
  %8918 = vmatmul.mubr.bf16.gmra.mrb[0].mxu0 %v8814
  %v8919 = vpop.f32.mrb[0].mxu0
  %v8920 = vadd.f32 0.0, %v8919
  %v8921 = vpop.f32.mrb[0].mxu0
  %v8922 = vpop.f32.mrb[0].mxu0
  %v8923 = vadd.f32 0.0, %v8922
  %v8924 = vpop.f32.mrb[0].mxu0
  %8925 = vmatprep.mubr.bf16.mxu0 0
  %8926 = vmatmul.mubr.bf16.gmra.mrb[0].mxu0 %v8815
  %v8927 = vpop.f32.mrb[0].mxu0
  %v8928 = vadd.f32 0.0, %v8927
  %v8929 = vpop.f32.mrb[0].mxu0
  %v8930 = vpop.f32.mrb[0].mxu0
  %v8931 = vadd.f32 0.0, %v8930
  %v8932 = vpop.f32.mrb[0].mxu0
  %8933 = vmatprep.mubr.bf16.mxu0 0
  %8934 = vmatmul.mubr.bf16.gmra.mrb[0].mxu0 %v8816
  %v8935 = vpop.f32.mrb[0].mxu0
  %v8936 = vadd.f32 0.0, %v8935
  %v8937 = vpop.f32.mrb[0].mxu0
  %v8938 = vpop.f32.mrb[0].mxu0
  %v8939 = vadd.f32 0.0, %v8938
  %v8940 = vpop.f32.mrb[0].mxu0
  %8941 = vmatprep.mubr.bf16.mxu0 0
  %8942 = vmatmul.mubr.bf16.gmra.mrb[0].mxu0 %v8817
  %v8943 = vpop.f32.mrb[0].mxu0
  %v8944 = vadd.f32 0.0, %v8943
  %v8945 = vpop.f32.mrb[0].mxu0
  %v8946 = vpop.f32.mrb[0].mxu0
  %v8947 = vadd.f32 0.0, %v8946
  %v8948 = vpop.f32.mrb[0].mxu0
  %8949 = vmatprep.mubr.bf16.mxu0 0
  %8950 = vmatmul.mubr.bf16.gmra.mrb[0].mxu0 %v8818
  %v8951 = vpop.f32.mrb[0].mxu0
  %v8952 = vadd.f32 0.0, %v8951
  %v8953 = vpop.f32.mrb[0].mxu0
  %v8954 = vpop.f32.mrb[0].mxu0
  %v8955 = vadd.f32 0.0, %v8954
  %v8956 = vpop.f32.mrb[0].mxu0
  %8957 = vmatprep.mubr.bf16.mxu0 0
  %8958 = vmatmul.mubr.bf16.gmra.mrb[0].mxu0 %v8819
  %v8959 = vpop.f32.mrb[0].mxu0
  %v8960 = vadd.f32 0.0, %v8959
  %v8961 = vpop.f32.mrb[0].mxu0
  %v8962 = vpop.f32.mrb[0].mxu0
  %v8963 = vadd.f32 0.0, %v8962
  %v8964 = vpop.f32.mrb[0].mxu0
  %8965 = vmatprep.mubr.bf16.mxu0 0
  %8966 = vmatmul.mubr.bf16.gmra.mrb[0].mxu0 %v8820
  %v8967 = vpop.f32.mrb[0].mxu0
  %v8968 = vadd.f32 0.0, %v8967
  %v8969 = vpop.f32.mrb[0].mxu0
  %v8970 = vpop.f32.mrb[0].mxu0
  %v8971 = vadd.f32 0.0, %v8970
  %v8972 = vpop.f32.mrb[0].mxu0
  %8973 = vdwg.mxu0
  %v8974 = vadd.f32 %v8460, %v8912
  %v8975 = vadd.f32 %v8461, %v8915
  %v8976 = vadd.f32 %v8462, %v8920
  %v8977 = vadd.f32 %v8463, %v8923
  %v8978 = vadd.f32 %v8464, %v8928
  %v8979 = vadd.f32 %v8465, %v8931
  %v8980 = vadd.f32 %v8466, %v8936
  %v8981 = vadd.f32 %v8467, %v8939
  %v8982 = vadd.f32 %v8468, %v8944
  %v8983 = vadd.f32 %v8469, %v8947
  %v8984 = vadd.f32 %v8470, %v8952
  %v8985 = vadd.f32 %v8471, %v8955
  %v8986 = vadd.f32 %v8472, %v8960
  %v8987 = vadd.f32 %v8473, %v8963
  %v8988 = vadd.f32 %v8474, %v8968
  %v8989 = vadd.f32 %v8475, %v8971
  %v8990 = vld [vmem:[%s7445] sm:$0xc]
  %v8991 = vld [vmem:[%s7445 + $0x8] sm:$0xc]
  %v8992 = vld [vmem:[%s7445 + $0x10] sm:$0xc]
  %v8993 = vld [vmem:[%s7445 + $0x18] sm:$0xc]
  %v8994 = vld [vmem:[%s7445 + $0x20] sm:$0xc]
  %v8995 = vld [vmem:[%s7445 + $0x28] sm:$0xc]
  %v8996 = vld [vmem:[%s7445 + $0x30] sm:$0xc]
  %v8997 = vld [vmem:[%s7445 + $0x38] sm:$0xc]
  %v8998 = vld [vmem:[%s7445 + $0x60] sm:$0xc]
  %v8999 = vld [vmem:[%s7445 + $0x68] sm:$0xc]
  %v9000 = vld [vmem:[%s7445 + $0x70] sm:$0xc]
  %v9001 = vld [vmem:[%s7445 + $0x78] sm:$0xc]
  %v9002 = vld [vmem:[%s7445 + $0x80] sm:$0xc]
  %v9003 = vld [vmem:[%s7445 + $0x88] sm:$0xc]
  %v9004 = vld [vmem:[%s7445 + $0x90] sm:$0xc]
  %v9005 = vld [vmem:[%s7445 + $0x98] sm:$0xc]
  %v9038 = vrot.slane %v8990, 6
  %v9039 = vrot.slane %v9038, 4
  %v9040 = vrot.slane %v8476, 6
  %v9041 = vsel %vm1569, %v9039, %v9040
  %v9042 = vrot.slane %v8991, 6
  %v9043 = vrot.slane %v9042, 4
  %v9044 = vrot.slane %v8477, 6
  %v9045 = vsel %vm1569, %v9043, %v9044
  %v9046 = vrot.slane %v8992, 6
  %v9047 = vrot.slane %v9046, 4
  %v9048 = vrot.slane %v8478, 6
  %v9049 = vsel %vm1569, %v9047, %v9048
  %v9050 = vrot.slane %v8993, 6
  %v9051 = vrot.slane %v9050, 4
  %v9052 = vrot.slane %v8479, 6
  %v9053 = vsel %vm1569, %v9051, %v9052
  %v9054 = vrot.slane %v8994, 6
  %v9055 = vrot.slane %v9054, 4
  %v9056 = vrot.slane %v8480, 6
  %v9057 = vsel %vm1569, %v9055, %v9056
  %v9058 = vrot.slane %v8995, 6
  %v9059 = vrot.slane %v9058, 4
  %v9060 = vrot.slane %v8481, 6
  %v9061 = vsel %vm1569, %v9059, %v9060
  %v9062 = vrot.slane %v8996, 6
  %v9063 = vrot.slane %v9062, 4
  %v9064 = vrot.slane %v8482, 6
  %v9065 = vsel %vm1569, %v9063, %v9064
  %v9066 = vrot.slane %v8997, 6
  %v9067 = vrot.slane %v9066, 4
  %v9068 = vrot.slane %v8483, 6
  %v9069 = vsel %vm1569, %v9067, %v9068
  %v9070 = vrot.slane %v8998, 6
  %v9071 = vrot.slane %v9070, 4
  %v9072 = vrot.slane %v8484, 6
  %v9073 = vsel %vm1569, %v9071, %v9072
  %v9074 = vrot.slane %v8999, 6
  %v9075 = vrot.slane %v9074, 4
  %v9076 = vrot.slane %v8485, 6
  %v9077 = vsel %vm1569, %v9075, %v9076
  %v9078 = vrot.slane %v9000, 6
  %v9079 = vrot.slane %v9078, 4
  %v9080 = vrot.slane %v8486, 6
  %v9081 = vsel %vm1569, %v9079, %v9080
  %v9082 = vrot.slane %v9001, 6
  %v9083 = vrot.slane %v9082, 4
  %v9084 = vrot.slane %v8487, 6
  %v9085 = vsel %vm1569, %v9083, %v9084
  %v9086 = vrot.slane %v9002, 6
  %v9087 = vrot.slane %v9086, 4
  %v9088 = vrot.slane %v8488, 6
  %v9089 = vsel %vm1569, %v9087, %v9088
  %v9090 = vrot.slane %v9003, 6
  %v9091 = vrot.slane %v9090, 4
  %v9092 = vrot.slane %v8489, 6
  %v9093 = vsel %vm1569, %v9091, %v9092
  %v9094 = vrot.slane %v9004, 6
  %v9095 = vrot.slane %v9094, 4
  %v9096 = vrot.slane %v8490, 6
  %v9097 = vsel %vm1569, %v9095, %v9096
  %v9098 = vrot.slane %v9005, 6
  %v9099 = vrot.slane %v9098, 4
  %v9100 = vrot.slane %v8491, 6
  %v9101 = vsel %vm1569, %v9099, %v9100
  %s9102 = scalar_lea.vmem %s1, 1536
  %v9103 = vld [vmem:[%s9102] sm:$0xf]
  %v9104 = vld [vmem:[%s9102 + $0x4] sm:$0xf]
  %v9105 = vld [vmem:[%s9102 + $0x8] sm:$0xf]
  %v9106 = vld [vmem:[%s9102 + $0xc] sm:$0xf]
  %v9107 = vld [vmem:[%s9102 + $0x10] sm:$0xf]
  %v9108 = vld [vmem:[%s9102 + $0x14] sm:$0xf]
  %v9109 = vld [vmem:[%s9102 + $0x18] sm:$0xf]
  %v9110 = vld [vmem:[%s9102 + $0x1c] sm:$0xf]
  %v9111 = vld [vmem:[%s9102 + $0x20] sm:$0xf]
  %v9112 = vld [vmem:[%s9102 + $0x24] sm:$0xf]
  %v9113 = vld [vmem:[%s9102 + $0x28] sm:$0xf]
  %v9114 = vld [vmem:[%s9102 + $0x2c] sm:$0xf]
  %v9115 = vld [vmem:[%s9102 + $0x30] sm:$0xf]
  %v9116 = vld [vmem:[%s9102 + $0x34] sm:$0xf]
  %v9117 = vld [vmem:[%s9102 + $0x38] sm:$0xf]
  %v9118 = vld [vmem:[%s9102 + $0x3c] sm:$0xf]
  %v9119 = vunpack.c.l.b16 %v9041
  %v9120 = vunpack.c.l.b16 %v9045
  %v9121 = vunpack.c.l.b16 %v9049
  %v9122 = vunpack.c.l.b16 %v9053
  %v9123 = vunpack.c.l.b16 %v9057
  %v9124 = vunpack.c.l.b16 %v9061
  %v9125 = vunpack.c.l.b16 %v9065
  %v9126 = vunpack.c.l.b16 %v9069
  %v9127 = vunpack.c.l.b16 %v9073
  %v9128 = vunpack.c.l.b16 %v9077
  %v9129 = vunpack.c.l.b16 %v9081
  %v9130 = vunpack.c.l.b16 %v9085
  %v9131 = vunpack.c.l.b16 %v9089
  %v9132 = vunpack.c.l.b16 %v9093
  %v9133 = vunpack.c.l.b16 %v9097
  %v9134 = vunpack.c.l.b16 %v9101
  %v9135 = vpack.c.b16 %v9120, %v9119
  %v9136 = vpack.c.b16 %v9122, %v9121
  %v9137 = vpack.c.b16 %v9124, %v9123
  %v9138 = vpack.c.b16 %v9126, %v9125
  %v9139 = vpack.c.b16 %v9128, %v9127
  %v9140 = vpack.c.b16 %v9130, %v9129
  %v9141 = vpack.c.b16 %v9132, %v9131
  %v9142 = vpack.c.b16 %v9134, %v9133
  %v9167 = vunpack.c.l.b16 %v9103
  %v9168 = vunpack.c.l.b16 %v9104
  %v9169 = vunpack.c.l.b16 %v9105
  %v9170 = vunpack.c.l.b16 %v9106
  %v9171 = vunpack.c.l.b16 %v9107
  %v9172 = vunpack.c.l.b16 %v9108
  %v9173 = vunpack.c.l.b16 %v9109
  %v9174 = vunpack.c.l.b16 %v9110
  %v9175 = vunpack.c.l.b16 %v9111
  %v9176 = vunpack.c.l.b16 %v9112
  %v9177 = vunpack.c.l.b16 %v9113
  %v9178 = vunpack.c.l.b16 %v9114
  %v9179 = vunpack.c.l.b16 %v9115
  %v9180 = vunpack.c.l.b16 %v9116
  %v9181 = vunpack.c.l.b16 %v9117
  %v9182 = vunpack.c.l.b16 %v9118
  %v9183 = vpack.c.b16 %v9168, %v9167
  %v9184 = vpack.c.b16 %v9170, %v9169
  %v9185 = vpack.c.b16 %v9172, %v9171
  %v9186 = vpack.c.b16 %v9174, %v9173
  %v9187 = vpack.c.b16 %v9176, %v9175
  %v9188 = vpack.c.b16 %v9178, %v9177
  %v9189 = vpack.c.b16 %v9180, %v9179
  %v9190 = vpack.c.b16 %v9182, %v9181
  %9199 = vmatprep.subr.bf16.mxu0 0
  %9200 = vmatpush1.bf16.msra.mxu0 %v9183
  %9201 = vmatprep.subr.bf16.mxu0 0
  %9202 = vmatpush1.bf16.msra.mxu0 %v9184
  %9203 = vmatprep.subr.bf16.mxu0 0
  %9204 = vmatpush1.bf16.msra.mxu0 %v9185
  %9205 = vmatprep.subr.bf16.mxu0 0
  %9206 = vmatpush1.bf16.msra.mxu0 %v9186
  %9207 = vmatprep.subr.bf16.mxu0 0
  %9208 = vmatpush1.bf16.msra.mxu0 %v9187
  %9209 = vmatprep.subr.bf16.mxu0 0
  %9210 = vmatpush1.bf16.msra.mxu0 %v9188
  %9211 = vmatprep.subr.bf16.mxu0 0
  %9212 = vmatpush1.bf16.msra.mxu0 %v9189
  %9213 = vmatprep.subr.bf16.mxu0 0
  %9214 = vmatpush1.bf16.msra.mxu0 %v9190
  %9215 = vmatprep.subr.bf16.mxu0 0
  %9216 = vmatpush1.bf16.msra.mxu0 0
  %9217 = vmatprep.subr.bf16.mxu0 0
  %9218 = vmatpush1.bf16.msra.mxu0 0
  %9219 = vmatprep.subr.bf16.mxu0 0
  %9220 = vmatpush1.bf16.msra.mxu0 0
  %9221 = vmatprep.subr.bf16.mxu0 0
  %9222 = vmatpush1.bf16.msra.mxu0 0
  %9223 = vmatprep.subr.bf16.mxu0 0
  %9224 = vmatpush1.bf16.msra.mxu0 0
  %9225 = vmatprep.subr.bf16.mxu0 0
  %9226 = vmatpush1.bf16.msra.mxu0 0
  %9227 = vmatprep.subr.bf16.mxu0 0
  %9228 = vmatpush1.bf16.msra.mxu0 0
  %9229 = vmatprep.subr.bf16.mxu0 0
  %9230 = vmatpush1.bf16.msra.mxu0 0
  %9231 = vmatprep.mubr.bf16.mxu0 0
  %9232 = vmatmul.mubr.bf16.gmra.mrb[0].mxu0 %v9135
  %v9233 = vpop.f32.mrb[0].mxu0
  %v9234 = vadd.f32 0.0, %v9233
  %v9235 = vpop.f32.mrb[0].mxu0
  %v9236 = vpop.f32.mrb[0].mxu0
  %v9237 = vadd.f32 0.0, %v9236
  %v9238 = vpop.f32.mrb[0].mxu0
  %9239 = vmatprep.mubr.bf16.mxu0 0
  %9240 = vmatmul.mubr.bf16.gmra.mrb[0].mxu0 %v9136
  %v9241 = vpop.f32.mrb[0].mxu0
  %v9242 = vadd.f32 0.0, %v9241
  %v9243 = vpop.f32.mrb[0].mxu0
  %v9244 = vpop.f32.mrb[0].mxu0
  %v9245 = vadd.f32 0.0, %v9244
  %v9246 = vpop.f32.mrb[0].mxu0
  %9247 = vmatprep.mubr.bf16.mxu0 0
  %9248 = vmatmul.mubr.bf16.gmra.mrb[0].mxu0 %v9137
  %v9249 = vpop.f32.mrb[0].mxu0
  %v9250 = vadd.f32 0.0, %v9249
  %v9251 = vpop.f32.mrb[0].mxu0
  %v9252 = vpop.f32.mrb[0].mxu0
  %v9253 = vadd.f32 0.0, %v9252
  %v9254 = vpop.f32.mrb[0].mxu0
  %9255 = vmatprep.mubr.bf16.mxu0 0
  %9256 = vmatmul.mubr.bf16.gmra.mrb[0].mxu0 %v9138
  %v9257 = vpop.f32.mrb[0].mxu0
  %v9258 = vadd.f32 0.0, %v9257
  %v9259 = vpop.f32.mrb[0].mxu0
  %v9260 = vpop.f32.mrb[0].mxu0
  %v9261 = vadd.f32 0.0, %v9260
  %v9262 = vpop.f32.mrb[0].mxu0
  %9263 = vmatprep.mubr.bf16.mxu0 0
  %9264 = vmatmul.mubr.bf16.gmra.mrb[0].mxu0 %v9139
  %v9265 = vpop.f32.mrb[0].mxu0
  %v9266 = vadd.f32 0.0, %v9265
  %v9267 = vpop.f32.mrb[0].mxu0
  %v9268 = vpop.f32.mrb[0].mxu0
  %v9269 = vadd.f32 0.0, %v9268
  %v9270 = vpop.f32.mrb[0].mxu0
  %9271 = vmatprep.mubr.bf16.mxu0 0
  %9272 = vmatmul.mubr.bf16.gmra.mrb[0].mxu0 %v9140
  %v9273 = vpop.f32.mrb[0].mxu0
  %v9274 = vadd.f32 0.0, %v9273
  %v9275 = vpop.f32.mrb[0].mxu0
  %v9276 = vpop.f32.mrb[0].mxu0
  %v9277 = vadd.f32 0.0, %v9276
  %v9278 = vpop.f32.mrb[0].mxu0
  %9279 = vmatprep.mubr.bf16.mxu0 0
  %9280 = vmatmul.mubr.bf16.gmra.mrb[0].mxu0 %v9141
  %v9281 = vpop.f32.mrb[0].mxu0
  %v9282 = vadd.f32 0.0, %v9281
  %v9283 = vpop.f32.mrb[0].mxu0
  %v9284 = vpop.f32.mrb[0].mxu0
  %v9285 = vadd.f32 0.0, %v9284
  %v9286 = vpop.f32.mrb[0].mxu0
  %9287 = vmatprep.mubr.bf16.mxu0 0
  %9288 = vmatmul.mubr.bf16.gmra.mrb[0].mxu0 %v9142
  %v9289 = vpop.f32.mrb[0].mxu0
  %v9290 = vadd.f32 0.0, %v9289
  %v9291 = vpop.f32.mrb[0].mxu0
  %v9292 = vpop.f32.mrb[0].mxu0
  %v9293 = vadd.f32 0.0, %v9292
  %v9294 = vpop.f32.mrb[0].mxu0
  %9295 = vdwg.mxu0
  %v9296 = vadd.f32 %v8974, %v9234
  %v9297 = vadd.f32 %v8975, %v9237
  %v9298 = vadd.f32 %v8976, %v9242
  %v9299 = vadd.f32 %v8977, %v9245
  %v9300 = vadd.f32 %v8978, %v9250
  %v9301 = vadd.f32 %v8979, %v9253
  %v9302 = vadd.f32 %v8980, %v9258
  %v9303 = vadd.f32 %v8981, %v9261
  %v9304 = vadd.f32 %v8982, %v9266
  %v9305 = vadd.f32 %v8983, %v9269
  %v9306 = vadd.f32 %v8984, %v9274
  %v9307 = vadd.f32 %v8985, %v9277
  %v9308 = vadd.f32 %v8986, %v9282
  %v9309 = vadd.f32 %v8987, %v9285
  %v9310 = vadd.f32 %v8988, %v9290
  %v9311 = vadd.f32 %v8989, %v9293
  %v9312 = vld [vmem:[%s2] sm:$0x1]
  %v9314 = vlaneseq
  %v9315 = vshrl.u32 %v9314, 7
  %v9316 = vsub.s32 0, %v9315
  %v9317 = vrot.slane %v9312, %v9316
  %v9319 = vadd.f32 %v9296, %v9317
  %v9320 = vadd.f32 %v9297, %v9317
  %v9321 = vadd.f32 %v9298, %v9317
  %v9322 = vadd.f32 %v9299, %v9317
  %v9323 = vadd.f32 %v9300, %v9317
  %v9324 = vadd.f32 %v9301, %v9317
  %v9325 = vadd.f32 %v9302, %v9317
  %v9326 = vadd.f32 %v9303, %v9317
  %v9327 = vadd.f32 %v9304, %v9317
  %v9328 = vadd.f32 %v9305, %v9317
  %v9329 = vadd.f32 %v9306, %v9317
  %v9330 = vadd.f32 %v9307, %v9317
  %v9331 = vadd.f32 %v9308, %v9317
  %v9332 = vadd.f32 %v9309, %v9317
  %v9333 = vadd.f32 %v9310, %v9317
  %v9334 = vadd.f32 %v9311, %v9317
  %v9335 = vmax.f32 %v9319, 0.0
  %v9336 = vmax.f32 %v9320, 0.0
  %v9337 = vmax.f32 %v9321, 0.0
  %v9338 = vmax.f32 %v9322, 0.0
  %v9339 = vmax.f32 %v9323, 0.0
  %v9340 = vmax.f32 %v9324, 0.0
  %v9341 = vmax.f32 %v9325, 0.0
  %v9342 = vmax.f32 %v9326, 0.0
  %v9343 = vmax.f32 %v9327, 0.0
  %v9344 = vmax.f32 %v9328, 0.0
  %v9345 = vmax.f32 %v9329, 0.0
  %v9346 = vmax.f32 %v9330, 0.0
  %v9347 = vmax.f32 %v9331, 0.0
  %v9348 = vmax.f32 %v9332, 0.0
  %v9349 = vmax.f32 %v9333, 0.0
  %v9350 = vmax.f32 %v9334, 0.0
  %9351 = vst [vmem:[#allocation2] sm:$0xff] %v9335
  %9352 = vst [vmem:[#allocation2 + $0x8] sm:$0xff] %v9336
  %9353 = vst [vmem:[#allocation2 + $0x10] sm:$0xff] %v9337
  %9354 = vst [vmem:[#allocation2 + $0x18] sm:$0xff] %v9338
  %9355 = vst [vmem:[#allocation2 + $0x20] sm:$0xff] %v9339
  %9356 = vst [vmem:[#allocation2 + $0x28] sm:$0xff] %v9340
  %9357 = vst [vmem:[#allocation2 + $0x30] sm:$0xff] %v9341
  %9358 = vst [vmem:[#allocation2 + $0x38] sm:$0xff] %v9342
  %9359 = vst [vmem:[#allocation2 + $0x40] sm:$0xff] %v9343
  %9360 = vst [vmem:[#allocation2 + $0x48] sm:$0xff] %v9344
  %9361 = vst [vmem:[#allocation2 + $0x50] sm:$0xff] %v9345
  %9362 = vst [vmem:[#allocation2 + $0x58] sm:$0xff] %v9346
  %9363 = vst [vmem:[#allocation2 + $0x60] sm:$0xff] %v9347
  %9364 = vst [vmem:[#allocation2 + $0x68] sm:$0xff] %v9348
  %9365 = vst [vmem:[#allocation2 + $0x70] sm:$0xff] %v9349
  %9366 = vst [vmem:[#allocation2 + $0x78] sm:$0xff] %v9350
  %v9367 = vld [vmem:[#allocation2] sm:$0x1]
  %v9368 = vld [vmem:[#allocation2 + $0x8] sm:$0x1]
  %v9369 = vld [vmem:[#allocation2 + $0x10] sm:$0x1]
  %v9370 = vld [vmem:[#allocation2 + $0x18] sm:$0x1]
  %v9371 = vld [vmem:[#allocation2 + $0x20] sm:$0x1]
  %v9372 = vld [vmem:[#allocation2 + $0x28] sm:$0x1]
  %v9373 = vld [vmem:[#allocation2 + $0x30] sm:$0x1]
  %v9374 = vld [vmem:[#allocation2 + $0x38] sm:$0x1]
  %v9375 = vld [vmem:[#allocation2 + $0x40] sm:$0x1]
  %v9376 = vld [vmem:[#allocation2 + $0x48] sm:$0x1]
  %v9377 = vld [vmem:[#allocation2 + $0x50] sm:$0x1]
  %v9378 = vld [vmem:[#allocation2 + $0x58] sm:$0x1]
  %v9379 = vld [vmem:[#allocation2 + $0x60] sm:$0x1]
  %v9380 = vld [vmem:[#allocation2 + $0x68] sm:$0x1]
  %v9381 = vld [vmem:[#allocation2 + $0x70] sm:$0x1]
  %v9382 = vld [vmem:[#allocation2 + $0x78] sm:$0x1]
  %v9383 = vld [vmem:[#allocation2 + $0x1] sm:$0x1]
  %v9384 = vld [vmem:[#allocation2 + $0x9] sm:$0x1]
  %v9385 = vld [vmem:[#allocation2 + $0x11] sm:$0x1]
  %v9386 = vld [vmem:[#allocation2 + $0x19] sm:$0x1]
  %v9387 = vld [vmem:[#allocation2 + $0x21] sm:$0x1]
  %v9388 = vld [vmem:[#allocation2 + $0x29] sm:$0x1]
  %v9389 = vld [vmem:[#allocation2 + $0x31] sm:$0x1]
  %v9390 = vld [vmem:[#allocation2 + $0x39] sm:$0x1]
  %v9391 = vld [vmem:[#allocation2 + $0x41] sm:$0x1]
  %v9392 = vld [vmem:[#allocation2 + $0x49] sm:$0x1]
  %v9393 = vld [vmem:[#allocation2 + $0x51] sm:$0x1]
  %v9394 = vld [vmem:[#allocation2 + $0x59] sm:$0x1]
  %v9395 = vld [vmem:[#allocation2 + $0x61] sm:$0x1]
  %v9396 = vld [vmem:[#allocation2 + $0x69] sm:$0x1]
  %v9397 = vld [vmem:[#allocation2 + $0x71] sm:$0x1]
  %v9398 = vld [vmem:[#allocation2 + $0x79] sm:$0x1]
  %v9399 = vmax.f32 %v9367, %v9383
  %v9400 = vmax.f32 %v9368, %v9384
  %v9401 = vmax.f32 %v9369, %v9385
  %v9402 = vmax.f32 %v9370, %v9386
  %v9403 = vmax.f32 %v9371, %v9387
  %v9404 = vmax.f32 %v9372, %v9388
  %v9405 = vmax.f32 %v9373, %v9389
  %v9406 = vmax.f32 %v9374, %v9390
  %v9407 = vmax.f32 %v9375, %v9391
  %v9408 = vmax.f32 %v9376, %v9392
  %v9409 = vmax.f32 %v9377, %v9393
  %v9410 = vmax.f32 %v9378, %v9394
  %v9411 = vmax.f32 %v9379, %v9395
  %v9412 = vmax.f32 %v9380, %v9396
  %v9413 = vmax.f32 %v9381, %v9397
  %v9414 = vmax.f32 %v9382, %v9398
  %v9415 = vmax.f32 %v9399, %v9400
  %v9416 = vmax.f32 %v9407, %v9408
  %v9417 = vpack.c.bf16 %v9415, %v9415
  %v9418 = vpack.c.bf16 %v9416, %v9416
  %vm9419 = vcmask 1040384
  %vm9420 = vsmask.f32 256
  %vm9421 = vmand %vm9419, %vm9420
  %v9422 = vld [vmem:[%s3] sm:$0x1]
  %v9423 = vsel %vm9421, %v9417, %v9422
  %9424 = vst [vmem:[%s3] sm:$0x1] %v9423
  %v9425 = vld [vmem:[%s3 + $0x8] sm:$0x1]
  %v9426 = vsel %vm9421, %v9418, %v9425
  %9427 = vst [vmem:[%s3 + $0x8] sm:$0x1] %v9426
  %v9428 = vmax.f32 %v9401, %v9402
  %v9429 = vmax.f32 %v9409, %v9410
  %v9430 = vpack.c.bf16 %v9428, %v9428
  %v9431 = vpack.c.bf16 %v9429, %v9429
  %v9434 = vunpack.c.l.b16 %v9430
  %v9435 = vunpack.c.l.b16 %v9431
  %v9436 = vpack.c.b16 %v9434, %v9434
  %v9437 = vpack.c.b16 %v9435, %v9435
  %v9438 = vrot.slane %v9436, 6
  %v9439 = vrot.slane %v9437, 6
  %vm9442 = vcmask 1042434
  %vm9443 = vmand %vm9442, %vm1018
  %v9444 = vld [vmem:[%s3] sm:$0x4]
  %v9445 = vsel %vm9443, %v9438, %v9444
  %9446 = vst [vmem:[%s3] sm:$0x4] %v9445
  %v9447 = vld [vmem:[%s3 + $0x8] sm:$0x4]
  %v9448 = vsel %vm9443, %v9439, %v9447
  %9449 = vst [vmem:[%s3 + $0x8] sm:$0x4] %v9448
  %v9450 = vmax.f32 %v9403, %v9404
  %v9451 = vmax.f32 %v9411, %v9412
  %v9452 = vpack.c.bf16 %v9450, %v9450
  %v9453 = vpack.c.bf16 %v9451, %v9451
  %v9454 = vld [vmem:[%s3 + $0x4] sm:$0x1]
  %v9455 = vsel %vm9421, %v9452, %v9454
  %9456 = vst [vmem:[%s3 + $0x4] sm:$0x1] %v9455
  %v9457 = vld [vmem:[%s3 + $0xc] sm:$0x1]
  %v9458 = vsel %vm9421, %v9453, %v9457
  %9459 = vst [vmem:[%s3 + $0xc] sm:$0x1] %v9458
  %v9460 = vmax.f32 %v9405, %v9406
  %v9461 = vmax.f32 %v9413, %v9414
  %v9462 = vpack.c.bf16 %v9460, %v9460
  %v9463 = vpack.c.bf16 %v9461, %v9461
  %v9466 = vunpack.c.l.b16 %v9462
  %v9467 = vunpack.c.l.b16 %v9463
  %v9468 = vpack.c.b16 %v9466, %v9466
  %v9469 = vpack.c.b16 %v9467, %v9467
  %v9470 = vrot.slane %v9468, 6
  %v9471 = vrot.slane %v9469, 6
  %v9474 = vld [vmem:[%s3 + $0x4] sm:$0x4]
  %v9475 = vsel %vm9443, %v9470, %v9474
  %9476 = vst [vmem:[%s3 + $0x4] sm:$0x4] %v9475
  %v9477 = vld [vmem:[%s3 + $0xc] sm:$0x4]
  %v9478 = vsel %vm9443, %v9471, %v9477
  %9479 = vst [vmem:[%s3 + $0xc] sm:$0x4] %v9478
  %v9480 = vld [vmem:[#allocation2 + $0x2] sm:$0x1]
  %v9481 = vld [vmem:[#allocation2 + $0xa] sm:$0x1]
  %v9482 = vld [vmem:[#allocation2 + $0x12] sm:$0x1]
  %v9483 = vld [vmem:[#allocation2 + $0x1a] sm:$0x1]
  %v9484 = vld [vmem:[#allocation2 + $0x22] sm:$0x1]
  %v9485 = vld [vmem:[#allocation2 + $0x2a] sm:$0x1]
  %v9486 = vld [vmem:[#allocation2 + $0x32] sm:$0x1]
  %v9487 = vld [vmem:[#allocation2 + $0x3a] sm:$0x1]
  %v9488 = vld [vmem:[#allocation2 + $0x42] sm:$0x1]
  %v9489 = vld [vmem:[#allocation2 + $0x4a] sm:$0x1]
  %v9490 = vld [vmem:[#allocation2 + $0x52] sm:$0x1]
  %v9491 = vld [vmem:[#allocation2 + $0x5a] sm:$0x1]
  %v9492 = vld [vmem:[#allocation2 + $0x62] sm:$0x1]
  %v9493 = vld [vmem:[#allocation2 + $0x6a] sm:$0x1]
  %v9494 = vld [vmem:[#allocation2 + $0x72] sm:$0x1]
  %v9495 = vld [vmem:[#allocation2 + $0x7a] sm:$0x1]
  %v9496 = vld [vmem:[#allocation2 + $0x3] sm:$0x1]
  %v9497 = vld [vmem:[#allocation2 + $0xb] sm:$0x1]
  %v9498 = vld [vmem:[#allocation2 + $0x13] sm:$0x1]
  %v9499 = vld [vmem:[#allocation2 + $0x1b] sm:$0x1]
  %v9500 = vld [vmem:[#allocation2 + $0x23] sm:$0x1]
  %v9501 = vld [vmem:[#allocation2 + $0x2b] sm:$0x1]
  %v9502 = vld [vmem:[#allocation2 + $0x33] sm:$0x1]
  %v9503 = vld [vmem:[#allocation2 + $0x3b] sm:$0x1]
  %v9504 = vld [vmem:[#allocation2 + $0x43] sm:$0x1]
  %v9505 = vld [vmem:[#allocation2 + $0x4b] sm:$0x1]
  %v9506 = vld [vmem:[#allocation2 + $0x53] sm:$0x1]
  %v9507 = vld [vmem:[#allocation2 + $0x5b] sm:$0x1]
  %v9508 = vld [vmem:[#allocation2 + $0x63] sm:$0x1]
  %v9509 = vld [vmem:[#allocation2 + $0x6b] sm:$0x1]
  %v9510 = vld [vmem:[#allocation2 + $0x73] sm:$0x1]
  %v9511 = vld [vmem:[#allocation2 + $0x7b] sm:$0x1]
  %v9512 = vmax.f32 %v9480, %v9496
  %v9513 = vmax.f32 %v9481, %v9497
  %v9514 = vmax.f32 %v9482, %v9498
  %v9515 = vmax.f32 %v9483, %v9499
  %v9516 = vmax.f32 %v9484, %v9500
  %v9517 = vmax.f32 %v9485, %v9501
  %v9518 = vmax.f32 %v9486, %v9502
  %v9519 = vmax.f32 %v9487, %v9503
  %v9520 = vmax.f32 %v9488, %v9504
  %v9521 = vmax.f32 %v9489, %v9505
  %v9522 = vmax.f32 %v9490, %v9506
  %v9523 = vmax.f32 %v9491, %v9507
  %v9524 = vmax.f32 %v9492, %v9508
  %v9525 = vmax.f32 %v9493, %v9509
  %v9526 = vmax.f32 %v9494, %v9510
  %v9527 = vmax.f32 %v9495, %v9511
  %v9528 = vmax.f32 %v9512, %v9513
  %v9529 = vmax.f32 %v9520, %v9521
  %v9530 = vpack.c.bf16 %v9528, %v9528
  %v9531 = vpack.c.bf16 %v9529, %v9529
  %v9534 = vunpack.c.l.b16 %v9530
  %v9535 = vunpack.c.l.b16 %v9531
  %v9536 = vpack.c.b16 %v9534, %v9534
  %v9537 = vpack.c.b16 %v9535, %v9535
  %v9539 = vshll.u32 %v9536, 16
  %v9542 = vshll.u32 %v9537, 16
  %vm9546 = vsmask.f32 7938
  %vm9547 = vmand %vm9419, %vm9546
  %v9548 = vld [vmem:[%s3] sm:$0x1]
  %v9549 = vsel %vm9547, %v9539, %v9548
  %9550 = vst [vmem:[%s3] sm:$0x1] %v9549
  %v9551 = vld [vmem:[%s3 + $0x8] sm:$0x1]
  %v9552 = vsel %vm9547, %v9542, %v9551
  %9553 = vst [vmem:[%s3 + $0x8] sm:$0x1] %v9552
  %v9554 = vmax.f32 %v9514, %v9515
  %v9555 = vmax.f32 %v9522, %v9523
  %v9556 = vpack.c.bf16 %v9554, %v9554
  %v9557 = vpack.c.bf16 %v9555, %v9555
  %v9560 = vunpack.c.l.b16 %v9556
  %v9561 = vunpack.c.l.b16 %v9557
  %v9562 = vpack.c.b16 %v9560, %v9560
  %v9563 = vpack.c.b16 %v9561, %v9561
  %v9565 = vshll.u32 %v9562, 16
  %v9567 = vrot.slane %v9565, 6
  %v9569 = vshll.u32 %v9563, 16
  %v9571 = vrot.slane %v9569, 6
  %vm9574 = vsmask.f32 7946
  %vm9575 = vmand %vm9442, %vm9574
  %v9576 = vld [vmem:[%s3] sm:$0x4]
  %v9577 = vsel %vm9575, %v9567, %v9576
  %9578 = vst [vmem:[%s3] sm:$0x4] %v9577
  %v9579 = vld [vmem:[%s3 + $0x8] sm:$0x4]
  %v9580 = vsel %vm9575, %v9571, %v9579
  %9581 = vst [vmem:[%s3 + $0x8] sm:$0x4] %v9580
  %v9582 = vmax.f32 %v9516, %v9517
  %v9583 = vmax.f32 %v9524, %v9525
  %v9584 = vpack.c.bf16 %v9582, %v9582
  %v9585 = vpack.c.bf16 %v9583, %v9583
  %v9588 = vunpack.c.l.b16 %v9584
  %v9589 = vunpack.c.l.b16 %v9585
  %v9590 = vpack.c.b16 %v9588, %v9588
  %v9591 = vpack.c.b16 %v9589, %v9589
  %v9593 = vshll.u32 %v9590, 16
  %v9596 = vshll.u32 %v9591, 16
  %v9600 = vld [vmem:[%s3 + $0x4] sm:$0x1]
  %v9601 = vsel %vm9547, %v9593, %v9600
  %9602 = vst [vmem:[%s3 + $0x4] sm:$0x1] %v9601
  %v9603 = vld [vmem:[%s3 + $0xc] sm:$0x1]
  %v9604 = vsel %vm9547, %v9596, %v9603
  %9605 = vst [vmem:[%s3 + $0xc] sm:$0x1] %v9604
  %v9606 = vmax.f32 %v9518, %v9519
  %v9607 = vmax.f32 %v9526, %v9527
  %v9608 = vpack.c.bf16 %v9606, %v9606
  %v9609 = vpack.c.bf16 %v9607, %v9607
  %v9612 = vunpack.c.l.b16 %v9608
  %v9613 = vunpack.c.l.b16 %v9609
  %v9614 = vpack.c.b16 %v9612, %v9612
  %v9615 = vpack.c.b16 %v9613, %v9613
  %v9617 = vshll.u32 %v9614, 16
  %v9619 = vrot.slane %v9617, 6
  %v9621 = vshll.u32 %v9615, 16
  %v9623 = vrot.slane %v9621, 6
  %v9626 = vld [vmem:[%s3 + $0x4] sm:$0x4]
  %v9627 = vsel %vm9575, %v9619, %v9626
  %9628 = vst [vmem:[%s3 + $0x4] sm:$0x4] %v9627
  %v9629 = vld [vmem:[%s3 + $0xc] sm:$0x4]
  %v9630 = vsel %vm9575, %v9623, %v9629
  %9631 = vst [vmem:[%s3 + $0xc] sm:$0x4] %v9630
  %v9632 = vld [vmem:[#allocation2 + $0x4] sm:$0x1]
  %v9633 = vld [vmem:[#allocation2 + $0xc] sm:$0x1]
  %v9634 = vld [vmem:[#allocation2 + $0x14] sm:$0x1]
  %v9635 = vld [vmem:[#allocation2 + $0x1c] sm:$0x1]
  %v9636 = vld [vmem:[#allocation2 + $0x24] sm:$0x1]
  %v9637 = vld [vmem:[#allocation2 + $0x2c] sm:$0x1]
  %v9638 = vld [vmem:[#allocation2 + $0x34] sm:$0x1]
  %v9639 = vld [vmem:[#allocation2 + $0x3c] sm:$0x1]
  %v9640 = vld [vmem:[#allocation2 + $0x44] sm:$0x1]
  %v9641 = vld [vmem:[#allocation2 + $0x4c] sm:$0x1]
  %v9642 = vld [vmem:[#allocation2 + $0x54] sm:$0x1]
  %v9643 = vld [vmem:[#allocation2 + $0x5c] sm:$0x1]
  %v9644 = vld [vmem:[#allocation2 + $0x64] sm:$0x1]
  %v9645 = vld [vmem:[#allocation2 + $0x6c] sm:$0x1]
  %v9646 = vld [vmem:[#allocation2 + $0x74] sm:$0x1]
  %v9647 = vld [vmem:[#allocation2 + $0x7c] sm:$0x1]
  %v9648 = vld [vmem:[#allocation2 + $0x5] sm:$0x1]
  %v9649 = vld [vmem:[#allocation2 + $0xd] sm:$0x1]
  %v9650 = vld [vmem:[#allocation2 + $0x15] sm:$0x1]
  %v9651 = vld [vmem:[#allocation2 + $0x1d] sm:$0x1]
  %v9652 = vld [vmem:[#allocation2 + $0x25] sm:$0x1]
  %v9653 = vld [vmem:[#allocation2 + $0x2d] sm:$0x1]
  %v9654 = vld [vmem:[#allocation2 + $0x35] sm:$0x1]
  %v9655 = vld [vmem:[#allocation2 + $0x3d] sm:$0x1]
  %v9656 = vld [vmem:[#allocation2 + $0x45] sm:$0x1]
  %v9657 = vld [vmem:[#allocation2 + $0x4d] sm:$0x1]
  %v9658 = vld [vmem:[#allocation2 + $0x55] sm:$0x1]
  %v9659 = vld [vmem:[#allocation2 + $0x5d] sm:$0x1]
  %v9660 = vld [vmem:[#allocation2 + $0x65] sm:$0x1]
  %v9661 = vld [vmem:[#allocation2 + $0x6d] sm:$0x1]
  %v9662 = vld [vmem:[#allocation2 + $0x75] sm:$0x1]
  %v9663 = vld [vmem:[#allocation2 + $0x7d] sm:$0x1]
  %v9664 = vmax.f32 %v9632, %v9648
  %v9665 = vmax.f32 %v9633, %v9649
  %v9666 = vmax.f32 %v9634, %v9650
  %v9667 = vmax.f32 %v9635, %v9651
  %v9668 = vmax.f32 %v9636, %v9652
  %v9669 = vmax.f32 %v9637, %v9653
  %v9670 = vmax.f32 %v9638, %v9654
  %v9671 = vmax.f32 %v9639, %v9655
  %v9672 = vmax.f32 %v9640, %v9656
  %v9673 = vmax.f32 %v9641, %v9657
  %v9674 = vmax.f32 %v9642, %v9658
  %v9675 = vmax.f32 %v9643, %v9659
  %v9676 = vmax.f32 %v9644, %v9660
  %v9677 = vmax.f32 %v9645, %v9661
  %v9678 = vmax.f32 %v9646, %v9662
  %v9679 = vmax.f32 %v9647, %v9663
  %v9680 = vmax.f32 %v9664, %v9665
  %v9681 = vmax.f32 %v9672, %v9673
  %v9682 = vpack.c.bf16 %v9680, %v9680
  %v9683 = vpack.c.bf16 %v9681, %v9681
  %v9686 = vunpack.c.l.b16 %v9682
  %v9687 = vunpack.c.l.b16 %v9683
  %v9688 = vpack.c.b16 %v9686, %v9686
  %v9689 = vpack.c.b16 %v9687, %v9687
  %v9690 = vrot.slane %v9688, 7
  %v9691 = vrot.slane %v9689, 7
  %vm9694 = vcmask 1041409
  %vm9695 = vsmask.f32 1280
  %vm9696 = vmand %vm9694, %vm9695
  %v9697 = vld [vmem:[%s3] sm:$0x2]
  %v9698 = vsel %vm9696, %v9690, %v9697
  %9699 = vst [vmem:[%s3] sm:$0x2] %v9698
  %v9700 = vld [vmem:[%s3 + $0x8] sm:$0x2]
  %v9701 = vsel %vm9696, %v9691, %v9700
  %9702 = vst [vmem:[%s3 + $0x8] sm:$0x2] %v9701
  %v9703 = vmax.f32 %v9666, %v9667
  %v9704 = vmax.f32 %v9674, %v9675
  %v9705 = vpack.c.bf16 %v9703, %v9703
  %v9706 = vpack.c.bf16 %v9704, %v9704
  %v9709 = vunpack.c.l.b16 %v9705
  %v9710 = vunpack.c.l.b16 %v9706
  %v9711 = vpack.c.b16 %v9709, %v9709
  %v9712 = vpack.c.b16 %v9710, %v9710
  %v9713 = vrot.slane %v9711, 5
  %v9714 = vrot.slane %v9712, 5
  %vm9717 = vcmask 1043459
  %vm9718 = vmand %vm9717, %vm63
  %v9719 = vld [vmem:[%s3] sm:$0x8]
  %v9720 = vsel %vm9718, %v9713, %v9719
  %9721 = vst [vmem:[%s3] sm:$0x8] %v9720
  %v9722 = vld [vmem:[%s3 + $0x8] sm:$0x8]
  %v9723 = vsel %vm9718, %v9714, %v9722
  %9724 = vst [vmem:[%s3 + $0x8] sm:$0x8] %v9723
  %v9725 = vmax.f32 %v9668, %v9669
  %v9726 = vmax.f32 %v9676, %v9677
  %v9727 = vpack.c.bf16 %v9725, %v9725
  %v9728 = vpack.c.bf16 %v9726, %v9726
  %v9731 = vunpack.c.l.b16 %v9727
  %v9732 = vunpack.c.l.b16 %v9728
  %v9733 = vpack.c.b16 %v9731, %v9731
  %v9734 = vpack.c.b16 %v9732, %v9732
  %v9735 = vrot.slane %v9733, 7
  %v9736 = vrot.slane %v9734, 7
  %v9739 = vld [vmem:[%s3 + $0x4] sm:$0x2]
  %v9740 = vsel %vm9696, %v9735, %v9739
  %9741 = vst [vmem:[%s3 + $0x4] sm:$0x2] %v9740
  %v9742 = vld [vmem:[%s3 + $0xc] sm:$0x2]
  %v9743 = vsel %vm9696, %v9736, %v9742
  %9744 = vst [vmem:[%s3 + $0xc] sm:$0x2] %v9743
  %v9745 = vmax.f32 %v9670, %v9671
  %v9746 = vmax.f32 %v9678, %v9679
  %v9747 = vpack.c.bf16 %v9745, %v9745
  %v9748 = vpack.c.bf16 %v9746, %v9746
  %v9751 = vunpack.c.l.b16 %v9747
  %v9752 = vunpack.c.l.b16 %v9748
  %v9753 = vpack.c.b16 %v9751, %v9751
  %v9754 = vpack.c.b16 %v9752, %v9752
  %v9755 = vrot.slane %v9753, 5
  %v9756 = vrot.slane %v9754, 5
  %v9759 = vld [vmem:[%s3 + $0x4] sm:$0x8]
  %v9760 = vsel %vm9718, %v9755, %v9759
  %9761 = vst [vmem:[%s3 + $0x4] sm:$0x8] %v9760
  %v9762 = vld [vmem:[%s3 + $0xc] sm:$0x8]
  %v9763 = vsel %vm9718, %v9756, %v9762
  %9764 = vst [vmem:[%s3 + $0xc] sm:$0x8] %v9763
  %v9765 = vld [vmem:[#allocation2 + $0x6] sm:$0x1]
  %v9766 = vld [vmem:[#allocation2 + $0xe] sm:$0x1]
  %v9767 = vld [vmem:[#allocation2 + $0x16] sm:$0x1]
  %v9768 = vld [vmem:[#allocation2 + $0x1e] sm:$0x1]
  %v9769 = vld [vmem:[#allocation2 + $0x26] sm:$0x1]
  %v9770 = vld [vmem:[#allocation2 + $0x2e] sm:$0x1]
  %v9771 = vld [vmem:[#allocation2 + $0x36] sm:$0x1]
  %v9772 = vld [vmem:[#allocation2 + $0x3e] sm:$0x1]
  %v9773 = vld [vmem:[#allocation2 + $0x46] sm:$0x1]
  %v9774 = vld [vmem:[#allocation2 + $0x4e] sm:$0x1]
  %v9775 = vld [vmem:[#allocation2 + $0x56] sm:$0x1]
  %v9776 = vld [vmem:[#allocation2 + $0x5e] sm:$0x1]
  %v9777 = vld [vmem:[#allocation2 + $0x66] sm:$0x1]
  %v9778 = vld [vmem:[#allocation2 + $0x6e] sm:$0x1]
  %v9779 = vld [vmem:[#allocation2 + $0x76] sm:$0x1]
  %v9780 = vld [vmem:[#allocation2 + $0x7e] sm:$0x1]
  %v9781 = vld [vmem:[#allocation2 + $0x7] sm:$0x1]
  %v9782 = vld [vmem:[#allocation2 + $0xf] sm:$0x1]
  %v9783 = vld [vmem:[#allocation2 + $0x17] sm:$0x1]
  %v9784 = vld [vmem:[#allocation2 + $0x1f] sm:$0x1]
  %v9785 = vld [vmem:[#allocation2 + $0x27] sm:$0x1]
  %v9786 = vld [vmem:[#allocation2 + $0x2f] sm:$0x1]
  %v9787 = vld [vmem:[#allocation2 + $0x37] sm:$0x1]
  %v9788 = vld [vmem:[#allocation2 + $0x3f] sm:$0x1]
  %v9789 = vld [vmem:[#allocation2 + $0x47] sm:$0x1]
  %v9790 = vld [vmem:[#allocation2 + $0x4f] sm:$0x1]
  %v9791 = vld [vmem:[#allocation2 + $0x57] sm:$0x1]
  %v9792 = vld [vmem:[#allocation2 + $0x5f] sm:$0x1]
  %v9793 = vld [vmem:[#allocation2 + $0x67] sm:$0x1]
  %v9794 = vld [vmem:[#allocation2 + $0x6f] sm:$0x1]
  %v9795 = vld [vmem:[#allocation2 + $0x77] sm:$0x1]
  %v9796 = vld [vmem:[#allocation2 + $0x7f] sm:$0x1]
  %v9797 = vmax.f32 %v9765, %v9781
  %v9798 = vmax.f32 %v9766, %v9782
  %v9799 = vmax.f32 %v9767, %v9783
  %v9800 = vmax.f32 %v9768, %v9784
  %v9801 = vmax.f32 %v9769, %v9785
  %v9802 = vmax.f32 %v9770, %v9786
  %v9803 = vmax.f32 %v9771, %v9787
  %v9804 = vmax.f32 %v9772, %v9788
  %v9805 = vmax.f32 %v9773, %v9789
  %v9806 = vmax.f32 %v9774, %v9790
  %v9807 = vmax.f32 %v9775, %v9791
  %v9808 = vmax.f32 %v9776, %v9792
  %v9809 = vmax.f32 %v9777, %v9793
  %v9810 = vmax.f32 %v9778, %v9794
  %v9811 = vmax.f32 %v9779, %v9795
  %v9812 = vmax.f32 %v9780, %v9796
  %v9813 = vmax.f32 %v9797, %v9798
  %v9814 = vmax.f32 %v9805, %v9806
  %v9815 = vpack.c.bf16 %v9813, %v9813
  %v9816 = vpack.c.bf16 %v9814, %v9814
  %v9819 = vunpack.c.l.b16 %v9815
  %v9820 = vunpack.c.l.b16 %v9816
  %v9821 = vpack.c.b16 %v9819, %v9819
  %v9822 = vpack.c.b16 %v9820, %v9820
  %v9824 = vshll.u32 %v9821, 16
  %v9826 = vrot.slane %v9824, 7
  %v9828 = vshll.u32 %v9822, 16
  %v9830 = vrot.slane %v9828, 7
  %vm9833 = vsmask.f32 7942
  %vm9834 = vmand %vm9694, %vm9833
  %v9835 = vld [vmem:[%s3] sm:$0x2]
  %v9836 = vsel %vm9834, %v9826, %v9835
  %9837 = vst [vmem:[%s3] sm:$0x2] %v9836
  %v9838 = vld [vmem:[%s3 + $0x8] sm:$0x2]
  %v9839 = vsel %vm9834, %v9830, %v9838
  %9840 = vst [vmem:[%s3 + $0x8] sm:$0x2] %v9839
  %v9841 = vmax.f32 %v9799, %v9800
  %v9842 = vmax.f32 %v9807, %v9808
  %v9843 = vpack.c.bf16 %v9841, %v9841
  %v9844 = vpack.c.bf16 %v9842, %v9842
  %v9847 = vunpack.c.l.b16 %v9843
  %v9848 = vunpack.c.l.b16 %v9844
  %v9849 = vpack.c.b16 %v9847, %v9847
  %v9850 = vpack.c.b16 %v9848, %v9848
  %v9852 = vshll.u32 %v9849, 16
  %v9854 = vrot.slane %v9852, 5
  %v9856 = vshll.u32 %v9850, 16
  %v9858 = vrot.slane %v9856, 5
  %vm9861 = vsmask.f32 7950
  %vm9862 = vmand %vm9717, %vm9861
  %v9863 = vld [vmem:[%s3] sm:$0x8]
  %v9864 = vsel %vm9862, %v9854, %v9863
  %9865 = vst [vmem:[%s3] sm:$0x8] %v9864
  %v9866 = vld [vmem:[%s3 + $0x8] sm:$0x8]
  %v9867 = vsel %vm9862, %v9858, %v9866
  %9868 = vst [vmem:[%s3 + $0x8] sm:$0x8] %v9867
  %v9869 = vmax.f32 %v9801, %v9802
  %v9870 = vmax.f32 %v9809, %v9810
  %v9871 = vpack.c.bf16 %v9869, %v9869
  %v9872 = vpack.c.bf16 %v9870, %v9870
  %v9875 = vunpack.c.l.b16 %v9871
  %v9876 = vunpack.c.l.b16 %v9872
  %v9877 = vpack.c.b16 %v9875, %v9875
  %v9878 = vpack.c.b16 %v9876, %v9876
  %v9880 = vshll.u32 %v9877, 16
  %v9882 = vrot.slane %v9880, 7
  %v9884 = vshll.u32 %v9878, 16
  %v9886 = vrot.slane %v9884, 7
  %v9889 = vld [vmem:[%s3 + $0x4] sm:$0x2]
  %v9890 = vsel %vm9834, %v9882, %v9889
  %9891 = vst [vmem:[%s3 + $0x4] sm:$0x2] %v9890
  %v9892 = vld [vmem:[%s3 + $0xc] sm:$0x2]
  %v9893 = vsel %vm9834, %v9886, %v9892
  %9894 = vst [vmem:[%s3 + $0xc] sm:$0x2] %v9893
  %v9895 = vmax.f32 %v9803, %v9804
  %v9896 = vmax.f32 %v9811, %v9812
  %v9897 = vpack.c.bf16 %v9895, %v9895
  %v9898 = vpack.c.bf16 %v9896, %v9896
  %v9901 = vunpack.c.l.b16 %v9897
  %v9902 = vunpack.c.l.b16 %v9898
  %v9903 = vpack.c.b16 %v9901, %v9901
  %v9904 = vpack.c.b16 %v9902, %v9902
  %v9906 = vshll.u32 %v9903, 16
  %v9908 = vrot.slane %v9906, 5
  %v9910 = vshll.u32 %v9904, 16
  %v9912 = vrot.slane %v9910, 5
  %v9915 = vld [vmem:[%s3 + $0x4] sm:$0x8]
  %v9916 = vsel %vm9862, %v9908, %v9915
  %9917 = vst [vmem:[%s3 + $0x4] sm:$0x8] %v9916
  %v9918 = vld [vmem:[%s3 + $0xc] sm:$0x8]
  %v9919 = vsel %vm9862, %v9912, %v9918
  %9920 = vst [vmem:[%s3 + $0xc] sm:$0x8] %v9919
  // Predicated region
  $region14: #{net_forward.4} parent=0 // pred_check
    _
  $region15: #{net_forward.4} parent=0 // pred_check_branch
    %9922 = sbr.rel (0) target = $region17
  $region16: #{net_forward.4} parent=0 // pred_region
    _
  $region17: #{net_forward.4} parent=0 // pred_fallthru
    _
  // Predicated region
  $region18: #{net_forward.4} parent=0 // pred_check
    _
  $region19: #{net_forward.4} parent=0 // pred_check_branch
    %9924 = sbr.rel (0) target = $region21
  $region20: #{net_forward.4} parent=0 // pred_region
    _
  $region21: #{net_forward.4} parent=0 // pred_fallthru
    _

</llo_original>
